<compile_context>
chip_gen: v7x
topology: tpu7x:2x2x1
jax: 0.10.0
libtpu: 0.0.40
codegen_flags: <defaults>
</compile_context>

<pallas_src>
import functools

import jax
import jax.numpy as jnp
from jax.experimental import pallas as pl
from jax.experimental.pallas import tpu as pltpu


_OFFSETS = tuple((dy, dx) for dy in (-1, 0, 1) for dx in (-1, 0, 1))


def _round_up(x, m):
    return (x + m - 1) // m * m


def _vmem_tile_bytes(shape, dtype):
    """Physical VMEM footprint of a 2D buffer after (sublane, 128-lane) padding."""
    it = jnp.dtype(dtype).itemsize
    sub = 8 * (4 // it)                      # 8 rows for f32, 16 for bf16
    rows = 1
    for d in shape[:-1]:
        rows *= d
    return _round_up(rows, sub) * _round_up(shape[-1], 128) * it


# ------------------------------ fused kernel -------------------------------- #

def _fused_forward_kernel(
    x_ref,
    w_stem_ref, b_stem_ref,
    w_res1_ref, b_res1_ref,
    w_res2_ref, b_res2_ref,
    w_fc1_ref, b_fc1_ref,
    w_fc2_ref, b_fc2_ref,
    out_ref,
    xpad_ref, apad_ref, colx_ref, cola_ref, hres_ref,
    *, H, W, c_in, c_h, halo,
):
    n = H * W
    inv_hw = 1.0 / float(n)

    # Column-boundary masks only: row-boundary (dy=+-1) taps read the zero halo
    # rows for free, so just 2 masks (dx=-1 / dx=+1) shared by 3 taps each.
    w_idx = jax.lax.broadcasted_iota(jnp.int32, (n, 1), 0) % W
    mask_l = (w_idx >= 1).astype(jnp.float32)        # valid for dx = -1
    mask_r = (w_idx <= W - 2).astype(jnp.float32)    # valid for dx = +1

    # Zero ONLY the halo rows; the interior is fully overwritten below.  Done
    # every grid step (cheap) so "parallel" grid splitting stays correct.
    xpad_ref[:halo, :] = jnp.zeros((halo, c_in), jnp.float32)
    xpad_ref[halo + n: n + 2 * halo, :] = jnp.zeros((halo, c_in), jnp.float32)
    apad_ref[:halo, :] = jnp.zeros((halo, c_h), jnp.float32)
    apad_ref[halo + n: n + 2 * halo, :] = jnp.zeros((halo, c_h), jnp.float32)

    def conv3x3(pad_ref, col_ref, w_ref, b_ref, c):
        """3x3 'same' conv: stage masked im2col cols (bf16), one K=9*c matmul."""
        for tap, (dy, dx) in enumerate(_OFFSETS):
            s = dy * W + dx                           # static row shift
            v = pad_ref[halo + s: halo + s + n, :]
            if dx == -1:
                v = v * mask_l
            elif dx == 1:
                v = v * mask_r
            col_ref[:, tap * c: (tap + 1) * c] = v.astype(jnp.bfloat16)
        return (jnp.dot(col_ref[...], w_ref[...],
                        preferred_element_type=jnp.float32) + b_ref[...])

    # ---- stem conv + ReLU ----------------------------------------------------
    xpad_ref[halo: halo + n, :] = x_ref[0]
    h1 = jnp.maximum(conv3x3(xpad_ref, colx_ref, w_stem_ref, b_stem_ref, c_in),
                     0.0)
    hres_ref[...] = h1                                # keep (f32) for the skip

    # ---- residual block ------------------------------------------------------
    apad_ref[halo: halo + n, :] = h1
    t = jnp.maximum(conv3x3(apad_ref, cola_ref, w_res1_ref, b_res1_ref, c_h),
                    0.0)
    apad_ref[halo: halo + n, :] = t                   # halo rows stay zero
    h2 = jnp.maximum(conv3x3(apad_ref, cola_ref, w_res2_ref, b_res2_ref, c_h)
                     + hres_ref[...], 0.0)

    # ---- global average pool (single image per grid step) ---------------------
    feat = (jnp.sum(h2, axis=0, keepdims=True) * inv_hw).astype(jnp.bfloat16)

    # ---- encoder_output head: fc1 + ReLU, fc2 ---------------------------------
    z = jnp.maximum(
        jnp.dot(feat, w_fc1_ref[...], preferred_element_type=jnp.float32)
        + b_fc1_ref[...], 0.0)
    out = jnp.dot(z.astype(jnp.bfloat16), w_fc2_ref[...],
                  preferred_element_type=jnp.float32) + b_fc2_ref[...]
    out_ref[...] = out[None].astype(out_ref.dtype)    # (1, 1, targets)


# ------------------------------ JAX wrapper --------------------------------- #

def res_encoder_finetune_forward(params, x_nchw):
    """Equivalent of ResEncoderfinetune.forward: encoder_output(encoder(x))."""
    # NCHW -> NHWC -> per-image flat rows (h, w) with channel last.
    x = jnp.transpose(x_nchw, (0, 2, 3, 1)).astype(jnp.float32)
    B, H, W, c_in = x.shape
    c_h = params["w_stem"].shape[1]
    out_h = params["w_fc1"].shape[1]
    targets = params["w_fc2"].shape[1]
    n = H * W
    halo = _round_up(W + 1, 8)        # zero halo rows on each side (>= W+1)

    x_rows = x.reshape(B, n, c_in)

    bf = lambda a: a.astype(jnp.bfloat16)
    frow = lambda a: a.reshape(1, -1).astype(jnp.float32)

    kernel = functools.partial(
        _fused_forward_kernel, H=H, W=W, c_in=c_in, c_h=c_h, halo=halo)

    # Cost hints.
    flops = int(B * (2 * n * 9 * (c_in * c_h + 2 * c_h * c_h)
                     + 2 * (c_h * out_h + out_h * targets)))
    bytes_accessed = int(4 * x_rows.size
                         + 2 * sum(int(p.size) for p in params.values())
                         + 4 * B * targets)

    # VMEM budget from actual padded scratch + block sizes (+ headroom).
    scratch_defs = [
        ((n + 2 * halo, c_in), jnp.float32),   # padded input rows
        ((n + 2 * halo, c_h), jnp.float32),    # padded activation rows
        ((n, 9 * c_in), jnp.bfloat16),         # im2col cols (stem)
        ((n, 9 * c_h), jnp.bfloat16),          # im2col cols (res convs)
        ((n, c_h), jnp.float32),               # stem output (residual skip)
    ]
    block_defs = [((n, c_in), jnp.float32),
                  ((9 * c_in, c_h), jnp.bfloat16), ((1, c_h), jnp.float32),
                  ((9 * c_h, c_h), jnp.bfloat16), ((1, c_h), jnp.float32),
                  ((9 * c_h, c_h), jnp.bfloat16), ((1, c_h), jnp.float32),
                  ((c_h, out_h), jnp.bfloat16), ((1, out_h), jnp.float32),
                  ((out_h, targets), jnp.bfloat16), ((1, targets), jnp.float32),
                  ((1, targets), jnp.float32)]
    vmem_need = (sum(_vmem_tile_bytes(s, d) for s, d in scratch_defs)
                 + 2 * sum(_vmem_tile_bytes(s, d) for s, d in block_defs))
    vmem_limit = min(96 << 20, max(16 << 20, 2 * vmem_need + (4 << 20)))

    # TODO(synk): for large H*W per image this single-block-per-image kernel
    # must be re-tiled over spatial row chunks (halo rows must then hold real
    # neighbor rows, not zeros) and/or repacked with spatial on lanes; size the
    # tiles against v7x's 64 MiB physical VMEM.
    grid_spec = pltpu.PrefetchScalarGridSpec(
        num_scalar_prefetch=0,
        grid=(B,),
        in_specs=[
            pl.BlockSpec((1, n, c_in), lambda b: (b, 0, 0)),
            pl.BlockSpec((9 * c_in, c_h), lambda b: (0, 0)),
            pl.BlockSpec((1, c_h), lambda b: (0, 0)),
            pl.BlockSpec((9 * c_h, c_h), lambda b: (0, 0)),
            pl.BlockSpec((1, c_h), lambda b: (0, 0)),
            pl.BlockSpec((9 * c_h, c_h), lambda b: (0, 0)),
            pl.BlockSpec((1, c_h), lambda b: (0, 0)),
            pl.BlockSpec((c_h, out_h), lambda b: (0, 0)),
            pl.BlockSpec((1, out_h), lambda b: (0, 0)),
            pl.BlockSpec((out_h, targets), lambda b: (0, 0)),
            pl.BlockSpec((1, targets), lambda b: (0, 0)),
        ],
        out_specs=pl.BlockSpec((1, 1, targets), lambda b: (b, 0, 0)),
        scratch_shapes=[pltpu.VMEM(s, d) for s, d in scratch_defs],
    )

    out = pl.pallas_call(
        kernel,
        out_shape=jax.ShapeDtypeStruct((B, 1, targets), jnp.float32),
        grid_spec=grid_spec,
        compiler_params=pltpu.CompilerParams(
            dimension_semantics=("parallel",),
            vmem_limit_bytes=int(vmem_limit)),
        cost_estimate=pl.CostEstimate(flops=flops, transcendentals=0,
                                      bytes_accessed=bytes_accessed),
    )(x_rows,
      bf(params["w_stem"]), frow(params["b_stem"]),
      bf(params["w_res1"]), frow(params["b_res1"]),
      bf(params["w_res2"]), frow(params["b_res2"]),
      bf(params["w_fc1"]), frow(params["b_fc1"]),
      bf(params["w_fc2"]), frow(params["b_fc2"]))
    return out.reshape(B, targets)


def init_params(key, c_in, c_hidden, output_h, targets):
    keys = jax.random.split(key, 5)

    def w_init(k, shape, fan_in):
        return jax.random.normal(k, shape, jnp.float32) / jnp.sqrt(float(fan_in))

    return {
        # conv weights stored in im2col layout (9*Cin, Cout); tap order is
        # (dh, dw) outer, input channel inner.
        "w_stem": w_init(keys[0], (9 * c_in, c_hidden), 9 * c_in),
        "b_stem": jnp.zeros((c_hidden,), jnp.float32),
        "w_res1": w_init(keys[1], (9 * c_hidden, c_hidden), 9 * c_hidden),
        "b_res1": jnp.zeros((c_hidden,), jnp.float32),
        "w_res2": w_init(keys[2], (9 * c_hidden, c_hidden), 9 * c_hidden),
        "b_res2": jnp.zeros((c_hidden,), jnp.float32),
        # encoder_output head
        "w_fc1": w_init(keys[3], (c_hidden, output_h), c_hidden),
        "b_fc1": jnp.zeros((output_h,), jnp.float32),
        "w_fc2": w_init(keys[4], (output_h, targets), output_h),
        "b_fc2": jnp.zeros((targets,), jnp.float32),
    }


# Pure-JAX reference (XLA).  matmul_dtype=bf16 mirrors the kernel's casting
# points exactly (tight check); matmul_dtype=f32 is the full-precision sanity
# reference (loose check, bf16 matmul error only).
def reference_forward(params, x_nchw, matmul_dtype=jnp.float32):
    x = jnp.transpose(x_nchw, (0, 2, 3, 1)).astype(jnp.float32)
    B, H, W, _ = x.shape
    c_h = params["w_stem"].shape[1]

    def conv(img, w, b):
        xp = jnp.pad(img, ((0, 0), (1, 1), (1, 1), (0, 0)))
        cols = jnp.concatenate(
            [xp[:, dh:dh + H, dw:dw + W, :]
             for dh in range(3) for dw in range(3)], axis=-1)
        cols = cols.reshape(B * H * W, -1).astype(matmul_dtype)
        y = jnp.dot(cols, w.astype(matmul_dtype),
                    preferred_element_type=jnp.float32)
        return y + b

    h = jax.nn.relu(conv(x, params["w_stem"], params["b_stem"]))
    t = jax.nn.relu(conv(h.reshape(B, H, W, c_h),
                         params["w_res1"], params["b_res1"]))
    h2 = jax.nn.relu(conv(t.reshape(B, H, W, c_h),
                          params["w_res2"], params["b_res2"]) + h)
    feat = h2.reshape(B, H * W, c_h).mean(axis=1)
    z = jax.nn.relu(
        jnp.dot(feat.astype(matmul_dtype), params["w_fc1"].astype(matmul_dtype),
                preferred_element_type=jnp.float32) + params["b_fc1"])
    return (jnp.dot(z.astype(matmul_dtype), params["w_fc2"].astype(matmul_dtype),
                    preferred_element_type=jnp.float32) + params["b_fc2"])


if __name__ == "__main__":
    # TODO(synk): multi_gpu DataParallel wrapping and the encoder_grad_frac
    # backward hook are training/device-placement-only; they do not affect
    # forward math and are not translated.
    B, C_IN, H, W = 2, 4, 16, 16
    C_HIDDEN, OUTPUT_H, TARGETS = 8, 128, 3

    key = jax.random.PRNGKey(0)
    k_x, k_p = jax.random.split(key)
    x = jax.random.normal(k_x, (B, C_IN, H, W), jnp.float32)   # NCHW, like PyTorch
    params = init_params(k_p, C_IN, C_HIDDEN, OUTPUT_H, TARGETS)

    out = jax.jit(res_encoder_finetune_forward)(params, x)
    jax.block_until_ready(out)
    assert out.shape == (B, TARGETS) and out.dtype == jnp.float32

    # Tight check vs a reference that quantizes matmul inputs identically (bf16).
    ref_bf16 = reference_forward(params, x, matmul_dtype=jnp.bfloat16)
    assert jnp.allclose(out, ref_bf16, rtol=2e-3, atol=2e-3), (out, ref_bf16)
    # Loose sanity check vs the pure-f32 reference (bf16 matmul-input error only).
    ref_f32 = reference_forward(params, x, matmul_dtype=jnp.float32)
    assert jnp.allclose(out, ref_f32, rtol=5e-2, atol=5e-2), (out, ref_f32)
    print("KERNEL_OK")
</pallas_src>

<mosaic_0001>
module attributes {stable_mosaic.version = 11 : i64} {
  func.func @_fused_forward_kernel(%arg0: i32, %arg1: memref<1x256x4xf32, #tpu.memory_space<vmem>>, %arg2: memref<36x8xbf16, #tpu.memory_space<vmem>>, %arg3: memref<1x8xf32, #tpu.memory_space<vmem>>, %arg4: memref<72x8xbf16, #tpu.memory_space<vmem>>, %arg5: memref<1x8xf32, #tpu.memory_space<vmem>>, %arg6: memref<72x8xbf16, #tpu.memory_space<vmem>>, %arg7: memref<1x8xf32, #tpu.memory_space<vmem>>, %arg8: memref<8x128xbf16, #tpu.memory_space<vmem>>, %arg9: memref<1x128xf32, #tpu.memory_space<vmem>>, %arg10: memref<128x3xbf16, #tpu.memory_space<vmem>>, %arg11: memref<1x3xf32, #tpu.memory_space<vmem>>, %arg12: memref<1x1x3xf32, #tpu.memory_space<vmem>>, %arg13: memref<304x4xf32, #tpu.memory_space<vmem>>, %arg14: memref<304x8xf32, #tpu.memory_space<vmem>>, %arg15: memref<256x36xbf16, #tpu.memory_space<vmem>>, %arg16: memref<256x72xbf16, #tpu.memory_space<vmem>>, %arg17: memref<256x8xf32, #tpu.memory_space<vmem>>) attributes {dimension_semantics = [#tpu.dimension_semantics<parallel>], iteration_bounds = array<i64: 2>, scalar_prefetch = 0 : i64, scratch_operands = 5 : i64, tpu.core_type = #tpu.core_type<tc>, window_params = [{transform_indices = @transform_0, window_bounds = array<i64: 1, 256, 4>}, {pipeline_mode = #tpu.pipeline_mode<synchronous>, transform_indices = @transform_1, window_bounds = array<i64: 36, 8>}, {pipeline_mode = #tpu.pipeline_mode<synchronous>, transform_indices = @transform_2, window_bounds = array<i64: 1, 8>}, {pipeline_mode = #tpu.pipeline_mode<synchronous>, transform_indices = @transform_3, window_bounds = array<i64: 72, 8>}, {pipeline_mode = #tpu.pipeline_mode<synchronous>, transform_indices = @transform_4, window_bounds = array<i64: 1, 8>}, {pipeline_mode = #tpu.pipeline_mode<synchronous>, transform_indices = @transform_5, window_bounds = array<i64: 72, 8>}, {pipeline_mode = #tpu.pipeline_mode<synchronous>, transform_indices = @transform_6, window_bounds = array<i64: 1, 8>}, {pipeline_mode = #tpu.pipeline_mode<synchronous>, transform_indices = @transform_7, window_bounds = array<i64: 8, 128>}, {pipeline_mode = #tpu.pipeline_mode<synchronous>, transform_indices = @transform_8, window_bounds = array<i64: 1, 128>}, {pipeline_mode = #tpu.pipeline_mode<synchronous>, transform_indices = @transform_9, window_bounds = array<i64: 128, 3>}, {pipeline_mode = #tpu.pipeline_mode<synchronous>, transform_indices = @transform_10, window_bounds = array<i64: 1, 3>}, {transform_indices = @transform_11, window_bounds = array<i64: 1, 1, 3>}]} {
    %0 = tpu.iota {dimensions = array<i32: 0>} : vector<256x1xi32>
    %c16_i32 = arith.constant 16 : i32
    %c0_i32 = arith.constant 0 : i32
    %1 = arith.cmpi eq, %c16_i32, %c0_i32 : i32
    %c1_i32 = arith.constant 1 : i32
    %2 = arith.select %1, %c1_i32, %c16_i32 : i32
    %3 = vector.broadcast %2 : i32 to vector<256x1xi32>
    %4 = arith.remsi %0, %3 : vector<256x1xi32>
    %c0_i32_0 = arith.constant 0 : i32
    %5 = vector.broadcast %c0_i32_0 : i32 to vector<256x1xi32>
    %6 = arith.cmpi ne, %4, %5 : vector<256x1xi32>
    %c0_i32_1 = arith.constant 0 : i32
    %7 = vector.broadcast %c0_i32_1 : i32 to vector<256x1xi32>
    %8 = arith.cmpi slt, %4, %7 : vector<256x1xi32>
    %c0_i32_2 = arith.constant 0 : i32
    %9 = arith.cmpi slt, %2, %c0_i32_2 : i32
    %10 = vector.broadcast %9 : i1 to vector<256x1xi1>
    %11 = vector.broadcast %10 : vector<256x1xi1> to vector<256x1xi1>
    %12 = arith.xori %8, %11 : vector<256x1xi1>
    %13 = arith.andi %12, %6 : vector<256x1xi1>
    %14 = vector.broadcast %2 : i32 to vector<256x1xi32>
    %15 = arith.addi %4, %14 : vector<256x1xi32>
    %16 = arith.select %13, %15, %4 : vector<256x1xi1>, vector<256x1xi32>
    %c1_i32_3 = arith.constant 1 : i32
    %17 = vector.broadcast %c1_i32_3 : i32 to vector<256x1xi32>
    %18 = arith.cmpi sge, %16, %17 : vector<256x1xi32>
    %19 = arith.extui %18 : vector<256x1xi1> to vector<256x1xi32>
    %20 = arith.sitofp %19 : vector<256x1xi32> to vector<256x1xf32>
    %c14_i32 = arith.constant 14 : i32
    %21 = vector.broadcast %c14_i32 : i32 to vector<256x1xi32>
    %22 = arith.cmpi sle, %16, %21 : vector<256x1xi32>
    %23 = arith.extui %22 : vector<256x1xi1> to vector<256x1xi32>
    %24 = arith.sitofp %23 : vector<256x1xi32> to vector<256x1xf32>
    %cst = arith.constant 0.000000e+00 : f32
    %25 = vector.broadcast %cst : f32 to vector<24x4xf32>
    %c0 = arith.constant 0 : index
    %c0_4 = arith.constant 0 : index
    %26 = vector.load %arg13[%c0, %c0_4] : memref<304x4xf32, #tpu.memory_space<vmem>>, vector<24x4xf32>
    tpu.vector_store %arg13[%c0, %c0_4], %25 {strides = array<i32>} : memref<304x4xf32, #tpu.memory_space<vmem>>, vector<24x4xf32>,
    %cst_5 = arith.constant 0.000000e+00 : f32
    %27 = vector.broadcast %cst_5 : f32 to vector<24x4xf32>
    %c280 = arith.constant 280 : index
    %c0_6 = arith.constant 0 : index
    %28 = vector.load %arg13[%c280, %c0_6] : memref<304x4xf32, #tpu.memory_space<vmem>>, vector<24x4xf32>
    tpu.vector_store %arg13[%c280, %c0_6], %27 {strides = array<i32>} : memref<304x4xf32, #tpu.memory_space<vmem>>, vector<24x4xf32>,
    %cst_7 = arith.constant 0.000000e+00 : f32
    %29 = vector.broadcast %cst_7 : f32 to vector<24x8xf32>
    %c0_8 = arith.constant 0 : index
    %c0_9 = arith.constant 0 : index
    %30 = vector.load %arg14[%c0_8, %c0_9] : memref<304x8xf32, #tpu.memory_space<vmem>>, vector<24x8xf32>
    tpu.vector_store %arg14[%c0_8, %c0_9], %29 {strides = array<i32>} : memref<304x8xf32, #tpu.memory_space<vmem>>, vector<24x8xf32>,
    %cst_10 = arith.constant 0.000000e+00 : f32
    %31 = vector.broadcast %cst_10 : f32 to vector<24x8xf32>
    %c280_11 = arith.constant 280 : index
    %c0_12 = arith.constant 0 : index
    %32 = vector.load %arg14[%c280_11, %c0_12] : memref<304x8xf32, #tpu.memory_space<vmem>>, vector<24x8xf32>
    tpu.vector_store %arg14[%c280_11, %c0_12], %31 {strides = array<i32>} : memref<304x8xf32, #tpu.memory_space<vmem>>, vector<24x8xf32>,
    %c0_13 = arith.constant 0 : index
    %c0_14 = arith.constant 0 : index
    %c0_15 = arith.constant 0 : index
    %33 = vector.load %arg1[%c0_13, %c0_14, %c0_15] : memref<1x256x4xf32, #tpu.memory_space<vmem>>, vector<1x256x4xf32>
    %34 = vector.shape_cast %33 : vector<1x256x4xf32> to vector<256x4xf32>
    %c24 = arith.constant 24 : index
    %c0_16 = arith.constant 0 : index
    %35 = vector.load %arg13[%c24, %c0_16] : memref<304x4xf32, #tpu.memory_space<vmem>>, vector<256x4xf32>
    tpu.vector_store %arg13[%c24, %c0_16], %34 {strides = array<i32>} : memref<304x4xf32, #tpu.memory_space<vmem>>, vector<256x4xf32>,
    %c7 = arith.constant 7 : index
    %c0_17 = arith.constant 0 : index
    %36 = vector.load %arg13[%c7, %c0_17] : memref<304x4xf32, #tpu.memory_space<vmem>>, vector<256x4xf32>
    %37 = vector.broadcast %20 : vector<256x1xf32> to vector<256x4xf32>
    %38 = arith.mulf %36, %37 : vector<256x4xf32>
    %39 = arith.truncf %38 : vector<256x4xf32> to vector<256x4xbf16>
    %c0_18 = arith.constant 0 : index
    %c0_19 = arith.constant 0 : index
    %40 = vector.load %arg15[%c0_18, %c0_19] : memref<256x36xbf16, #tpu.memory_space<vmem>>, vector<256x4xbf16>
    tpu.vector_store %arg15[%c0_18, %c0_19], %39 {strides = array<i32>} : memref<256x36xbf16, #tpu.memory_space<vmem>>, vector<256x4xbf16>,
    %c8 = arith.constant 8 : index
    %c0_20 = arith.constant 0 : index
    %41 = vector.load %arg13[%c8, %c0_20] : memref<304x4xf32, #tpu.memory_space<vmem>>, vector<256x4xf32>
    %42 = arith.truncf %41 : vector<256x4xf32> to vector<256x4xbf16>
    %c0_21 = arith.constant 0 : index
    %c4 = arith.constant 4 : index
    %43 = vector.load %arg15[%c0_21, %c4] : memref<256x36xbf16, #tpu.memory_space<vmem>>, vector<256x4xbf16>
    tpu.vector_store %arg15[%c0_21, %c4], %42 {strides = array<i32>} : memref<256x36xbf16, #tpu.memory_space<vmem>>, vector<256x4xbf16>,
    %c9 = arith.constant 9 : index
    %c0_22 = arith.constant 0 : index
    %44 = vector.load %arg13[%c9, %c0_22] : memref<304x4xf32, #tpu.memory_space<vmem>>, vector<256x4xf32>
    %45 = vector.broadcast %24 : vector<256x1xf32> to vector<256x4xf32>
    %46 = arith.mulf %44, %45 : vector<256x4xf32>
    %47 = arith.truncf %46 : vector<256x4xf32> to vector<256x4xbf16>
    %c0_23 = arith.constant 0 : index
    %c8_24 = arith.constant 8 : index
    %48 = vector.load %arg15[%c0_23, %c8_24] : memref<256x36xbf16, #tpu.memory_space<vmem>>, vector<256x4xbf16>
    tpu.vector_store %arg15[%c0_23, %c8_24], %47 {strides = array<i32>} : memref<256x36xbf16, #tpu.memory_space<vmem>>, vector<256x4xbf16>,
    %c23 = arith.constant 23 : index
    %c0_25 = arith.constant 0 : index
    %49 = vector.load %arg13[%c23, %c0_25] : memref<304x4xf32, #tpu.memory_space<vmem>>, vector<256x4xf32>
    %50 = vector.broadcast %20 : vector<256x1xf32> to vector<256x4xf32>
    %51 = arith.mulf %49, %50 : vector<256x4xf32>
    %52 = arith.truncf %51 : vector<256x4xf32> to vector<256x4xbf16>
    %c0_26 = arith.constant 0 : index
    %c12 = arith.constant 12 : index
    %53 = vector.load %arg15[%c0_26, %c12] : memref<256x36xbf16, #tpu.memory_space<vmem>>, vector<256x4xbf16>
    tpu.vector_store %arg15[%c0_26, %c12], %52 {strides = array<i32>} : memref<256x36xbf16, #tpu.memory_space<vmem>>, vector<256x4xbf16>,
    %c24_27 = arith.constant 24 : index
    %c0_28 = arith.constant 0 : index
    %54 = vector.load %arg13[%c24_27, %c0_28] : memref<304x4xf32, #tpu.memory_space<vmem>>, vector<256x4xf32>
    %55 = arith.truncf %54 : vector<256x4xf32> to vector<256x4xbf16>
    %c0_29 = arith.constant 0 : index
    %c16 = arith.constant 16 : index
    %56 = vector.load %arg15[%c0_29, %c16] : memref<256x36xbf16, #tpu.memory_space<vmem>>, vector<256x4xbf16>
    tpu.vector_store %arg15[%c0_29, %c16], %55 {strides = array<i32>} : memref<256x36xbf16, #tpu.memory_space<vmem>>, vector<256x4xbf16>,
    %c25 = arith.constant 25 : index
    %c0_30 = arith.constant 0 : index
    %57 = vector.load %arg13[%c25, %c0_30] : memref<304x4xf32, #tpu.memory_space<vmem>>, vector<256x4xf32>
    %58 = vector.broadcast %24 : vector<256x1xf32> to vector<256x4xf32>
    %59 = arith.mulf %57, %58 : vector<256x4xf32>
    %60 = arith.truncf %59 : vector<256x4xf32> to vector<256x4xbf16>
    %c0_31 = arith.constant 0 : index
    %c20 = arith.constant 20 : index
    %61 = vector.load %arg15[%c0_31, %c20] : memref<256x36xbf16, #tpu.memory_space<vmem>>, vector<256x4xbf16>
    tpu.vector_store %arg15[%c0_31, %c20], %60 {strides = array<i32>} : memref<256x36xbf16, #tpu.memory_space<vmem>>, vector<256x4xbf16>,
    %c39 = arith.constant 39 : index
    %c0_32 = arith.constant 0 : index
    %62 = vector.load %arg13[%c39, %c0_32] : memref<304x4xf32, #tpu.memory_space<vmem>>, vector<256x4xf32>
    %63 = vector.broadcast %20 : vector<256x1xf32> to vector<256x4xf32>
    %64 = arith.mulf %62, %63 : vector<256x4xf32>
    %65 = arith.truncf %64 : vector<256x4xf32> to vector<256x4xbf16>
    %c0_33 = arith.constant 0 : index
    %c24_34 = arith.constant 24 : index
    %66 = vector.load %arg15[%c0_33, %c24_34] : memref<256x36xbf16, #tpu.memory_space<vmem>>, vector<256x4xbf16>
    tpu.vector_store %arg15[%c0_33, %c24_34], %65 {strides = array<i32>} : memref<256x36xbf16, #tpu.memory_space<vmem>>, vector<256x4xbf16>,
    %c40 = arith.constant 40 : index
    %c0_35 = arith.constant 0 : index
    %67 = vector.load %arg13[%c40, %c0_35] : memref<304x4xf32, #tpu.memory_space<vmem>>, vector<256x4xf32>
    %68 = arith.truncf %67 : vector<256x4xf32> to vector<256x4xbf16>
    %c0_36 = arith.constant 0 : index
    %c28 = arith.constant 28 : index
    %69 = vector.load %arg15[%c0_36, %c28] : memref<256x36xbf16, #tpu.memory_space<vmem>>, vector<256x4xbf16>
    tpu.vector_store %arg15[%c0_36, %c28], %68 {strides = array<i32>} : memref<256x36xbf16, #tpu.memory_space<vmem>>, vector<256x4xbf16>,
    %c41 = arith.constant 41 : index
    %c0_37 = arith.constant 0 : index
    %70 = vector.load %arg13[%c41, %c0_37] : memref<304x4xf32, #tpu.memory_space<vmem>>, vector<256x4xf32>
    %71 = vector.broadcast %24 : vector<256x1xf32> to vector<256x4xf32>
    %72 = arith.mulf %70, %71 : vector<256x4xf32>
    %73 = arith.truncf %72 : vector<256x4xf32> to vector<256x4xbf16>
    %c0_38 = arith.constant 0 : index
    %c32 = arith.constant 32 : index
    %74 = vector.load %arg15[%c0_38, %c32] : memref<256x36xbf16, #tpu.memory_space<vmem>>, vector<256x4xbf16>
    tpu.vector_store %arg15[%c0_38, %c32], %73 {strides = array<i32>} : memref<256x36xbf16, #tpu.memory_space<vmem>>, vector<256x4xbf16>,
    %c0_39 = arith.constant 0 : index
    %c0_40 = arith.constant 0 : index
    %75 = vector.load %arg15[%c0_39, %c0_40] : memref<256x36xbf16, #tpu.memory_space<vmem>>, vector<256x36xbf16>
    %c0_41 = arith.constant 0 : index
    %c0_42 = arith.constant 0 : index
    %76 = vector.load %arg2[%c0_41, %c0_42] : memref<36x8xbf16, #tpu.memory_space<vmem>>, vector<36x8xbf16>
    %cst_43 = arith.constant dense<0.000000e+00> : vector<256x8xf32>
    %77 = tpu.matmul %75, %76, %cst_43 {dimension_numbers = #tpu.dot_dimension_numbers<[1], [0], [0], [1], [0, 0, 1, 1], [], []>} : vector<256x36xbf16>, vector<36x8xbf16>, vector<256x8xf32> -> vector<256x8xf32>
    %c0_44 = arith.constant 0 : index
    %c0_45 = arith.constant 0 : index
    %78 = vector.load %arg3[%c0_44, %c0_45] : memref<1x8xf32, #tpu.memory_space<vmem>>, vector<1x8xf32>
    %79 = vector.broadcast %78 : vector<1x8xf32> to vector<256x8xf32>
    %80 = arith.addf %77, %79 : vector<256x8xf32>
    %cst_46 = arith.constant 0.000000e+00 : f32
    %81 = vector.broadcast %cst_46 : f32 to vector<256x8xf32>
    %82 = arith.maximumf %80, %81 : vector<256x8xf32>
    %c0_47 = arith.constant 0 : index
    %c0_48 = arith.constant 0 : index
    %83 = vector.load %arg17[%c0_47, %c0_48] : memref<256x8xf32, #tpu.memory_space<vmem>>, vector<256x8xf32>
    tpu.vector_store %arg17[%c0_47, %c0_48], %82 {strides = array<i32>} : memref<256x8xf32, #tpu.memory_space<vmem>>, vector<256x8xf32>,
    %c24_49 = arith.constant 24 : index
    %c0_50 = arith.constant 0 : index
    %84 = vector.load %arg14[%c24_49, %c0_50] : memref<304x8xf32, #tpu.memory_space<vmem>>, vector<256x8xf32>
    tpu.vector_store %arg14[%c24_49, %c0_50], %82 {strides = array<i32>} : memref<304x8xf32, #tpu.memory_space<vmem>>, vector<256x8xf32>,
    %c7_51 = arith.constant 7 : index
    %c0_52 = arith.constant 0 : index
    %85 = vector.load %arg14[%c7_51, %c0_52] : memref<304x8xf32, #tpu.memory_space<vmem>>, vector<256x8xf32>
    %86 = vector.broadcast %20 : vector<256x1xf32> to vector<256x8xf32>
    %87 = arith.mulf %85, %86 : vector<256x8xf32>
    %88 = arith.truncf %87 : vector<256x8xf32> to vector<256x8xbf16>
    %c0_53 = arith.constant 0 : index
    %c0_54 = arith.constant 0 : index
    %89 = vector.load %arg16[%c0_53, %c0_54] : memref<256x72xbf16, #tpu.memory_space<vmem>>, vector<256x8xbf16>
    tpu.vector_store %arg16[%c0_53, %c0_54], %88 {strides = array<i32>} : memref<256x72xbf16, #tpu.memory_space<vmem>>, vector<256x8xbf16>,
    %c8_55 = arith.constant 8 : index
    %c0_56 = arith.constant 0 : index
    %90 = vector.load %arg14[%c8_55, %c0_56] : memref<304x8xf32, #tpu.memory_space<vmem>>, vector<256x8xf32>
    %91 = arith.truncf %90 : vector<256x8xf32> to vector<256x8xbf16>
    %c0_57 = arith.constant 0 : index
    %c8_58 = arith.constant 8 : index
    %92 = vector.load %arg16[%c0_57, %c8_58] : memref<256x72xbf16, #tpu.memory_space<vmem>>, vector<256x8xbf16>
    tpu.vector_store %arg16[%c0_57, %c8_58], %91 {strides = array<i32>} : memref<256x72xbf16, #tpu.memory_space<vmem>>, vector<256x8xbf16>,
    %c9_59 = arith.constant 9 : index
    %c0_60 = arith.constant 0 : index
    %93 = vector.load %arg14[%c9_59, %c0_60] : memref<304x8xf32, #tpu.memory_space<vmem>>, vector<256x8xf32>
    %94 = vector.broadcast %24 : vector<256x1xf32> to vector<256x8xf32>
    %95 = arith.mulf %93, %94 : vector<256x8xf32>
    %96 = arith.truncf %95 : vector<256x8xf32> to vector<256x8xbf16>
    %c0_61 = arith.constant 0 : index
    %c16_62 = arith.constant 16 : index
    %97 = vector.load %arg16[%c0_61, %c16_62] : memref<256x72xbf16, #tpu.memory_space<vmem>>, vector<256x8xbf16>
    tpu.vector_store %arg16[%c0_61, %c16_62], %96 {strides = array<i32>} : memref<256x72xbf16, #tpu.memory_space<vmem>>, vector<256x8xbf16>,
    %c23_63 = arith.constant 23 : index
    %c0_64 = arith.constant 0 : index
    %98 = vector.load %arg14[%c23_63, %c0_64] : memref<304x8xf32, #tpu.memory_space<vmem>>, vector<256x8xf32>
    %99 = vector.broadcast %20 : vector<256x1xf32> to vector<256x8xf32>
    %100 = arith.mulf %98, %99 : vector<256x8xf32>
    %101 = arith.truncf %100 : vector<256x8xf32> to vector<256x8xbf16>
    %c0_65 = arith.constant 0 : index
    %c24_66 = arith.constant 24 : index
    %102 = vector.load %arg16[%c0_65, %c24_66] : memref<256x72xbf16, #tpu.memory_space<vmem>>, vector<256x8xbf16>
    tpu.vector_store %arg16[%c0_65, %c24_66], %101 {strides = array<i32>} : memref<256x72xbf16, #tpu.memory_space<vmem>>, vector<256x8xbf16>,
    %c24_67 = arith.constant 24 : index
    %c0_68 = arith.constant 0 : index
    %103 = vector.load %arg14[%c24_67, %c0_68] : memref<304x8xf32, #tpu.memory_space<vmem>>, vector<256x8xf32>
    %104 = arith.truncf %103 : vector<256x8xf32> to vector<256x8xbf16>
    %c0_69 = arith.constant 0 : index
    %c32_70 = arith.constant 32 : index
    %105 = vector.load %arg16[%c0_69, %c32_70] : memref<256x72xbf16, #tpu.memory_space<vmem>>, vector<256x8xbf16>
    tpu.vector_store %arg16[%c0_69, %c32_70], %104 {strides = array<i32>} : memref<256x72xbf16, #tpu.memory_space<vmem>>, vector<256x8xbf16>,
    %c25_71 = arith.constant 25 : index
    %c0_72 = arith.constant 0 : index
    %106 = vector.load %arg14[%c25_71, %c0_72] : memref<304x8xf32, #tpu.memory_space<vmem>>, vector<256x8xf32>
    %107 = vector.broadcast %24 : vector<256x1xf32> to vector<256x8xf32>
    %108 = arith.mulf %106, %107 : vector<256x8xf32>
    %109 = arith.truncf %108 : vector<256x8xf32> to vector<256x8xbf16>
    %c0_73 = arith.constant 0 : index
    %c40_74 = arith.constant 40 : index
    %110 = vector.load %arg16[%c0_73, %c40_74] : memref<256x72xbf16, #tpu.memory_space<vmem>>, vector<256x8xbf16>
    tpu.vector_store %arg16[%c0_73, %c40_74], %109 {strides = array<i32>} : memref<256x72xbf16, #tpu.memory_space<vmem>>, vector<256x8xbf16>,
    %c39_75 = arith.constant 39 : index
    %c0_76 = arith.constant 0 : index
    %111 = vector.load %arg14[%c39_75, %c0_76] : memref<304x8xf32, #tpu.memory_space<vmem>>, vector<256x8xf32>
    %112 = vector.broadcast %20 : vector<256x1xf32> to vector<256x8xf32>
    %113 = arith.mulf %111, %112 : vector<256x8xf32>
    %114 = arith.truncf %113 : vector<256x8xf32> to vector<256x8xbf16>
    %c0_77 = arith.constant 0 : index
    %c48 = arith.constant 48 : index
    %115 = vector.load %arg16[%c0_77, %c48] : memref<256x72xbf16, #tpu.memory_space<vmem>>, vector<256x8xbf16>
    tpu.vector_store %arg16[%c0_77, %c48], %114 {strides = array<i32>} : memref<256x72xbf16, #tpu.memory_space<vmem>>, vector<256x8xbf16>,
    %c40_78 = arith.constant 40 : index
    %c0_79 = arith.constant 0 : index
    %116 = vector.load %arg14[%c40_78, %c0_79] : memref<304x8xf32, #tpu.memory_space<vmem>>, vector<256x8xf32>
    %117 = arith.truncf %116 : vector<256x8xf32> to vector<256x8xbf16>
    %c0_80 = arith.constant 0 : index
    %c56 = arith.constant 56 : index
    %118 = vector.load %arg16[%c0_80, %c56] : memref<256x72xbf16, #tpu.memory_space<vmem>>, vector<256x8xbf16>
    tpu.vector_store %arg16[%c0_80, %c56], %117 {strides = array<i32>} : memref<256x72xbf16, #tpu.memory_space<vmem>>, vector<256x8xbf16>,
    %c41_81 = arith.constant 41 : index
    %c0_82 = arith.constant 0 : index
    %119 = vector.load %arg14[%c41_81, %c0_82] : memref<304x8xf32, #tpu.memory_space<vmem>>, vector<256x8xf32>
    %120 = vector.broadcast %24 : vector<256x1xf32> to vector<256x8xf32>
    %121 = arith.mulf %119, %120 : vector<256x8xf32>
    %122 = arith.truncf %121 : vector<256x8xf32> to vector<256x8xbf16>
    %c0_83 = arith.constant 0 : index
    %c64 = arith.constant 64 : index
    %123 = vector.load %arg16[%c0_83, %c64] : memref<256x72xbf16, #tpu.memory_space<vmem>>, vector<256x8xbf16>
    tpu.vector_store %arg16[%c0_83, %c64], %122 {strides = array<i32>} : memref<256x72xbf16, #tpu.memory_space<vmem>>, vector<256x8xbf16>,
    %c0_84 = arith.constant 0 : index
    %c0_85 = arith.constant 0 : index
    %124 = vector.load %arg16[%c0_84, %c0_85] : memref<256x72xbf16, #tpu.memory_space<vmem>>, vector<256x72xbf16>
    %c0_86 = arith.constant 0 : index
    %c0_87 = arith.constant 0 : index
    %125 = vector.load %arg4[%c0_86, %c0_87] : memref<72x8xbf16, #tpu.memory_space<vmem>>, vector<72x8xbf16>
    %cst_88 = arith.constant dense<0.000000e+00> : vector<256x8xf32>
    %126 = tpu.matmul %124, %125, %cst_88 {dimension_numbers = #tpu.dot_dimension_numbers<[1], [0], [0], [1], [0, 0, 1, 1], [], []>} : vector<256x72xbf16>, vector<72x8xbf16>, vector<256x8xf32> -> vector<256x8xf32>
    %c0_89 = arith.constant 0 : index
    %c0_90 = arith.constant 0 : index
    %127 = vector.load %arg5[%c0_89, %c0_90] : memref<1x8xf32, #tpu.memory_space<vmem>>, vector<1x8xf32>
    %128 = vector.broadcast %127 : vector<1x8xf32> to vector<256x8xf32>
    %129 = arith.addf %126, %128 : vector<256x8xf32>
    %cst_91 = arith.constant 0.000000e+00 : f32
    %130 = vector.broadcast %cst_91 : f32 to vector<256x8xf32>
    %131 = arith.maximumf %129, %130 : vector<256x8xf32>
    %c24_92 = arith.constant 24 : index
    %c0_93 = arith.constant 0 : index
    %132 = vector.load %arg14[%c24_92, %c0_93] : memref<304x8xf32, #tpu.memory_space<vmem>>, vector<256x8xf32>
    tpu.vector_store %arg14[%c24_92, %c0_93], %131 {strides = array<i32>} : memref<304x8xf32, #tpu.memory_space<vmem>>, vector<256x8xf32>,
    %c7_94 = arith.constant 7 : index
    %c0_95 = arith.constant 0 : index
    %133 = vector.load %arg14[%c7_94, %c0_95] : memref<304x8xf32, #tpu.memory_space<vmem>>, vector<256x8xf32>
    %134 = vector.broadcast %20 : vector<256x1xf32> to vector<256x8xf32>
    %135 = arith.mulf %133, %134 : vector<256x8xf32>
    %136 = arith.truncf %135 : vector<256x8xf32> to vector<256x8xbf16>
    %c0_96 = arith.constant 0 : index
    %c0_97 = arith.constant 0 : index
    %137 = vector.load %arg16[%c0_96, %c0_97] : memref<256x72xbf16, #tpu.memory_space<vmem>>, vector<256x8xbf16>
    tpu.vector_store %arg16[%c0_96, %c0_97], %136 {strides = array<i32>} : memref<256x72xbf16, #tpu.memory_space<vmem>>, vector<256x8xbf16>,
    %c8_98 = arith.constant 8 : index
    %c0_99 = arith.constant 0 : index
    %138 = vector.load %arg14[%c8_98, %c0_99] : memref<304x8xf32, #tpu.memory_space<vmem>>, vector<256x8xf32>
    %139 = arith.truncf %138 : vector<256x8xf32> to vector<256x8xbf16>
    %c0_100 = arith.constant 0 : index
    %c8_101 = arith.constant 8 : index
    %140 = vector.load %arg16[%c0_100, %c8_101] : memref<256x72xbf16, #tpu.memory_space<vmem>>, vector<256x8xbf16>
    tpu.vector_store %arg16[%c0_100, %c8_101], %139 {strides = array<i32>} : memref<256x72xbf16, #tpu.memory_space<vmem>>, vector<256x8xbf16>,
    %c9_102 = arith.constant 9 : index
    %c0_103 = arith.constant 0 : index
    %141 = vector.load %arg14[%c9_102, %c0_103] : memref<304x8xf32, #tpu.memory_space<vmem>>, vector<256x8xf32>
    %142 = vector.broadcast %24 : vector<256x1xf32> to vector<256x8xf32>
    %143 = arith.mulf %141, %142 : vector<256x8xf32>
    %144 = arith.truncf %143 : vector<256x8xf32> to vector<256x8xbf16>
    %c0_104 = arith.constant 0 : index
    %c16_105 = arith.constant 16 : index
    %145 = vector.load %arg16[%c0_104, %c16_105] : memref<256x72xbf16, #tpu.memory_space<vmem>>, vector<256x8xbf16>
    tpu.vector_store %arg16[%c0_104, %c16_105], %144 {strides = array<i32>} : memref<256x72xbf16, #tpu.memory_space<vmem>>, vector<256x8xbf16>,
    %c23_106 = arith.constant 23 : index
    %c0_107 = arith.constant 0 : index
    %146 = vector.load %arg14[%c23_106, %c0_107] : memref<304x8xf32, #tpu.memory_space<vmem>>, vector<256x8xf32>
    %147 = vector.broadcast %20 : vector<256x1xf32> to vector<256x8xf32>
    %148 = arith.mulf %146, %147 : vector<256x8xf32>
    %149 = arith.truncf %148 : vector<256x8xf32> to vector<256x8xbf16>
    %c0_108 = arith.constant 0 : index
    %c24_109 = arith.constant 24 : index
    %150 = vector.load %arg16[%c0_108, %c24_109] : memref<256x72xbf16, #tpu.memory_space<vmem>>, vector<256x8xbf16>
    tpu.vector_store %arg16[%c0_108, %c24_109], %149 {strides = array<i32>} : memref<256x72xbf16, #tpu.memory_space<vmem>>, vector<256x8xbf16>,
    %c24_110 = arith.constant 24 : index
    %c0_111 = arith.constant 0 : index
    %151 = vector.load %arg14[%c24_110, %c0_111] : memref<304x8xf32, #tpu.memory_space<vmem>>, vector<256x8xf32>
    %152 = arith.truncf %151 : vector<256x8xf32> to vector<256x8xbf16>
    %c0_112 = arith.constant 0 : index
    %c32_113 = arith.constant 32 : index
    %153 = vector.load %arg16[%c0_112, %c32_113] : memref<256x72xbf16, #tpu.memory_space<vmem>>, vector<256x8xbf16>
    tpu.vector_store %arg16[%c0_112, %c32_113], %152 {strides = array<i32>} : memref<256x72xbf16, #tpu.memory_space<vmem>>, vector<256x8xbf16>,
    %c25_114 = arith.constant 25 : index
    %c0_115 = arith.constant 0 : index
    %154 = vector.load %arg14[%c25_114, %c0_115] : memref<304x8xf32, #tpu.memory_space<vmem>>, vector<256x8xf32>
    %155 = vector.broadcast %24 : vector<256x1xf32> to vector<256x8xf32>
    %156 = arith.mulf %154, %155 : vector<256x8xf32>
    %157 = arith.truncf %156 : vector<256x8xf32> to vector<256x8xbf16>
    %c0_116 = arith.constant 0 : index
    %c40_117 = arith.constant 40 : index
    %158 = vector.load %arg16[%c0_116, %c40_117] : memref<256x72xbf16, #tpu.memory_space<vmem>>, vector<256x8xbf16>
    tpu.vector_store %arg16[%c0_116, %c40_117], %157 {strides = array<i32>} : memref<256x72xbf16, #tpu.memory_space<vmem>>, vector<256x8xbf16>,
    %c39_118 = arith.constant 39 : index
    %c0_119 = arith.constant 0 : index
    %159 = vector.load %arg14[%c39_118, %c0_119] : memref<304x8xf32, #tpu.memory_space<vmem>>, vector<256x8xf32>
    %160 = vector.broadcast %20 : vector<256x1xf32> to vector<256x8xf32>
    %161 = arith.mulf %159, %160 : vector<256x8xf32>
    %162 = arith.truncf %161 : vector<256x8xf32> to vector<256x8xbf16>
    %c0_120 = arith.constant 0 : index
    %c48_121 = arith.constant 48 : index
    %163 = vector.load %arg16[%c0_120, %c48_121] : memref<256x72xbf16, #tpu.memory_space<vmem>>, vector<256x8xbf16>
    tpu.vector_store %arg16[%c0_120, %c48_121], %162 {strides = array<i32>} : memref<256x72xbf16, #tpu.memory_space<vmem>>, vector<256x8xbf16>,
    %c40_122 = arith.constant 40 : index
    %c0_123 = arith.constant 0 : index
    %164 = vector.load %arg14[%c40_122, %c0_123] : memref<304x8xf32, #tpu.memory_space<vmem>>, vector<256x8xf32>
    %165 = arith.truncf %164 : vector<256x8xf32> to vector<256x8xbf16>
    %c0_124 = arith.constant 0 : index
    %c56_125 = arith.constant 56 : index
    %166 = vector.load %arg16[%c0_124, %c56_125] : memref<256x72xbf16, #tpu.memory_space<vmem>>, vector<256x8xbf16>
    tpu.vector_store %arg16[%c0_124, %c56_125], %165 {strides = array<i32>} : memref<256x72xbf16, #tpu.memory_space<vmem>>, vector<256x8xbf16>,
    %c41_126 = arith.constant 41 : index
    %c0_127 = arith.constant 0 : index
    %167 = vector.load %arg14[%c41_126, %c0_127] : memref<304x8xf32, #tpu.memory_space<vmem>>, vector<256x8xf32>
    %168 = vector.broadcast %24 : vector<256x1xf32> to vector<256x8xf32>
    %169 = arith.mulf %167, %168 : vector<256x8xf32>
    %170 = arith.truncf %169 : vector<256x8xf32> to vector<256x8xbf16>
    %c0_128 = arith.constant 0 : index
    %c64_129 = arith.constant 64 : index
    %171 = vector.load %arg16[%c0_128, %c64_129] : memref<256x72xbf16, #tpu.memory_space<vmem>>, vector<256x8xbf16>
    tpu.vector_store %arg16[%c0_128, %c64_129], %170 {strides = array<i32>} : memref<256x72xbf16, #tpu.memory_space<vmem>>, vector<256x8xbf16>,
    %c0_130 = arith.constant 0 : index
    %c0_131 = arith.constant 0 : index
    %172 = vector.load %arg16[%c0_130, %c0_131] : memref<256x72xbf16, #tpu.memory_space<vmem>>, vector<256x72xbf16>
    %c0_132 = arith.constant 0 : index
    %c0_133 = arith.constant 0 : index
    %173 = vector.load %arg6[%c0_132, %c0_133] : memref<72x8xbf16, #tpu.memory_space<vmem>>, vector<72x8xbf16>
    %cst_134 = arith.constant dense<0.000000e+00> : vector<256x8xf32>
    %174 = tpu.matmul %172, %173, %cst_134 {dimension_numbers = #tpu.dot_dimension_numbers<[1], [0], [0], [1], [0, 0, 1, 1], [], []>} : vector<256x72xbf16>, vector<72x8xbf16>, vector<256x8xf32> -> vector<256x8xf32>
    %c0_135 = arith.constant 0 : index
    %c0_136 = arith.constant 0 : index
    %175 = vector.load %arg7[%c0_135, %c0_136] : memref<1x8xf32, #tpu.memory_space<vmem>>, vector<1x8xf32>
    %176 = vector.broadcast %175 : vector<1x8xf32> to vector<256x8xf32>
    %177 = arith.addf %174, %176 : vector<256x8xf32>
    %c0_137 = arith.constant 0 : index
    %c0_138 = arith.constant 0 : index
    %178 = vector.load %arg17[%c0_137, %c0_138] : memref<256x8xf32, #tpu.memory_space<vmem>>, vector<256x8xf32>
    %179 = arith.addf %177, %178 : vector<256x8xf32>
    %cst_139 = arith.constant 0.000000e+00 : f32
    %180 = vector.broadcast %cst_139 : f32 to vector<256x8xf32>
    %181 = arith.maximumf %179, %180 : vector<256x8xf32>
    %cst_140 = arith.constant dense<0.000000e+00> : vector<8xf32>
    %182 = vector.multi_reduction <add>, %181, %cst_140 [0] : vector<256x8xf32> to vector<8xf32>
    %183 = vector.shape_cast %182 : vector<8xf32> to vector<1x8xf32>
    %cst_141 = arith.constant 3.906250e-03 : f32
    %184 = vector.broadcast %cst_141 : f32 to vector<1x8xf32>
    %185 = arith.mulf %183, %184 : vector<1x8xf32>
    %186 = arith.truncf %185 : vector<1x8xf32> to vector<1x8xbf16>
    %c0_142 = arith.constant 0 : index
    %c0_143 = arith.constant 0 : index
    %187 = vector.load %arg8[%c0_142, %c0_143] : memref<8x128xbf16, #tpu.memory_space<vmem>>, vector<8x128xbf16>
    %cst_144 = arith.constant dense<0.000000e+00> : vector<1x128xf32>
    %188 = tpu.matmul %186, %187, %cst_144 {dimension_numbers = #tpu.dot_dimension_numbers<[1], [0], [0], [1], [0, 0, 1, 1], [], []>} : vector<1x8xbf16>, vector<8x128xbf16>, vector<1x128xf32> -> vector<1x128xf32>
    %c0_145 = arith.constant 0 : index
    %c0_146 = arith.constant 0 : index
    %189 = vector.load %arg9[%c0_145, %c0_146] : memref<1x128xf32, #tpu.memory_space<vmem>>, vector<1x128xf32>
    %190 = arith.addf %188, %189 : vector<1x128xf32>
    %cst_147 = arith.constant 0.000000e+00 : f32
    %191 = vector.broadcast %cst_147 : f32 to vector<1x128xf32>
    %192 = arith.maximumf %190, %191 : vector<1x128xf32>
    %193 = arith.truncf %192 : vector<1x128xf32> to vector<1x128xbf16>
    %c0_148 = arith.constant 0 : index
    %c0_149 = arith.constant 0 : index
    %194 = vector.load %arg10[%c0_148, %c0_149] : memref<128x3xbf16, #tpu.memory_space<vmem>>, vector<128x3xbf16>
    %cst_150 = arith.constant dense<0.000000e+00> : vector<1x3xf32>
    %195 = tpu.matmul %193, %194, %cst_150 {dimension_numbers = #tpu.dot_dimension_numbers<[1], [0], [0], [1], [0, 0, 1, 1], [], []>} : vector<1x128xbf16>, vector<128x3xbf16>, vector<1x3xf32> -> vector<1x3xf32>
    %c0_151 = arith.constant 0 : index
    %c0_152 = arith.constant 0 : index
    %196 = vector.load %arg11[%c0_151, %c0_152] : memref<1x3xf32, #tpu.memory_space<vmem>>, vector<1x3xf32>
    %197 = arith.addf %195, %196 : vector<1x3xf32>
    %198 = vector.shape_cast %197 : vector<1x3xf32> to vector<1x1x3xf32>
    %c0_153 = arith.constant 0 : index
    %c0_154 = arith.constant 0 : index
    %c0_155 = arith.constant 0 : index
    %199 = vector.load %arg12[%c0_153, %c0_154, %c0_155] : memref<1x1x3xf32, #tpu.memory_space<vmem>>, vector<1x1x3xf32>
    tpu.vector_store %arg12[%c0_153, %c0_154, %c0_155], %198 {strides = array<i32>} : memref<1x1x3xf32, #tpu.memory_space<vmem>>, vector<1x1x3xf32>,
    return
  }
  func.func @transform_0(%arg0: i32) -> (i32, i32, i32) {
    %c0_i32 = arith.constant 0 : i32
    %c0_i32_0 = arith.constant 0 : i32
    %c0_i32_1 = arith.constant 0 : i32
    return %arg0, %c0_i32, %c0_i32_0 : i32, i32, i32
  }
  func.func @transform_1(%arg0: i32) -> (i32, i32) {
    %c0_i32 = arith.constant 0 : i32
    %c0_i32_0 = arith.constant 0 : i32
    %c0_i32_1 = arith.constant 0 : i32
    return %c0_i32, %c0_i32_0 : i32, i32
  }
  func.func @transform_2(%arg0: i32) -> (i32, i32) {
    %c0_i32 = arith.constant 0 : i32
    %c0_i32_0 = arith.constant 0 : i32
    %c0_i32_1 = arith.constant 0 : i32
    return %c0_i32, %c0_i32_0 : i32, i32
  }
  func.func @transform_3(%arg0: i32) -> (i32, i32) {
    %c0_i32 = arith.constant 0 : i32
    %c0_i32_0 = arith.constant 0 : i32
    %c0_i32_1 = arith.constant 0 : i32
    return %c0_i32, %c0_i32_0 : i32, i32
  }
  func.func @transform_4(%arg0: i32) -> (i32, i32) {
    %c0_i32 = arith.constant 0 : i32
    %c0_i32_0 = arith.constant 0 : i32
    %c0_i32_1 = arith.constant 0 : i32
    return %c0_i32, %c0_i32_0 : i32, i32
  }
  func.func @transform_5(%arg0: i32) -> (i32, i32) {
    %c0_i32 = arith.constant 0 : i32
    %c0_i32_0 = arith.constant 0 : i32
    %c0_i32_1 = arith.constant 0 : i32
    return %c0_i32, %c0_i32_0 : i32, i32
  }
  func.func @transform_6(%arg0: i32) -> (i32, i32) {
    %c0_i32 = arith.constant 0 : i32
    %c0_i32_0 = arith.constant 0 : i32
    %c0_i32_1 = arith.constant 0 : i32
    return %c0_i32, %c0_i32_0 : i32, i32
  }
  func.func @transform_7(%arg0: i32) -> (i32, i32) {
    %c0_i32 = arith.constant 0 : i32
    %c0_i32_0 = arith.constant 0 : i32
    %c0_i32_1 = arith.constant 0 : i32
    return %c0_i32, %c0_i32_0 : i32, i32
  }
  func.func @transform_8(%arg0: i32) -> (i32, i32) {
    %c0_i32 = arith.constant 0 : i32
    %c0_i32_0 = arith.constant 0 : i32
    %c0_i32_1 = arith.constant 0 : i32
    return %c0_i32, %c0_i32_0 : i32, i32
  }
  func.func @transform_9(%arg0: i32) -> (i32, i32) {
    %c0_i32 = arith.constant 0 : i32
    %c0_i32_0 = arith.constant 0 : i32
    %c0_i32_1 = arith.constant 0 : i32
    return %c0_i32, %c0_i32_0 : i32, i32
  }
  func.func @transform_10(%arg0: i32) -> (i32, i32) {
    %c0_i32 = arith.constant 0 : i32
    %c0_i32_0 = arith.constant 0 : i32
    %c0_i32_1 = arith.constant 0 : i32
    return %c0_i32, %c0_i32_0 : i32, i32
  }
  func.func @transform_11(%arg0: i32) -> (i32, i32, i32) {
    %c0_i32 = arith.constant 0 : i32
    %c0_i32_0 = arith.constant 0 : i32
    %c0_i32_1 = arith.constant 0 : i32
    return %arg0, %c0_i32, %c0_i32_0 : i32, i32, i32
  }
}

</mosaic_0001>

<llo_original>
// kernel: res_encoder_finetune_forward.1
$region0: #{res_encoder_finetune_forward.1}
  #allocation0 [shape = 'u32[]', space=smem, size = 0x4, offset = 0x4, fixed_abs, tag = 'smem constant byte address 0x4 - core index']
  #allocation1 [shape = 'u32[144,128]{1,0:T(1,128)}', space=vmem, size = 0x12000, scoped, tag = 'internal scratch']
  #allocation2 [shape = 'f32[304,4]{1,0:T(8,128)}', space=vmem, size = 0x26000, scoped, tag = 'scratch operand']
  #allocation3 [shape = 'f32[304,8]{1,0:T(8,128)}', space=vmem, size = 0x26000, scoped, tag = 'scratch operand']
  #allocation4 [shape = 'bf16[256,36]{1,0:T(16,128)(2,1)}', space=vmem, size = 0x10000, scoped, tag = 'scratch operand']
  #allocation5 [shape = 'bf16[256,72]{1,0:T(16,128)(2,1)}', space=vmem, size = 0x10000, scoped, tag = 'scratch operand']
  #allocation6 [shape = 'f32[256,8]{1,0:T(8,128)}', space=vmem, size = 0x20000, scoped, tag = 'scratch operand']
  %s0 = inlined_call_operand.vmem [shape: f32[2,256,4], index: 0, kind: input, shape index: {}]
  %s1 = inlined_call_operand.vmem [shape: bf16[36,8], index: 1, kind: input, shape index: {}]
  %s2 = inlined_call_operand.vmem [shape: f32[1,8], index: 2, kind: input, shape index: {}]
  %s3 = inlined_call_operand.vmem [shape: bf16[72,8], index: 3, kind: input, shape index: {}]
  %s4 = inlined_call_operand.vmem [shape: f32[1,8], index: 4, kind: input, shape index: {}]
  %s5 = inlined_call_operand.vmem [shape: bf16[72,8], index: 5, kind: input, shape index: {}]
  %s6 = inlined_call_operand.vmem [shape: f32[1,8], index: 6, kind: input, shape index: {}]
  %s7 = inlined_call_operand.vmem [shape: bf16[8,128], index: 7, kind: input, shape index: {}]
  %s8 = inlined_call_operand.vmem [shape: f32[1,128], index: 8, kind: input, shape index: {}]
  %s9 = inlined_call_operand.vmem [shape: bf16[128,3], index: 9, kind: input, shape index: {}]
  %s10 = inlined_call_operand.vmem [shape: f32[1,3], index: 10, kind: input, shape index: {}]
  %s11 = inlined_call_operand.hbm [shape: f32[2,1,3], index: 11, kind: output, shape index: {}]
  %s12 = sld [smem:[#allocation0]]
  $region77: #{res_encoder_finetune_forward.1} parent=0
    _
  %s14 = ssub.s32 1, %s12
  %s15 = scalar_select 0, %s14, %s12
  $region1: #{res_encoder_finetune_forward.1} parent=0
    #allocation7 [shape = 'u8[1024]{0}', space=vmem, size = 0x400, scoped, tag = 'output window, operand 0']
    #allocation8 [shape = 's32[2]{0}', space=sflag, size = 0x8, scoped, tag = 'scoped memory for res_encoder_finetune_forward.1']
    %16 = vsyncpa [#allocation8], 0
    %s17 = scalar_lea.sflag [#allocation8], 1
    %18 = vsyncpa %s17, 0
    loop: start=0, step=1, limit=4
    $region2: #{res_encoder_finetune_forward.1} parent=1 // loop_pre_header
      _
    $region3: #{res_encoder_finetune_forward.1} parent=1 // loop_header
      %s20 = sphi 0, %s24
      %p21 = scmp.ge.s32.totalorder %s20, 4
      %s30 = sphi 0, %s32
      %s33 = sphi 0, %s30
      %s34 = sphi 0, %s33
      %s50 = sphi 0, %s34
      %s54 = sphi 0, %s54
      %s56 = sphi 0, %s54
      %s57 = sphi 0, %s56
      %s71 = sphi 0, %s57
      %s75 = sphi 0, %s75
      %s77 = sphi 0, %s75
      %s78 = sphi 0, %s77
      %s92 = sphi 0, %s78
      %s96 = sphi 0, %s96
      %s98 = sphi 0, %s96
      %s99 = sphi 0, %s98
      %s113 = sphi 0, %s99
      %s117 = sphi 0, %s117
      %s119 = sphi 0, %s117
      %s120 = sphi 0, %s119
      %s134 = sphi 0, %s120
      %s138 = sphi 0, %s138
      %s140 = sphi 0, %s138
      %s141 = sphi 0, %s140
      %s155 = sphi 0, %s141
      %s159 = sphi 0, %s159
      %s161 = sphi 0, %s159
      %s162 = sphi 0, %s161
      %s176 = sphi 0, %s162
      %s180 = sphi 0, %s180
      %s182 = sphi 0, %s180
      %s183 = sphi 0, %s182
      %s197 = sphi 0, %s183
      %s201 = sphi 0, %s201
      %s203 = sphi 0, %s201
      %s204 = sphi 0, %s203
      %s218 = sphi 0, %s204
      %s222 = sphi 0, %s222
      %s224 = sphi 0, %s222
      %s225 = sphi 0, %s224
      %s239 = sphi 0, %s225
      %s243 = sphi 0, %s243
      %s245 = sphi 0, %s243
      %s246 = sphi 0, %s245
      %s260 = sphi 0, %s246
      %s266 = sphi 0, %s268
      %s269 = sphi 0, %s266
      %s270 = sphi 0, %s269
      %s286 = sphi 0, %s270
    $region4: #{res_encoder_finetune_forward.1} parent=1 // loop_header_branch
      %23 = sbr.rel (%p21) target = $region8
    $region5: #{res_encoder_finetune_forward.1} parent=1 // loop_body
      %s25 = ssub.s32 %s20, 1
      %s26 = ssub.s32 %s20, 2
      %s27 = sadd.s32 %s20, 1
      %s28 = ssub.s32 %s20, %s27
      %p29 = scmp.eq.s32.totalorder %s28, 0
      %s31 = sadd.s32 %s30, 1
      %s32 = scalar_select %p29, %s30, %s31
      %p35 = pneg %p29
      %p36 = scmp.eq.s32.totalorder %s20, 1
      %p37 = por %p35, %p36
      %p38 = scmp.ne.s32.totalorder %s30, %s33
      %p39 = scmp.eq.s32.totalorder %s20, 0
      %p40 = por %p38, %p39
      %p41 = scmp.ne.s32.totalorder %s30, %s33
      %p42 = scmp.eq.s32.totalorder %s25, 1
      %p43 = por %p41, %p42
      %p44 = scmp.ne.s32.totalorder %s33, %s34
      %p45 = scmp.eq.s32.totalorder %s25, 0
      %p46 = por %p44, %p45
      %p47 = scmp.ne.s32.totalorder %s33, %s34
      %p48 = scmp.eq.s32.totalorder %s26, 1
      %p49 = por %p47, %p48
      %p51 = scmp.ne.s32.totalorder %s34, %s50
      %p52 = scmp.eq.s32.totalorder %s26, 0
      %p53 = por %p51, %p52
      %s55 = sadd.s32 %s54, 1
      %p58 = scmp.eq.s32.totalorder %s20, 1
      %p59 = scmp.ne.s32.totalorder %s54, %s56
      %p60 = scmp.eq.s32.totalorder %s20, 0
      %p61 = por %p59, %p60
      %p62 = scmp.ne.s32.totalorder %s54, %s56
      %p63 = scmp.eq.s32.totalorder %s25, 1
      %p64 = por %p62, %p63
      %p65 = scmp.ne.s32.totalorder %s56, %s57
      %p66 = scmp.eq.s32.totalorder %s25, 0
      %p67 = por %p65, %p66
      %p68 = scmp.ne.s32.totalorder %s56, %s57
      %p69 = scmp.eq.s32.totalorder %s26, 1
      %p70 = por %p68, %p69
      %p72 = scmp.ne.s32.totalorder %s57, %s71
      %p73 = scmp.eq.s32.totalorder %s26, 0
      %p74 = por %p72, %p73
      %s76 = sadd.s32 %s75, 1
      %p79 = scmp.eq.s32.totalorder %s20, 1
      %p80 = scmp.ne.s32.totalorder %s75, %s77
      %p81 = scmp.eq.s32.totalorder %s20, 0
      %p82 = por %p80, %p81
      %p83 = scmp.ne.s32.totalorder %s75, %s77
      %p84 = scmp.eq.s32.totalorder %s25, 1
      %p85 = por %p83, %p84
      %p86 = scmp.ne.s32.totalorder %s77, %s78
      %p87 = scmp.eq.s32.totalorder %s25, 0
      %p88 = por %p86, %p87
      %p89 = scmp.ne.s32.totalorder %s77, %s78
      %p90 = scmp.eq.s32.totalorder %s26, 1
      %p91 = por %p89, %p90
      %p93 = scmp.ne.s32.totalorder %s78, %s92
      %p94 = scmp.eq.s32.totalorder %s26, 0
      %p95 = por %p93, %p94
      %s97 = sadd.s32 %s96, 1
      %p100 = scmp.eq.s32.totalorder %s20, 1
      %p101 = scmp.ne.s32.totalorder %s96, %s98
      %p102 = scmp.eq.s32.totalorder %s20, 0
      %p103 = por %p101, %p102
      %p104 = scmp.ne.s32.totalorder %s96, %s98
      %p105 = scmp.eq.s32.totalorder %s25, 1
      %p106 = por %p104, %p105
      %p107 = scmp.ne.s32.totalorder %s98, %s99
      %p108 = scmp.eq.s32.totalorder %s25, 0
      %p109 = por %p107, %p108
      %p110 = scmp.ne.s32.totalorder %s98, %s99
      %p111 = scmp.eq.s32.totalorder %s26, 1
      %p112 = por %p110, %p111
      %p114 = scmp.ne.s32.totalorder %s99, %s113
      %p115 = scmp.eq.s32.totalorder %s26, 0
      %p116 = por %p114, %p115
      %s118 = sadd.s32 %s117, 1
      %p121 = scmp.eq.s32.totalorder %s20, 1
      %p122 = scmp.ne.s32.totalorder %s117, %s119
      %p123 = scmp.eq.s32.totalorder %s20, 0
      %p124 = por %p122, %p123
      %p125 = scmp.ne.s32.totalorder %s117, %s119
      %p126 = scmp.eq.s32.totalorder %s25, 1
      %p127 = por %p125, %p126
      %p128 = scmp.ne.s32.totalorder %s119, %s120
      %p129 = scmp.eq.s32.totalorder %s25, 0
      %p130 = por %p128, %p129
      %p131 = scmp.ne.s32.totalorder %s119, %s120
      %p132 = scmp.eq.s32.totalorder %s26, 1
      %p133 = por %p131, %p132
      %p135 = scmp.ne.s32.totalorder %s120, %s134
      %p136 = scmp.eq.s32.totalorder %s26, 0
      %p137 = por %p135, %p136
      %s139 = sadd.s32 %s138, 1
      %p142 = scmp.eq.s32.totalorder %s20, 1
      %p143 = scmp.ne.s32.totalorder %s138, %s140
      %p144 = scmp.eq.s32.totalorder %s20, 0
      %p145 = por %p143, %p144
      %p146 = scmp.ne.s32.totalorder %s138, %s140
      %p147 = scmp.eq.s32.totalorder %s25, 1
      %p148 = por %p146, %p147
      %p149 = scmp.ne.s32.totalorder %s140, %s141
      %p150 = scmp.eq.s32.totalorder %s25, 0
      %p151 = por %p149, %p150
      %p152 = scmp.ne.s32.totalorder %s140, %s141
      %p153 = scmp.eq.s32.totalorder %s26, 1
      %p154 = por %p152, %p153
      %p156 = scmp.ne.s32.totalorder %s141, %s155
      %p157 = scmp.eq.s32.totalorder %s26, 0
      %p158 = por %p156, %p157
      %s160 = sadd.s32 %s159, 1
      %p163 = scmp.eq.s32.totalorder %s20, 1
      %p164 = scmp.ne.s32.totalorder %s159, %s161
      %p165 = scmp.eq.s32.totalorder %s20, 0
      %p166 = por %p164, %p165
      %p167 = scmp.ne.s32.totalorder %s159, %s161
      %p168 = scmp.eq.s32.totalorder %s25, 1
      %p169 = por %p167, %p168
      %p170 = scmp.ne.s32.totalorder %s161, %s162
      %p171 = scmp.eq.s32.totalorder %s25, 0
      %p172 = por %p170, %p171
      %p173 = scmp.ne.s32.totalorder %s161, %s162
      %p174 = scmp.eq.s32.totalorder %s26, 1
      %p175 = por %p173, %p174
      %p177 = scmp.ne.s32.totalorder %s162, %s176
      %p178 = scmp.eq.s32.totalorder %s26, 0
      %p179 = por %p177, %p178
      %s181 = sadd.s32 %s180, 1
      %p184 = scmp.eq.s32.totalorder %s20, 1
      %p185 = scmp.ne.s32.totalorder %s180, %s182
      %p186 = scmp.eq.s32.totalorder %s20, 0
      %p187 = por %p185, %p186
      %p188 = scmp.ne.s32.totalorder %s180, %s182
      %p189 = scmp.eq.s32.totalorder %s25, 1
      %p190 = por %p188, %p189
      %p191 = scmp.ne.s32.totalorder %s182, %s183
      %p192 = scmp.eq.s32.totalorder %s25, 0
      %p193 = por %p191, %p192
      %p194 = scmp.ne.s32.totalorder %s182, %s183
      %p195 = scmp.eq.s32.totalorder %s26, 1
      %p196 = por %p194, %p195
      %p198 = scmp.ne.s32.totalorder %s183, %s197
      %p199 = scmp.eq.s32.totalorder %s26, 0
      %p200 = por %p198, %p199
      %s202 = sadd.s32 %s201, 1
      %p205 = scmp.eq.s32.totalorder %s20, 1
      %p206 = scmp.ne.s32.totalorder %s201, %s203
      %p207 = scmp.eq.s32.totalorder %s20, 0
      %p208 = por %p206, %p207
      %p209 = scmp.ne.s32.totalorder %s201, %s203
      %p210 = scmp.eq.s32.totalorder %s25, 1
      %p211 = por %p209, %p210
      %p212 = scmp.ne.s32.totalorder %s203, %s204
      %p213 = scmp.eq.s32.totalorder %s25, 0
      %p214 = por %p212, %p213
      %p215 = scmp.ne.s32.totalorder %s203, %s204
      %p216 = scmp.eq.s32.totalorder %s26, 1
      %p217 = por %p215, %p216
      %p219 = scmp.ne.s32.totalorder %s204, %s218
      %p220 = scmp.eq.s32.totalorder %s26, 0
      %p221 = por %p219, %p220
      %s223 = sadd.s32 %s222, 1
      %p226 = scmp.eq.s32.totalorder %s20, 1
      %p227 = scmp.ne.s32.totalorder %s222, %s224
      %p228 = scmp.eq.s32.totalorder %s20, 0
      %p229 = por %p227, %p228
      %p230 = scmp.ne.s32.totalorder %s222, %s224
      %p231 = scmp.eq.s32.totalorder %s25, 1
      %p232 = por %p230, %p231
      %p233 = scmp.ne.s32.totalorder %s224, %s225
      %p234 = scmp.eq.s32.totalorder %s25, 0
      %p235 = por %p233, %p234
      %p236 = scmp.ne.s32.totalorder %s224, %s225
      %p237 = scmp.eq.s32.totalorder %s26, 1
      %p238 = por %p236, %p237
      %p240 = scmp.ne.s32.totalorder %s225, %s239
      %p241 = scmp.eq.s32.totalorder %s26, 0
      %p242 = por %p240, %p241
      %s244 = sadd.s32 %s243, 1
      %p247 = scmp.eq.s32.totalorder %s20, 1
      %p248 = scmp.ne.s32.totalorder %s243, %s245
      %p249 = scmp.eq.s32.totalorder %s20, 0
      %p250 = por %p248, %p249
      %p251 = scmp.ne.s32.totalorder %s243, %s245
      %p252 = scmp.eq.s32.totalorder %s25, 1
      %p253 = por %p251, %p252
      %p254 = scmp.ne.s32.totalorder %s245, %s246
      %p255 = scmp.eq.s32.totalorder %s25, 0
      %p256 = por %p254, %p255
      %p257 = scmp.ne.s32.totalorder %s245, %s246
      %p258 = scmp.eq.s32.totalorder %s26, 1
      %p259 = por %p257, %p258
      %p261 = scmp.ne.s32.totalorder %s246, %s260
      %p262 = scmp.eq.s32.totalorder %s26, 0
      %p263 = por %p261, %p262
      %s264 = ssub.s32 %s20, %s27
      %p265 = scmp.eq.s32.totalorder %s264, 0
      %s267 = sadd.s32 %s266, 1
      %s268 = scalar_select %p265, %s266, %s267
      %p271 = pneg %p265
      %p272 = scmp.eq.s32.totalorder %s20, 1
      %p273 = por %p271, %p272
      %p274 = scmp.ne.s32.totalorder %s266, %s269
      %p275 = scmp.eq.s32.totalorder %s20, 0
      %p276 = por %p274, %p275
      %p277 = scmp.ne.s32.totalorder %s266, %s269
      %p278 = scmp.eq.s32.totalorder %s25, 1
      %p279 = por %p277, %p278
      %p280 = scmp.ne.s32.totalorder %s269, %s270
      %p281 = scmp.eq.s32.totalorder %s25, 0
      %p282 = por %p280, %p281
      %p283 = scmp.ne.s32.totalorder %s269, %s270
      %p284 = scmp.eq.s32.totalorder %s26, 1
      %p285 = por %p283, %p284
      %p287 = scmp.ne.s32.totalorder %s270, %s286
      %p288 = scmp.eq.s32.totalorder %s26, 0
      %p289 = por %p287, %p288
      %p290 = scmp.le.s32.totalorder 1, %s20
      %p291 = scmp.lt.s32.totalorder %s20, 3
      %p292 = pnand %p290, %p291
      %p293 = pneg %p292
      // Predicated region
      $region9: #{res_encoder_finetune_forward.1} parent=5 // pred_check
        _
      $region10: #{res_encoder_finetune_forward.1} parent=5 // pred_check_branch
        %295 = sbr.rel (%p292) target = $region12
      $region11: #{res_encoder_finetune_forward.1} parent=5 // pred_region
        %s296 = ssub.s32 %s20, 1
        // Predicated region
        $region13: #{res_encoder_finetune_forward.1} parent=11 // pred_check
          %p297 = pneg %p67
        $region14: #{res_encoder_finetune_forward.1} parent=11 // pred_check_branch
          %299 = sbr.rel (%p297) target = $region16
        $region15: #{res_encoder_finetune_forward.1} parent=11 // pred_region
          _
        $region16: #{res_encoder_finetune_forward.1} parent=11 // pred_fallthru
          _
        // Predicated region
        $region17: #{res_encoder_finetune_forward.1} parent=11 // pred_check
          %p300 = pneg %p88
        $region18: #{res_encoder_finetune_forward.1} parent=11 // pred_check_branch
          %302 = sbr.rel (%p300) target = $region20
        $region19: #{res_encoder_finetune_forward.1} parent=11 // pred_region
          _
        $region20: #{res_encoder_finetune_forward.1} parent=11 // pred_fallthru
          _
        // Predicated region
        $region21: #{res_encoder_finetune_forward.1} parent=11 // pred_check
          %p303 = pneg %p109
        $region22: #{res_encoder_finetune_forward.1} parent=11 // pred_check_branch
          %305 = sbr.rel (%p303) target = $region24
        $region23: #{res_encoder_finetune_forward.1} parent=11 // pred_region
          _
        $region24: #{res_encoder_finetune_forward.1} parent=11 // pred_fallthru
          _
        // Predicated region
        $region25: #{res_encoder_finetune_forward.1} parent=11 // pred_check
          %p306 = pneg %p130
        $region26: #{res_encoder_finetune_forward.1} parent=11 // pred_check_branch
          %308 = sbr.rel (%p306) target = $region28
        $region27: #{res_encoder_finetune_forward.1} parent=11 // pred_region
          _
        $region28: #{res_encoder_finetune_forward.1} parent=11 // pred_fallthru
          _
        // Predicated region
        $region29: #{res_encoder_finetune_forward.1} parent=11 // pred_check
          %p309 = pneg %p151
        $region30: #{res_encoder_finetune_forward.1} parent=11 // pred_check_branch
          %311 = sbr.rel (%p309) target = $region32
        $region31: #{res_encoder_finetune_forward.1} parent=11 // pred_region
          _
        $region32: #{res_encoder_finetune_forward.1} parent=11 // pred_fallthru
          _
        // Predicated region
        $region33: #{res_encoder_finetune_forward.1} parent=11 // pred_check
          %p312 = pneg %p172
        $region34: #{res_encoder_finetune_forward.1} parent=11 // pred_check_branch
          %314 = sbr.rel (%p312) target = $region36
        $region35: #{res_encoder_finetune_forward.1} parent=11 // pred_region
          _
        $region36: #{res_encoder_finetune_forward.1} parent=11 // pred_fallthru
          _
        // Predicated region
        $region37: #{res_encoder_finetune_forward.1} parent=11 // pred_check
          %p315 = pneg %p193
        $region38: #{res_encoder_finetune_forward.1} parent=11 // pred_check_branch
          %317 = sbr.rel (%p315) target = $region40
        $region39: #{res_encoder_finetune_forward.1} parent=11 // pred_region
          _
        $region40: #{res_encoder_finetune_forward.1} parent=11 // pred_fallthru
          _
        // Predicated region
        $region41: #{res_encoder_finetune_forward.1} parent=11 // pred_check
          %p318 = pneg %p214
        $region42: #{res_encoder_finetune_forward.1} parent=11 // pred_check_branch
          %320 = sbr.rel (%p318) target = $region44
        $region43: #{res_encoder_finetune_forward.1} parent=11 // pred_region
          _
        $region44: #{res_encoder_finetune_forward.1} parent=11 // pred_fallthru
          _
        // Predicated region
        $region45: #{res_encoder_finetune_forward.1} parent=11 // pred_check
          %p321 = pneg %p235
        $region46: #{res_encoder_finetune_forward.1} parent=11 // pred_check_branch
          %323 = sbr.rel (%p321) target = $region48
        $region47: #{res_encoder_finetune_forward.1} parent=11 // pred_region
          _
        $region48: #{res_encoder_finetune_forward.1} parent=11 // pred_fallthru
          _
        // Predicated region
        $region49: #{res_encoder_finetune_forward.1} parent=11 // pred_check
          %p324 = pneg %p256
        $region50: #{res_encoder_finetune_forward.1} parent=11 // pred_check_branch
          %326 = sbr.rel (%p324) target = $region52
        $region51: #{res_encoder_finetune_forward.1} parent=11 // pred_region
          _
        $region52: #{res_encoder_finetune_forward.1} parent=11 // pred_fallthru
          _
      $region12: #{res_encoder_finetune_forward.1} parent=5 // pred_fallthru
        _
      %p327 = scmp.lt.s32.totalorder %s20, 2
      // Predicated region
      $region53: #{res_encoder_finetune_forward.1} parent=5 // pred_check
        %p328 = pneg %p327
      $region54: #{res_encoder_finetune_forward.1} parent=5 // pred_check_branch
        %330 = sbr.rel (%p328) target = $region56
      $region55: #{res_encoder_finetune_forward.1} parent=5 // pred_region
        // Predicated region
        $region57: #{res_encoder_finetune_forward.1} parent=55 // pred_check
          %p331 = pneg %p40
        $region58: #{res_encoder_finetune_forward.1} parent=55 // pred_check_branch
          %333 = sbr.rel (%p331) target = $region60
        $region59: #{res_encoder_finetune_forward.1} parent=55 // pred_region
          %p334 = scmp.lt.s32.totalorder %s20, 1
          %s335 = scalar_select %p334, %s20, 1
          %s336 = smul.addr %s335, 32
          %s337 = smul.addr %s336, 8
          %s338 = scalar_lea.vmem %s0, %s337
        $region60: #{res_encoder_finetune_forward.1} parent=55 // pred_fallthru
          _
      $region56: #{res_encoder_finetune_forward.1} parent=5 // pred_fallthru
        _
      %p339 = scmp.le.s32.totalorder 1, %s20
      %p340 = scmp.lt.s32.totalorder %s20, 3
      %p341 = pnand %p339, %p340
      %p342 = pneg %p341
      // Predicated region
      $region61: #{res_encoder_finetune_forward.1} parent=5 // pred_check
        _
      $region62: #{res_encoder_finetune_forward.1} parent=5 // pred_check_branch
        %344 = sbr.rel (%p341) target = $region64
      $region63: #{res_encoder_finetune_forward.1} parent=5 // pred_region
        %s345 = ssub.s32 %s20, 1
        %p346 = scmp.lt.s32.totalorder %s25, 1
        %s347 = scalar_select %p346, %s25, 1
        %s348 = smul.addr %s347, 32
        %s349 = smul.addr %s348, 8
        %s350 = scalar_lea.vmem %s0, %s349
        %p351 = pneg %p46
        %p352 = pneg %p43
        %p353 = pneg %p67
        %p354 = pneg %p64
        %p355 = pneg %p88
        %p356 = pneg %p85
        %p357 = pneg %p109
        %p358 = pneg %p106
        %p359 = pneg %p130
        %p360 = pneg %p127
        %p361 = pneg %p151
        %p362 = pneg %p148
        %p363 = pneg %p172
        %p364 = pneg %p169
        %p365 = pneg %p193
        %p366 = pneg %p190
        %p367 = pneg %p214
        %p368 = pneg %p211
        %p369 = pneg %p235
        %p370 = pneg %p232
        %p371 = pneg %p256
        %p372 = pneg %p253
        %p373 = pneg %p282
        %p374 = pneg %p279
        %s375 = sand.u32 %s269, 1
        %s376 = scalar_lea.sflag [#allocation8], %s375
        %s377 = sand.u32 %s269, 1
        %s378 = scalar_lea.vmem [#allocation7], %s377
        %p379 = scmp.lt.s32.totalorder %s25, 1
        %s380 = scalar_select %p379, %s25, 1
        %s381 = smul.addr %s380, 32
        %s382 = smul.addr %s381, 8
        %s383 = scalar_lea.vmem %s0, %s382
        %v385 = vlaneseq
        %v386 = vshrl.u32 %v385, 7
        %v387 = vadd.s32 %v386, 8
        %v388 = vadd.s32 %v386, 16
        %v389 = vadd.s32 %v386, 24
        %v390 = vadd.s32 %v386, 32
        %v391 = vadd.s32 %v386, 40
        %v392 = vadd.s32 %v386, 48
        %v393 = vadd.s32 %v386, 56
        %v394 = vadd.s32 %v386, 64
        %v395 = vadd.s32 %v386, 72
        %v396 = vadd.s32 %v386, 80
        %v397 = vadd.s32 %v386, 88
        %v398 = vadd.s32 %v386, 96
        %v399 = vadd.s32 %v386, 104
        %v400 = vadd.s32 %v386, 112
        %v401 = vadd.s32 %v386, 120
        %v402 = vadd.s32 %v386, 128
        %v403 = vadd.s32 %v386, 136
        %v404 = vadd.s32 %v386, 144
        %v405 = vadd.s32 %v386, 152
        %v406 = vadd.s32 %v386, 160
        %v407 = vadd.s32 %v386, 168
        %v408 = vadd.s32 %v386, 176
        %v409 = vadd.s32 %v386, 184
        %v410 = vadd.s32 %v386, 192
        %v411 = vadd.s32 %v386, 200
        %v412 = vadd.s32 %v386, 208
        %v413 = vadd.s32 %v386, 216
        %v414 = vadd.s32 %v386, 224
        %v415 = vadd.s32 %v386, 232
        %v416 = vadd.s32 %v386, 240
        %v417 = vadd.s32 %v386, 248
        %vm418 = vcmp.lt.s32.totalorder %v386, 0
        %v419 = vsub.s32 0, %v386
        %v420 = vsel %vm418, %v419, %v386
        %v421 = vshrl.u32 %v420, 4
        %v422 = vand.u32 %v420, 15
        %v423 = vsub.s32 0, %v422
        %v424 = vsel %vm418, %v423, %v422
        %vm425 = vcmp.lt.s32.totalorder %v387, 0
        %v426 = vsub.s32 0, %v387
        %v427 = vsel %vm425, %v426, %v387
        %v428 = vshrl.u32 %v427, 4
        %v429 = vand.u32 %v427, 15
        %v430 = vsub.s32 0, %v429
        %v431 = vsel %vm425, %v430, %v429
        %vm432 = vcmp.lt.s32.totalorder %v388, 0
        %v433 = vsub.s32 0, %v388
        %v434 = vsel %vm432, %v433, %v388
        %v435 = vshrl.u32 %v434, 4
        %v436 = vand.u32 %v434, 15
        %v437 = vsub.s32 0, %v436
        %v438 = vsel %vm432, %v437, %v436
        %vm439 = vcmp.lt.s32.totalorder %v389, 0
        %v440 = vsub.s32 0, %v389
        %v441 = vsel %vm439, %v440, %v389
        %v442 = vshrl.u32 %v441, 4
        %v443 = vand.u32 %v441, 15
        %v444 = vsub.s32 0, %v443
        %v445 = vsel %vm439, %v444, %v443
        %vm446 = vcmp.lt.s32.totalorder %v390, 0
        %v447 = vsub.s32 0, %v390
        %v448 = vsel %vm446, %v447, %v390
        %v449 = vshrl.u32 %v448, 4
        %v450 = vand.u32 %v448, 15
        %v451 = vsub.s32 0, %v450
        %v452 = vsel %vm446, %v451, %v450
        %vm453 = vcmp.lt.s32.totalorder %v391, 0
        %v454 = vsub.s32 0, %v391
        %v455 = vsel %vm453, %v454, %v391
        %v456 = vshrl.u32 %v455, 4
        %v457 = vand.u32 %v455, 15
        %v458 = vsub.s32 0, %v457
        %v459 = vsel %vm453, %v458, %v457
        %vm460 = vcmp.lt.s32.totalorder %v392, 0
        %v461 = vsub.s32 0, %v392
        %v462 = vsel %vm460, %v461, %v392
        %v463 = vshrl.u32 %v462, 4
        %v464 = vand.u32 %v462, 15
        %v465 = vsub.s32 0, %v464
        %v466 = vsel %vm460, %v465, %v464
        %vm467 = vcmp.lt.s32.totalorder %v393, 0
        %v468 = vsub.s32 0, %v393
        %v469 = vsel %vm467, %v468, %v393
        %v470 = vshrl.u32 %v469, 4
        %v471 = vand.u32 %v469, 15
        %v472 = vsub.s32 0, %v471
        %v473 = vsel %vm467, %v472, %v471
        %vm474 = vcmp.lt.s32.totalorder %v394, 0
        %v475 = vsub.s32 0, %v394
        %v476 = vsel %vm474, %v475, %v394
        %v477 = vshrl.u32 %v476, 4
        %v478 = vand.u32 %v476, 15
        %v479 = vsub.s32 0, %v478
        %v480 = vsel %vm474, %v479, %v478
        %vm481 = vcmp.lt.s32.totalorder %v395, 0
        %v482 = vsub.s32 0, %v395
        %v483 = vsel %vm481, %v482, %v395
        %v484 = vshrl.u32 %v483, 4
        %v485 = vand.u32 %v483, 15
        %v486 = vsub.s32 0, %v485
        %v487 = vsel %vm481, %v486, %v485
        %vm488 = vcmp.lt.s32.totalorder %v396, 0
        %v489 = vsub.s32 0, %v396
        %v490 = vsel %vm488, %v489, %v396
        %v491 = vshrl.u32 %v490, 4
        %v492 = vand.u32 %v490, 15
        %v493 = vsub.s32 0, %v492
        %v494 = vsel %vm488, %v493, %v492
        %vm495 = vcmp.lt.s32.totalorder %v397, 0
        %v496 = vsub.s32 0, %v397
        %v497 = vsel %vm495, %v496, %v397
        %v498 = vshrl.u32 %v497, 4
        %v499 = vand.u32 %v497, 15
        %v500 = vsub.s32 0, %v499
        %v501 = vsel %vm495, %v500, %v499
        %vm502 = vcmp.lt.s32.totalorder %v398, 0
        %v503 = vsub.s32 0, %v398
        %v504 = vsel %vm502, %v503, %v398
        %v505 = vshrl.u32 %v504, 4
        %v506 = vand.u32 %v504, 15
        %v507 = vsub.s32 0, %v506
        %v508 = vsel %vm502, %v507, %v506
        %vm509 = vcmp.lt.s32.totalorder %v399, 0
        %v510 = vsub.s32 0, %v399
        %v511 = vsel %vm509, %v510, %v399
        %v512 = vshrl.u32 %v511, 4
        %v513 = vand.u32 %v511, 15
        %v514 = vsub.s32 0, %v513
        %v515 = vsel %vm509, %v514, %v513
        %vm516 = vcmp.lt.s32.totalorder %v400, 0
        %v517 = vsub.s32 0, %v400
        %v518 = vsel %vm516, %v517, %v400
        %v519 = vshrl.u32 %v518, 4
        %v520 = vand.u32 %v518, 15
        %v521 = vsub.s32 0, %v520
        %v522 = vsel %vm516, %v521, %v520
        %vm523 = vcmp.lt.s32.totalorder %v401, 0
        %v524 = vsub.s32 0, %v401
        %v525 = vsel %vm523, %v524, %v401
        %v526 = vshrl.u32 %v525, 4
        %v527 = vand.u32 %v525, 15
        %v528 = vsub.s32 0, %v527
        %v529 = vsel %vm523, %v528, %v527
        %vm530 = vcmp.lt.s32.totalorder %v402, 0
        %v531 = vsub.s32 0, %v402
        %v532 = vsel %vm530, %v531, %v402
        %v533 = vshrl.u32 %v532, 4
        %v534 = vand.u32 %v532, 15
        %v535 = vsub.s32 0, %v534
        %v536 = vsel %vm530, %v535, %v534
        %vm537 = vcmp.lt.s32.totalorder %v403, 0
        %v538 = vsub.s32 0, %v403
        %v539 = vsel %vm537, %v538, %v403
        %v540 = vshrl.u32 %v539, 4
        %v541 = vand.u32 %v539, 15
        %v542 = vsub.s32 0, %v541
        %v543 = vsel %vm537, %v542, %v541
        %vm544 = vcmp.lt.s32.totalorder %v404, 0
        %v545 = vsub.s32 0, %v404
        %v546 = vsel %vm544, %v545, %v404
        %v547 = vshrl.u32 %v546, 4
        %v548 = vand.u32 %v546, 15
        %v549 = vsub.s32 0, %v548
        %v550 = vsel %vm544, %v549, %v548
        %vm551 = vcmp.lt.s32.totalorder %v405, 0
        %v552 = vsub.s32 0, %v405
        %v553 = vsel %vm551, %v552, %v405
        %v554 = vshrl.u32 %v553, 4
        %v555 = vand.u32 %v553, 15
        %v556 = vsub.s32 0, %v555
        %v557 = vsel %vm551, %v556, %v555
        %vm558 = vcmp.lt.s32.totalorder %v406, 0
        %v559 = vsub.s32 0, %v406
        %v560 = vsel %vm558, %v559, %v406
        %v561 = vshrl.u32 %v560, 4
        %v562 = vand.u32 %v560, 15
        %v563 = vsub.s32 0, %v562
        %v564 = vsel %vm558, %v563, %v562
        %vm565 = vcmp.lt.s32.totalorder %v407, 0
        %v566 = vsub.s32 0, %v407
        %v567 = vsel %vm565, %v566, %v407
        %v568 = vshrl.u32 %v567, 4
        %v569 = vand.u32 %v567, 15
        %v570 = vsub.s32 0, %v569
        %v571 = vsel %vm565, %v570, %v569
        %vm572 = vcmp.lt.s32.totalorder %v408, 0
        %v573 = vsub.s32 0, %v408
        %v574 = vsel %vm572, %v573, %v408
        %v575 = vshrl.u32 %v574, 4
        %v576 = vand.u32 %v574, 15
        %v577 = vsub.s32 0, %v576
        %v578 = vsel %vm572, %v577, %v576
        %vm579 = vcmp.lt.s32.totalorder %v409, 0
        %v580 = vsub.s32 0, %v409
        %v581 = vsel %vm579, %v580, %v409
        %v582 = vshrl.u32 %v581, 4
        %v583 = vand.u32 %v581, 15
        %v584 = vsub.s32 0, %v583
        %v585 = vsel %vm579, %v584, %v583
        %vm586 = vcmp.lt.s32.totalorder %v410, 0
        %v587 = vsub.s32 0, %v410
        %v588 = vsel %vm586, %v587, %v410
        %v589 = vshrl.u32 %v588, 4
        %v590 = vand.u32 %v588, 15
        %v591 = vsub.s32 0, %v590
        %v592 = vsel %vm586, %v591, %v590
        %vm593 = vcmp.lt.s32.totalorder %v411, 0
        %v594 = vsub.s32 0, %v411
        %v595 = vsel %vm593, %v594, %v411
        %v596 = vshrl.u32 %v595, 4
        %v597 = vand.u32 %v595, 15
        %v598 = vsub.s32 0, %v597
        %v599 = vsel %vm593, %v598, %v597
        %vm600 = vcmp.lt.s32.totalorder %v412, 0
        %v601 = vsub.s32 0, %v412
        %v602 = vsel %vm600, %v601, %v412
        %v603 = vshrl.u32 %v602, 4
        %v604 = vand.u32 %v602, 15
        %v605 = vsub.s32 0, %v604
        %v606 = vsel %vm600, %v605, %v604
        %vm607 = vcmp.lt.s32.totalorder %v413, 0
        %v608 = vsub.s32 0, %v413
        %v609 = vsel %vm607, %v608, %v413
        %v610 = vshrl.u32 %v609, 4
        %v611 = vand.u32 %v609, 15
        %v612 = vsub.s32 0, %v611
        %v613 = vsel %vm607, %v612, %v611
        %vm614 = vcmp.lt.s32.totalorder %v414, 0
        %v615 = vsub.s32 0, %v414
        %v616 = vsel %vm614, %v615, %v414
        %v617 = vshrl.u32 %v616, 4
        %v618 = vand.u32 %v616, 15
        %v619 = vsub.s32 0, %v618
        %v620 = vsel %vm614, %v619, %v618
        %vm621 = vcmp.lt.s32.totalorder %v415, 0
        %v622 = vsub.s32 0, %v415
        %v623 = vsel %vm621, %v622, %v415
        %v624 = vshrl.u32 %v623, 4
        %v625 = vand.u32 %v623, 15
        %v626 = vsub.s32 0, %v625
        %v627 = vsel %vm621, %v626, %v625
        %vm628 = vcmp.lt.s32.totalorder %v416, 0
        %v629 = vsub.s32 0, %v416
        %v630 = vsel %vm628, %v629, %v416
        %v631 = vshrl.u32 %v630, 4
        %v632 = vand.u32 %v630, 15
        %v633 = vsub.s32 0, %v632
        %v634 = vsel %vm628, %v633, %v632
        %vm635 = vcmp.lt.s32.totalorder %v417, 0
        %v636 = vsub.s32 0, %v417
        %v637 = vsel %vm635, %v636, %v417
        %v638 = vshrl.u32 %v637, 4
        %v639 = vand.u32 %v637, 15
        %v640 = vsub.s32 0, %v639
        %v641 = vsel %vm635, %v640, %v639
        %vm642 = vcmp.ne.s32.totalorder %v424, 0
        %vm643 = vcmp.ne.s32.totalorder %v431, 0
        %vm644 = vcmp.ne.s32.totalorder %v438, 0
        %vm645 = vcmp.ne.s32.totalorder %v445, 0
        %vm646 = vcmp.ne.s32.totalorder %v452, 0
        %vm647 = vcmp.ne.s32.totalorder %v459, 0
        %vm648 = vcmp.ne.s32.totalorder %v466, 0
        %vm649 = vcmp.ne.s32.totalorder %v473, 0
        %vm650 = vcmp.ne.s32.totalorder %v480, 0
        %vm651 = vcmp.ne.s32.totalorder %v487, 0
        %vm652 = vcmp.ne.s32.totalorder %v494, 0
        %vm653 = vcmp.ne.s32.totalorder %v501, 0
        %vm654 = vcmp.ne.s32.totalorder %v508, 0
        %vm655 = vcmp.ne.s32.totalorder %v515, 0
        %vm656 = vcmp.ne.s32.totalorder %v522, 0
        %vm657 = vcmp.ne.s32.totalorder %v529, 0
        %vm658 = vcmp.ne.s32.totalorder %v536, 0
        %vm659 = vcmp.ne.s32.totalorder %v543, 0
        %vm660 = vcmp.ne.s32.totalorder %v550, 0
        %vm661 = vcmp.ne.s32.totalorder %v557, 0
        %vm662 = vcmp.ne.s32.totalorder %v564, 0
        %vm663 = vcmp.ne.s32.totalorder %v571, 0
        %vm664 = vcmp.ne.s32.totalorder %v578, 0
        %vm665 = vcmp.ne.s32.totalorder %v585, 0
        %vm666 = vcmp.ne.s32.totalorder %v592, 0
        %vm667 = vcmp.ne.s32.totalorder %v599, 0
        %vm668 = vcmp.ne.s32.totalorder %v606, 0
        %vm669 = vcmp.ne.s32.totalorder %v613, 0
        %vm670 = vcmp.ne.s32.totalorder %v620, 0
        %vm671 = vcmp.ne.s32.totalorder %v627, 0
        %vm672 = vcmp.ne.s32.totalorder %v634, 0
        %vm673 = vcmp.ne.s32.totalorder %v641, 0
        %vm674 = vcmp.lt.s32.totalorder %v424, 0
        %vm675 = vcmp.lt.s32.totalorder %v431, 0
        %vm676 = vcmp.lt.s32.totalorder %v438, 0
        %vm677 = vcmp.lt.s32.totalorder %v445, 0
        %vm678 = vcmp.lt.s32.totalorder %v452, 0
        %vm679 = vcmp.lt.s32.totalorder %v459, 0
        %vm680 = vcmp.lt.s32.totalorder %v466, 0
        %vm681 = vcmp.lt.s32.totalorder %v473, 0
        %vm682 = vcmp.lt.s32.totalorder %v480, 0
        %vm683 = vcmp.lt.s32.totalorder %v487, 0
        %vm684 = vcmp.lt.s32.totalorder %v494, 0
        %vm685 = vcmp.lt.s32.totalorder %v501, 0
        %vm686 = vcmp.lt.s32.totalorder %v508, 0
        %vm687 = vcmp.lt.s32.totalorder %v515, 0
        %vm688 = vcmp.lt.s32.totalorder %v522, 0
        %vm689 = vcmp.lt.s32.totalorder %v529, 0
        %vm690 = vcmp.lt.s32.totalorder %v536, 0
        %vm691 = vcmp.lt.s32.totalorder %v543, 0
        %vm692 = vcmp.lt.s32.totalorder %v550, 0
        %vm693 = vcmp.lt.s32.totalorder %v557, 0
        %vm694 = vcmp.lt.s32.totalorder %v564, 0
        %vm695 = vcmp.lt.s32.totalorder %v571, 0
        %vm696 = vcmp.lt.s32.totalorder %v578, 0
        %vm697 = vcmp.lt.s32.totalorder %v585, 0
        %vm698 = vcmp.lt.s32.totalorder %v592, 0
        %vm699 = vcmp.lt.s32.totalorder %v599, 0
        %vm700 = vcmp.lt.s32.totalorder %v606, 0
        %vm701 = vcmp.lt.s32.totalorder %v613, 0
        %vm702 = vcmp.lt.s32.totalorder %v620, 0
        %vm703 = vcmp.lt.s32.totalorder %v627, 0
        %vm704 = vcmp.lt.s32.totalorder %v634, 0
        %vm705 = vcmp.lt.s32.totalorder %v641, 0
        %vm706 = vmand %vm674, %vm642
        %vm707 = vmand %vm675, %vm643
        %vm708 = vmand %vm676, %vm644
        %vm709 = vmand %vm677, %vm645
        %vm710 = vmand %vm678, %vm646
        %vm711 = vmand %vm679, %vm647
        %vm712 = vmand %vm680, %vm648
        %vm713 = vmand %vm681, %vm649
        %vm714 = vmand %vm682, %vm650
        %vm715 = vmand %vm683, %vm651
        %vm716 = vmand %vm684, %vm652
        %vm717 = vmand %vm685, %vm653
        %vm718 = vmand %vm686, %vm654
        %vm719 = vmand %vm687, %vm655
        %vm720 = vmand %vm688, %vm656
        %vm721 = vmand %vm689, %vm657
        %vm722 = vmand %vm690, %vm658
        %vm723 = vmand %vm691, %vm659
        %vm724 = vmand %vm692, %vm660
        %vm725 = vmand %vm693, %vm661
        %vm726 = vmand %vm694, %vm662
        %vm727 = vmand %vm695, %vm663
        %vm728 = vmand %vm696, %vm664
        %vm729 = vmand %vm697, %vm665
        %vm730 = vmand %vm698, %vm666
        %vm731 = vmand %vm699, %vm667
        %vm732 = vmand %vm700, %vm668
        %vm733 = vmand %vm701, %vm669
        %vm734 = vmand %vm702, %vm670
        %vm735 = vmand %vm703, %vm671
        %vm736 = vmand %vm704, %vm672
        %vm737 = vmand %vm705, %vm673
        %v738 = vadd.s32 %v424, 16
        %v739 = vadd.s32 %v431, 16
        %v740 = vadd.s32 %v438, 16
        %v741 = vadd.s32 %v445, 16
        %v742 = vadd.s32 %v452, 16
        %v743 = vadd.s32 %v459, 16
        %v744 = vadd.s32 %v466, 16
        %v745 = vadd.s32 %v473, 16
        %v746 = vadd.s32 %v480, 16
        %v747 = vadd.s32 %v487, 16
        %v748 = vadd.s32 %v494, 16
        %v749 = vadd.s32 %v501, 16
        %v750 = vadd.s32 %v508, 16
        %v751 = vadd.s32 %v515, 16
        %v752 = vadd.s32 %v522, 16
        %v753 = vadd.s32 %v529, 16
        %v754 = vadd.s32 %v536, 16
        %v755 = vadd.s32 %v543, 16
        %v756 = vadd.s32 %v550, 16
        %v757 = vadd.s32 %v557, 16
        %v758 = vadd.s32 %v564, 16
        %v759 = vadd.s32 %v571, 16
        %v760 = vadd.s32 %v578, 16
        %v761 = vadd.s32 %v585, 16
        %v762 = vadd.s32 %v592, 16
        %v763 = vadd.s32 %v599, 16
        %v764 = vadd.s32 %v606, 16
        %v765 = vadd.s32 %v613, 16
        %v766 = vadd.s32 %v620, 16
        %v767 = vadd.s32 %v627, 16
        %v768 = vadd.s32 %v634, 16
        %v769 = vadd.s32 %v641, 16
        %v770 = vsel %vm706, %v738, %v424
        %v771 = vsel %vm707, %v739, %v431
        %v772 = vsel %vm708, %v740, %v438
        %v773 = vsel %vm709, %v741, %v445
        %v774 = vsel %vm710, %v742, %v452
        %v775 = vsel %vm711, %v743, %v459
        %v776 = vsel %vm712, %v744, %v466
        %v777 = vsel %vm713, %v745, %v473
        %v778 = vsel %vm714, %v746, %v480
        %v779 = vsel %vm715, %v747, %v487
        %v780 = vsel %vm716, %v748, %v494
        %v781 = vsel %vm717, %v749, %v501
        %v782 = vsel %vm718, %v750, %v508
        %v783 = vsel %vm719, %v751, %v515
        %v784 = vsel %vm720, %v752, %v522
        %v785 = vsel %vm721, %v753, %v529
        %v786 = vsel %vm722, %v754, %v536
        %v787 = vsel %vm723, %v755, %v543
        %v788 = vsel %vm724, %v756, %v550
        %v789 = vsel %vm725, %v757, %v557
        %v790 = vsel %vm726, %v758, %v564
        %v791 = vsel %vm727, %v759, %v571
        %v792 = vsel %vm728, %v760, %v578
        %v793 = vsel %vm729, %v761, %v585
        %v794 = vsel %vm730, %v762, %v592
        %v795 = vsel %vm731, %v763, %v599
        %v796 = vsel %vm732, %v764, %v606
        %v797 = vsel %vm733, %v765, %v613
        %v798 = vsel %vm734, %v766, %v620
        %v799 = vsel %vm735, %v767, %v627
        %v800 = vsel %vm736, %v768, %v634
        %v801 = vsel %vm737, %v769, %v641
        %vm802 = vcmp.ge.s32.totalorder %v770, 1
        %vm803 = vcmp.ge.s32.totalorder %v771, 1
        %vm804 = vcmp.ge.s32.totalorder %v772, 1
        %vm805 = vcmp.ge.s32.totalorder %v773, 1
        %vm806 = vcmp.ge.s32.totalorder %v774, 1
        %vm807 = vcmp.ge.s32.totalorder %v775, 1
        %vm808 = vcmp.ge.s32.totalorder %v776, 1
        %vm809 = vcmp.ge.s32.totalorder %v777, 1
        %vm810 = vcmp.ge.s32.totalorder %v778, 1
        %vm811 = vcmp.ge.s32.totalorder %v779, 1
        %vm812 = vcmp.ge.s32.totalorder %v780, 1
        %vm813 = vcmp.ge.s32.totalorder %v781, 1
        %vm814 = vcmp.ge.s32.totalorder %v782, 1
        %vm815 = vcmp.ge.s32.totalorder %v783, 1
        %vm816 = vcmp.ge.s32.totalorder %v784, 1
        %vm817 = vcmp.ge.s32.totalorder %v785, 1
        %vm818 = vcmp.ge.s32.totalorder %v786, 1
        %vm819 = vcmp.ge.s32.totalorder %v787, 1
        %vm820 = vcmp.ge.s32.totalorder %v788, 1
        %vm821 = vcmp.ge.s32.totalorder %v789, 1
        %vm822 = vcmp.ge.s32.totalorder %v790, 1
        %vm823 = vcmp.ge.s32.totalorder %v791, 1
        %vm824 = vcmp.ge.s32.totalorder %v792, 1
        %vm825 = vcmp.ge.s32.totalorder %v793, 1
        %vm826 = vcmp.ge.s32.totalorder %v794, 1
        %vm827 = vcmp.ge.s32.totalorder %v795, 1
        %vm828 = vcmp.ge.s32.totalorder %v796, 1
        %vm829 = vcmp.ge.s32.totalorder %v797, 1
        %vm830 = vcmp.ge.s32.totalorder %v798, 1
        %vm831 = vcmp.ge.s32.totalorder %v799, 1
        %vm832 = vcmp.ge.s32.totalorder %v800, 1
        %vm833 = vcmp.ge.s32.totalorder %v801, 1
        %v834 = vsel %vm802, 1, 0
        %v835 = vsel %vm803, 1, 0
        %v836 = vsel %vm804, 1, 0
        %v837 = vsel %vm805, 1, 0
        %v838 = vsel %vm806, 1, 0
        %v839 = vsel %vm807, 1, 0
        %v840 = vsel %vm808, 1, 0
        %v841 = vsel %vm809, 1, 0
        %v842 = vsel %vm810, 1, 0
        %v843 = vsel %vm811, 1, 0
        %v844 = vsel %vm812, 1, 0
        %v845 = vsel %vm813, 1, 0
        %v846 = vsel %vm814, 1, 0
        %v847 = vsel %vm815, 1, 0
        %v848 = vsel %vm816, 1, 0
        %v849 = vsel %vm817, 1, 0
        %v850 = vsel %vm818, 1, 0
        %v851 = vsel %vm819, 1, 0
        %v852 = vsel %vm820, 1, 0
        %v853 = vsel %vm821, 1, 0
        %v854 = vsel %vm822, 1, 0
        %v855 = vsel %vm823, 1, 0
        %v856 = vsel %vm824, 1, 0
        %v857 = vsel %vm825, 1, 0
        %v858 = vsel %vm826, 1, 0
        %v859 = vsel %vm827, 1, 0
        %v860 = vsel %vm828, 1, 0
        %v861 = vsel %vm829, 1, 0
        %v862 = vsel %vm830, 1, 0
        %v863 = vsel %vm831, 1, 0
        %v864 = vsel %vm832, 1, 0
        %v865 = vsel %vm833, 1, 0
        %v866 = vcvt.s32.f32 %v834
        %v867 = vcvt.s32.f32 %v835
        %v868 = vcvt.s32.f32 %v836
        %v869 = vcvt.s32.f32 %v837
        %v870 = vcvt.s32.f32 %v838
        %v871 = vcvt.s32.f32 %v839
        %v872 = vcvt.s32.f32 %v840
        %v873 = vcvt.s32.f32 %v841
        %v874 = vcvt.s32.f32 %v842
        %v875 = vcvt.s32.f32 %v843
        %v876 = vcvt.s32.f32 %v844
        %v877 = vcvt.s32.f32 %v845
        %v878 = vcvt.s32.f32 %v846
        %v879 = vcvt.s32.f32 %v847
        %v880 = vcvt.s32.f32 %v848
        %v881 = vcvt.s32.f32 %v849
        %v882 = vcvt.s32.f32 %v850
        %v883 = vcvt.s32.f32 %v851
        %v884 = vcvt.s32.f32 %v852
        %v885 = vcvt.s32.f32 %v853
        %v886 = vcvt.s32.f32 %v854
        %v887 = vcvt.s32.f32 %v855
        %v888 = vcvt.s32.f32 %v856
        %v889 = vcvt.s32.f32 %v857
        %v890 = vcvt.s32.f32 %v858
        %v891 = vcvt.s32.f32 %v859
        %v892 = vcvt.s32.f32 %v860
        %v893 = vcvt.s32.f32 %v861
        %v894 = vcvt.s32.f32 %v862
        %v895 = vcvt.s32.f32 %v863
        %v896 = vcvt.s32.f32 %v864
        %v897 = vcvt.s32.f32 %v865
        %vm898 = vcmp.le.s32.totalorder %v770, 14
        %vm899 = vcmp.le.s32.totalorder %v771, 14
        %vm900 = vcmp.le.s32.totalorder %v772, 14
        %vm901 = vcmp.le.s32.totalorder %v773, 14
        %vm902 = vcmp.le.s32.totalorder %v774, 14
        %vm903 = vcmp.le.s32.totalorder %v775, 14
        %vm904 = vcmp.le.s32.totalorder %v776, 14
        %vm905 = vcmp.le.s32.totalorder %v777, 14
        %vm906 = vcmp.le.s32.totalorder %v778, 14
        %vm907 = vcmp.le.s32.totalorder %v779, 14
        %vm908 = vcmp.le.s32.totalorder %v780, 14
        %vm909 = vcmp.le.s32.totalorder %v781, 14
        %vm910 = vcmp.le.s32.totalorder %v782, 14
        %vm911 = vcmp.le.s32.totalorder %v783, 14
        %vm912 = vcmp.le.s32.totalorder %v784, 14
        %vm913 = vcmp.le.s32.totalorder %v785, 14
        %vm914 = vcmp.le.s32.totalorder %v786, 14
        %vm915 = vcmp.le.s32.totalorder %v787, 14
        %vm916 = vcmp.le.s32.totalorder %v788, 14
        %vm917 = vcmp.le.s32.totalorder %v789, 14
        %vm918 = vcmp.le.s32.totalorder %v790, 14
        %vm919 = vcmp.le.s32.totalorder %v791, 14
        %vm920 = vcmp.le.s32.totalorder %v792, 14
        %vm921 = vcmp.le.s32.totalorder %v793, 14
        %vm922 = vcmp.le.s32.totalorder %v794, 14
        %vm923 = vcmp.le.s32.totalorder %v795, 14
        %vm924 = vcmp.le.s32.totalorder %v796, 14
        %vm925 = vcmp.le.s32.totalorder %v797, 14
        %vm926 = vcmp.le.s32.totalorder %v798, 14
        %vm927 = vcmp.le.s32.totalorder %v799, 14
        %vm928 = vcmp.le.s32.totalorder %v800, 14
        %vm929 = vcmp.le.s32.totalorder %v801, 14
        %v930 = vsel %vm898, 1, 0
        %v931 = vsel %vm899, 1, 0
        %v932 = vsel %vm900, 1, 0
        %v933 = vsel %vm901, 1, 0
        %v934 = vsel %vm902, 1, 0
        %v935 = vsel %vm903, 1, 0
        %v936 = vsel %vm904, 1, 0
        %v937 = vsel %vm905, 1, 0
        %v938 = vsel %vm906, 1, 0
        %v939 = vsel %vm907, 1, 0
        %v940 = vsel %vm908, 1, 0
        %v941 = vsel %vm909, 1, 0
        %v942 = vsel %vm910, 1, 0
        %v943 = vsel %vm911, 1, 0
        %v944 = vsel %vm912, 1, 0
        %v945 = vsel %vm913, 1, 0
        %v946 = vsel %vm914, 1, 0
        %v947 = vsel %vm915, 1, 0
        %v948 = vsel %vm916, 1, 0
        %v949 = vsel %vm917, 1, 0
        %v950 = vsel %vm918, 1, 0
        %v951 = vsel %vm919, 1, 0
        %v952 = vsel %vm920, 1, 0
        %v953 = vsel %vm921, 1, 0
        %v954 = vsel %vm922, 1, 0
        %v955 = vsel %vm923, 1, 0
        %v956 = vsel %vm924, 1, 0
        %v957 = vsel %vm925, 1, 0
        %v958 = vsel %vm926, 1, 0
        %v959 = vsel %vm927, 1, 0
        %v960 = vsel %vm928, 1, 0
        %v961 = vsel %vm929, 1, 0
        %v962 = vcvt.s32.f32 %v930
        %v963 = vcvt.s32.f32 %v931
        %v964 = vcvt.s32.f32 %v932
        %v965 = vcvt.s32.f32 %v933
        %v966 = vcvt.s32.f32 %v934
        %v967 = vcvt.s32.f32 %v935
        %v968 = vcvt.s32.f32 %v936
        %v969 = vcvt.s32.f32 %v937
        %v970 = vcvt.s32.f32 %v938
        %v971 = vcvt.s32.f32 %v939
        %v972 = vcvt.s32.f32 %v940
        %v973 = vcvt.s32.f32 %v941
        %v974 = vcvt.s32.f32 %v942
        %v975 = vcvt.s32.f32 %v943
        %v976 = vcvt.s32.f32 %v944
        %v977 = vcvt.s32.f32 %v945
        %v978 = vcvt.s32.f32 %v946
        %v979 = vcvt.s32.f32 %v947
        %v980 = vcvt.s32.f32 %v948
        %v981 = vcvt.s32.f32 %v949
        %v982 = vcvt.s32.f32 %v950
        %v983 = vcvt.s32.f32 %v951
        %v984 = vcvt.s32.f32 %v952
        %v985 = vcvt.s32.f32 %v953
        %v986 = vcvt.s32.f32 %v954
        %v987 = vcvt.s32.f32 %v955
        %v988 = vcvt.s32.f32 %v956
        %v989 = vcvt.s32.f32 %v957
        %v990 = vcvt.s32.f32 %v958
        %v991 = vcvt.s32.f32 %v959
        %v992 = vcvt.s32.f32 %v960
        %v993 = vcvt.s32.f32 %v961
        %vm994 = vcmask 31744
        %995 = vst.msk [vmem:[#allocation2] sm:$0xff] %vm994, 0.0
        %996 = vst.msk [vmem:[#allocation2 + $0x8] sm:$0xff] %vm994, 0.0
        %997 = vst.msk [vmem:[#allocation2 + $0x10] sm:$0xff] %vm994, 0.0
        %998 = vst.msk [vmem:[#allocation2 + $0x118] sm:$0xff] %vm994, 0.0
        %999 = vst.msk [vmem:[#allocation2 + $0x120] sm:$0xff] %vm994, 0.0
        %1000 = vst.msk [vmem:[#allocation2 + $0x128] sm:$0xff] %vm994, 0.0
        %vm1001 = vcmask 64512
        %1002 = vst.msk [vmem:[#allocation3] sm:$0xff] %vm1001, 0.0
        %1003 = vst.msk [vmem:[#allocation3 + $0x8] sm:$0xff] %vm1001, 0.0
        %1004 = vst.msk [vmem:[#allocation3 + $0x10] sm:$0xff] %vm1001, 0.0
        %1005 = vst.msk [vmem:[#allocation3 + $0x118] sm:$0xff] %vm1001, 0.0
        %1006 = vst.msk [vmem:[#allocation3 + $0x120] sm:$0xff] %vm1001, 0.0
        %1007 = vst.msk [vmem:[#allocation3 + $0x128] sm:$0xff] %vm1001, 0.0
        %v1008 = vld [vmem:[%s383] sm:$0xff]
        %v1009 = vld [vmem:[%s383 + $0x8] sm:$0xff]
        %v1010 = vld [vmem:[%s383 + $0x10] sm:$0xff]
        %v1011 = vld [vmem:[%s383 + $0x18] sm:$0xff]
        %v1012 = vld [vmem:[%s383 + $0x20] sm:$0xff]
        %v1013 = vld [vmem:[%s383 + $0x28] sm:$0xff]
        %v1014 = vld [vmem:[%s383 + $0x30] sm:$0xff]
        %v1015 = vld [vmem:[%s383 + $0x38] sm:$0xff]
        %v1016 = vld [vmem:[%s383 + $0x40] sm:$0xff]
        %v1017 = vld [vmem:[%s383 + $0x48] sm:$0xff]
        %v1018 = vld [vmem:[%s383 + $0x50] sm:$0xff]
        %v1019 = vld [vmem:[%s383 + $0x58] sm:$0xff]
        %v1020 = vld [vmem:[%s383 + $0x60] sm:$0xff]
        %v1021 = vld [vmem:[%s383 + $0x68] sm:$0xff]
        %v1022 = vld [vmem:[%s383 + $0x70] sm:$0xff]
        %v1023 = vld [vmem:[%s383 + $0x78] sm:$0xff]
        %v1024 = vld [vmem:[%s383 + $0x80] sm:$0xff]
        %v1025 = vld [vmem:[%s383 + $0x88] sm:$0xff]
        %v1026 = vld [vmem:[%s383 + $0x90] sm:$0xff]
        %v1027 = vld [vmem:[%s383 + $0x98] sm:$0xff]
        %v1028 = vld [vmem:[%s383 + $0xa0] sm:$0xff]
        %v1029 = vld [vmem:[%s383 + $0xa8] sm:$0xff]
        %v1030 = vld [vmem:[%s383 + $0xb0] sm:$0xff]
        %v1031 = vld [vmem:[%s383 + $0xb8] sm:$0xff]
        %v1032 = vld [vmem:[%s383 + $0xc0] sm:$0xff]
        %v1033 = vld [vmem:[%s383 + $0xc8] sm:$0xff]
        %v1034 = vld [vmem:[%s383 + $0xd0] sm:$0xff]
        %v1035 = vld [vmem:[%s383 + $0xd8] sm:$0xff]
        %v1036 = vld [vmem:[%s383 + $0xe0] sm:$0xff]
        %v1037 = vld [vmem:[%s383 + $0xe8] sm:$0xff]
        %v1038 = vld [vmem:[%s383 + $0xf0] sm:$0xff]
        %v1039 = vld [vmem:[%s383 + $0xf8] sm:$0xff]
        %1040 = vst.msk [vmem:[#allocation2 + $0x18] sm:$0xff] %vm994, %v1008
        %1041 = vst.msk [vmem:[#allocation2 + $0x20] sm:$0xff] %vm994, %v1009
        %1042 = vst.msk [vmem:[#allocation2 + $0x28] sm:$0xff] %vm994, %v1010
        %1043 = vst.msk [vmem:[#allocation2 + $0x30] sm:$0xff] %vm994, %v1011
        %1044 = vst.msk [vmem:[#allocation2 + $0x38] sm:$0xff] %vm994, %v1012
        %1045 = vst.msk [vmem:[#allocation2 + $0x40] sm:$0xff] %vm994, %v1013
        %1046 = vst.msk [vmem:[#allocation2 + $0x48] sm:$0xff] %vm994, %v1014
        %1047 = vst.msk [vmem:[#allocation2 + $0x50] sm:$0xff] %vm994, %v1015
        %1048 = vst.msk [vmem:[#allocation2 + $0x58] sm:$0xff] %vm994, %v1016
        %1049 = vst.msk [vmem:[#allocation2 + $0x60] sm:$0xff] %vm994, %v1017
        %1050 = vst.msk [vmem:[#allocation2 + $0x68] sm:$0xff] %vm994, %v1018
        %1051 = vst.msk [vmem:[#allocation2 + $0x70] sm:$0xff] %vm994, %v1019
        %1052 = vst.msk [vmem:[#allocation2 + $0x78] sm:$0xff] %vm994, %v1020
        %1053 = vst.msk [vmem:[#allocation2 + $0x80] sm:$0xff] %vm994, %v1021
        %1054 = vst.msk [vmem:[#allocation2 + $0x88] sm:$0xff] %vm994, %v1022
        %1055 = vst.msk [vmem:[#allocation2 + $0x90] sm:$0xff] %vm994, %v1023
        %1056 = vst.msk [vmem:[#allocation2 + $0x98] sm:$0xff] %vm994, %v1024
        %1057 = vst.msk [vmem:[#allocation2 + $0xa0] sm:$0xff] %vm994, %v1025
        %1058 = vst.msk [vmem:[#allocation2 + $0xa8] sm:$0xff] %vm994, %v1026
        %1059 = vst.msk [vmem:[#allocation2 + $0xb0] sm:$0xff] %vm994, %v1027
        %1060 = vst.msk [vmem:[#allocation2 + $0xb8] sm:$0xff] %vm994, %v1028
        %1061 = vst.msk [vmem:[#allocation2 + $0xc0] sm:$0xff] %vm994, %v1029
        %1062 = vst.msk [vmem:[#allocation2 + $0xc8] sm:$0xff] %vm994, %v1030
        %1063 = vst.msk [vmem:[#allocation2 + $0xd0] sm:$0xff] %vm994, %v1031
        %1064 = vst.msk [vmem:[#allocation2 + $0xd8] sm:$0xff] %vm994, %v1032
        %1065 = vst.msk [vmem:[#allocation2 + $0xe0] sm:$0xff] %vm994, %v1033
        %1066 = vst.msk [vmem:[#allocation2 + $0xe8] sm:$0xff] %vm994, %v1034
        %1067 = vst.msk [vmem:[#allocation2 + $0xf0] sm:$0xff] %vm994, %v1035
        %1068 = vst.msk [vmem:[#allocation2 + $0xf8] sm:$0xff] %vm994, %v1036
        %1069 = vst.msk [vmem:[#allocation2 + $0x100] sm:$0xff] %vm994, %v1037
        %1070 = vst.msk [vmem:[#allocation2 + $0x108] sm:$0xff] %vm994, %v1038
        %1071 = vst.msk [vmem:[#allocation2 + $0x110] sm:$0xff] %vm994, %v1039
        %v1072 = vld [vmem:[#allocation2 + $0x7] sm:$0xff]
        %v1073 = vld [vmem:[#allocation2 + $0xf] sm:$0xff]
        %v1074 = vld [vmem:[#allocation2 + $0x17] sm:$0xff]
        %v1075 = vld [vmem:[#allocation2 + $0x1f] sm:$0xff]
        %v1076 = vld [vmem:[#allocation2 + $0x27] sm:$0xff]
        %v1077 = vld [vmem:[#allocation2 + $0x2f] sm:$0xff]
        %v1078 = vld [vmem:[#allocation2 + $0x37] sm:$0xff]
        %v1079 = vld [vmem:[#allocation2 + $0x3f] sm:$0xff]
        %v1080 = vld [vmem:[#allocation2 + $0x47] sm:$0xff]
        %v1081 = vld [vmem:[#allocation2 + $0x4f] sm:$0xff]
        %v1082 = vld [vmem:[#allocation2 + $0x57] sm:$0xff]
        %v1083 = vld [vmem:[#allocation2 + $0x5f] sm:$0xff]
        %v1084 = vld [vmem:[#allocation2 + $0x67] sm:$0xff]
        %v1085 = vld [vmem:[#allocation2 + $0x6f] sm:$0xff]
        %v1086 = vld [vmem:[#allocation2 + $0x77] sm:$0xff]
        %v1087 = vld [vmem:[#allocation2 + $0x7f] sm:$0xff]
        %v1088 = vld [vmem:[#allocation2 + $0x87] sm:$0xff]
        %v1089 = vld [vmem:[#allocation2 + $0x8f] sm:$0xff]
        %v1090 = vld [vmem:[#allocation2 + $0x97] sm:$0xff]
        %v1091 = vld [vmem:[#allocation2 + $0x9f] sm:$0xff]
        %v1092 = vld [vmem:[#allocation2 + $0xa7] sm:$0xff]
        %v1093 = vld [vmem:[#allocation2 + $0xaf] sm:$0xff]
        %v1094 = vld [vmem:[#allocation2 + $0xb7] sm:$0xff]
        %v1095 = vld [vmem:[#allocation2 + $0xbf] sm:$0xff]
        %v1096 = vld [vmem:[#allocation2 + $0xc7] sm:$0xff]
        %v1097 = vld [vmem:[#allocation2 + $0xcf] sm:$0xff]
        %v1098 = vld [vmem:[#allocation2 + $0xd7] sm:$0xff]
        %v1099 = vld [vmem:[#allocation2 + $0xdf] sm:$0xff]
        %v1100 = vld [vmem:[#allocation2 + $0xe7] sm:$0xff]
        %v1101 = vld [vmem:[#allocation2 + $0xef] sm:$0xff]
        %v1102 = vld [vmem:[#allocation2 + $0xf7] sm:$0xff]
        %v1103 = vld [vmem:[#allocation2 + $0xff] sm:$0xff]
        %v1104 = vmul.f32 %v1072, %v866
        %v1105 = vmul.f32 %v1073, %v867
        %v1106 = vmul.f32 %v1074, %v868
        %v1107 = vmul.f32 %v1075, %v869
        %v1108 = vmul.f32 %v1076, %v870
        %v1109 = vmul.f32 %v1077, %v871
        %v1110 = vmul.f32 %v1078, %v872
        %v1111 = vmul.f32 %v1079, %v873
        %v1112 = vmul.f32 %v1080, %v874
        %v1113 = vmul.f32 %v1081, %v875
        %v1114 = vmul.f32 %v1082, %v876
        %v1115 = vmul.f32 %v1083, %v877
        %v1116 = vmul.f32 %v1084, %v878
        %v1117 = vmul.f32 %v1085, %v879
        %v1118 = vmul.f32 %v1086, %v880
        %v1119 = vmul.f32 %v1087, %v881
        %v1120 = vmul.f32 %v1088, %v882
        %v1121 = vmul.f32 %v1089, %v883
        %v1122 = vmul.f32 %v1090, %v884
        %v1123 = vmul.f32 %v1091, %v885
        %v1124 = vmul.f32 %v1092, %v886
        %v1125 = vmul.f32 %v1093, %v887
        %v1126 = vmul.f32 %v1094, %v888
        %v1127 = vmul.f32 %v1095, %v889
        %v1128 = vmul.f32 %v1096, %v890
        %v1129 = vmul.f32 %v1097, %v891
        %v1130 = vmul.f32 %v1098, %v892
        %v1131 = vmul.f32 %v1099, %v893
        %v1132 = vmul.f32 %v1100, %v894
        %v1133 = vmul.f32 %v1101, %v895
        %v1134 = vmul.f32 %v1102, %v896
        %v1135 = vmul.f32 %v1103, %v897
        %v1136 = vpack.c.bf16 %v1105, %v1104
        %v1137 = vpack.c.bf16 %v1107, %v1106
        %v1138 = vpack.c.bf16 %v1109, %v1108
        %v1139 = vpack.c.bf16 %v1111, %v1110
        %v1140 = vpack.c.bf16 %v1113, %v1112
        %v1141 = vpack.c.bf16 %v1115, %v1114
        %v1142 = vpack.c.bf16 %v1117, %v1116
        %v1143 = vpack.c.bf16 %v1119, %v1118
        %v1144 = vpack.c.bf16 %v1121, %v1120
        %v1145 = vpack.c.bf16 %v1123, %v1122
        %v1146 = vpack.c.bf16 %v1125, %v1124
        %v1147 = vpack.c.bf16 %v1127, %v1126
        %v1148 = vpack.c.bf16 %v1129, %v1128
        %v1149 = vpack.c.bf16 %v1131, %v1130
        %v1150 = vpack.c.bf16 %v1133, %v1132
        %v1151 = vpack.c.bf16 %v1135, %v1134
        %1152 = vst.msk [vmem:[#allocation4] sm:$0xff] %vm994, %v1136
        %1153 = vst.msk [vmem:[#allocation4 + $0x8] sm:$0xff] %vm994, %v1137
        %1154 = vst.msk [vmem:[#allocation4 + $0x10] sm:$0xff] %vm994, %v1138
        %1155 = vst.msk [vmem:[#allocation4 + $0x18] sm:$0xff] %vm994, %v1139
        %1156 = vst.msk [vmem:[#allocation4 + $0x20] sm:$0xff] %vm994, %v1140
        %1157 = vst.msk [vmem:[#allocation4 + $0x28] sm:$0xff] %vm994, %v1141
        %1158 = vst.msk [vmem:[#allocation4 + $0x30] sm:$0xff] %vm994, %v1142
        %1159 = vst.msk [vmem:[#allocation4 + $0x38] sm:$0xff] %vm994, %v1143
        %1160 = vst.msk [vmem:[#allocation4 + $0x40] sm:$0xff] %vm994, %v1144
        %1161 = vst.msk [vmem:[#allocation4 + $0x48] sm:$0xff] %vm994, %v1145
        %1162 = vst.msk [vmem:[#allocation4 + $0x50] sm:$0xff] %vm994, %v1146
        %1163 = vst.msk [vmem:[#allocation4 + $0x58] sm:$0xff] %vm994, %v1147
        %1164 = vst.msk [vmem:[#allocation4 + $0x60] sm:$0xff] %vm994, %v1148
        %1165 = vst.msk [vmem:[#allocation4 + $0x68] sm:$0xff] %vm994, %v1149
        %1166 = vst.msk [vmem:[#allocation4 + $0x70] sm:$0xff] %vm994, %v1150
        %1167 = vst.msk [vmem:[#allocation4 + $0x78] sm:$0xff] %vm994, %v1151
        %v1168 = vld [vmem:[#allocation2 + $0x8] sm:$0xff]
        %v1169 = vld [vmem:[#allocation2 + $0x10] sm:$0xff]
        %v1170 = vld [vmem:[#allocation2 + $0x18] sm:$0xff]
        %v1171 = vld [vmem:[#allocation2 + $0x20] sm:$0xff]
        %v1172 = vld [vmem:[#allocation2 + $0x28] sm:$0xff]
        %v1173 = vld [vmem:[#allocation2 + $0x30] sm:$0xff]
        %v1174 = vld [vmem:[#allocation2 + $0x38] sm:$0xff]
        %v1175 = vld [vmem:[#allocation2 + $0x40] sm:$0xff]
        %v1176 = vld [vmem:[#allocation2 + $0x48] sm:$0xff]
        %v1177 = vld [vmem:[#allocation2 + $0x50] sm:$0xff]
        %v1178 = vld [vmem:[#allocation2 + $0x58] sm:$0xff]
        %v1179 = vld [vmem:[#allocation2 + $0x60] sm:$0xff]
        %v1180 = vld [vmem:[#allocation2 + $0x68] sm:$0xff]
        %v1181 = vld [vmem:[#allocation2 + $0x70] sm:$0xff]
        %v1182 = vld [vmem:[#allocation2 + $0x78] sm:$0xff]
        %v1183 = vld [vmem:[#allocation2 + $0x80] sm:$0xff]
        %v1184 = vld [vmem:[#allocation2 + $0x88] sm:$0xff]
        %v1185 = vld [vmem:[#allocation2 + $0x90] sm:$0xff]
        %v1186 = vld [vmem:[#allocation2 + $0x98] sm:$0xff]
        %v1187 = vld [vmem:[#allocation2 + $0xa0] sm:$0xff]
        %v1188 = vld [vmem:[#allocation2 + $0xa8] sm:$0xff]
        %v1189 = vld [vmem:[#allocation2 + $0xb0] sm:$0xff]
        %v1190 = vld [vmem:[#allocation2 + $0xb8] sm:$0xff]
        %v1191 = vld [vmem:[#allocation2 + $0xc0] sm:$0xff]
        %v1192 = vld [vmem:[#allocation2 + $0xc8] sm:$0xff]
        %v1193 = vld [vmem:[#allocation2 + $0xd0] sm:$0xff]
        %v1194 = vld [vmem:[#allocation2 + $0xd8] sm:$0xff]
        %v1195 = vld [vmem:[#allocation2 + $0xe0] sm:$0xff]
        %v1196 = vld [vmem:[#allocation2 + $0xe8] sm:$0xff]
        %v1197 = vld [vmem:[#allocation2 + $0xf0] sm:$0xff]
        %v1198 = vld [vmem:[#allocation2 + $0xf8] sm:$0xff]
        %v1199 = vld [vmem:[#allocation2 + $0x100] sm:$0xff]
        %v1200 = vpack.c.bf16 %v1169, %v1168
        %v1201 = vpack.c.bf16 %v1171, %v1170
        %v1202 = vpack.c.bf16 %v1173, %v1172
        %v1203 = vpack.c.bf16 %v1175, %v1174
        %v1204 = vpack.c.bf16 %v1177, %v1176
        %v1205 = vpack.c.bf16 %v1179, %v1178
        %v1206 = vpack.c.bf16 %v1181, %v1180
        %v1207 = vpack.c.bf16 %v1183, %v1182
        %v1208 = vpack.c.bf16 %v1185, %v1184
        %v1209 = vpack.c.bf16 %v1187, %v1186
        %v1210 = vpack.c.bf16 %v1189, %v1188
        %v1211 = vpack.c.bf16 %v1191, %v1190
        %v1212 = vpack.c.bf16 %v1193, %v1192
        %v1213 = vpack.c.bf16 %v1195, %v1194
        %v1214 = vpack.c.bf16 %v1197, %v1196
        %v1215 = vpack.c.bf16 %v1199, %v1198
        %1232 = vrot.lane.b32.xlu0 %v1200, 4
        %v1233 = vpop.permute.xlu0 %1232
        %1234 = vrot.lane.b32.xlu0 %v1201, 4
        %v1235 = vpop.permute.xlu0 %1234
        %1236 = vrot.lane.b32.xlu0 %v1202, 4
        %v1237 = vpop.permute.xlu0 %1236
        %1238 = vrot.lane.b32.xlu0 %v1203, 4
        %v1239 = vpop.permute.xlu0 %1238
        %1240 = vrot.lane.b32.xlu0 %v1204, 4
        %v1241 = vpop.permute.xlu0 %1240
        %1242 = vrot.lane.b32.xlu0 %v1205, 4
        %v1243 = vpop.permute.xlu0 %1242
        %1244 = vrot.lane.b32.xlu0 %v1206, 4
        %v1245 = vpop.permute.xlu0 %1244
        %1246 = vrot.lane.b32.xlu0 %v1207, 4
        %v1247 = vpop.permute.xlu0 %1246
        %1248 = vrot.lane.b32.xlu0 %v1208, 4
        %v1249 = vpop.permute.xlu0 %1248
        %1250 = vrot.lane.b32.xlu0 %v1209, 4
        %v1251 = vpop.permute.xlu0 %1250
        %1252 = vrot.lane.b32.xlu0 %v1210, 4
        %v1253 = vpop.permute.xlu0 %1252
        %1254 = vrot.lane.b32.xlu0 %v1211, 4
        %v1255 = vpop.permute.xlu0 %1254
        %1256 = vrot.lane.b32.xlu0 %v1212, 4
        %v1257 = vpop.permute.xlu0 %1256
        %1258 = vrot.lane.b32.xlu0 %v1213, 4
        %v1259 = vpop.permute.xlu0 %1258
        %1260 = vrot.lane.b32.xlu0 %v1214, 4
        %v1261 = vpop.permute.xlu0 %1260
        %1262 = vrot.lane.b32.xlu0 %v1215, 4
        %v1263 = vpop.permute.xlu0 %1262
        %vm1280 = vcmask 64544
        %1281 = vst.msk [vmem:[#allocation4] sm:$0xff] %vm1280, %v1233
        %1282 = vst.msk [vmem:[#allocation4 + $0x8] sm:$0xff] %vm1280, %v1235
        %1283 = vst.msk [vmem:[#allocation4 + $0x10] sm:$0xff] %vm1280, %v1237
        %1284 = vst.msk [vmem:[#allocation4 + $0x18] sm:$0xff] %vm1280, %v1239
        %1285 = vst.msk [vmem:[#allocation4 + $0x20] sm:$0xff] %vm1280, %v1241
        %1286 = vst.msk [vmem:[#allocation4 + $0x28] sm:$0xff] %vm1280, %v1243
        %1287 = vst.msk [vmem:[#allocation4 + $0x30] sm:$0xff] %vm1280, %v1245
        %1288 = vst.msk [vmem:[#allocation4 + $0x38] sm:$0xff] %vm1280, %v1247
        %1289 = vst.msk [vmem:[#allocation4 + $0x40] sm:$0xff] %vm1280, %v1249
        %1290 = vst.msk [vmem:[#allocation4 + $0x48] sm:$0xff] %vm1280, %v1251
        %1291 = vst.msk [vmem:[#allocation4 + $0x50] sm:$0xff] %vm1280, %v1253
        %1292 = vst.msk [vmem:[#allocation4 + $0x58] sm:$0xff] %vm1280, %v1255
        %1293 = vst.msk [vmem:[#allocation4 + $0x60] sm:$0xff] %vm1280, %v1257
        %1294 = vst.msk [vmem:[#allocation4 + $0x68] sm:$0xff] %vm1280, %v1259
        %1295 = vst.msk [vmem:[#allocation4 + $0x70] sm:$0xff] %vm1280, %v1261
        %1296 = vst.msk [vmem:[#allocation4 + $0x78] sm:$0xff] %vm1280, %v1263
        %v1297 = vld [vmem:[#allocation2 + $0x9] sm:$0xff]
        %v1298 = vld [vmem:[#allocation2 + $0x11] sm:$0xff]
        %v1299 = vld [vmem:[#allocation2 + $0x19] sm:$0xff]
        %v1300 = vld [vmem:[#allocation2 + $0x21] sm:$0xff]
        %v1301 = vld [vmem:[#allocation2 + $0x29] sm:$0xff]
        %v1302 = vld [vmem:[#allocation2 + $0x31] sm:$0xff]
        %v1303 = vld [vmem:[#allocation2 + $0x39] sm:$0xff]
        %v1304 = vld [vmem:[#allocation2 + $0x41] sm:$0xff]
        %v1305 = vld [vmem:[#allocation2 + $0x49] sm:$0xff]
        %v1306 = vld [vmem:[#allocation2 + $0x51] sm:$0xff]
        %v1307 = vld [vmem:[#allocation2 + $0x59] sm:$0xff]
        %v1308 = vld [vmem:[#allocation2 + $0x61] sm:$0xff]
        %v1309 = vld [vmem:[#allocation2 + $0x69] sm:$0xff]
        %v1310 = vld [vmem:[#allocation2 + $0x71] sm:$0xff]
        %v1311 = vld [vmem:[#allocation2 + $0x79] sm:$0xff]
        %v1312 = vld [vmem:[#allocation2 + $0x81] sm:$0xff]
        %v1313 = vld [vmem:[#allocation2 + $0x89] sm:$0xff]
        %v1314 = vld [vmem:[#allocation2 + $0x91] sm:$0xff]
        %v1315 = vld [vmem:[#allocation2 + $0x99] sm:$0xff]
        %v1316 = vld [vmem:[#allocation2 + $0xa1] sm:$0xff]
        %v1317 = vld [vmem:[#allocation2 + $0xa9] sm:$0xff]
        %v1318 = vld [vmem:[#allocation2 + $0xb1] sm:$0xff]
        %v1319 = vld [vmem:[#allocation2 + $0xb9] sm:$0xff]
        %v1320 = vld [vmem:[#allocation2 + $0xc1] sm:$0xff]
        %v1321 = vld [vmem:[#allocation2 + $0xc9] sm:$0xff]
        %v1322 = vld [vmem:[#allocation2 + $0xd1] sm:$0xff]
        %v1323 = vld [vmem:[#allocation2 + $0xd9] sm:$0xff]
        %v1324 = vld [vmem:[#allocation2 + $0xe1] sm:$0xff]
        %v1325 = vld [vmem:[#allocation2 + $0xe9] sm:$0xff]
        %v1326 = vld [vmem:[#allocation2 + $0xf1] sm:$0xff]
        %v1327 = vld [vmem:[#allocation2 + $0xf9] sm:$0xff]
        %v1328 = vld [vmem:[#allocation2 + $0x101] sm:$0xff]
        %v1329 = vmul.f32 %v1297, %v962
        %v1330 = vmul.f32 %v1298, %v963
        %v1331 = vmul.f32 %v1299, %v964
        %v1332 = vmul.f32 %v1300, %v965
        %v1333 = vmul.f32 %v1301, %v966
        %v1334 = vmul.f32 %v1302, %v967
        %v1335 = vmul.f32 %v1303, %v968
        %v1336 = vmul.f32 %v1304, %v969
        %v1337 = vmul.f32 %v1305, %v970
        %v1338 = vmul.f32 %v1306, %v971
        %v1339 = vmul.f32 %v1307, %v972
        %v1340 = vmul.f32 %v1308, %v973
        %v1341 = vmul.f32 %v1309, %v974
        %v1342 = vmul.f32 %v1310, %v975
        %v1343 = vmul.f32 %v1311, %v976
        %v1344 = vmul.f32 %v1312, %v977
        %v1345 = vmul.f32 %v1313, %v978
        %v1346 = vmul.f32 %v1314, %v979
        %v1347 = vmul.f32 %v1315, %v980
        %v1348 = vmul.f32 %v1316, %v981
        %v1349 = vmul.f32 %v1317, %v982
        %v1350 = vmul.f32 %v1318, %v983
        %v1351 = vmul.f32 %v1319, %v984
        %v1352 = vmul.f32 %v1320, %v985
        %v1353 = vmul.f32 %v1321, %v986
        %v1354 = vmul.f32 %v1322, %v987
        %v1355 = vmul.f32 %v1323, %v988
        %v1356 = vmul.f32 %v1324, %v989
        %v1357 = vmul.f32 %v1325, %v990
        %v1358 = vmul.f32 %v1326, %v991
        %v1359 = vmul.f32 %v1327, %v992
        %v1360 = vmul.f32 %v1328, %v993
        %v1361 = vpack.c.bf16 %v1330, %v1329
        %v1362 = vpack.c.bf16 %v1332, %v1331
        %v1363 = vpack.c.bf16 %v1334, %v1333
        %v1364 = vpack.c.bf16 %v1336, %v1335
        %v1365 = vpack.c.bf16 %v1338, %v1337
        %v1366 = vpack.c.bf16 %v1340, %v1339
        %v1367 = vpack.c.bf16 %v1342, %v1341
        %v1368 = vpack.c.bf16 %v1344, %v1343
        %v1369 = vpack.c.bf16 %v1346, %v1345
        %v1370 = vpack.c.bf16 %v1348, %v1347
        %v1371 = vpack.c.bf16 %v1350, %v1349
        %v1372 = vpack.c.bf16 %v1352, %v1351
        %v1373 = vpack.c.bf16 %v1354, %v1353
        %v1374 = vpack.c.bf16 %v1356, %v1355
        %v1375 = vpack.c.bf16 %v1358, %v1357
        %v1376 = vpack.c.bf16 %v1360, %v1359
        %1393 = vrot.lane.b32.xlu0 %v1361, 8
        %v1394 = vpop.permute.xlu0 %1393
        %1395 = vrot.lane.b32.xlu0 %v1362, 8
        %v1396 = vpop.permute.xlu0 %1395
        %1397 = vrot.lane.b32.xlu0 %v1363, 8
        %v1398 = vpop.permute.xlu0 %1397
        %1399 = vrot.lane.b32.xlu0 %v1364, 8
        %v1400 = vpop.permute.xlu0 %1399
        %1401 = vrot.lane.b32.xlu0 %v1365, 8
        %v1402 = vpop.permute.xlu0 %1401
        %1403 = vrot.lane.b32.xlu0 %v1366, 8
        %v1404 = vpop.permute.xlu0 %1403
        %1405 = vrot.lane.b32.xlu0 %v1367, 8
        %v1406 = vpop.permute.xlu0 %1405
        %1407 = vrot.lane.b32.xlu0 %v1368, 8
        %v1408 = vpop.permute.xlu0 %1407
        %1409 = vrot.lane.b32.xlu0 %v1369, 8
        %v1410 = vpop.permute.xlu0 %1409
        %1411 = vrot.lane.b32.xlu0 %v1370, 8
        %v1412 = vpop.permute.xlu0 %1411
        %1413 = vrot.lane.b32.xlu0 %v1371, 8
        %v1414 = vpop.permute.xlu0 %1413
        %1415 = vrot.lane.b32.xlu0 %v1372, 8
        %v1416 = vpop.permute.xlu0 %1415
        %1417 = vrot.lane.b32.xlu0 %v1373, 8
        %v1418 = vpop.permute.xlu0 %1417
        %1419 = vrot.lane.b32.xlu0 %v1374, 8
        %v1420 = vpop.permute.xlu0 %1419
        %1421 = vrot.lane.b32.xlu0 %v1375, 8
        %v1422 = vpop.permute.xlu0 %1421
        %1423 = vrot.lane.b32.xlu0 %v1376, 8
        %v1424 = vpop.permute.xlu0 %1423
        %vm1441 = vcmask 97344
        %1442 = vst.msk [vmem:[#allocation4] sm:$0xff] %vm1441, %v1394
        %1443 = vst.msk [vmem:[#allocation4 + $0x8] sm:$0xff] %vm1441, %v1396
        %1444 = vst.msk [vmem:[#allocation4 + $0x10] sm:$0xff] %vm1441, %v1398
        %1445 = vst.msk [vmem:[#allocation4 + $0x18] sm:$0xff] %vm1441, %v1400
        %1446 = vst.msk [vmem:[#allocation4 + $0x20] sm:$0xff] %vm1441, %v1402
        %1447 = vst.msk [vmem:[#allocation4 + $0x28] sm:$0xff] %vm1441, %v1404
        %1448 = vst.msk [vmem:[#allocation4 + $0x30] sm:$0xff] %vm1441, %v1406
        %1449 = vst.msk [vmem:[#allocation4 + $0x38] sm:$0xff] %vm1441, %v1408
        %1450 = vst.msk [vmem:[#allocation4 + $0x40] sm:$0xff] %vm1441, %v1410
        %1451 = vst.msk [vmem:[#allocation4 + $0x48] sm:$0xff] %vm1441, %v1412
        %1452 = vst.msk [vmem:[#allocation4 + $0x50] sm:$0xff] %vm1441, %v1414
        %1453 = vst.msk [vmem:[#allocation4 + $0x58] sm:$0xff] %vm1441, %v1416
        %1454 = vst.msk [vmem:[#allocation4 + $0x60] sm:$0xff] %vm1441, %v1418
        %1455 = vst.msk [vmem:[#allocation4 + $0x68] sm:$0xff] %vm1441, %v1420
        %1456 = vst.msk [vmem:[#allocation4 + $0x70] sm:$0xff] %vm1441, %v1422
        %1457 = vst.msk [vmem:[#allocation4 + $0x78] sm:$0xff] %vm1441, %v1424
        %v1458 = vld [vmem:[#allocation2 + $0x17] sm:$0xff]
        %v1459 = vld [vmem:[#allocation2 + $0x1f] sm:$0xff]
        %v1460 = vld [vmem:[#allocation2 + $0x27] sm:$0xff]
        %v1461 = vld [vmem:[#allocation2 + $0x2f] sm:$0xff]
        %v1462 = vld [vmem:[#allocation2 + $0x37] sm:$0xff]
        %v1463 = vld [vmem:[#allocation2 + $0x3f] sm:$0xff]
        %v1464 = vld [vmem:[#allocation2 + $0x47] sm:$0xff]
        %v1465 = vld [vmem:[#allocation2 + $0x4f] sm:$0xff]
        %v1466 = vld [vmem:[#allocation2 + $0x57] sm:$0xff]
        %v1467 = vld [vmem:[#allocation2 + $0x5f] sm:$0xff]
        %v1468 = vld [vmem:[#allocation2 + $0x67] sm:$0xff]
        %v1469 = vld [vmem:[#allocation2 + $0x6f] sm:$0xff]
        %v1470 = vld [vmem:[#allocation2 + $0x77] sm:$0xff]
        %v1471 = vld [vmem:[#allocation2 + $0x7f] sm:$0xff]
        %v1472 = vld [vmem:[#allocation2 + $0x87] sm:$0xff]
        %v1473 = vld [vmem:[#allocation2 + $0x8f] sm:$0xff]
        %v1474 = vld [vmem:[#allocation2 + $0x97] sm:$0xff]
        %v1475 = vld [vmem:[#allocation2 + $0x9f] sm:$0xff]
        %v1476 = vld [vmem:[#allocation2 + $0xa7] sm:$0xff]
        %v1477 = vld [vmem:[#allocation2 + $0xaf] sm:$0xff]
        %v1478 = vld [vmem:[#allocation2 + $0xb7] sm:$0xff]
        %v1479 = vld [vmem:[#allocation2 + $0xbf] sm:$0xff]
        %v1480 = vld [vmem:[#allocation2 + $0xc7] sm:$0xff]
        %v1481 = vld [vmem:[#allocation2 + $0xcf] sm:$0xff]
        %v1482 = vld [vmem:[#allocation2 + $0xd7] sm:$0xff]
        %v1483 = vld [vmem:[#allocation2 + $0xdf] sm:$0xff]
        %v1484 = vld [vmem:[#allocation2 + $0xe7] sm:$0xff]
        %v1485 = vld [vmem:[#allocation2 + $0xef] sm:$0xff]
        %v1486 = vld [vmem:[#allocation2 + $0xf7] sm:$0xff]
        %v1487 = vld [vmem:[#allocation2 + $0xff] sm:$0xff]
        %v1488 = vld [vmem:[#allocation2 + $0x107] sm:$0xff]
        %v1489 = vld [vmem:[#allocation2 + $0x10f] sm:$0xff]
        %v1490 = vmul.f32 %v1458, %v866
        %v1491 = vmul.f32 %v1459, %v867
        %v1492 = vmul.f32 %v1460, %v868
        %v1493 = vmul.f32 %v1461, %v869
        %v1494 = vmul.f32 %v1462, %v870
        %v1495 = vmul.f32 %v1463, %v871
        %v1496 = vmul.f32 %v1464, %v872
        %v1497 = vmul.f32 %v1465, %v873
        %v1498 = vmul.f32 %v1466, %v874
        %v1499 = vmul.f32 %v1467, %v875
        %v1500 = vmul.f32 %v1468, %v876
        %v1501 = vmul.f32 %v1469, %v877
        %v1502 = vmul.f32 %v1470, %v878
        %v1503 = vmul.f32 %v1471, %v879
        %v1504 = vmul.f32 %v1472, %v880
        %v1505 = vmul.f32 %v1473, %v881
        %v1506 = vmul.f32 %v1474, %v882
        %v1507 = vmul.f32 %v1475, %v883
        %v1508 = vmul.f32 %v1476, %v884
        %v1509 = vmul.f32 %v1477, %v885
        %v1510 = vmul.f32 %v1478, %v886
        %v1511 = vmul.f32 %v1479, %v887
        %v1512 = vmul.f32 %v1480, %v888
        %v1513 = vmul.f32 %v1481, %v889
        %v1514 = vmul.f32 %v1482, %v890
        %v1515 = vmul.f32 %v1483, %v891
        %v1516 = vmul.f32 %v1484, %v892
        %v1517 = vmul.f32 %v1485, %v893
        %v1518 = vmul.f32 %v1486, %v894
        %v1519 = vmul.f32 %v1487, %v895
        %v1520 = vmul.f32 %v1488, %v896
        %v1521 = vmul.f32 %v1489, %v897
        %v1522 = vpack.c.bf16 %v1491, %v1490
        %v1523 = vpack.c.bf16 %v1493, %v1492
        %v1524 = vpack.c.bf16 %v1495, %v1494
        %v1525 = vpack.c.bf16 %v1497, %v1496
        %v1526 = vpack.c.bf16 %v1499, %v1498
        %v1527 = vpack.c.bf16 %v1501, %v1500
        %v1528 = vpack.c.bf16 %v1503, %v1502
        %v1529 = vpack.c.bf16 %v1505, %v1504
        %v1530 = vpack.c.bf16 %v1507, %v1506
        %v1531 = vpack.c.bf16 %v1509, %v1508
        %v1532 = vpack.c.bf16 %v1511, %v1510
        %v1533 = vpack.c.bf16 %v1513, %v1512
        %v1534 = vpack.c.bf16 %v1515, %v1514
        %v1535 = vpack.c.bf16 %v1517, %v1516
        %v1536 = vpack.c.bf16 %v1519, %v1518
        %v1537 = vpack.c.bf16 %v1521, %v1520
        %1554 = vrot.lane.b32.xlu0 %v1522, 12
        %v1555 = vpop.permute.xlu0 %1554
        %1556 = vrot.lane.b32.xlu0 %v1523, 12
        %v1557 = vpop.permute.xlu0 %1556
        %1558 = vrot.lane.b32.xlu0 %v1524, 12
        %v1559 = vpop.permute.xlu0 %1558
        %1560 = vrot.lane.b32.xlu0 %v1525, 12
        %v1561 = vpop.permute.xlu0 %1560
        %1562 = vrot.lane.b32.xlu0 %v1526, 12
        %v1563 = vpop.permute.xlu0 %1562
        %1564 = vrot.lane.b32.xlu0 %v1527, 12
        %v1565 = vpop.permute.xlu0 %1564
        %1566 = vrot.lane.b32.xlu0 %v1528, 12
        %v1567 = vpop.permute.xlu0 %1566
        %1568 = vrot.lane.b32.xlu0 %v1529, 12
        %v1569 = vpop.permute.xlu0 %1568
        %1570 = vrot.lane.b32.xlu0 %v1530, 12
        %v1571 = vpop.permute.xlu0 %1570
        %1572 = vrot.lane.b32.xlu0 %v1531, 12
        %v1573 = vpop.permute.xlu0 %1572
        %1574 = vrot.lane.b32.xlu0 %v1532, 12
        %v1575 = vpop.permute.xlu0 %1574
        %1576 = vrot.lane.b32.xlu0 %v1533, 12
        %v1577 = vpop.permute.xlu0 %1576
        %1578 = vrot.lane.b32.xlu0 %v1534, 12
        %v1579 = vpop.permute.xlu0 %1578
        %1580 = vrot.lane.b32.xlu0 %v1535, 12
        %v1581 = vpop.permute.xlu0 %1580
        %1582 = vrot.lane.b32.xlu0 %v1536, 12
        %v1583 = vpop.permute.xlu0 %1582
        %1584 = vrot.lane.b32.xlu0 %v1537, 12
        %v1585 = vpop.permute.xlu0 %1584
        %vm1602 = vcmask 130144
        %1603 = vst.msk [vmem:[#allocation4] sm:$0xff] %vm1602, %v1555
        %1604 = vst.msk [vmem:[#allocation4 + $0x8] sm:$0xff] %vm1602, %v1557
        %1605 = vst.msk [vmem:[#allocation4 + $0x10] sm:$0xff] %vm1602, %v1559
        %1606 = vst.msk [vmem:[#allocation4 + $0x18] sm:$0xff] %vm1602, %v1561
        %1607 = vst.msk [vmem:[#allocation4 + $0x20] sm:$0xff] %vm1602, %v1563
        %1608 = vst.msk [vmem:[#allocation4 + $0x28] sm:$0xff] %vm1602, %v1565
        %1609 = vst.msk [vmem:[#allocation4 + $0x30] sm:$0xff] %vm1602, %v1567
        %1610 = vst.msk [vmem:[#allocation4 + $0x38] sm:$0xff] %vm1602, %v1569
        %1611 = vst.msk [vmem:[#allocation4 + $0x40] sm:$0xff] %vm1602, %v1571
        %1612 = vst.msk [vmem:[#allocation4 + $0x48] sm:$0xff] %vm1602, %v1573
        %1613 = vst.msk [vmem:[#allocation4 + $0x50] sm:$0xff] %vm1602, %v1575
        %1614 = vst.msk [vmem:[#allocation4 + $0x58] sm:$0xff] %vm1602, %v1577
        %1615 = vst.msk [vmem:[#allocation4 + $0x60] sm:$0xff] %vm1602, %v1579
        %1616 = vst.msk [vmem:[#allocation4 + $0x68] sm:$0xff] %vm1602, %v1581
        %1617 = vst.msk [vmem:[#allocation4 + $0x70] sm:$0xff] %vm1602, %v1583
        %1618 = vst.msk [vmem:[#allocation4 + $0x78] sm:$0xff] %vm1602, %v1585
        %v1619 = vld [vmem:[#allocation2 + $0x18] sm:$0xff]
        %v1620 = vld [vmem:[#allocation2 + $0x20] sm:$0xff]
        %v1621 = vld [vmem:[#allocation2 + $0x28] sm:$0xff]
        %v1622 = vld [vmem:[#allocation2 + $0x30] sm:$0xff]
        %v1623 = vld [vmem:[#allocation2 + $0x38] sm:$0xff]
        %v1624 = vld [vmem:[#allocation2 + $0x40] sm:$0xff]
        %v1625 = vld [vmem:[#allocation2 + $0x48] sm:$0xff]
        %v1626 = vld [vmem:[#allocation2 + $0x50] sm:$0xff]
        %v1627 = vld [vmem:[#allocation2 + $0x58] sm:$0xff]
        %v1628 = vld [vmem:[#allocation2 + $0x60] sm:$0xff]
        %v1629 = vld [vmem:[#allocation2 + $0x68] sm:$0xff]
        %v1630 = vld [vmem:[#allocation2 + $0x70] sm:$0xff]
        %v1631 = vld [vmem:[#allocation2 + $0x78] sm:$0xff]
        %v1632 = vld [vmem:[#allocation2 + $0x80] sm:$0xff]
        %v1633 = vld [vmem:[#allocation2 + $0x88] sm:$0xff]
        %v1634 = vld [vmem:[#allocation2 + $0x90] sm:$0xff]
        %v1635 = vld [vmem:[#allocation2 + $0x98] sm:$0xff]
        %v1636 = vld [vmem:[#allocation2 + $0xa0] sm:$0xff]
        %v1637 = vld [vmem:[#allocation2 + $0xa8] sm:$0xff]
        %v1638 = vld [vmem:[#allocation2 + $0xb0] sm:$0xff]
        %v1639 = vld [vmem:[#allocation2 + $0xb8] sm:$0xff]
        %v1640 = vld [vmem:[#allocation2 + $0xc0] sm:$0xff]
        %v1641 = vld [vmem:[#allocation2 + $0xc8] sm:$0xff]
        %v1642 = vld [vmem:[#allocation2 + $0xd0] sm:$0xff]
        %v1643 = vld [vmem:[#allocation2 + $0xd8] sm:$0xff]
        %v1644 = vld [vmem:[#allocation2 + $0xe0] sm:$0xff]
        %v1645 = vld [vmem:[#allocation2 + $0xe8] sm:$0xff]
        %v1646 = vld [vmem:[#allocation2 + $0xf0] sm:$0xff]
        %v1647 = vld [vmem:[#allocation2 + $0xf8] sm:$0xff]
        %v1648 = vld [vmem:[#allocation2 + $0x100] sm:$0xff]
        %v1649 = vld [vmem:[#allocation2 + $0x108] sm:$0xff]
        %v1650 = vld [vmem:[#allocation2 + $0x110] sm:$0xff]
        %v1651 = vpack.c.bf16 %v1620, %v1619
        %v1652 = vpack.c.bf16 %v1622, %v1621
        %v1653 = vpack.c.bf16 %v1624, %v1623
        %v1654 = vpack.c.bf16 %v1626, %v1625
        %v1655 = vpack.c.bf16 %v1628, %v1627
        %v1656 = vpack.c.bf16 %v1630, %v1629
        %v1657 = vpack.c.bf16 %v1632, %v1631
        %v1658 = vpack.c.bf16 %v1634, %v1633
        %v1659 = vpack.c.bf16 %v1636, %v1635
        %v1660 = vpack.c.bf16 %v1638, %v1637
        %v1661 = vpack.c.bf16 %v1640, %v1639
        %v1662 = vpack.c.bf16 %v1642, %v1641
        %v1663 = vpack.c.bf16 %v1644, %v1643
        %v1664 = vpack.c.bf16 %v1646, %v1645
        %v1665 = vpack.c.bf16 %v1648, %v1647
        %v1666 = vpack.c.bf16 %v1650, %v1649
        %1683 = vrot.lane.b32.xlu0 %v1651, 16
        %v1684 = vpop.permute.xlu0 %1683
        %1685 = vrot.lane.b32.xlu0 %v1652, 16
        %v1686 = vpop.permute.xlu0 %1685
        %1687 = vrot.lane.b32.xlu0 %v1653, 16
        %v1688 = vpop.permute.xlu0 %1687
        %1689 = vrot.lane.b32.xlu0 %v1654, 16
        %v1690 = vpop.permute.xlu0 %1689
        %1691 = vrot.lane.b32.xlu0 %v1655, 16
        %v1692 = vpop.permute.xlu0 %1691
        %1693 = vrot.lane.b32.xlu0 %v1656, 16
        %v1694 = vpop.permute.xlu0 %1693
        %1695 = vrot.lane.b32.xlu0 %v1657, 16
        %v1696 = vpop.permute.xlu0 %1695
        %1697 = vrot.lane.b32.xlu0 %v1658, 16
        %v1698 = vpop.permute.xlu0 %1697
        %1699 = vrot.lane.b32.xlu0 %v1659, 16
        %v1700 = vpop.permute.xlu0 %1699
        %1701 = vrot.lane.b32.xlu0 %v1660, 16
        %v1702 = vpop.permute.xlu0 %1701
        %1703 = vrot.lane.b32.xlu0 %v1661, 16
        %v1704 = vpop.permute.xlu0 %1703
        %1705 = vrot.lane.b32.xlu0 %v1662, 16
        %v1706 = vpop.permute.xlu0 %1705
        %1707 = vrot.lane.b32.xlu0 %v1663, 16
        %v1708 = vpop.permute.xlu0 %1707
        %1709 = vrot.lane.b32.xlu0 %v1664, 16
        %v1710 = vpop.permute.xlu0 %1709
        %1711 = vrot.lane.b32.xlu0 %v1665, 16
        %v1712 = vpop.permute.xlu0 %1711
        %1713 = vrot.lane.b32.xlu0 %v1666, 16
        %v1714 = vpop.permute.xlu0 %1713
        %vm1731 = vcmask 162944
        %1732 = vst.msk [vmem:[#allocation4] sm:$0xff] %vm1731, %v1684
        %1733 = vst.msk [vmem:[#allocation4 + $0x8] sm:$0xff] %vm1731, %v1686
        %1734 = vst.msk [vmem:[#allocation4 + $0x10] sm:$0xff] %vm1731, %v1688
        %1735 = vst.msk [vmem:[#allocation4 + $0x18] sm:$0xff] %vm1731, %v1690
        %1736 = vst.msk [vmem:[#allocation4 + $0x20] sm:$0xff] %vm1731, %v1692
        %1737 = vst.msk [vmem:[#allocation4 + $0x28] sm:$0xff] %vm1731, %v1694
        %1738 = vst.msk [vmem:[#allocation4 + $0x30] sm:$0xff] %vm1731, %v1696
        %1739 = vst.msk [vmem:[#allocation4 + $0x38] sm:$0xff] %vm1731, %v1698
        %1740 = vst.msk [vmem:[#allocation4 + $0x40] sm:$0xff] %vm1731, %v1700
        %1741 = vst.msk [vmem:[#allocation4 + $0x48] sm:$0xff] %vm1731, %v1702
        %1742 = vst.msk [vmem:[#allocation4 + $0x50] sm:$0xff] %vm1731, %v1704
        %1743 = vst.msk [vmem:[#allocation4 + $0x58] sm:$0xff] %vm1731, %v1706
        %1744 = vst.msk [vmem:[#allocation4 + $0x60] sm:$0xff] %vm1731, %v1708
        %1745 = vst.msk [vmem:[#allocation4 + $0x68] sm:$0xff] %vm1731, %v1710
        %1746 = vst.msk [vmem:[#allocation4 + $0x70] sm:$0xff] %vm1731, %v1712
        %1747 = vst.msk [vmem:[#allocation4 + $0x78] sm:$0xff] %vm1731, %v1714
        %v1748 = vld [vmem:[#allocation2 + $0x19] sm:$0xff]
        %v1749 = vld [vmem:[#allocation2 + $0x21] sm:$0xff]
        %v1750 = vld [vmem:[#allocation2 + $0x29] sm:$0xff]
        %v1751 = vld [vmem:[#allocation2 + $0x31] sm:$0xff]
        %v1752 = vld [vmem:[#allocation2 + $0x39] sm:$0xff]
        %v1753 = vld [vmem:[#allocation2 + $0x41] sm:$0xff]
        %v1754 = vld [vmem:[#allocation2 + $0x49] sm:$0xff]
        %v1755 = vld [vmem:[#allocation2 + $0x51] sm:$0xff]
        %v1756 = vld [vmem:[#allocation2 + $0x59] sm:$0xff]
        %v1757 = vld [vmem:[#allocation2 + $0x61] sm:$0xff]
        %v1758 = vld [vmem:[#allocation2 + $0x69] sm:$0xff]
        %v1759 = vld [vmem:[#allocation2 + $0x71] sm:$0xff]
        %v1760 = vld [vmem:[#allocation2 + $0x79] sm:$0xff]
        %v1761 = vld [vmem:[#allocation2 + $0x81] sm:$0xff]
        %v1762 = vld [vmem:[#allocation2 + $0x89] sm:$0xff]
        %v1763 = vld [vmem:[#allocation2 + $0x91] sm:$0xff]
        %v1764 = vld [vmem:[#allocation2 + $0x99] sm:$0xff]
        %v1765 = vld [vmem:[#allocation2 + $0xa1] sm:$0xff]
        %v1766 = vld [vmem:[#allocation2 + $0xa9] sm:$0xff]
        %v1767 = vld [vmem:[#allocation2 + $0xb1] sm:$0xff]
        %v1768 = vld [vmem:[#allocation2 + $0xb9] sm:$0xff]
        %v1769 = vld [vmem:[#allocation2 + $0xc1] sm:$0xff]
        %v1770 = vld [vmem:[#allocation2 + $0xc9] sm:$0xff]
        %v1771 = vld [vmem:[#allocation2 + $0xd1] sm:$0xff]
        %v1772 = vld [vmem:[#allocation2 + $0xd9] sm:$0xff]
        %v1773 = vld [vmem:[#allocation2 + $0xe1] sm:$0xff]
        %v1774 = vld [vmem:[#allocation2 + $0xe9] sm:$0xff]
        %v1775 = vld [vmem:[#allocation2 + $0xf1] sm:$0xff]
        %v1776 = vld [vmem:[#allocation2 + $0xf9] sm:$0xff]
        %v1777 = vld [vmem:[#allocation2 + $0x101] sm:$0xff]
        %v1778 = vld [vmem:[#allocation2 + $0x109] sm:$0xff]
        %v1779 = vld [vmem:[#allocation2 + $0x111] sm:$0xff]
        %v1780 = vmul.f32 %v1748, %v962
        %v1781 = vmul.f32 %v1749, %v963
        %v1782 = vmul.f32 %v1750, %v964
        %v1783 = vmul.f32 %v1751, %v965
        %v1784 = vmul.f32 %v1752, %v966
        %v1785 = vmul.f32 %v1753, %v967
        %v1786 = vmul.f32 %v1754, %v968
        %v1787 = vmul.f32 %v1755, %v969
        %v1788 = vmul.f32 %v1756, %v970
        %v1789 = vmul.f32 %v1757, %v971
        %v1790 = vmul.f32 %v1758, %v972
        %v1791 = vmul.f32 %v1759, %v973
        %v1792 = vmul.f32 %v1760, %v974
        %v1793 = vmul.f32 %v1761, %v975
        %v1794 = vmul.f32 %v1762, %v976
        %v1795 = vmul.f32 %v1763, %v977
        %v1796 = vmul.f32 %v1764, %v978
        %v1797 = vmul.f32 %v1765, %v979
        %v1798 = vmul.f32 %v1766, %v980
        %v1799 = vmul.f32 %v1767, %v981
        %v1800 = vmul.f32 %v1768, %v982
        %v1801 = vmul.f32 %v1769, %v983
        %v1802 = vmul.f32 %v1770, %v984
        %v1803 = vmul.f32 %v1771, %v985
        %v1804 = vmul.f32 %v1772, %v986
        %v1805 = vmul.f32 %v1773, %v987
        %v1806 = vmul.f32 %v1774, %v988
        %v1807 = vmul.f32 %v1775, %v989
        %v1808 = vmul.f32 %v1776, %v990
        %v1809 = vmul.f32 %v1777, %v991
        %v1810 = vmul.f32 %v1778, %v992
        %v1811 = vmul.f32 %v1779, %v993
        %v1812 = vpack.c.bf16 %v1781, %v1780
        %v1813 = vpack.c.bf16 %v1783, %v1782
        %v1814 = vpack.c.bf16 %v1785, %v1784
        %v1815 = vpack.c.bf16 %v1787, %v1786
        %v1816 = vpack.c.bf16 %v1789, %v1788
        %v1817 = vpack.c.bf16 %v1791, %v1790
        %v1818 = vpack.c.bf16 %v1793, %v1792
        %v1819 = vpack.c.bf16 %v1795, %v1794
        %v1820 = vpack.c.bf16 %v1797, %v1796
        %v1821 = vpack.c.bf16 %v1799, %v1798
        %v1822 = vpack.c.bf16 %v1801, %v1800
        %v1823 = vpack.c.bf16 %v1803, %v1802
        %v1824 = vpack.c.bf16 %v1805, %v1804
        %v1825 = vpack.c.bf16 %v1807, %v1806
        %v1826 = vpack.c.bf16 %v1809, %v1808
        %v1827 = vpack.c.bf16 %v1811, %v1810
        %1844 = vrot.lane.b32.xlu0 %v1812, 20
        %v1845 = vpop.permute.xlu0 %1844
        %1846 = vrot.lane.b32.xlu0 %v1813, 20
        %v1847 = vpop.permute.xlu0 %1846
        %1848 = vrot.lane.b32.xlu0 %v1814, 20
        %v1849 = vpop.permute.xlu0 %1848
        %1850 = vrot.lane.b32.xlu0 %v1815, 20
        %v1851 = vpop.permute.xlu0 %1850
        %1852 = vrot.lane.b32.xlu0 %v1816, 20
        %v1853 = vpop.permute.xlu0 %1852
        %1854 = vrot.lane.b32.xlu0 %v1817, 20
        %v1855 = vpop.permute.xlu0 %1854
        %1856 = vrot.lane.b32.xlu0 %v1818, 20
        %v1857 = vpop.permute.xlu0 %1856
        %1858 = vrot.lane.b32.xlu0 %v1819, 20
        %v1859 = vpop.permute.xlu0 %1858
        %1860 = vrot.lane.b32.xlu0 %v1820, 20
        %v1861 = vpop.permute.xlu0 %1860
        %1862 = vrot.lane.b32.xlu0 %v1821, 20
        %v1863 = vpop.permute.xlu0 %1862
        %1864 = vrot.lane.b32.xlu0 %v1822, 20
        %v1865 = vpop.permute.xlu0 %1864
        %1866 = vrot.lane.b32.xlu0 %v1823, 20
        %v1867 = vpop.permute.xlu0 %1866
        %1868 = vrot.lane.b32.xlu0 %v1824, 20
        %v1869 = vpop.permute.xlu0 %1868
        %1870 = vrot.lane.b32.xlu0 %v1825, 20
        %v1871 = vpop.permute.xlu0 %1870
        %1872 = vrot.lane.b32.xlu0 %v1826, 20
        %v1873 = vpop.permute.xlu0 %1872
        %1874 = vrot.lane.b32.xlu0 %v1827, 20
        %v1875 = vpop.permute.xlu0 %1874
        %vm1892 = vcmask 195744
        %1893 = vst.msk [vmem:[#allocation4] sm:$0xff] %vm1892, %v1845
        %1894 = vst.msk [vmem:[#allocation4 + $0x8] sm:$0xff] %vm1892, %v1847
        %1895 = vst.msk [vmem:[#allocation4 + $0x10] sm:$0xff] %vm1892, %v1849
        %1896 = vst.msk [vmem:[#allocation4 + $0x18] sm:$0xff] %vm1892, %v1851
        %1897 = vst.msk [vmem:[#allocation4 + $0x20] sm:$0xff] %vm1892, %v1853
        %1898 = vst.msk [vmem:[#allocation4 + $0x28] sm:$0xff] %vm1892, %v1855
        %1899 = vst.msk [vmem:[#allocation4 + $0x30] sm:$0xff] %vm1892, %v1857
        %1900 = vst.msk [vmem:[#allocation4 + $0x38] sm:$0xff] %vm1892, %v1859
        %1901 = vst.msk [vmem:[#allocation4 + $0x40] sm:$0xff] %vm1892, %v1861
        %1902 = vst.msk [vmem:[#allocation4 + $0x48] sm:$0xff] %vm1892, %v1863
        %1903 = vst.msk [vmem:[#allocation4 + $0x50] sm:$0xff] %vm1892, %v1865
        %1904 = vst.msk [vmem:[#allocation4 + $0x58] sm:$0xff] %vm1892, %v1867
        %1905 = vst.msk [vmem:[#allocation4 + $0x60] sm:$0xff] %vm1892, %v1869
        %1906 = vst.msk [vmem:[#allocation4 + $0x68] sm:$0xff] %vm1892, %v1871
        %1907 = vst.msk [vmem:[#allocation4 + $0x70] sm:$0xff] %vm1892, %v1873
        %1908 = vst.msk [vmem:[#allocation4 + $0x78] sm:$0xff] %vm1892, %v1875
        %v1909 = vld [vmem:[#allocation2 + $0x27] sm:$0xff]
        %v1910 = vld [vmem:[#allocation2 + $0x2f] sm:$0xff]
        %v1911 = vld [vmem:[#allocation2 + $0x37] sm:$0xff]
        %v1912 = vld [vmem:[#allocation2 + $0x3f] sm:$0xff]
        %v1913 = vld [vmem:[#allocation2 + $0x47] sm:$0xff]
        %v1914 = vld [vmem:[#allocation2 + $0x4f] sm:$0xff]
        %v1915 = vld [vmem:[#allocation2 + $0x57] sm:$0xff]
        %v1916 = vld [vmem:[#allocation2 + $0x5f] sm:$0xff]
        %v1917 = vld [vmem:[#allocation2 + $0x67] sm:$0xff]
        %v1918 = vld [vmem:[#allocation2 + $0x6f] sm:$0xff]
        %v1919 = vld [vmem:[#allocation2 + $0x77] sm:$0xff]
        %v1920 = vld [vmem:[#allocation2 + $0x7f] sm:$0xff]
        %v1921 = vld [vmem:[#allocation2 + $0x87] sm:$0xff]
        %v1922 = vld [vmem:[#allocation2 + $0x8f] sm:$0xff]
        %v1923 = vld [vmem:[#allocation2 + $0x97] sm:$0xff]
        %v1924 = vld [vmem:[#allocation2 + $0x9f] sm:$0xff]
        %v1925 = vld [vmem:[#allocation2 + $0xa7] sm:$0xff]
        %v1926 = vld [vmem:[#allocation2 + $0xaf] sm:$0xff]
        %v1927 = vld [vmem:[#allocation2 + $0xb7] sm:$0xff]
        %v1928 = vld [vmem:[#allocation2 + $0xbf] sm:$0xff]
        %v1929 = vld [vmem:[#allocation2 + $0xc7] sm:$0xff]
        %v1930 = vld [vmem:[#allocation2 + $0xcf] sm:$0xff]
        %v1931 = vld [vmem:[#allocation2 + $0xd7] sm:$0xff]
        %v1932 = vld [vmem:[#allocation2 + $0xdf] sm:$0xff]
        %v1933 = vld [vmem:[#allocation2 + $0xe7] sm:$0xff]
        %v1934 = vld [vmem:[#allocation2 + $0xef] sm:$0xff]
        %v1935 = vld [vmem:[#allocation2 + $0xf7] sm:$0xff]
        %v1936 = vld [vmem:[#allocation2 + $0xff] sm:$0xff]
        %v1937 = vld [vmem:[#allocation2 + $0x107] sm:$0xff]
        %v1938 = vld [vmem:[#allocation2 + $0x10f] sm:$0xff]
        %v1939 = vld [vmem:[#allocation2 + $0x117] sm:$0xff]
        %v1940 = vld [vmem:[#allocation2 + $0x11f] sm:$0xff]
        %v1941 = vmul.f32 %v1909, %v866
        %v1942 = vmul.f32 %v1910, %v867
        %v1943 = vmul.f32 %v1911, %v868
        %v1944 = vmul.f32 %v1912, %v869
        %v1945 = vmul.f32 %v1913, %v870
        %v1946 = vmul.f32 %v1914, %v871
        %v1947 = vmul.f32 %v1915, %v872
        %v1948 = vmul.f32 %v1916, %v873
        %v1949 = vmul.f32 %v1917, %v874
        %v1950 = vmul.f32 %v1918, %v875
        %v1951 = vmul.f32 %v1919, %v876
        %v1952 = vmul.f32 %v1920, %v877
        %v1953 = vmul.f32 %v1921, %v878
        %v1954 = vmul.f32 %v1922, %v879
        %v1955 = vmul.f32 %v1923, %v880
        %v1956 = vmul.f32 %v1924, %v881
        %v1957 = vmul.f32 %v1925, %v882
        %v1958 = vmul.f32 %v1926, %v883
        %v1959 = vmul.f32 %v1927, %v884
        %v1960 = vmul.f32 %v1928, %v885
        %v1961 = vmul.f32 %v1929, %v886
        %v1962 = vmul.f32 %v1930, %v887
        %v1963 = vmul.f32 %v1931, %v888
        %v1964 = vmul.f32 %v1932, %v889
        %v1965 = vmul.f32 %v1933, %v890
        %v1966 = vmul.f32 %v1934, %v891
        %v1967 = vmul.f32 %v1935, %v892
        %v1968 = vmul.f32 %v1936, %v893
        %v1969 = vmul.f32 %v1937, %v894
        %v1970 = vmul.f32 %v1938, %v895
        %v1971 = vmul.f32 %v1939, %v896
        %v1972 = vmul.f32 %v1940, %v897
        %v1973 = vpack.c.bf16 %v1942, %v1941
        %v1974 = vpack.c.bf16 %v1944, %v1943
        %v1975 = vpack.c.bf16 %v1946, %v1945
        %v1976 = vpack.c.bf16 %v1948, %v1947
        %v1977 = vpack.c.bf16 %v1950, %v1949
        %v1978 = vpack.c.bf16 %v1952, %v1951
        %v1979 = vpack.c.bf16 %v1954, %v1953
        %v1980 = vpack.c.bf16 %v1956, %v1955
        %v1981 = vpack.c.bf16 %v1958, %v1957
        %v1982 = vpack.c.bf16 %v1960, %v1959
        %v1983 = vpack.c.bf16 %v1962, %v1961
        %v1984 = vpack.c.bf16 %v1964, %v1963
        %v1985 = vpack.c.bf16 %v1966, %v1965
        %v1986 = vpack.c.bf16 %v1968, %v1967
        %v1987 = vpack.c.bf16 %v1970, %v1969
        %v1988 = vpack.c.bf16 %v1972, %v1971
        %2005 = vrot.lane.b32.xlu0 %v1973, 24
        %v2006 = vpop.permute.xlu0 %2005
        %2007 = vrot.lane.b32.xlu0 %v1974, 24
        %v2008 = vpop.permute.xlu0 %2007
        %2009 = vrot.lane.b32.xlu0 %v1975, 24
        %v2010 = vpop.permute.xlu0 %2009
        %2011 = vrot.lane.b32.xlu0 %v1976, 24
        %v2012 = vpop.permute.xlu0 %2011
        %2013 = vrot.lane.b32.xlu0 %v1977, 24
        %v2014 = vpop.permute.xlu0 %2013
        %2015 = vrot.lane.b32.xlu0 %v1978, 24
        %v2016 = vpop.permute.xlu0 %2015
        %2017 = vrot.lane.b32.xlu0 %v1979, 24
        %v2018 = vpop.permute.xlu0 %2017
        %2019 = vrot.lane.b32.xlu0 %v1980, 24
        %v2020 = vpop.permute.xlu0 %2019
        %2021 = vrot.lane.b32.xlu0 %v1981, 24
        %v2022 = vpop.permute.xlu0 %2021
        %2023 = vrot.lane.b32.xlu0 %v1982, 24
        %v2024 = vpop.permute.xlu0 %2023
        %2025 = vrot.lane.b32.xlu0 %v1983, 24
        %v2026 = vpop.permute.xlu0 %2025
        %2027 = vrot.lane.b32.xlu0 %v1984, 24
        %v2028 = vpop.permute.xlu0 %2027
        %2029 = vrot.lane.b32.xlu0 %v1985, 24
        %v2030 = vpop.permute.xlu0 %2029
        %2031 = vrot.lane.b32.xlu0 %v1986, 24
        %v2032 = vpop.permute.xlu0 %2031
        %2033 = vrot.lane.b32.xlu0 %v1987, 24
        %v2034 = vpop.permute.xlu0 %2033
        %2035 = vrot.lane.b32.xlu0 %v1988, 24
        %v2036 = vpop.permute.xlu0 %2035
        %vm2053 = vcmask 228544
        %2054 = vst.msk [vmem:[#allocation4] sm:$0xff] %vm2053, %v2006
        %2055 = vst.msk [vmem:[#allocation4 + $0x8] sm:$0xff] %vm2053, %v2008
        %2056 = vst.msk [vmem:[#allocation4 + $0x10] sm:$0xff] %vm2053, %v2010
        %2057 = vst.msk [vmem:[#allocation4 + $0x18] sm:$0xff] %vm2053, %v2012
        %2058 = vst.msk [vmem:[#allocation4 + $0x20] sm:$0xff] %vm2053, %v2014
        %2059 = vst.msk [vmem:[#allocation4 + $0x28] sm:$0xff] %vm2053, %v2016
        %2060 = vst.msk [vmem:[#allocation4 + $0x30] sm:$0xff] %vm2053, %v2018
        %2061 = vst.msk [vmem:[#allocation4 + $0x38] sm:$0xff] %vm2053, %v2020
        %2062 = vst.msk [vmem:[#allocation4 + $0x40] sm:$0xff] %vm2053, %v2022
        %2063 = vst.msk [vmem:[#allocation4 + $0x48] sm:$0xff] %vm2053, %v2024
        %2064 = vst.msk [vmem:[#allocation4 + $0x50] sm:$0xff] %vm2053, %v2026
        %2065 = vst.msk [vmem:[#allocation4 + $0x58] sm:$0xff] %vm2053, %v2028
        %2066 = vst.msk [vmem:[#allocation4 + $0x60] sm:$0xff] %vm2053, %v2030
        %2067 = vst.msk [vmem:[#allocation4 + $0x68] sm:$0xff] %vm2053, %v2032
        %2068 = vst.msk [vmem:[#allocation4 + $0x70] sm:$0xff] %vm2053, %v2034
        %2069 = vst.msk [vmem:[#allocation4 + $0x78] sm:$0xff] %vm2053, %v2036
        %v2070 = vld [vmem:[#allocation2 + $0x28] sm:$0xff]
        %v2071 = vld [vmem:[#allocation2 + $0x30] sm:$0xff]
        %v2072 = vld [vmem:[#allocation2 + $0x38] sm:$0xff]
        %v2073 = vld [vmem:[#allocation2 + $0x40] sm:$0xff]
        %v2074 = vld [vmem:[#allocation2 + $0x48] sm:$0xff]
        %v2075 = vld [vmem:[#allocation2 + $0x50] sm:$0xff]
        %v2076 = vld [vmem:[#allocation2 + $0x58] sm:$0xff]
        %v2077 = vld [vmem:[#allocation2 + $0x60] sm:$0xff]
        %v2078 = vld [vmem:[#allocation2 + $0x68] sm:$0xff]
        %v2079 = vld [vmem:[#allocation2 + $0x70] sm:$0xff]
        %v2080 = vld [vmem:[#allocation2 + $0x78] sm:$0xff]
        %v2081 = vld [vmem:[#allocation2 + $0x80] sm:$0xff]
        %v2082 = vld [vmem:[#allocation2 + $0x88] sm:$0xff]
        %v2083 = vld [vmem:[#allocation2 + $0x90] sm:$0xff]
        %v2084 = vld [vmem:[#allocation2 + $0x98] sm:$0xff]
        %v2085 = vld [vmem:[#allocation2 + $0xa0] sm:$0xff]
        %v2086 = vld [vmem:[#allocation2 + $0xa8] sm:$0xff]
        %v2087 = vld [vmem:[#allocation2 + $0xb0] sm:$0xff]
        %v2088 = vld [vmem:[#allocation2 + $0xb8] sm:$0xff]
        %v2089 = vld [vmem:[#allocation2 + $0xc0] sm:$0xff]
        %v2090 = vld [vmem:[#allocation2 + $0xc8] sm:$0xff]
        %v2091 = vld [vmem:[#allocation2 + $0xd0] sm:$0xff]
        %v2092 = vld [vmem:[#allocation2 + $0xd8] sm:$0xff]
        %v2093 = vld [vmem:[#allocation2 + $0xe0] sm:$0xff]
        %v2094 = vld [vmem:[#allocation2 + $0xe8] sm:$0xff]
        %v2095 = vld [vmem:[#allocation2 + $0xf0] sm:$0xff]
        %v2096 = vld [vmem:[#allocation2 + $0xf8] sm:$0xff]
        %v2097 = vld [vmem:[#allocation2 + $0x100] sm:$0xff]
        %v2098 = vld [vmem:[#allocation2 + $0x108] sm:$0xff]
        %v2099 = vld [vmem:[#allocation2 + $0x110] sm:$0xff]
        %v2100 = vld [vmem:[#allocation2 + $0x118] sm:$0xff]
        %v2101 = vld [vmem:[#allocation2 + $0x120] sm:$0xff]
        %v2102 = vpack.c.bf16 %v2071, %v2070
        %v2103 = vpack.c.bf16 %v2073, %v2072
        %v2104 = vpack.c.bf16 %v2075, %v2074
        %v2105 = vpack.c.bf16 %v2077, %v2076
        %v2106 = vpack.c.bf16 %v2079, %v2078
        %v2107 = vpack.c.bf16 %v2081, %v2080
        %v2108 = vpack.c.bf16 %v2083, %v2082
        %v2109 = vpack.c.bf16 %v2085, %v2084
        %v2110 = vpack.c.bf16 %v2087, %v2086
        %v2111 = vpack.c.bf16 %v2089, %v2088
        %v2112 = vpack.c.bf16 %v2091, %v2090
        %v2113 = vpack.c.bf16 %v2093, %v2092
        %v2114 = vpack.c.bf16 %v2095, %v2094
        %v2115 = vpack.c.bf16 %v2097, %v2096
        %v2116 = vpack.c.bf16 %v2099, %v2098
        %v2117 = vpack.c.bf16 %v2101, %v2100
        %2134 = vrot.lane.b32.xlu0 %v2102, 28
        %v2135 = vpop.permute.xlu0 %2134
        %2136 = vrot.lane.b32.xlu0 %v2103, 28
        %v2137 = vpop.permute.xlu0 %2136
        %2138 = vrot.lane.b32.xlu0 %v2104, 28
        %v2139 = vpop.permute.xlu0 %2138
        %2140 = vrot.lane.b32.xlu0 %v2105, 28
        %v2141 = vpop.permute.xlu0 %2140
        %2142 = vrot.lane.b32.xlu0 %v2106, 28
        %v2143 = vpop.permute.xlu0 %2142
        %2144 = vrot.lane.b32.xlu0 %v2107, 28
        %v2145 = vpop.permute.xlu0 %2144
        %2146 = vrot.lane.b32.xlu0 %v2108, 28
        %v2147 = vpop.permute.xlu0 %2146
        %2148 = vrot.lane.b32.xlu0 %v2109, 28
        %v2149 = vpop.permute.xlu0 %2148
        %2150 = vrot.lane.b32.xlu0 %v2110, 28
        %v2151 = vpop.permute.xlu0 %2150
        %2152 = vrot.lane.b32.xlu0 %v2111, 28
        %v2153 = vpop.permute.xlu0 %2152
        %2154 = vrot.lane.b32.xlu0 %v2112, 28
        %v2155 = vpop.permute.xlu0 %2154
        %2156 = vrot.lane.b32.xlu0 %v2113, 28
        %v2157 = vpop.permute.xlu0 %2156
        %2158 = vrot.lane.b32.xlu0 %v2114, 28
        %v2159 = vpop.permute.xlu0 %2158
        %2160 = vrot.lane.b32.xlu0 %v2115, 28
        %v2161 = vpop.permute.xlu0 %2160
        %2162 = vrot.lane.b32.xlu0 %v2116, 28
        %v2163 = vpop.permute.xlu0 %2162
        %2164 = vrot.lane.b32.xlu0 %v2117, 28
        %v2165 = vpop.permute.xlu0 %2164
        %vm2182 = vcmask 261344
        %2183 = vst.msk [vmem:[#allocation4] sm:$0xff] %vm2182, %v2135
        %2184 = vst.msk [vmem:[#allocation4 + $0x8] sm:$0xff] %vm2182, %v2137
        %2185 = vst.msk [vmem:[#allocation4 + $0x10] sm:$0xff] %vm2182, %v2139
        %2186 = vst.msk [vmem:[#allocation4 + $0x18] sm:$0xff] %vm2182, %v2141
        %2187 = vst.msk [vmem:[#allocation4 + $0x20] sm:$0xff] %vm2182, %v2143
        %2188 = vst.msk [vmem:[#allocation4 + $0x28] sm:$0xff] %vm2182, %v2145
        %2189 = vst.msk [vmem:[#allocation4 + $0x30] sm:$0xff] %vm2182, %v2147
        %2190 = vst.msk [vmem:[#allocation4 + $0x38] sm:$0xff] %vm2182, %v2149
        %2191 = vst.msk [vmem:[#allocation4 + $0x40] sm:$0xff] %vm2182, %v2151
        %2192 = vst.msk [vmem:[#allocation4 + $0x48] sm:$0xff] %vm2182, %v2153
        %2193 = vst.msk [vmem:[#allocation4 + $0x50] sm:$0xff] %vm2182, %v2155
        %2194 = vst.msk [vmem:[#allocation4 + $0x58] sm:$0xff] %vm2182, %v2157
        %2195 = vst.msk [vmem:[#allocation4 + $0x60] sm:$0xff] %vm2182, %v2159
        %2196 = vst.msk [vmem:[#allocation4 + $0x68] sm:$0xff] %vm2182, %v2161
        %2197 = vst.msk [vmem:[#allocation4 + $0x70] sm:$0xff] %vm2182, %v2163
        %2198 = vst.msk [vmem:[#allocation4 + $0x78] sm:$0xff] %vm2182, %v2165
        %v2199 = vld [vmem:[#allocation2 + $0x29] sm:$0xff]
        %v2200 = vld [vmem:[#allocation2 + $0x31] sm:$0xff]
        %v2201 = vld [vmem:[#allocation2 + $0x39] sm:$0xff]
        %v2202 = vld [vmem:[#allocation2 + $0x41] sm:$0xff]
        %v2203 = vld [vmem:[#allocation2 + $0x49] sm:$0xff]
        %v2204 = vld [vmem:[#allocation2 + $0x51] sm:$0xff]
        %v2205 = vld [vmem:[#allocation2 + $0x59] sm:$0xff]
        %v2206 = vld [vmem:[#allocation2 + $0x61] sm:$0xff]
        %v2207 = vld [vmem:[#allocation2 + $0x69] sm:$0xff]
        %v2208 = vld [vmem:[#allocation2 + $0x71] sm:$0xff]
        %v2209 = vld [vmem:[#allocation2 + $0x79] sm:$0xff]
        %v2210 = vld [vmem:[#allocation2 + $0x81] sm:$0xff]
        %v2211 = vld [vmem:[#allocation2 + $0x89] sm:$0xff]
        %v2212 = vld [vmem:[#allocation2 + $0x91] sm:$0xff]
        %v2213 = vld [vmem:[#allocation2 + $0x99] sm:$0xff]
        %v2214 = vld [vmem:[#allocation2 + $0xa1] sm:$0xff]
        %v2215 = vld [vmem:[#allocation2 + $0xa9] sm:$0xff]
        %v2216 = vld [vmem:[#allocation2 + $0xb1] sm:$0xff]
        %v2217 = vld [vmem:[#allocation2 + $0xb9] sm:$0xff]
        %v2218 = vld [vmem:[#allocation2 + $0xc1] sm:$0xff]
        %v2219 = vld [vmem:[#allocation2 + $0xc9] sm:$0xff]
        %v2220 = vld [vmem:[#allocation2 + $0xd1] sm:$0xff]
        %v2221 = vld [vmem:[#allocation2 + $0xd9] sm:$0xff]
        %v2222 = vld [vmem:[#allocation2 + $0xe1] sm:$0xff]
        %v2223 = vld [vmem:[#allocation2 + $0xe9] sm:$0xff]
        %v2224 = vld [vmem:[#allocation2 + $0xf1] sm:$0xff]
        %v2225 = vld [vmem:[#allocation2 + $0xf9] sm:$0xff]
        %v2226 = vld [vmem:[#allocation2 + $0x101] sm:$0xff]
        %v2227 = vld [vmem:[#allocation2 + $0x109] sm:$0xff]
        %v2228 = vld [vmem:[#allocation2 + $0x111] sm:$0xff]
        %v2229 = vld [vmem:[#allocation2 + $0x119] sm:$0xff]
        %v2230 = vld [vmem:[#allocation2 + $0x121] sm:$0xff]
        %v2231 = vmul.f32 %v2199, %v962
        %v2232 = vmul.f32 %v2200, %v963
        %v2233 = vmul.f32 %v2201, %v964
        %v2234 = vmul.f32 %v2202, %v965
        %v2235 = vmul.f32 %v2203, %v966
        %v2236 = vmul.f32 %v2204, %v967
        %v2237 = vmul.f32 %v2205, %v968
        %v2238 = vmul.f32 %v2206, %v969
        %v2239 = vmul.f32 %v2207, %v970
        %v2240 = vmul.f32 %v2208, %v971
        %v2241 = vmul.f32 %v2209, %v972
        %v2242 = vmul.f32 %v2210, %v973
        %v2243 = vmul.f32 %v2211, %v974
        %v2244 = vmul.f32 %v2212, %v975
        %v2245 = vmul.f32 %v2213, %v976
        %v2246 = vmul.f32 %v2214, %v977
        %v2247 = vmul.f32 %v2215, %v978
        %v2248 = vmul.f32 %v2216, %v979
        %v2249 = vmul.f32 %v2217, %v980
        %v2250 = vmul.f32 %v2218, %v981
        %v2251 = vmul.f32 %v2219, %v982
        %v2252 = vmul.f32 %v2220, %v983
        %v2253 = vmul.f32 %v2221, %v984
        %v2254 = vmul.f32 %v2222, %v985
        %v2255 = vmul.f32 %v2223, %v986
        %v2256 = vmul.f32 %v2224, %v987
        %v2257 = vmul.f32 %v2225, %v988
        %v2258 = vmul.f32 %v2226, %v989
        %v2259 = vmul.f32 %v2227, %v990
        %v2260 = vmul.f32 %v2228, %v991
        %v2261 = vmul.f32 %v2229, %v992
        %v2262 = vmul.f32 %v2230, %v993
        %v2263 = vpack.c.bf16 %v2232, %v2231
        %v2264 = vpack.c.bf16 %v2234, %v2233
        %v2265 = vpack.c.bf16 %v2236, %v2235
        %v2266 = vpack.c.bf16 %v2238, %v2237
        %v2267 = vpack.c.bf16 %v2240, %v2239
        %v2268 = vpack.c.bf16 %v2242, %v2241
        %v2269 = vpack.c.bf16 %v2244, %v2243
        %v2270 = vpack.c.bf16 %v2246, %v2245
        %v2271 = vpack.c.bf16 %v2248, %v2247
        %v2272 = vpack.c.bf16 %v2250, %v2249
        %v2273 = vpack.c.bf16 %v2252, %v2251
        %v2274 = vpack.c.bf16 %v2254, %v2253
        %v2275 = vpack.c.bf16 %v2256, %v2255
        %v2276 = vpack.c.bf16 %v2258, %v2257
        %v2277 = vpack.c.bf16 %v2260, %v2259
        %v2278 = vpack.c.bf16 %v2262, %v2261
        %2295 = vrot.lane.b32.xlu0 %v2263, 32
        %v2296 = vpop.permute.xlu0 %2295
        %2297 = vrot.lane.b32.xlu0 %v2264, 32
        %v2298 = vpop.permute.xlu0 %2297
        %2299 = vrot.lane.b32.xlu0 %v2265, 32
        %v2300 = vpop.permute.xlu0 %2299
        %2301 = vrot.lane.b32.xlu0 %v2266, 32
        %v2302 = vpop.permute.xlu0 %2301
        %2303 = vrot.lane.b32.xlu0 %v2267, 32
        %v2304 = vpop.permute.xlu0 %2303
        %2305 = vrot.lane.b32.xlu0 %v2268, 32
        %v2306 = vpop.permute.xlu0 %2305
        %2307 = vrot.lane.b32.xlu0 %v2269, 32
        %v2308 = vpop.permute.xlu0 %2307
        %2309 = vrot.lane.b32.xlu0 %v2270, 32
        %v2310 = vpop.permute.xlu0 %2309
        %2311 = vrot.lane.b32.xlu0 %v2271, 32
        %v2312 = vpop.permute.xlu0 %2311
        %2313 = vrot.lane.b32.xlu0 %v2272, 32
        %v2314 = vpop.permute.xlu0 %2313
        %2315 = vrot.lane.b32.xlu0 %v2273, 32
        %v2316 = vpop.permute.xlu0 %2315
        %2317 = vrot.lane.b32.xlu0 %v2274, 32
        %v2318 = vpop.permute.xlu0 %2317
        %2319 = vrot.lane.b32.xlu0 %v2275, 32
        %v2320 = vpop.permute.xlu0 %2319
        %2321 = vrot.lane.b32.xlu0 %v2276, 32
        %v2322 = vpop.permute.xlu0 %2321
        %2323 = vrot.lane.b32.xlu0 %v2277, 32
        %v2324 = vpop.permute.xlu0 %2323
        %2325 = vrot.lane.b32.xlu0 %v2278, 32
        %v2326 = vpop.permute.xlu0 %2325
        %vm2343 = vcmask 294144
        %2344 = vst.msk [vmem:[#allocation4] sm:$0xff] %vm2343, %v2296
        %2345 = vst.msk [vmem:[#allocation4 + $0x8] sm:$0xff] %vm2343, %v2298
        %2346 = vst.msk [vmem:[#allocation4 + $0x10] sm:$0xff] %vm2343, %v2300
        %2347 = vst.msk [vmem:[#allocation4 + $0x18] sm:$0xff] %vm2343, %v2302
        %2348 = vst.msk [vmem:[#allocation4 + $0x20] sm:$0xff] %vm2343, %v2304
        %2349 = vst.msk [vmem:[#allocation4 + $0x28] sm:$0xff] %vm2343, %v2306
        %2350 = vst.msk [vmem:[#allocation4 + $0x30] sm:$0xff] %vm2343, %v2308
        %2351 = vst.msk [vmem:[#allocation4 + $0x38] sm:$0xff] %vm2343, %v2310
        %2352 = vst.msk [vmem:[#allocation4 + $0x40] sm:$0xff] %vm2343, %v2312
        %2353 = vst.msk [vmem:[#allocation4 + $0x48] sm:$0xff] %vm2343, %v2314
        %2354 = vst.msk [vmem:[#allocation4 + $0x50] sm:$0xff] %vm2343, %v2316
        %2355 = vst.msk [vmem:[#allocation4 + $0x58] sm:$0xff] %vm2343, %v2318
        %2356 = vst.msk [vmem:[#allocation4 + $0x60] sm:$0xff] %vm2343, %v2320
        %2357 = vst.msk [vmem:[#allocation4 + $0x68] sm:$0xff] %vm2343, %v2322
        %2358 = vst.msk [vmem:[#allocation4 + $0x70] sm:$0xff] %vm2343, %v2324
        %2359 = vst.msk [vmem:[#allocation4 + $0x78] sm:$0xff] %vm2343, %v2326
        %v2360 = vld [vmem:[#allocation4] sm:$0xff]
        %v2361 = vld [vmem:[#allocation4 + $0x8] sm:$0xff]
        %v2362 = vld [vmem:[#allocation4 + $0x10] sm:$0xff]
        %v2363 = vld [vmem:[#allocation4 + $0x18] sm:$0xff]
        %v2364 = vld [vmem:[#allocation4 + $0x20] sm:$0xff]
        %v2365 = vld [vmem:[#allocation4 + $0x28] sm:$0xff]
        %v2366 = vld [vmem:[#allocation4 + $0x30] sm:$0xff]
        %v2367 = vld [vmem:[#allocation4 + $0x38] sm:$0xff]
        %v2368 = vld [vmem:[#allocation4 + $0x40] sm:$0xff]
        %v2369 = vld [vmem:[#allocation4 + $0x48] sm:$0xff]
        %v2370 = vld [vmem:[#allocation4 + $0x50] sm:$0xff]
        %v2371 = vld [vmem:[#allocation4 + $0x58] sm:$0xff]
        %v2372 = vld [vmem:[#allocation4 + $0x60] sm:$0xff]
        %v2373 = vld [vmem:[#allocation4 + $0x68] sm:$0xff]
        %v2374 = vld [vmem:[#allocation4 + $0x70] sm:$0xff]
        %v2375 = vld [vmem:[#allocation4 + $0x78] sm:$0xff]
        %v2376 = vld [vmem:[%s1] sm:$0xf]
        %v2377 = vld [vmem:[%s1 + $0x4] sm:$0xf]
        %v2378 = vld [vmem:[%s1 + $0x8] sm:$0xf]
        %v2379 = vld [vmem:[%s1 + $0xc] sm:$0xf]
        %v2380 = vld [vmem:[%s1 + $0x10] sm:$0x3]
        %v2381 = vld [vmem:[%s2] sm:$0x1]
        %v2383 = vlaneseq
        %v2384 = vshrl.u32 %v2383, 7
        %v2385 = vsub.s32 0, %v2384
        %v2386 = vrot.slane %v2381, %v2385
        %v2393 = vunpack.c.l.b16 %v2376
        %v2394 = vunpack.c.l.b16 %v2377
        %v2395 = vunpack.c.l.b16 %v2378
        %v2396 = vunpack.c.l.b16 %v2379
        %v2397 = vunpack.c.l.b16 %v2380
        %v2398 = vpack.c.b16 %v2394, %v2393
        %v2399 = vpack.c.b16 %v2396, %v2395
        %v2400 = vpack.c.b16 %v2397, %v2397
        %vm2403 = vcmask 293888
        %v2405 = vsel %vm2403, %v2360, 0
        %v2408 = vsel %vm2403, %v2361, 0
        %v2411 = vsel %vm2403, %v2362, 0
        %v2414 = vsel %vm2403, %v2363, 0
        %v2417 = vsel %vm2403, %v2364, 0
        %v2420 = vsel %vm2403, %v2365, 0
        %v2423 = vsel %vm2403, %v2366, 0
        %v2426 = vsel %vm2403, %v2367, 0
        %v2429 = vsel %vm2403, %v2368, 0
        %v2432 = vsel %vm2403, %v2369, 0
        %v2435 = vsel %vm2403, %v2370, 0
        %v2438 = vsel %vm2403, %v2371, 0
        %v2441 = vsel %vm2403, %v2372, 0
        %v2444 = vsel %vm2403, %v2373, 0
        %v2447 = vsel %vm2403, %v2374, 0
        %v2450 = vsel %vm2403, %v2375, 0
        %vm2452 = vcmask 1041408
        %v2454 = vsel %vm2452, %v2400, 0
        %2456 = vmatprep.subr.bf16.mxu0 0
        %2457 = vmatpush1.bf16.msra.mxu0 %v2398
        %2458 = vmatprep.subr.bf16.mxu0 0
        %2459 = vmatpush1.bf16.msra.mxu0 %v2399
        %2460 = vmatprep.subr.bf16.mxu0 0
        %2461 = vmatpush1.bf16.msra.mxu0 %v2454
        %2462 = vmatprep.subr.bf16.mxu0 0
        %2463 = vmatpush1.bf16.msra.mxu0 0
        %2464 = vmatprep.subr.bf16.mxu0 0
        %2465 = vmatpush1.bf16.msra.mxu0 0
        %2466 = vmatprep.subr.bf16.mxu0 0
        %2467 = vmatpush1.bf16.msra.mxu0 0
        %2468 = vmatprep.subr.bf16.mxu0 0
        %2469 = vmatpush1.bf16.msra.mxu0 0
        %2470 = vmatprep.subr.bf16.mxu0 0
        %2471 = vmatpush1.bf16.msra.mxu0 0
        %2472 = vmatprep.subr.bf16.mxu0 0
        %2473 = vmatpush1.bf16.msra.mxu0 0
        %2474 = vmatprep.subr.bf16.mxu0 0
        %2475 = vmatpush1.bf16.msra.mxu0 0
        %2476 = vmatprep.subr.bf16.mxu0 0
        %2477 = vmatpush1.bf16.msra.mxu0 0
        %2478 = vmatprep.subr.bf16.mxu0 0
        %2479 = vmatpush1.bf16.msra.mxu0 0
        %2480 = vmatprep.subr.bf16.mxu0 0
        %2481 = vmatpush1.bf16.msra.mxu0 0
        %2482 = vmatprep.subr.bf16.mxu0 0
        %2483 = vmatpush1.bf16.msra.mxu0 0
        %2484 = vmatprep.subr.bf16.mxu0 0
        %2485 = vmatpush1.bf16.msra.mxu0 0
        %2486 = vmatprep.subr.bf16.mxu0 0
        %2487 = vmatpush1.bf16.msra.mxu0 0
        %2488 = vmatprep.mubr.bf16.mxu0 0
        %2489 = vmatmul.mubr.bf16.gmra.mrb[0].mxu0 %v2405
        %v2490 = vpop.f32.mrb[0].mxu0
        %v2491 = vadd.f32 %v2386, %v2490
        %v2492 = vpop.f32.mrb[0].mxu0
        %v2493 = vpop.f32.mrb[0].mxu0
        %v2494 = vadd.f32 %v2386, %v2493
        %v2495 = vpop.f32.mrb[0].mxu0
        %2496 = vmatprep.mubr.bf16.mxu0 0
        %2497 = vmatmul.mubr.bf16.gmra.mrb[0].mxu0 %v2408
        %v2498 = vpop.f32.mrb[0].mxu0
        %v2499 = vadd.f32 %v2386, %v2498
        %v2500 = vpop.f32.mrb[0].mxu0
        %v2501 = vpop.f32.mrb[0].mxu0
        %v2502 = vadd.f32 %v2386, %v2501
        %v2503 = vpop.f32.mrb[0].mxu0
        %2504 = vmatprep.mubr.bf16.mxu0 0
        %2505 = vmatmul.mubr.bf16.gmra.mrb[0].mxu0 %v2411
        %v2506 = vpop.f32.mrb[0].mxu0
        %v2507 = vadd.f32 %v2386, %v2506
        %v2508 = vpop.f32.mrb[0].mxu0
        %v2509 = vpop.f32.mrb[0].mxu0
        %v2510 = vadd.f32 %v2386, %v2509
        %v2511 = vpop.f32.mrb[0].mxu0
        %2512 = vmatprep.mubr.bf16.mxu0 0
        %2513 = vmatmul.mubr.bf16.gmra.mrb[0].mxu0 %v2414
        %v2514 = vpop.f32.mrb[0].mxu0
        %v2515 = vadd.f32 %v2386, %v2514
        %v2516 = vpop.f32.mrb[0].mxu0
        %v2517 = vpop.f32.mrb[0].mxu0
        %v2518 = vadd.f32 %v2386, %v2517
        %v2519 = vpop.f32.mrb[0].mxu0
        %2520 = vmatprep.mubr.bf16.mxu0 0
        %2521 = vmatmul.mubr.bf16.gmra.mrb[0].mxu0 %v2417
        %v2522 = vpop.f32.mrb[0].mxu0
        %v2523 = vadd.f32 %v2386, %v2522
        %v2524 = vpop.f32.mrb[0].mxu0
        %v2525 = vpop.f32.mrb[0].mxu0
        %v2526 = vadd.f32 %v2386, %v2525
        %v2527 = vpop.f32.mrb[0].mxu0
        %2528 = vmatprep.mubr.bf16.mxu0 0
        %2529 = vmatmul.mubr.bf16.gmra.mrb[0].mxu0 %v2420
        %v2530 = vpop.f32.mrb[0].mxu0
        %v2531 = vadd.f32 %v2386, %v2530
        %v2532 = vpop.f32.mrb[0].mxu0
        %v2533 = vpop.f32.mrb[0].mxu0
        %v2534 = vadd.f32 %v2386, %v2533
        %v2535 = vpop.f32.mrb[0].mxu0
        %2536 = vmatprep.mubr.bf16.mxu0 0
        %2537 = vmatmul.mubr.bf16.gmra.mrb[0].mxu0 %v2423
        %v2538 = vpop.f32.mrb[0].mxu0
        %v2539 = vadd.f32 %v2386, %v2538
        %v2540 = vpop.f32.mrb[0].mxu0
        %v2541 = vpop.f32.mrb[0].mxu0
        %v2542 = vadd.f32 %v2386, %v2541
        %v2543 = vpop.f32.mrb[0].mxu0
        %2544 = vmatprep.mubr.bf16.mxu0 0
        %2545 = vmatmul.mubr.bf16.gmra.mrb[0].mxu0 %v2426
        %v2546 = vpop.f32.mrb[0].mxu0
        %v2547 = vadd.f32 %v2386, %v2546
        %v2548 = vpop.f32.mrb[0].mxu0
        %v2549 = vpop.f32.mrb[0].mxu0
        %v2550 = vadd.f32 %v2386, %v2549
        %v2551 = vpop.f32.mrb[0].mxu0
        %2552 = vmatprep.mubr.bf16.mxu0 0
        %2553 = vmatmul.mubr.bf16.gmra.mrb[0].mxu0 %v2429
        %v2554 = vpop.f32.mrb[0].mxu0
        %v2555 = vadd.f32 %v2386, %v2554
        %v2556 = vpop.f32.mrb[0].mxu0
        %v2557 = vpop.f32.mrb[0].mxu0
        %v2558 = vadd.f32 %v2386, %v2557
        %v2559 = vpop.f32.mrb[0].mxu0
        %2560 = vmatprep.mubr.bf16.mxu0 0
        %2561 = vmatmul.mubr.bf16.gmra.mrb[0].mxu0 %v2432
        %v2562 = vpop.f32.mrb[0].mxu0
        %v2563 = vadd.f32 %v2386, %v2562
        %v2564 = vpop.f32.mrb[0].mxu0
        %v2565 = vpop.f32.mrb[0].mxu0
        %v2566 = vadd.f32 %v2386, %v2565
        %v2567 = vpop.f32.mrb[0].mxu0
        %2568 = vmatprep.mubr.bf16.mxu0 0
        %2569 = vmatmul.mubr.bf16.gmra.mrb[0].mxu0 %v2435
        %v2570 = vpop.f32.mrb[0].mxu0
        %v2571 = vadd.f32 %v2386, %v2570
        %v2572 = vpop.f32.mrb[0].mxu0
        %v2573 = vpop.f32.mrb[0].mxu0
        %v2574 = vadd.f32 %v2386, %v2573
        %v2575 = vpop.f32.mrb[0].mxu0
        %2576 = vmatprep.mubr.bf16.mxu0 0
        %2577 = vmatmul.mubr.bf16.gmra.mrb[0].mxu0 %v2438
        %v2578 = vpop.f32.mrb[0].mxu0
        %v2579 = vadd.f32 %v2386, %v2578
        %v2580 = vpop.f32.mrb[0].mxu0
        %v2581 = vpop.f32.mrb[0].mxu0
        %v2582 = vadd.f32 %v2386, %v2581
        %v2583 = vpop.f32.mrb[0].mxu0
        %2584 = vmatprep.mubr.bf16.mxu0 0
        %2585 = vmatmul.mubr.bf16.gmra.mrb[0].mxu0 %v2441
        %v2586 = vpop.f32.mrb[0].mxu0
        %v2587 = vadd.f32 %v2386, %v2586
        %v2588 = vpop.f32.mrb[0].mxu0
        %v2589 = vpop.f32.mrb[0].mxu0
        %v2590 = vadd.f32 %v2386, %v2589
        %v2591 = vpop.f32.mrb[0].mxu0
        %2592 = vmatprep.mubr.bf16.mxu0 0
        %2593 = vmatmul.mubr.bf16.gmra.mrb[0].mxu0 %v2444
        %v2594 = vpop.f32.mrb[0].mxu0
        %v2595 = vadd.f32 %v2386, %v2594
        %v2596 = vpop.f32.mrb[0].mxu0
        %v2597 = vpop.f32.mrb[0].mxu0
        %v2598 = vadd.f32 %v2386, %v2597
        %v2599 = vpop.f32.mrb[0].mxu0
        %2600 = vmatprep.mubr.bf16.mxu0 0
        %2601 = vmatmul.mubr.bf16.gmra.mrb[0].mxu0 %v2447
        %v2602 = vpop.f32.mrb[0].mxu0
        %v2603 = vadd.f32 %v2386, %v2602
        %v2604 = vpop.f32.mrb[0].mxu0
        %v2605 = vpop.f32.mrb[0].mxu0
        %v2606 = vadd.f32 %v2386, %v2605
        %v2607 = vpop.f32.mrb[0].mxu0
        %2608 = vmatprep.mubr.bf16.mxu0 0
        %2609 = vmatmul.mubr.bf16.gmra.mrb[0].mxu0 %v2450
        %v2610 = vpop.f32.mrb[0].mxu0
        %v2611 = vadd.f32 %v2386, %v2610
        %v2612 = vpop.f32.mrb[0].mxu0
        %v2613 = vpop.f32.mrb[0].mxu0
        %v2614 = vadd.f32 %v2386, %v2613
        %v2615 = vpop.f32.mrb[0].mxu0
        %2616 = vdwg.mxu0
        %v2617 = vmax.f32 %v2491, 0.0
        %v2618 = vmax.f32 %v2494, 0.0
        %v2619 = vmax.f32 %v2499, 0.0
        %v2620 = vmax.f32 %v2502, 0.0
        %v2621 = vmax.f32 %v2507, 0.0
        %v2622 = vmax.f32 %v2510, 0.0
        %v2623 = vmax.f32 %v2515, 0.0
        %v2624 = vmax.f32 %v2518, 0.0
        %v2625 = vmax.f32 %v2523, 0.0
        %v2626 = vmax.f32 %v2526, 0.0
        %v2627 = vmax.f32 %v2531, 0.0
        %v2628 = vmax.f32 %v2534, 0.0
        %v2629 = vmax.f32 %v2539, 0.0
        %v2630 = vmax.f32 %v2542, 0.0
        %v2631 = vmax.f32 %v2547, 0.0
        %v2632 = vmax.f32 %v2550, 0.0
        %v2633 = vmax.f32 %v2555, 0.0
        %v2634 = vmax.f32 %v2558, 0.0
        %v2635 = vmax.f32 %v2563, 0.0
        %v2636 = vmax.f32 %v2566, 0.0
        %v2637 = vmax.f32 %v2571, 0.0
        %v2638 = vmax.f32 %v2574, 0.0
        %v2639 = vmax.f32 %v2579, 0.0
        %v2640 = vmax.f32 %v2582, 0.0
        %v2641 = vmax.f32 %v2587, 0.0
        %v2642 = vmax.f32 %v2590, 0.0
        %v2643 = vmax.f32 %v2595, 0.0
        %v2644 = vmax.f32 %v2598, 0.0
        %v2645 = vmax.f32 %v2603, 0.0
        %v2646 = vmax.f32 %v2606, 0.0
        %v2647 = vmax.f32 %v2611, 0.0
        %v2648 = vmax.f32 %v2614, 0.0
        %2649 = vst.msk [vmem:[#allocation6] sm:$0xff] %vm1001, %v2617
        %2650 = vst.msk [vmem:[#allocation6 + $0x8] sm:$0xff] %vm1001, %v2618
        %2651 = vst.msk [vmem:[#allocation6 + $0x10] sm:$0xff] %vm1001, %v2619
        %2652 = vst.msk [vmem:[#allocation6 + $0x18] sm:$0xff] %vm1001, %v2620
        %2653 = vst.msk [vmem:[#allocation6 + $0x20] sm:$0xff] %vm1001, %v2621
        %2654 = vst.msk [vmem:[#allocation6 + $0x28] sm:$0xff] %vm1001, %v2622
        %2655 = vst.msk [vmem:[#allocation6 + $0x30] sm:$0xff] %vm1001, %v2623
        %2656 = vst.msk [vmem:[#allocation6 + $0x38] sm:$0xff] %vm1001, %v2624
        %2657 = vst.msk [vmem:[#allocation6 + $0x40] sm:$0xff] %vm1001, %v2625
        %2658 = vst.msk [vmem:[#allocation6 + $0x48] sm:$0xff] %vm1001, %v2626
        %2659 = vst.msk [vmem:[#allocation6 + $0x50] sm:$0xff] %vm1001, %v2627
        %2660 = vst.msk [vmem:[#allocation6 + $0x58] sm:$0xff] %vm1001, %v2628
        %2661 = vst.msk [vmem:[#allocation6 + $0x60] sm:$0xff] %vm1001, %v2629
        %2662 = vst.msk [vmem:[#allocation6 + $0x68] sm:$0xff] %vm1001, %v2630
        %2663 = vst.msk [vmem:[#allocation6 + $0x70] sm:$0xff] %vm1001, %v2631
        %2664 = vst.msk [vmem:[#allocation6 + $0x78] sm:$0xff] %vm1001, %v2632
        %2665 = vst.msk [vmem:[#allocation6 + $0x80] sm:$0xff] %vm1001, %v2633
        %2666 = vst.msk [vmem:[#allocation6 + $0x88] sm:$0xff] %vm1001, %v2634
        %2667 = vst.msk [vmem:[#allocation6 + $0x90] sm:$0xff] %vm1001, %v2635
        %2668 = vst.msk [vmem:[#allocation6 + $0x98] sm:$0xff] %vm1001, %v2636
        %2669 = vst.msk [vmem:[#allocation6 + $0xa0] sm:$0xff] %vm1001, %v2637
        %2670 = vst.msk [vmem:[#allocation6 + $0xa8] sm:$0xff] %vm1001, %v2638
        %2671 = vst.msk [vmem:[#allocation6 + $0xb0] sm:$0xff] %vm1001, %v2639
        %2672 = vst.msk [vmem:[#allocation6 + $0xb8] sm:$0xff] %vm1001, %v2640
        %2673 = vst.msk [vmem:[#allocation6 + $0xc0] sm:$0xff] %vm1001, %v2641
        %2674 = vst.msk [vmem:[#allocation6 + $0xc8] sm:$0xff] %vm1001, %v2642
        %2675 = vst.msk [vmem:[#allocation6 + $0xd0] sm:$0xff] %vm1001, %v2643
        %2676 = vst.msk [vmem:[#allocation6 + $0xd8] sm:$0xff] %vm1001, %v2644
        %2677 = vst.msk [vmem:[#allocation6 + $0xe0] sm:$0xff] %vm1001, %v2645
        %2678 = vst.msk [vmem:[#allocation6 + $0xe8] sm:$0xff] %vm1001, %v2646
        %2679 = vst.msk [vmem:[#allocation6 + $0xf0] sm:$0xff] %vm1001, %v2647
        %2680 = vst.msk [vmem:[#allocation6 + $0xf8] sm:$0xff] %vm1001, %v2648
        %2681 = vst.msk [vmem:[#allocation3 + $0x18] sm:$0xff] %vm1001, %v2617
        %2682 = vst.msk [vmem:[#allocation3 + $0x20] sm:$0xff] %vm1001, %v2618
        %2683 = vst.msk [vmem:[#allocation3 + $0x28] sm:$0xff] %vm1001, %v2619
        %2684 = vst.msk [vmem:[#allocation3 + $0x30] sm:$0xff] %vm1001, %v2620
        %2685 = vst.msk [vmem:[#allocation3 + $0x38] sm:$0xff] %vm1001, %v2621
        %2686 = vst.msk [vmem:[#allocation3 + $0x40] sm:$0xff] %vm1001, %v2622
        %2687 = vst.msk [vmem:[#allocation3 + $0x48] sm:$0xff] %vm1001, %v2623
        %2688 = vst.msk [vmem:[#allocation3 + $0x50] sm:$0xff] %vm1001, %v2624
        %2689 = vst.msk [vmem:[#allocation3 + $0x58] sm:$0xff] %vm1001, %v2625
        %2690 = vst.msk [vmem:[#allocation3 + $0x60] sm:$0xff] %vm1001, %v2626
        %2691 = vst.msk [vmem:[#allocation3 + $0x68] sm:$0xff] %vm1001, %v2627
        %2692 = vst.msk [vmem:[#allocation3 + $0x70] sm:$0xff] %vm1001, %v2628
        %2693 = vst.msk [vmem:[#allocation3 + $0x78] sm:$0xff] %vm1001, %v2629
        %2694 = vst.msk [vmem:[#allocation3 + $0x80] sm:$0xff] %vm1001, %v2630
        %2695 = vst.msk [vmem:[#allocation3 + $0x88] sm:$0xff] %vm1001, %v2631
        %2696 = vst.msk [vmem:[#allocation3 + $0x90] sm:$0xff] %vm1001, %v2632
        %2697 = vst.msk [vmem:[#allocation3 + $0x98] sm:$0xff] %vm1001, %v2633
        %2698 = vst.msk [vmem:[#allocation3 + $0xa0] sm:$0xff] %vm1001, %v2634
        %2699 = vst.msk [vmem:[#allocation3 + $0xa8] sm:$0xff] %vm1001, %v2635
        %2700 = vst.msk [vmem:[#allocation3 + $0xb0] sm:$0xff] %vm1001, %v2636
        %2701 = vst.msk [vmem:[#allocation3 + $0xb8] sm:$0xff] %vm1001, %v2637
        %2702 = vst.msk [vmem:[#allocation3 + $0xc0] sm:$0xff] %vm1001, %v2638
        %2703 = vst.msk [vmem:[#allocation3 + $0xc8] sm:$0xff] %vm1001, %v2639
        %2704 = vst.msk [vmem:[#allocation3 + $0xd0] sm:$0xff] %vm1001, %v2640
        %2705 = vst.msk [vmem:[#allocation3 + $0xd8] sm:$0xff] %vm1001, %v2641
        %2706 = vst.msk [vmem:[#allocation3 + $0xe0] sm:$0xff] %vm1001, %v2642
        %2707 = vst.msk [vmem:[#allocation3 + $0xe8] sm:$0xff] %vm1001, %v2643
        %2708 = vst.msk [vmem:[#allocation3 + $0xf0] sm:$0xff] %vm1001, %v2644
        %2709 = vst.msk [vmem:[#allocation3 + $0xf8] sm:$0xff] %vm1001, %v2645
        %2710 = vst.msk [vmem:[#allocation3 + $0x100] sm:$0xff] %vm1001, %v2646
        %2711 = vst.msk [vmem:[#allocation3 + $0x108] sm:$0xff] %vm1001, %v2647
        %2712 = vst.msk [vmem:[#allocation3 + $0x110] sm:$0xff] %vm1001, %v2648
        %v2713 = vld [vmem:[#allocation3 + $0x7] sm:$0xff]
        %v2714 = vld [vmem:[#allocation3 + $0xf] sm:$0xff]
        %v2715 = vld [vmem:[#allocation3 + $0x17] sm:$0xff]
        %v2716 = vld [vmem:[#allocation3 + $0x1f] sm:$0xff]
        %v2717 = vld [vmem:[#allocation3 + $0x27] sm:$0xff]
        %v2718 = vld [vmem:[#allocation3 + $0x2f] sm:$0xff]
        %v2719 = vld [vmem:[#allocation3 + $0x37] sm:$0xff]
        %v2720 = vld [vmem:[#allocation3 + $0x3f] sm:$0xff]
        %v2721 = vld [vmem:[#allocation3 + $0x47] sm:$0xff]
        %v2722 = vld [vmem:[#allocation3 + $0x4f] sm:$0xff]
        %v2723 = vld [vmem:[#allocation3 + $0x57] sm:$0xff]
        %v2724 = vld [vmem:[#allocation3 + $0x5f] sm:$0xff]
        %v2725 = vld [vmem:[#allocation3 + $0x67] sm:$0xff]
        %v2726 = vld [vmem:[#allocation3 + $0x6f] sm:$0xff]
        %v2727 = vld [vmem:[#allocation3 + $0x77] sm:$0xff]
        %v2728 = vld [vmem:[#allocation3 + $0x7f] sm:$0xff]
        %v2729 = vld [vmem:[#allocation3 + $0x87] sm:$0xff]
        %v2730 = vld [vmem:[#allocation3 + $0x8f] sm:$0xff]
        %v2731 = vld [vmem:[#allocation3 + $0x97] sm:$0xff]
        %v2732 = vld [vmem:[#allocation3 + $0x9f] sm:$0xff]
        %v2733 = vld [vmem:[#allocation3 + $0xa7] sm:$0xff]
        %v2734 = vld [vmem:[#allocation3 + $0xaf] sm:$0xff]
        %v2735 = vld [vmem:[#allocation3 + $0xb7] sm:$0xff]
        %v2736 = vld [vmem:[#allocation3 + $0xbf] sm:$0xff]
        %v2737 = vld [vmem:[#allocation3 + $0xc7] sm:$0xff]
        %v2738 = vld [vmem:[#allocation3 + $0xcf] sm:$0xff]
        %v2739 = vld [vmem:[#allocation3 + $0xd7] sm:$0xff]
        %v2740 = vld [vmem:[#allocation3 + $0xdf] sm:$0xff]
        %v2741 = vld [vmem:[#allocation3 + $0xe7] sm:$0xff]
        %v2742 = vld [vmem:[#allocation3 + $0xef] sm:$0xff]
        %v2743 = vld [vmem:[#allocation3 + $0xf7] sm:$0xff]
        %v2744 = vld [vmem:[#allocation3 + $0xff] sm:$0xff]
        %v2745 = vmul.f32 %v2713, %v866
        %v2746 = vmul.f32 %v2714, %v867
        %v2747 = vmul.f32 %v2715, %v868
        %v2748 = vmul.f32 %v2716, %v869
        %v2749 = vmul.f32 %v2717, %v870
        %v2750 = vmul.f32 %v2718, %v871
        %v2751 = vmul.f32 %v2719, %v872
        %v2752 = vmul.f32 %v2720, %v873
        %v2753 = vmul.f32 %v2721, %v874
        %v2754 = vmul.f32 %v2722, %v875
        %v2755 = vmul.f32 %v2723, %v876
        %v2756 = vmul.f32 %v2724, %v877
        %v2757 = vmul.f32 %v2725, %v878
        %v2758 = vmul.f32 %v2726, %v879
        %v2759 = vmul.f32 %v2727, %v880
        %v2760 = vmul.f32 %v2728, %v881
        %v2761 = vmul.f32 %v2729, %v882
        %v2762 = vmul.f32 %v2730, %v883
        %v2763 = vmul.f32 %v2731, %v884
        %v2764 = vmul.f32 %v2732, %v885
        %v2765 = vmul.f32 %v2733, %v886
        %v2766 = vmul.f32 %v2734, %v887
        %v2767 = vmul.f32 %v2735, %v888
        %v2768 = vmul.f32 %v2736, %v889
        %v2769 = vmul.f32 %v2737, %v890
        %v2770 = vmul.f32 %v2738, %v891
        %v2771 = vmul.f32 %v2739, %v892
        %v2772 = vmul.f32 %v2740, %v893
        %v2773 = vmul.f32 %v2741, %v894
        %v2774 = vmul.f32 %v2742, %v895
        %v2775 = vmul.f32 %v2743, %v896
        %v2776 = vmul.f32 %v2744, %v897
        %v2777 = vpack.c.bf16 %v2746, %v2745
        %v2778 = vpack.c.bf16 %v2748, %v2747
        %v2779 = vpack.c.bf16 %v2750, %v2749
        %v2780 = vpack.c.bf16 %v2752, %v2751
        %v2781 = vpack.c.bf16 %v2754, %v2753
        %v2782 = vpack.c.bf16 %v2756, %v2755
        %v2783 = vpack.c.bf16 %v2758, %v2757
        %v2784 = vpack.c.bf16 %v2760, %v2759
        %v2785 = vpack.c.bf16 %v2762, %v2761
        %v2786 = vpack.c.bf16 %v2764, %v2763
        %v2787 = vpack.c.bf16 %v2766, %v2765
        %v2788 = vpack.c.bf16 %v2768, %v2767
        %v2789 = vpack.c.bf16 %v2770, %v2769
        %v2790 = vpack.c.bf16 %v2772, %v2771
        %v2791 = vpack.c.bf16 %v2774, %v2773
        %v2792 = vpack.c.bf16 %v2776, %v2775
        %2793 = vst.msk [vmem:[#allocation5] sm:$0xff] %vm1001, %v2777
        %2794 = vst.msk [vmem:[#allocation5 + $0x8] sm:$0xff] %vm1001, %v2778
        %2795 = vst.msk [vmem:[#allocation5 + $0x10] sm:$0xff] %vm1001, %v2779
        %2796 = vst.msk [vmem:[#allocation5 + $0x18] sm:$0xff] %vm1001, %v2780
        %2797 = vst.msk [vmem:[#allocation5 + $0x20] sm:$0xff] %vm1001, %v2781
        %2798 = vst.msk [vmem:[#allocation5 + $0x28] sm:$0xff] %vm1001, %v2782
        %2799 = vst.msk [vmem:[#allocation5 + $0x30] sm:$0xff] %vm1001, %v2783
        %2800 = vst.msk [vmem:[#allocation5 + $0x38] sm:$0xff] %vm1001, %v2784
        %2801 = vst.msk [vmem:[#allocation5 + $0x40] sm:$0xff] %vm1001, %v2785
        %2802 = vst.msk [vmem:[#allocation5 + $0x48] sm:$0xff] %vm1001, %v2786
        %2803 = vst.msk [vmem:[#allocation5 + $0x50] sm:$0xff] %vm1001, %v2787
        %2804 = vst.msk [vmem:[#allocation5 + $0x58] sm:$0xff] %vm1001, %v2788
        %2805 = vst.msk [vmem:[#allocation5 + $0x60] sm:$0xff] %vm1001, %v2789
        %2806 = vst.msk [vmem:[#allocation5 + $0x68] sm:$0xff] %vm1001, %v2790
        %2807 = vst.msk [vmem:[#allocation5 + $0x70] sm:$0xff] %vm1001, %v2791
        %2808 = vst.msk [vmem:[#allocation5 + $0x78] sm:$0xff] %vm1001, %v2792
        %v2809 = vld [vmem:[#allocation3 + $0x8] sm:$0xff]
        %v2810 = vld [vmem:[#allocation3 + $0x10] sm:$0xff]
        %v2811 = vld [vmem:[#allocation3 + $0x18] sm:$0xff]
        %v2812 = vld [vmem:[#allocation3 + $0x20] sm:$0xff]
        %v2813 = vld [vmem:[#allocation3 + $0x28] sm:$0xff]
        %v2814 = vld [vmem:[#allocation3 + $0x30] sm:$0xff]
        %v2815 = vld [vmem:[#allocation3 + $0x38] sm:$0xff]
        %v2816 = vld [vmem:[#allocation3 + $0x40] sm:$0xff]
        %v2817 = vld [vmem:[#allocation3 + $0x48] sm:$0xff]
        %v2818 = vld [vmem:[#allocation3 + $0x50] sm:$0xff]
        %v2819 = vld [vmem:[#allocation3 + $0x58] sm:$0xff]
        %v2820 = vld [vmem:[#allocation3 + $0x60] sm:$0xff]
        %v2821 = vld [vmem:[#allocation3 + $0x68] sm:$0xff]
        %v2822 = vld [vmem:[#allocation3 + $0x70] sm:$0xff]
        %v2823 = vld [vmem:[#allocation3 + $0x78] sm:$0xff]
        %v2824 = vld [vmem:[#allocation3 + $0x80] sm:$0xff]
        %v2825 = vld [vmem:[#allocation3 + $0x88] sm:$0xff]
        %v2826 = vld [vmem:[#allocation3 + $0x90] sm:$0xff]
        %v2827 = vld [vmem:[#allocation3 + $0x98] sm:$0xff]
        %v2828 = vld [vmem:[#allocation3 + $0xa0] sm:$0xff]
        %v2829 = vld [vmem:[#allocation3 + $0xa8] sm:$0xff]
        %v2830 = vld [vmem:[#allocation3 + $0xb0] sm:$0xff]
        %v2831 = vld [vmem:[#allocation3 + $0xb8] sm:$0xff]
        %v2832 = vld [vmem:[#allocation3 + $0xc0] sm:$0xff]
        %v2833 = vld [vmem:[#allocation3 + $0xc8] sm:$0xff]
        %v2834 = vld [vmem:[#allocation3 + $0xd0] sm:$0xff]
        %v2835 = vld [vmem:[#allocation3 + $0xd8] sm:$0xff]
        %v2836 = vld [vmem:[#allocation3 + $0xe0] sm:$0xff]
        %v2837 = vld [vmem:[#allocation3 + $0xe8] sm:$0xff]
        %v2838 = vld [vmem:[#allocation3 + $0xf0] sm:$0xff]
        %v2839 = vld [vmem:[#allocation3 + $0xf8] sm:$0xff]
        %v2840 = vld [vmem:[#allocation3 + $0x100] sm:$0xff]
        %v2841 = vpack.c.bf16 %v2810, %v2809
        %v2842 = vpack.c.bf16 %v2812, %v2811
        %v2843 = vpack.c.bf16 %v2814, %v2813
        %v2844 = vpack.c.bf16 %v2816, %v2815
        %v2845 = vpack.c.bf16 %v2818, %v2817
        %v2846 = vpack.c.bf16 %v2820, %v2819
        %v2847 = vpack.c.bf16 %v2822, %v2821
        %v2848 = vpack.c.bf16 %v2824, %v2823
        %v2849 = vpack.c.bf16 %v2826, %v2825
        %v2850 = vpack.c.bf16 %v2828, %v2827
        %v2851 = vpack.c.bf16 %v2830, %v2829
        %v2852 = vpack.c.bf16 %v2832, %v2831
        %v2853 = vpack.c.bf16 %v2834, %v2833
        %v2854 = vpack.c.bf16 %v2836, %v2835
        %v2855 = vpack.c.bf16 %v2838, %v2837
        %v2856 = vpack.c.bf16 %v2840, %v2839
        %2873 = vrot.lane.b32.xlu0 %v2841, 8
        %v2874 = vpop.permute.xlu0 %2873
        %2875 = vrot.lane.b32.xlu0 %v2842, 8
        %v2876 = vpop.permute.xlu0 %2875
        %2877 = vrot.lane.b32.xlu0 %v2843, 8
        %v2878 = vpop.permute.xlu0 %2877
        %2879 = vrot.lane.b32.xlu0 %v2844, 8
        %v2880 = vpop.permute.xlu0 %2879
        %2881 = vrot.lane.b32.xlu0 %v2845, 8
        %v2882 = vpop.permute.xlu0 %2881
        %2883 = vrot.lane.b32.xlu0 %v2846, 8
        %v2884 = vpop.permute.xlu0 %2883
        %2885 = vrot.lane.b32.xlu0 %v2847, 8
        %v2886 = vpop.permute.xlu0 %2885
        %2887 = vrot.lane.b32.xlu0 %v2848, 8
        %v2888 = vpop.permute.xlu0 %2887
        %2889 = vrot.lane.b32.xlu0 %v2849, 8
        %v2890 = vpop.permute.xlu0 %2889
        %2891 = vrot.lane.b32.xlu0 %v2850, 8
        %v2892 = vpop.permute.xlu0 %2891
        %2893 = vrot.lane.b32.xlu0 %v2851, 8
        %v2894 = vpop.permute.xlu0 %2893
        %2895 = vrot.lane.b32.xlu0 %v2852, 8
        %v2896 = vpop.permute.xlu0 %2895
        %2897 = vrot.lane.b32.xlu0 %v2853, 8
        %v2898 = vpop.permute.xlu0 %2897
        %2899 = vrot.lane.b32.xlu0 %v2854, 8
        %v2900 = vpop.permute.xlu0 %2899
        %2901 = vrot.lane.b32.xlu0 %v2855, 8
        %v2902 = vpop.permute.xlu0 %2901
        %2903 = vrot.lane.b32.xlu0 %v2856, 8
        %v2904 = vpop.permute.xlu0 %2903
        %vm2921 = vcmask 130112
        %2922 = vst.msk [vmem:[#allocation5] sm:$0xff] %vm2921, %v2874
        %2923 = vst.msk [vmem:[#allocation5 + $0x8] sm:$0xff] %vm2921, %v2876
        %2924 = vst.msk [vmem:[#allocation5 + $0x10] sm:$0xff] %vm2921, %v2878
        %2925 = vst.msk [vmem:[#allocation5 + $0x18] sm:$0xff] %vm2921, %v2880
        %2926 = vst.msk [vmem:[#allocation5 + $0x20] sm:$0xff] %vm2921, %v2882
        %2927 = vst.msk [vmem:[#allocation5 + $0x28] sm:$0xff] %vm2921, %v2884
        %2928 = vst.msk [vmem:[#allocation5 + $0x30] sm:$0xff] %vm2921, %v2886
        %2929 = vst.msk [vmem:[#allocation5 + $0x38] sm:$0xff] %vm2921, %v2888
        %2930 = vst.msk [vmem:[#allocation5 + $0x40] sm:$0xff] %vm2921, %v2890
        %2931 = vst.msk [vmem:[#allocation5 + $0x48] sm:$0xff] %vm2921, %v2892
        %2932 = vst.msk [vmem:[#allocation5 + $0x50] sm:$0xff] %vm2921, %v2894
        %2933 = vst.msk [vmem:[#allocation5 + $0x58] sm:$0xff] %vm2921, %v2896
        %2934 = vst.msk [vmem:[#allocation5 + $0x60] sm:$0xff] %vm2921, %v2898
        %2935 = vst.msk [vmem:[#allocation5 + $0x68] sm:$0xff] %vm2921, %v2900
        %2936 = vst.msk [vmem:[#allocation5 + $0x70] sm:$0xff] %vm2921, %v2902
        %2937 = vst.msk [vmem:[#allocation5 + $0x78] sm:$0xff] %vm2921, %v2904
        %v2938 = vld [vmem:[#allocation3 + $0x9] sm:$0xff]
        %v2939 = vld [vmem:[#allocation3 + $0x11] sm:$0xff]
        %v2940 = vld [vmem:[#allocation3 + $0x19] sm:$0xff]
        %v2941 = vld [vmem:[#allocation3 + $0x21] sm:$0xff]
        %v2942 = vld [vmem:[#allocation3 + $0x29] sm:$0xff]
        %v2943 = vld [vmem:[#allocation3 + $0x31] sm:$0xff]
        %v2944 = vld [vmem:[#allocation3 + $0x39] sm:$0xff]
        %v2945 = vld [vmem:[#allocation3 + $0x41] sm:$0xff]
        %v2946 = vld [vmem:[#allocation3 + $0x49] sm:$0xff]
        %v2947 = vld [vmem:[#allocation3 + $0x51] sm:$0xff]
        %v2948 = vld [vmem:[#allocation3 + $0x59] sm:$0xff]
        %v2949 = vld [vmem:[#allocation3 + $0x61] sm:$0xff]
        %v2950 = vld [vmem:[#allocation3 + $0x69] sm:$0xff]
        %v2951 = vld [vmem:[#allocation3 + $0x71] sm:$0xff]
        %v2952 = vld [vmem:[#allocation3 + $0x79] sm:$0xff]
        %v2953 = vld [vmem:[#allocation3 + $0x81] sm:$0xff]
        %v2954 = vld [vmem:[#allocation3 + $0x89] sm:$0xff]
        %v2955 = vld [vmem:[#allocation3 + $0x91] sm:$0xff]
        %v2956 = vld [vmem:[#allocation3 + $0x99] sm:$0xff]
        %v2957 = vld [vmem:[#allocation3 + $0xa1] sm:$0xff]
        %v2958 = vld [vmem:[#allocation3 + $0xa9] sm:$0xff]
        %v2959 = vld [vmem:[#allocation3 + $0xb1] sm:$0xff]
        %v2960 = vld [vmem:[#allocation3 + $0xb9] sm:$0xff]
        %v2961 = vld [vmem:[#allocation3 + $0xc1] sm:$0xff]
        %v2962 = vld [vmem:[#allocation3 + $0xc9] sm:$0xff]
        %v2963 = vld [vmem:[#allocation3 + $0xd1] sm:$0xff]
        %v2964 = vld [vmem:[#allocation3 + $0xd9] sm:$0xff]
        %v2965 = vld [vmem:[#allocation3 + $0xe1] sm:$0xff]
        %v2966 = vld [vmem:[#allocation3 + $0xe9] sm:$0xff]
        %v2967 = vld [vmem:[#allocation3 + $0xf1] sm:$0xff]
        %v2968 = vld [vmem:[#allocation3 + $0xf9] sm:$0xff]
        %v2969 = vld [vmem:[#allocation3 + $0x101] sm:$0xff]
        %v2970 = vmul.f32 %v2938, %v962
        %v2971 = vmul.f32 %v2939, %v963
        %v2972 = vmul.f32 %v2940, %v964
        %v2973 = vmul.f32 %v2941, %v965
        %v2974 = vmul.f32 %v2942, %v966
        %v2975 = vmul.f32 %v2943, %v967
        %v2976 = vmul.f32 %v2944, %v968
        %v2977 = vmul.f32 %v2945, %v969
        %v2978 = vmul.f32 %v2946, %v970
        %v2979 = vmul.f32 %v2947, %v971
        %v2980 = vmul.f32 %v2948, %v972
        %v2981 = vmul.f32 %v2949, %v973
        %v2982 = vmul.f32 %v2950, %v974
        %v2983 = vmul.f32 %v2951, %v975
        %v2984 = vmul.f32 %v2952, %v976
        %v2985 = vmul.f32 %v2953, %v977
        %v2986 = vmul.f32 %v2954, %v978
        %v2987 = vmul.f32 %v2955, %v979
        %v2988 = vmul.f32 %v2956, %v980
        %v2989 = vmul.f32 %v2957, %v981
        %v2990 = vmul.f32 %v2958, %v982
        %v2991 = vmul.f32 %v2959, %v983
        %v2992 = vmul.f32 %v2960, %v984
        %v2993 = vmul.f32 %v2961, %v985
        %v2994 = vmul.f32 %v2962, %v986
        %v2995 = vmul.f32 %v2963, %v987
        %v2996 = vmul.f32 %v2964, %v988
        %v2997 = vmul.f32 %v2965, %v989
        %v2998 = vmul.f32 %v2966, %v990
        %v2999 = vmul.f32 %v2967, %v991
        %v3000 = vmul.f32 %v2968, %v992
        %v3001 = vmul.f32 %v2969, %v993
        %v3002 = vpack.c.bf16 %v2971, %v2970
        %v3003 = vpack.c.bf16 %v2973, %v2972
        %v3004 = vpack.c.bf16 %v2975, %v2974
        %v3005 = vpack.c.bf16 %v2977, %v2976
        %v3006 = vpack.c.bf16 %v2979, %v2978
        %v3007 = vpack.c.bf16 %v2981, %v2980
        %v3008 = vpack.c.bf16 %v2983, %v2982
        %v3009 = vpack.c.bf16 %v2985, %v2984
        %v3010 = vpack.c.bf16 %v2987, %v2986
        %v3011 = vpack.c.bf16 %v2989, %v2988
        %v3012 = vpack.c.bf16 %v2991, %v2990
        %v3013 = vpack.c.bf16 %v2993, %v2992
        %v3014 = vpack.c.bf16 %v2995, %v2994
        %v3015 = vpack.c.bf16 %v2997, %v2996
        %v3016 = vpack.c.bf16 %v2999, %v2998
        %v3017 = vpack.c.bf16 %v3001, %v3000
        %3034 = vrot.lane.b32.xlu0 %v3002, 16
        %v3035 = vpop.permute.xlu0 %3034
        %3036 = vrot.lane.b32.xlu0 %v3003, 16
        %v3037 = vpop.permute.xlu0 %3036
        %3038 = vrot.lane.b32.xlu0 %v3004, 16
        %v3039 = vpop.permute.xlu0 %3038
        %3040 = vrot.lane.b32.xlu0 %v3005, 16
        %v3041 = vpop.permute.xlu0 %3040
        %3042 = vrot.lane.b32.xlu0 %v3006, 16
        %v3043 = vpop.permute.xlu0 %3042
        %3044 = vrot.lane.b32.xlu0 %v3007, 16
        %v3045 = vpop.permute.xlu0 %3044
        %3046 = vrot.lane.b32.xlu0 %v3008, 16
        %v3047 = vpop.permute.xlu0 %3046
        %3048 = vrot.lane.b32.xlu0 %v3009, 16
        %v3049 = vpop.permute.xlu0 %3048
        %3050 = vrot.lane.b32.xlu0 %v3010, 16
        %v3051 = vpop.permute.xlu0 %3050
        %3052 = vrot.lane.b32.xlu0 %v3011, 16
        %v3053 = vpop.permute.xlu0 %3052
        %3054 = vrot.lane.b32.xlu0 %v3012, 16
        %v3055 = vpop.permute.xlu0 %3054
        %3056 = vrot.lane.b32.xlu0 %v3013, 16
        %v3057 = vpop.permute.xlu0 %3056
        %3058 = vrot.lane.b32.xlu0 %v3014, 16
        %v3059 = vpop.permute.xlu0 %3058
        %3060 = vrot.lane.b32.xlu0 %v3015, 16
        %v3061 = vpop.permute.xlu0 %3060
        %3062 = vrot.lane.b32.xlu0 %v3016, 16
        %v3063 = vpop.permute.xlu0 %3062
        %3064 = vrot.lane.b32.xlu0 %v3017, 16
        %v3065 = vpop.permute.xlu0 %3064
        %vm3082 = vcmask 195712
        %3083 = vst.msk [vmem:[#allocation5] sm:$0xff] %vm3082, %v3035
        %3084 = vst.msk [vmem:[#allocation5 + $0x8] sm:$0xff] %vm3082, %v3037
        %3085 = vst.msk [vmem:[#allocation5 + $0x10] sm:$0xff] %vm3082, %v3039
        %3086 = vst.msk [vmem:[#allocation5 + $0x18] sm:$0xff] %vm3082, %v3041
        %3087 = vst.msk [vmem:[#allocation5 + $0x20] sm:$0xff] %vm3082, %v3043
        %3088 = vst.msk [vmem:[#allocation5 + $0x28] sm:$0xff] %vm3082, %v3045
        %3089 = vst.msk [vmem:[#allocation5 + $0x30] sm:$0xff] %vm3082, %v3047
        %3090 = vst.msk [vmem:[#allocation5 + $0x38] sm:$0xff] %vm3082, %v3049
        %3091 = vst.msk [vmem:[#allocation5 + $0x40] sm:$0xff] %vm3082, %v3051
        %3092 = vst.msk [vmem:[#allocation5 + $0x48] sm:$0xff] %vm3082, %v3053
        %3093 = vst.msk [vmem:[#allocation5 + $0x50] sm:$0xff] %vm3082, %v3055
        %3094 = vst.msk [vmem:[#allocation5 + $0x58] sm:$0xff] %vm3082, %v3057
        %3095 = vst.msk [vmem:[#allocation5 + $0x60] sm:$0xff] %vm3082, %v3059
        %3096 = vst.msk [vmem:[#allocation5 + $0x68] sm:$0xff] %vm3082, %v3061
        %3097 = vst.msk [vmem:[#allocation5 + $0x70] sm:$0xff] %vm3082, %v3063
        %3098 = vst.msk [vmem:[#allocation5 + $0x78] sm:$0xff] %vm3082, %v3065
        %v3099 = vld [vmem:[#allocation3 + $0x17] sm:$0xff]
        %v3100 = vld [vmem:[#allocation3 + $0x1f] sm:$0xff]
        %v3101 = vld [vmem:[#allocation3 + $0x27] sm:$0xff]
        %v3102 = vld [vmem:[#allocation3 + $0x2f] sm:$0xff]
        %v3103 = vld [vmem:[#allocation3 + $0x37] sm:$0xff]
        %v3104 = vld [vmem:[#allocation3 + $0x3f] sm:$0xff]
        %v3105 = vld [vmem:[#allocation3 + $0x47] sm:$0xff]
        %v3106 = vld [vmem:[#allocation3 + $0x4f] sm:$0xff]
        %v3107 = vld [vmem:[#allocation3 + $0x57] sm:$0xff]
        %v3108 = vld [vmem:[#allocation3 + $0x5f] sm:$0xff]
        %v3109 = vld [vmem:[#allocation3 + $0x67] sm:$0xff]
        %v3110 = vld [vmem:[#allocation3 + $0x6f] sm:$0xff]
        %v3111 = vld [vmem:[#allocation3 + $0x77] sm:$0xff]
        %v3112 = vld [vmem:[#allocation3 + $0x7f] sm:$0xff]
        %v3113 = vld [vmem:[#allocation3 + $0x87] sm:$0xff]
        %v3114 = vld [vmem:[#allocation3 + $0x8f] sm:$0xff]
        %v3115 = vld [vmem:[#allocation3 + $0x97] sm:$0xff]
        %v3116 = vld [vmem:[#allocation3 + $0x9f] sm:$0xff]
        %v3117 = vld [vmem:[#allocation3 + $0xa7] sm:$0xff]
        %v3118 = vld [vmem:[#allocation3 + $0xaf] sm:$0xff]
        %v3119 = vld [vmem:[#allocation3 + $0xb7] sm:$0xff]
        %v3120 = vld [vmem:[#allocation3 + $0xbf] sm:$0xff]
        %v3121 = vld [vmem:[#allocation3 + $0xc7] sm:$0xff]
        %v3122 = vld [vmem:[#allocation3 + $0xcf] sm:$0xff]
        %v3123 = vld [vmem:[#allocation3 + $0xd7] sm:$0xff]
        %v3124 = vld [vmem:[#allocation3 + $0xdf] sm:$0xff]
        %v3125 = vld [vmem:[#allocation3 + $0xe7] sm:$0xff]
        %v3126 = vld [vmem:[#allocation3 + $0xef] sm:$0xff]
        %v3127 = vld [vmem:[#allocation3 + $0xf7] sm:$0xff]
        %v3128 = vld [vmem:[#allocation3 + $0xff] sm:$0xff]
        %v3129 = vld [vmem:[#allocation3 + $0x107] sm:$0xff]
        %v3130 = vld [vmem:[#allocation3 + $0x10f] sm:$0xff]
        %v3131 = vmul.f32 %v3099, %v866
        %v3132 = vmul.f32 %v3100, %v867
        %v3133 = vmul.f32 %v3101, %v868
        %v3134 = vmul.f32 %v3102, %v869
        %v3135 = vmul.f32 %v3103, %v870
        %v3136 = vmul.f32 %v3104, %v871
        %v3137 = vmul.f32 %v3105, %v872
        %v3138 = vmul.f32 %v3106, %v873
        %v3139 = vmul.f32 %v3107, %v874
        %v3140 = vmul.f32 %v3108, %v875
        %v3141 = vmul.f32 %v3109, %v876
        %v3142 = vmul.f32 %v3110, %v877
        %v3143 = vmul.f32 %v3111, %v878
        %v3144 = vmul.f32 %v3112, %v879
        %v3145 = vmul.f32 %v3113, %v880
        %v3146 = vmul.f32 %v3114, %v881
        %v3147 = vmul.f32 %v3115, %v882
        %v3148 = vmul.f32 %v3116, %v883
        %v3149 = vmul.f32 %v3117, %v884
        %v3150 = vmul.f32 %v3118, %v885
        %v3151 = vmul.f32 %v3119, %v886
        %v3152 = vmul.f32 %v3120, %v887
        %v3153 = vmul.f32 %v3121, %v888
        %v3154 = vmul.f32 %v3122, %v889
        %v3155 = vmul.f32 %v3123, %v890
        %v3156 = vmul.f32 %v3124, %v891
        %v3157 = vmul.f32 %v3125, %v892
        %v3158 = vmul.f32 %v3126, %v893
        %v3159 = vmul.f32 %v3127, %v894
        %v3160 = vmul.f32 %v3128, %v895
        %v3161 = vmul.f32 %v3129, %v896
        %v3162 = vmul.f32 %v3130, %v897
        %v3163 = vpack.c.bf16 %v3132, %v3131
        %v3164 = vpack.c.bf16 %v3134, %v3133
        %v3165 = vpack.c.bf16 %v3136, %v3135
        %v3166 = vpack.c.bf16 %v3138, %v3137
        %v3167 = vpack.c.bf16 %v3140, %v3139
        %v3168 = vpack.c.bf16 %v3142, %v3141
        %v3169 = vpack.c.bf16 %v3144, %v3143
        %v3170 = vpack.c.bf16 %v3146, %v3145
        %v3171 = vpack.c.bf16 %v3148, %v3147
        %v3172 = vpack.c.bf16 %v3150, %v3149
        %v3173 = vpack.c.bf16 %v3152, %v3151
        %v3174 = vpack.c.bf16 %v3154, %v3153
        %v3175 = vpack.c.bf16 %v3156, %v3155
        %v3176 = vpack.c.bf16 %v3158, %v3157
        %v3177 = vpack.c.bf16 %v3160, %v3159
        %v3178 = vpack.c.bf16 %v3162, %v3161
        %3195 = vrot.lane.b32.xlu0 %v3163, 24
        %v3196 = vpop.permute.xlu0 %3195
        %3197 = vrot.lane.b32.xlu0 %v3164, 24
        %v3198 = vpop.permute.xlu0 %3197
        %3199 = vrot.lane.b32.xlu0 %v3165, 24
        %v3200 = vpop.permute.xlu0 %3199
        %3201 = vrot.lane.b32.xlu0 %v3166, 24
        %v3202 = vpop.permute.xlu0 %3201
        %3203 = vrot.lane.b32.xlu0 %v3167, 24
        %v3204 = vpop.permute.xlu0 %3203
        %3205 = vrot.lane.b32.xlu0 %v3168, 24
        %v3206 = vpop.permute.xlu0 %3205
        %3207 = vrot.lane.b32.xlu0 %v3169, 24
        %v3208 = vpop.permute.xlu0 %3207
        %3209 = vrot.lane.b32.xlu0 %v3170, 24
        %v3210 = vpop.permute.xlu0 %3209
        %3211 = vrot.lane.b32.xlu0 %v3171, 24
        %v3212 = vpop.permute.xlu0 %3211
        %3213 = vrot.lane.b32.xlu0 %v3172, 24
        %v3214 = vpop.permute.xlu0 %3213
        %3215 = vrot.lane.b32.xlu0 %v3173, 24
        %v3216 = vpop.permute.xlu0 %3215
        %3217 = vrot.lane.b32.xlu0 %v3174, 24
        %v3218 = vpop.permute.xlu0 %3217
        %3219 = vrot.lane.b32.xlu0 %v3175, 24
        %v3220 = vpop.permute.xlu0 %3219
        %3221 = vrot.lane.b32.xlu0 %v3176, 24
        %v3222 = vpop.permute.xlu0 %3221
        %3223 = vrot.lane.b32.xlu0 %v3177, 24
        %v3224 = vpop.permute.xlu0 %3223
        %3225 = vrot.lane.b32.xlu0 %v3178, 24
        %v3226 = vpop.permute.xlu0 %3225
        %vm3243 = vcmask 261312
        %3244 = vst.msk [vmem:[#allocation5] sm:$0xff] %vm3243, %v3196
        %3245 = vst.msk [vmem:[#allocation5 + $0x8] sm:$0xff] %vm3243, %v3198
        %3246 = vst.msk [vmem:[#allocation5 + $0x10] sm:$0xff] %vm3243, %v3200
        %3247 = vst.msk [vmem:[#allocation5 + $0x18] sm:$0xff] %vm3243, %v3202
        %3248 = vst.msk [vmem:[#allocation5 + $0x20] sm:$0xff] %vm3243, %v3204
        %3249 = vst.msk [vmem:[#allocation5 + $0x28] sm:$0xff] %vm3243, %v3206
        %3250 = vst.msk [vmem:[#allocation5 + $0x30] sm:$0xff] %vm3243, %v3208
        %3251 = vst.msk [vmem:[#allocation5 + $0x38] sm:$0xff] %vm3243, %v3210
        %3252 = vst.msk [vmem:[#allocation5 + $0x40] sm:$0xff] %vm3243, %v3212
        %3253 = vst.msk [vmem:[#allocation5 + $0x48] sm:$0xff] %vm3243, %v3214
        %3254 = vst.msk [vmem:[#allocation5 + $0x50] sm:$0xff] %vm3243, %v3216
        %3255 = vst.msk [vmem:[#allocation5 + $0x58] sm:$0xff] %vm3243, %v3218
        %3256 = vst.msk [vmem:[#allocation5 + $0x60] sm:$0xff] %vm3243, %v3220
        %3257 = vst.msk [vmem:[#allocation5 + $0x68] sm:$0xff] %vm3243, %v3222
        %3258 = vst.msk [vmem:[#allocation5 + $0x70] sm:$0xff] %vm3243, %v3224
        %3259 = vst.msk [vmem:[#allocation5 + $0x78] sm:$0xff] %vm3243, %v3226
        %v3260 = vld [vmem:[#allocation3 + $0x18] sm:$0xff]
        %v3261 = vld [vmem:[#allocation3 + $0x20] sm:$0xff]
        %v3262 = vld [vmem:[#allocation3 + $0x28] sm:$0xff]
        %v3263 = vld [vmem:[#allocation3 + $0x30] sm:$0xff]
        %v3264 = vld [vmem:[#allocation3 + $0x38] sm:$0xff]
        %v3265 = vld [vmem:[#allocation3 + $0x40] sm:$0xff]
        %v3266 = vld [vmem:[#allocation3 + $0x48] sm:$0xff]
        %v3267 = vld [vmem:[#allocation3 + $0x50] sm:$0xff]
        %v3268 = vld [vmem:[#allocation3 + $0x58] sm:$0xff]
        %v3269 = vld [vmem:[#allocation3 + $0x60] sm:$0xff]
        %v3270 = vld [vmem:[#allocation3 + $0x68] sm:$0xff]
        %v3271 = vld [vmem:[#allocation3 + $0x70] sm:$0xff]
        %v3272 = vld [vmem:[#allocation3 + $0x78] sm:$0xff]
        %v3273 = vld [vmem:[#allocation3 + $0x80] sm:$0xff]
        %v3274 = vld [vmem:[#allocation3 + $0x88] sm:$0xff]
        %v3275 = vld [vmem:[#allocation3 + $0x90] sm:$0xff]
        %v3276 = vld [vmem:[#allocation3 + $0x98] sm:$0xff]
        %v3277 = vld [vmem:[#allocation3 + $0xa0] sm:$0xff]
        %v3278 = vld [vmem:[#allocation3 + $0xa8] sm:$0xff]
        %v3279 = vld [vmem:[#allocation3 + $0xb0] sm:$0xff]
        %v3280 = vld [vmem:[#allocation3 + $0xb8] sm:$0xff]
        %v3281 = vld [vmem:[#allocation3 + $0xc0] sm:$0xff]
        %v3282 = vld [vmem:[#allocation3 + $0xc8] sm:$0xff]
        %v3283 = vld [vmem:[#allocation3 + $0xd0] sm:$0xff]
        %v3284 = vld [vmem:[#allocation3 + $0xd8] sm:$0xff]
        %v3285 = vld [vmem:[#allocation3 + $0xe0] sm:$0xff]
        %v3286 = vld [vmem:[#allocation3 + $0xe8] sm:$0xff]
        %v3287 = vld [vmem:[#allocation3 + $0xf0] sm:$0xff]
        %v3288 = vld [vmem:[#allocation3 + $0xf8] sm:$0xff]
        %v3289 = vld [vmem:[#allocation3 + $0x100] sm:$0xff]
        %v3290 = vld [vmem:[#allocation3 + $0x108] sm:$0xff]
        %v3291 = vld [vmem:[#allocation3 + $0x110] sm:$0xff]
        %v3292 = vpack.c.bf16 %v3261, %v3260
        %v3293 = vpack.c.bf16 %v3263, %v3262
        %v3294 = vpack.c.bf16 %v3265, %v3264
        %v3295 = vpack.c.bf16 %v3267, %v3266
        %v3296 = vpack.c.bf16 %v3269, %v3268
        %v3297 = vpack.c.bf16 %v3271, %v3270
        %v3298 = vpack.c.bf16 %v3273, %v3272
        %v3299 = vpack.c.bf16 %v3275, %v3274
        %v3300 = vpack.c.bf16 %v3277, %v3276
        %v3301 = vpack.c.bf16 %v3279, %v3278
        %v3302 = vpack.c.bf16 %v3281, %v3280
        %v3303 = vpack.c.bf16 %v3283, %v3282
        %v3304 = vpack.c.bf16 %v3285, %v3284
        %v3305 = vpack.c.bf16 %v3287, %v3286
        %v3306 = vpack.c.bf16 %v3289, %v3288
        %v3307 = vpack.c.bf16 %v3291, %v3290
        %3324 = vrot.lane.b32.xlu0 %v3292, 32
        %v3325 = vpop.permute.xlu0 %3324
        %3326 = vrot.lane.b32.xlu0 %v3293, 32
        %v3327 = vpop.permute.xlu0 %3326
        %3328 = vrot.lane.b32.xlu0 %v3294, 32
        %v3329 = vpop.permute.xlu0 %3328
        %3330 = vrot.lane.b32.xlu0 %v3295, 32
        %v3331 = vpop.permute.xlu0 %3330
        %3332 = vrot.lane.b32.xlu0 %v3296, 32
        %v3333 = vpop.permute.xlu0 %3332
        %3334 = vrot.lane.b32.xlu0 %v3297, 32
        %v3335 = vpop.permute.xlu0 %3334
        %3336 = vrot.lane.b32.xlu0 %v3298, 32
        %v3337 = vpop.permute.xlu0 %3336
        %3338 = vrot.lane.b32.xlu0 %v3299, 32
        %v3339 = vpop.permute.xlu0 %3338
        %3340 = vrot.lane.b32.xlu0 %v3300, 32
        %v3341 = vpop.permute.xlu0 %3340
        %3342 = vrot.lane.b32.xlu0 %v3301, 32
        %v3343 = vpop.permute.xlu0 %3342
        %3344 = vrot.lane.b32.xlu0 %v3302, 32
        %v3345 = vpop.permute.xlu0 %3344
        %3346 = vrot.lane.b32.xlu0 %v3303, 32
        %v3347 = vpop.permute.xlu0 %3346
        %3348 = vrot.lane.b32.xlu0 %v3304, 32
        %v3349 = vpop.permute.xlu0 %3348
        %3350 = vrot.lane.b32.xlu0 %v3305, 32
        %v3351 = vpop.permute.xlu0 %3350
        %3352 = vrot.lane.b32.xlu0 %v3306, 32
        %v3353 = vpop.permute.xlu0 %3352
        %3354 = vrot.lane.b32.xlu0 %v3307, 32
        %v3355 = vpop.permute.xlu0 %3354
        %vm3372 = vcmask 326912
        %3373 = vst.msk [vmem:[#allocation5] sm:$0xff] %vm3372, %v3325
        %3374 = vst.msk [vmem:[#allocation5 + $0x8] sm:$0xff] %vm3372, %v3327
        %3375 = vst.msk [vmem:[#allocation5 + $0x10] sm:$0xff] %vm3372, %v3329
        %3376 = vst.msk [vmem:[#allocation5 + $0x18] sm:$0xff] %vm3372, %v3331
        %3377 = vst.msk [vmem:[#allocation5 + $0x20] sm:$0xff] %vm3372, %v3333
        %3378 = vst.msk [vmem:[#allocation5 + $0x28] sm:$0xff] %vm3372, %v3335
        %3379 = vst.msk [vmem:[#allocation5 + $0x30] sm:$0xff] %vm3372, %v3337
        %3380 = vst.msk [vmem:[#allocation5 + $0x38] sm:$0xff] %vm3372, %v3339
        %3381 = vst.msk [vmem:[#allocation5 + $0x40] sm:$0xff] %vm3372, %v3341
        %3382 = vst.msk [vmem:[#allocation5 + $0x48] sm:$0xff] %vm3372, %v3343
        %3383 = vst.msk [vmem:[#allocation5 + $0x50] sm:$0xff] %vm3372, %v3345
        %3384 = vst.msk [vmem:[#allocation5 + $0x58] sm:$0xff] %vm3372, %v3347
        %3385 = vst.msk [vmem:[#allocation5 + $0x60] sm:$0xff] %vm3372, %v3349
        %3386 = vst.msk [vmem:[#allocation5 + $0x68] sm:$0xff] %vm3372, %v3351
        %3387 = vst.msk [vmem:[#allocation5 + $0x70] sm:$0xff] %vm3372, %v3353
        %3388 = vst.msk [vmem:[#allocation5 + $0x78] sm:$0xff] %vm3372, %v3355
        %v3389 = vld [vmem:[#allocation3 + $0x19] sm:$0xff]
        %v3390 = vld [vmem:[#allocation3 + $0x21] sm:$0xff]
        %v3391 = vld [vmem:[#allocation3 + $0x29] sm:$0xff]
        %v3392 = vld [vmem:[#allocation3 + $0x31] sm:$0xff]
        %v3393 = vld [vmem:[#allocation3 + $0x39] sm:$0xff]
        %v3394 = vld [vmem:[#allocation3 + $0x41] sm:$0xff]
        %v3395 = vld [vmem:[#allocation3 + $0x49] sm:$0xff]
        %v3396 = vld [vmem:[#allocation3 + $0x51] sm:$0xff]
        %v3397 = vld [vmem:[#allocation3 + $0x59] sm:$0xff]
        %v3398 = vld [vmem:[#allocation3 + $0x61] sm:$0xff]
        %v3399 = vld [vmem:[#allocation3 + $0x69] sm:$0xff]
        %v3400 = vld [vmem:[#allocation3 + $0x71] sm:$0xff]
        %v3401 = vld [vmem:[#allocation3 + $0x79] sm:$0xff]
        %v3402 = vld [vmem:[#allocation3 + $0x81] sm:$0xff]
        %v3403 = vld [vmem:[#allocation3 + $0x89] sm:$0xff]
        %v3404 = vld [vmem:[#allocation3 + $0x91] sm:$0xff]
        %v3405 = vld [vmem:[#allocation3 + $0x99] sm:$0xff]
        %v3406 = vld [vmem:[#allocation3 + $0xa1] sm:$0xff]
        %v3407 = vld [vmem:[#allocation3 + $0xa9] sm:$0xff]
        %v3408 = vld [vmem:[#allocation3 + $0xb1] sm:$0xff]
        %v3409 = vld [vmem:[#allocation3 + $0xb9] sm:$0xff]
        %v3410 = vld [vmem:[#allocation3 + $0xc1] sm:$0xff]
        %v3411 = vld [vmem:[#allocation3 + $0xc9] sm:$0xff]
        %v3412 = vld [vmem:[#allocation3 + $0xd1] sm:$0xff]
        %v3413 = vld [vmem:[#allocation3 + $0xd9] sm:$0xff]
        %v3414 = vld [vmem:[#allocation3 + $0xe1] sm:$0xff]
        %v3415 = vld [vmem:[#allocation3 + $0xe9] sm:$0xff]
        %v3416 = vld [vmem:[#allocation3 + $0xf1] sm:$0xff]
        %v3417 = vld [vmem:[#allocation3 + $0xf9] sm:$0xff]
        %v3418 = vld [vmem:[#allocation3 + $0x101] sm:$0xff]
        %v3419 = vld [vmem:[#allocation3 + $0x109] sm:$0xff]
        %v3420 = vld [vmem:[#allocation3 + $0x111] sm:$0xff]
        %v3421 = vmul.f32 %v3389, %v962
        %v3422 = vmul.f32 %v3390, %v963
        %v3423 = vmul.f32 %v3391, %v964
        %v3424 = vmul.f32 %v3392, %v965
        %v3425 = vmul.f32 %v3393, %v966
        %v3426 = vmul.f32 %v3394, %v967
        %v3427 = vmul.f32 %v3395, %v968
        %v3428 = vmul.f32 %v3396, %v969
        %v3429 = vmul.f32 %v3397, %v970
        %v3430 = vmul.f32 %v3398, %v971
        %v3431 = vmul.f32 %v3399, %v972
        %v3432 = vmul.f32 %v3400, %v973
        %v3433 = vmul.f32 %v3401, %v974
        %v3434 = vmul.f32 %v3402, %v975
        %v3435 = vmul.f32 %v3403, %v976
        %v3436 = vmul.f32 %v3404, %v977
        %v3437 = vmul.f32 %v3405, %v978
        %v3438 = vmul.f32 %v3406, %v979
        %v3439 = vmul.f32 %v3407, %v980
        %v3440 = vmul.f32 %v3408, %v981
        %v3441 = vmul.f32 %v3409, %v982
        %v3442 = vmul.f32 %v3410, %v983
        %v3443 = vmul.f32 %v3411, %v984
        %v3444 = vmul.f32 %v3412, %v985
        %v3445 = vmul.f32 %v3413, %v986
        %v3446 = vmul.f32 %v3414, %v987
        %v3447 = vmul.f32 %v3415, %v988
        %v3448 = vmul.f32 %v3416, %v989
        %v3449 = vmul.f32 %v3417, %v990
        %v3450 = vmul.f32 %v3418, %v991
        %v3451 = vmul.f32 %v3419, %v992
        %v3452 = vmul.f32 %v3420, %v993
        %v3453 = vpack.c.bf16 %v3422, %v3421
        %v3454 = vpack.c.bf16 %v3424, %v3423
        %v3455 = vpack.c.bf16 %v3426, %v3425
        %v3456 = vpack.c.bf16 %v3428, %v3427
        %v3457 = vpack.c.bf16 %v3430, %v3429
        %v3458 = vpack.c.bf16 %v3432, %v3431
        %v3459 = vpack.c.bf16 %v3434, %v3433
        %v3460 = vpack.c.bf16 %v3436, %v3435
        %v3461 = vpack.c.bf16 %v3438, %v3437
        %v3462 = vpack.c.bf16 %v3440, %v3439
        %v3463 = vpack.c.bf16 %v3442, %v3441
        %v3464 = vpack.c.bf16 %v3444, %v3443
        %v3465 = vpack.c.bf16 %v3446, %v3445
        %v3466 = vpack.c.bf16 %v3448, %v3447
        %v3467 = vpack.c.bf16 %v3450, %v3449
        %v3468 = vpack.c.bf16 %v3452, %v3451
        %3485 = vrot.lane.b32.xlu0 %v3453, 40
        %v3486 = vpop.permute.xlu0 %3485
        %3487 = vrot.lane.b32.xlu0 %v3454, 40
        %v3488 = vpop.permute.xlu0 %3487
        %3489 = vrot.lane.b32.xlu0 %v3455, 40
        %v3490 = vpop.permute.xlu0 %3489
        %3491 = vrot.lane.b32.xlu0 %v3456, 40
        %v3492 = vpop.permute.xlu0 %3491
        %3493 = vrot.lane.b32.xlu0 %v3457, 40
        %v3494 = vpop.permute.xlu0 %3493
        %3495 = vrot.lane.b32.xlu0 %v3458, 40
        %v3496 = vpop.permute.xlu0 %3495
        %3497 = vrot.lane.b32.xlu0 %v3459, 40
        %v3498 = vpop.permute.xlu0 %3497
        %3499 = vrot.lane.b32.xlu0 %v3460, 40
        %v3500 = vpop.permute.xlu0 %3499
        %3501 = vrot.lane.b32.xlu0 %v3461, 40
        %v3502 = vpop.permute.xlu0 %3501
        %3503 = vrot.lane.b32.xlu0 %v3462, 40
        %v3504 = vpop.permute.xlu0 %3503
        %3505 = vrot.lane.b32.xlu0 %v3463, 40
        %v3506 = vpop.permute.xlu0 %3505
        %3507 = vrot.lane.b32.xlu0 %v3464, 40
        %v3508 = vpop.permute.xlu0 %3507
        %3509 = vrot.lane.b32.xlu0 %v3465, 40
        %v3510 = vpop.permute.xlu0 %3509
        %3511 = vrot.lane.b32.xlu0 %v3466, 40
        %v3512 = vpop.permute.xlu0 %3511
        %3513 = vrot.lane.b32.xlu0 %v3467, 40
        %v3514 = vpop.permute.xlu0 %3513
        %3515 = vrot.lane.b32.xlu0 %v3468, 40
        %v3516 = vpop.permute.xlu0 %3515
        %vm3533 = vcmask 392512
        %3534 = vst.msk [vmem:[#allocation5] sm:$0xff] %vm3533, %v3486
        %3535 = vst.msk [vmem:[#allocation5 + $0x8] sm:$0xff] %vm3533, %v3488
        %3536 = vst.msk [vmem:[#allocation5 + $0x10] sm:$0xff] %vm3533, %v3490
        %3537 = vst.msk [vmem:[#allocation5 + $0x18] sm:$0xff] %vm3533, %v3492
        %3538 = vst.msk [vmem:[#allocation5 + $0x20] sm:$0xff] %vm3533, %v3494
        %3539 = vst.msk [vmem:[#allocation5 + $0x28] sm:$0xff] %vm3533, %v3496
        %3540 = vst.msk [vmem:[#allocation5 + $0x30] sm:$0xff] %vm3533, %v3498
        %3541 = vst.msk [vmem:[#allocation5 + $0x38] sm:$0xff] %vm3533, %v3500
        %3542 = vst.msk [vmem:[#allocation5 + $0x40] sm:$0xff] %vm3533, %v3502
        %3543 = vst.msk [vmem:[#allocation5 + $0x48] sm:$0xff] %vm3533, %v3504
        %3544 = vst.msk [vmem:[#allocation5 + $0x50] sm:$0xff] %vm3533, %v3506
        %3545 = vst.msk [vmem:[#allocation5 + $0x58] sm:$0xff] %vm3533, %v3508
        %3546 = vst.msk [vmem:[#allocation5 + $0x60] sm:$0xff] %vm3533, %v3510
        %3547 = vst.msk [vmem:[#allocation5 + $0x68] sm:$0xff] %vm3533, %v3512
        %3548 = vst.msk [vmem:[#allocation5 + $0x70] sm:$0xff] %vm3533, %v3514
        %3549 = vst.msk [vmem:[#allocation5 + $0x78] sm:$0xff] %vm3533, %v3516
        %v3550 = vld [vmem:[#allocation3 + $0x27] sm:$0xff]
        %v3551 = vld [vmem:[#allocation3 + $0x2f] sm:$0xff]
        %v3552 = vld [vmem:[#allocation3 + $0x37] sm:$0xff]
        %v3553 = vld [vmem:[#allocation3 + $0x3f] sm:$0xff]
        %v3554 = vld [vmem:[#allocation3 + $0x47] sm:$0xff]
        %v3555 = vld [vmem:[#allocation3 + $0x4f] sm:$0xff]
        %v3556 = vld [vmem:[#allocation3 + $0x57] sm:$0xff]
        %v3557 = vld [vmem:[#allocation3 + $0x5f] sm:$0xff]
        %v3558 = vld [vmem:[#allocation3 + $0x67] sm:$0xff]
        %v3559 = vld [vmem:[#allocation3 + $0x6f] sm:$0xff]
        %v3560 = vld [vmem:[#allocation3 + $0x77] sm:$0xff]
        %v3561 = vld [vmem:[#allocation3 + $0x7f] sm:$0xff]
        %v3562 = vld [vmem:[#allocation3 + $0x87] sm:$0xff]
        %v3563 = vld [vmem:[#allocation3 + $0x8f] sm:$0xff]
        %v3564 = vld [vmem:[#allocation3 + $0x97] sm:$0xff]
        %v3565 = vld [vmem:[#allocation3 + $0x9f] sm:$0xff]
        %v3566 = vld [vmem:[#allocation3 + $0xa7] sm:$0xff]
        %v3567 = vld [vmem:[#allocation3 + $0xaf] sm:$0xff]
        %v3568 = vld [vmem:[#allocation3 + $0xb7] sm:$0xff]
        %v3569 = vld [vmem:[#allocation3 + $0xbf] sm:$0xff]
        %v3570 = vld [vmem:[#allocation3 + $0xc7] sm:$0xff]
        %v3571 = vld [vmem:[#allocation3 + $0xcf] sm:$0xff]
        %v3572 = vld [vmem:[#allocation3 + $0xd7] sm:$0xff]
        %v3573 = vld [vmem:[#allocation3 + $0xdf] sm:$0xff]
        %v3574 = vld [vmem:[#allocation3 + $0xe7] sm:$0xff]
        %v3575 = vld [vmem:[#allocation3 + $0xef] sm:$0xff]
        %v3576 = vld [vmem:[#allocation3 + $0xf7] sm:$0xff]
        %v3577 = vld [vmem:[#allocation3 + $0xff] sm:$0xff]
        %v3578 = vld [vmem:[#allocation3 + $0x107] sm:$0xff]
        %v3579 = vld [vmem:[#allocation3 + $0x10f] sm:$0xff]
        %v3580 = vld [vmem:[#allocation3 + $0x117] sm:$0xff]
        %v3581 = vld [vmem:[#allocation3 + $0x11f] sm:$0xff]
        %v3582 = vmul.f32 %v3550, %v866
        %v3583 = vmul.f32 %v3551, %v867
        %v3584 = vmul.f32 %v3552, %v868
        %v3585 = vmul.f32 %v3553, %v869
        %v3586 = vmul.f32 %v3554, %v870
        %v3587 = vmul.f32 %v3555, %v871
        %v3588 = vmul.f32 %v3556, %v872
        %v3589 = vmul.f32 %v3557, %v873
        %v3590 = vmul.f32 %v3558, %v874
        %v3591 = vmul.f32 %v3559, %v875
        %v3592 = vmul.f32 %v3560, %v876
        %v3593 = vmul.f32 %v3561, %v877
        %v3594 = vmul.f32 %v3562, %v878
        %v3595 = vmul.f32 %v3563, %v879
        %v3596 = vmul.f32 %v3564, %v880
        %v3597 = vmul.f32 %v3565, %v881
        %v3598 = vmul.f32 %v3566, %v882
        %v3599 = vmul.f32 %v3567, %v883
        %v3600 = vmul.f32 %v3568, %v884
        %v3601 = vmul.f32 %v3569, %v885
        %v3602 = vmul.f32 %v3570, %v886
        %v3603 = vmul.f32 %v3571, %v887
        %v3604 = vmul.f32 %v3572, %v888
        %v3605 = vmul.f32 %v3573, %v889
        %v3606 = vmul.f32 %v3574, %v890
        %v3607 = vmul.f32 %v3575, %v891
        %v3608 = vmul.f32 %v3576, %v892
        %v3609 = vmul.f32 %v3577, %v893
        %v3610 = vmul.f32 %v3578, %v894
        %v3611 = vmul.f32 %v3579, %v895
        %v3612 = vmul.f32 %v3580, %v896
        %v3613 = vmul.f32 %v3581, %v897
        %v3614 = vpack.c.bf16 %v3583, %v3582
        %v3615 = vpack.c.bf16 %v3585, %v3584
        %v3616 = vpack.c.bf16 %v3587, %v3586
        %v3617 = vpack.c.bf16 %v3589, %v3588
        %v3618 = vpack.c.bf16 %v3591, %v3590
        %v3619 = vpack.c.bf16 %v3593, %v3592
        %v3620 = vpack.c.bf16 %v3595, %v3594
        %v3621 = vpack.c.bf16 %v3597, %v3596
        %v3622 = vpack.c.bf16 %v3599, %v3598
        %v3623 = vpack.c.bf16 %v3601, %v3600
        %v3624 = vpack.c.bf16 %v3603, %v3602
        %v3625 = vpack.c.bf16 %v3605, %v3604
        %v3626 = vpack.c.bf16 %v3607, %v3606
        %v3627 = vpack.c.bf16 %v3609, %v3608
        %v3628 = vpack.c.bf16 %v3611, %v3610
        %v3629 = vpack.c.bf16 %v3613, %v3612
        %3646 = vrot.lane.b32.xlu0 %v3614, 48
        %v3647 = vpop.permute.xlu0 %3646
        %3648 = vrot.lane.b32.xlu0 %v3615, 48
        %v3649 = vpop.permute.xlu0 %3648
        %3650 = vrot.lane.b32.xlu0 %v3616, 48
        %v3651 = vpop.permute.xlu0 %3650
        %3652 = vrot.lane.b32.xlu0 %v3617, 48
        %v3653 = vpop.permute.xlu0 %3652
        %3654 = vrot.lane.b32.xlu0 %v3618, 48
        %v3655 = vpop.permute.xlu0 %3654
        %3656 = vrot.lane.b32.xlu0 %v3619, 48
        %v3657 = vpop.permute.xlu0 %3656
        %3658 = vrot.lane.b32.xlu0 %v3620, 48
        %v3659 = vpop.permute.xlu0 %3658
        %3660 = vrot.lane.b32.xlu0 %v3621, 48
        %v3661 = vpop.permute.xlu0 %3660
        %3662 = vrot.lane.b32.xlu0 %v3622, 48
        %v3663 = vpop.permute.xlu0 %3662
        %3664 = vrot.lane.b32.xlu0 %v3623, 48
        %v3665 = vpop.permute.xlu0 %3664
        %3666 = vrot.lane.b32.xlu0 %v3624, 48
        %v3667 = vpop.permute.xlu0 %3666
        %3668 = vrot.lane.b32.xlu0 %v3625, 48
        %v3669 = vpop.permute.xlu0 %3668
        %3670 = vrot.lane.b32.xlu0 %v3626, 48
        %v3671 = vpop.permute.xlu0 %3670
        %3672 = vrot.lane.b32.xlu0 %v3627, 48
        %v3673 = vpop.permute.xlu0 %3672
        %3674 = vrot.lane.b32.xlu0 %v3628, 48
        %v3675 = vpop.permute.xlu0 %3674
        %3676 = vrot.lane.b32.xlu0 %v3629, 48
        %v3677 = vpop.permute.xlu0 %3676
        %vm3694 = vcmask 458112
        %3695 = vst.msk [vmem:[#allocation5] sm:$0xff] %vm3694, %v3647
        %3696 = vst.msk [vmem:[#allocation5 + $0x8] sm:$0xff] %vm3694, %v3649
        %3697 = vst.msk [vmem:[#allocation5 + $0x10] sm:$0xff] %vm3694, %v3651
        %3698 = vst.msk [vmem:[#allocation5 + $0x18] sm:$0xff] %vm3694, %v3653
        %3699 = vst.msk [vmem:[#allocation5 + $0x20] sm:$0xff] %vm3694, %v3655
        %3700 = vst.msk [vmem:[#allocation5 + $0x28] sm:$0xff] %vm3694, %v3657
        %3701 = vst.msk [vmem:[#allocation5 + $0x30] sm:$0xff] %vm3694, %v3659
        %3702 = vst.msk [vmem:[#allocation5 + $0x38] sm:$0xff] %vm3694, %v3661
        %3703 = vst.msk [vmem:[#allocation5 + $0x40] sm:$0xff] %vm3694, %v3663
        %3704 = vst.msk [vmem:[#allocation5 + $0x48] sm:$0xff] %vm3694, %v3665
        %3705 = vst.msk [vmem:[#allocation5 + $0x50] sm:$0xff] %vm3694, %v3667
        %3706 = vst.msk [vmem:[#allocation5 + $0x58] sm:$0xff] %vm3694, %v3669
        %3707 = vst.msk [vmem:[#allocation5 + $0x60] sm:$0xff] %vm3694, %v3671
        %3708 = vst.msk [vmem:[#allocation5 + $0x68] sm:$0xff] %vm3694, %v3673
        %3709 = vst.msk [vmem:[#allocation5 + $0x70] sm:$0xff] %vm3694, %v3675
        %3710 = vst.msk [vmem:[#allocation5 + $0x78] sm:$0xff] %vm3694, %v3677
        %v3711 = vld [vmem:[#allocation3 + $0x28] sm:$0xff]
        %v3712 = vld [vmem:[#allocation3 + $0x30] sm:$0xff]
        %v3713 = vld [vmem:[#allocation3 + $0x38] sm:$0xff]
        %v3714 = vld [vmem:[#allocation3 + $0x40] sm:$0xff]
        %v3715 = vld [vmem:[#allocation3 + $0x48] sm:$0xff]
        %v3716 = vld [vmem:[#allocation3 + $0x50] sm:$0xff]
        %v3717 = vld [vmem:[#allocation3 + $0x58] sm:$0xff]
        %v3718 = vld [vmem:[#allocation3 + $0x60] sm:$0xff]
        %v3719 = vld [vmem:[#allocation3 + $0x68] sm:$0xff]
        %v3720 = vld [vmem:[#allocation3 + $0x70] sm:$0xff]
        %v3721 = vld [vmem:[#allocation3 + $0x78] sm:$0xff]
        %v3722 = vld [vmem:[#allocation3 + $0x80] sm:$0xff]
        %v3723 = vld [vmem:[#allocation3 + $0x88] sm:$0xff]
        %v3724 = vld [vmem:[#allocation3 + $0x90] sm:$0xff]
        %v3725 = vld [vmem:[#allocation3 + $0x98] sm:$0xff]
        %v3726 = vld [vmem:[#allocation3 + $0xa0] sm:$0xff]
        %v3727 = vld [vmem:[#allocation3 + $0xa8] sm:$0xff]
        %v3728 = vld [vmem:[#allocation3 + $0xb0] sm:$0xff]
        %v3729 = vld [vmem:[#allocation3 + $0xb8] sm:$0xff]
        %v3730 = vld [vmem:[#allocation3 + $0xc0] sm:$0xff]
        %v3731 = vld [vmem:[#allocation3 + $0xc8] sm:$0xff]
        %v3732 = vld [vmem:[#allocation3 + $0xd0] sm:$0xff]
        %v3733 = vld [vmem:[#allocation3 + $0xd8] sm:$0xff]
        %v3734 = vld [vmem:[#allocation3 + $0xe0] sm:$0xff]
        %v3735 = vld [vmem:[#allocation3 + $0xe8] sm:$0xff]
        %v3736 = vld [vmem:[#allocation3 + $0xf0] sm:$0xff]
        %v3737 = vld [vmem:[#allocation3 + $0xf8] sm:$0xff]
        %v3738 = vld [vmem:[#allocation3 + $0x100] sm:$0xff]
        %v3739 = vld [vmem:[#allocation3 + $0x108] sm:$0xff]
        %v3740 = vld [vmem:[#allocation3 + $0x110] sm:$0xff]
        %v3741 = vld [vmem:[#allocation3 + $0x118] sm:$0xff]
        %v3742 = vld [vmem:[#allocation3 + $0x120] sm:$0xff]
        %v3743 = vpack.c.bf16 %v3712, %v3711
        %v3744 = vpack.c.bf16 %v3714, %v3713
        %v3745 = vpack.c.bf16 %v3716, %v3715
        %v3746 = vpack.c.bf16 %v3718, %v3717
        %v3747 = vpack.c.bf16 %v3720, %v3719
        %v3748 = vpack.c.bf16 %v3722, %v3721
        %v3749 = vpack.c.bf16 %v3724, %v3723
        %v3750 = vpack.c.bf16 %v3726, %v3725
        %v3751 = vpack.c.bf16 %v3728, %v3727
        %v3752 = vpack.c.bf16 %v3730, %v3729
        %v3753 = vpack.c.bf16 %v3732, %v3731
        %v3754 = vpack.c.bf16 %v3734, %v3733
        %v3755 = vpack.c.bf16 %v3736, %v3735
        %v3756 = vpack.c.bf16 %v3738, %v3737
        %v3757 = vpack.c.bf16 %v3740, %v3739
        %v3758 = vpack.c.bf16 %v3742, %v3741
        %3775 = vrot.lane.b32.xlu0 %v3743, 56
        %v3776 = vpop.permute.xlu0 %3775
        %3777 = vrot.lane.b32.xlu0 %v3744, 56
        %v3778 = vpop.permute.xlu0 %3777
        %3779 = vrot.lane.b32.xlu0 %v3745, 56
        %v3780 = vpop.permute.xlu0 %3779
        %3781 = vrot.lane.b32.xlu0 %v3746, 56
        %v3782 = vpop.permute.xlu0 %3781
        %3783 = vrot.lane.b32.xlu0 %v3747, 56
        %v3784 = vpop.permute.xlu0 %3783
        %3785 = vrot.lane.b32.xlu0 %v3748, 56
        %v3786 = vpop.permute.xlu0 %3785
        %3787 = vrot.lane.b32.xlu0 %v3749, 56
        %v3788 = vpop.permute.xlu0 %3787
        %3789 = vrot.lane.b32.xlu0 %v3750, 56
        %v3790 = vpop.permute.xlu0 %3789
        %3791 = vrot.lane.b32.xlu0 %v3751, 56
        %v3792 = vpop.permute.xlu0 %3791
        %3793 = vrot.lane.b32.xlu0 %v3752, 56
        %v3794 = vpop.permute.xlu0 %3793
        %3795 = vrot.lane.b32.xlu0 %v3753, 56
        %v3796 = vpop.permute.xlu0 %3795
        %3797 = vrot.lane.b32.xlu0 %v3754, 56
        %v3798 = vpop.permute.xlu0 %3797
        %3799 = vrot.lane.b32.xlu0 %v3755, 56
        %v3800 = vpop.permute.xlu0 %3799
        %3801 = vrot.lane.b32.xlu0 %v3756, 56
        %v3802 = vpop.permute.xlu0 %3801
        %3803 = vrot.lane.b32.xlu0 %v3757, 56
        %v3804 = vpop.permute.xlu0 %3803
        %3805 = vrot.lane.b32.xlu0 %v3758, 56
        %v3806 = vpop.permute.xlu0 %3805
        %vm3823 = vcmask 523712
        %3824 = vst.msk [vmem:[#allocation5] sm:$0xff] %vm3823, %v3776
        %3825 = vst.msk [vmem:[#allocation5 + $0x8] sm:$0xff] %vm3823, %v3778
        %3826 = vst.msk [vmem:[#allocation5 + $0x10] sm:$0xff] %vm3823, %v3780
        %3827 = vst.msk [vmem:[#allocation5 + $0x18] sm:$0xff] %vm3823, %v3782
        %3828 = vst.msk [vmem:[#allocation5 + $0x20] sm:$0xff] %vm3823, %v3784
        %3829 = vst.msk [vmem:[#allocation5 + $0x28] sm:$0xff] %vm3823, %v3786
        %3830 = vst.msk [vmem:[#allocation5 + $0x30] sm:$0xff] %vm3823, %v3788
        %3831 = vst.msk [vmem:[#allocation5 + $0x38] sm:$0xff] %vm3823, %v3790
        %3832 = vst.msk [vmem:[#allocation5 + $0x40] sm:$0xff] %vm3823, %v3792
        %3833 = vst.msk [vmem:[#allocation5 + $0x48] sm:$0xff] %vm3823, %v3794
        %3834 = vst.msk [vmem:[#allocation5 + $0x50] sm:$0xff] %vm3823, %v3796
        %3835 = vst.msk [vmem:[#allocation5 + $0x58] sm:$0xff] %vm3823, %v3798
        %3836 = vst.msk [vmem:[#allocation5 + $0x60] sm:$0xff] %vm3823, %v3800
        %3837 = vst.msk [vmem:[#allocation5 + $0x68] sm:$0xff] %vm3823, %v3802
        %3838 = vst.msk [vmem:[#allocation5 + $0x70] sm:$0xff] %vm3823, %v3804
        %3839 = vst.msk [vmem:[#allocation5 + $0x78] sm:$0xff] %vm3823, %v3806
        %v3840 = vld [vmem:[#allocation3 + $0x29] sm:$0xff]
        %v3841 = vld [vmem:[#allocation3 + $0x31] sm:$0xff]
        %v3842 = vld [vmem:[#allocation3 + $0x39] sm:$0xff]
        %v3843 = vld [vmem:[#allocation3 + $0x41] sm:$0xff]
        %v3844 = vld [vmem:[#allocation3 + $0x49] sm:$0xff]
        %v3845 = vld [vmem:[#allocation3 + $0x51] sm:$0xff]
        %v3846 = vld [vmem:[#allocation3 + $0x59] sm:$0xff]
        %v3847 = vld [vmem:[#allocation3 + $0x61] sm:$0xff]
        %v3848 = vld [vmem:[#allocation3 + $0x69] sm:$0xff]
        %v3849 = vld [vmem:[#allocation3 + $0x71] sm:$0xff]
        %v3850 = vld [vmem:[#allocation3 + $0x79] sm:$0xff]
        %v3851 = vld [vmem:[#allocation3 + $0x81] sm:$0xff]
        %v3852 = vld [vmem:[#allocation3 + $0x89] sm:$0xff]
        %v3853 = vld [vmem:[#allocation3 + $0x91] sm:$0xff]
        %v3854 = vld [vmem:[#allocation3 + $0x99] sm:$0xff]
        %v3855 = vld [vmem:[#allocation3 + $0xa1] sm:$0xff]
        %v3856 = vld [vmem:[#allocation3 + $0xa9] sm:$0xff]
        %v3857 = vld [vmem:[#allocation3 + $0xb1] sm:$0xff]
        %v3858 = vld [vmem:[#allocation3 + $0xb9] sm:$0xff]
        %v3859 = vld [vmem:[#allocation3 + $0xc1] sm:$0xff]
        %v3860 = vld [vmem:[#allocation3 + $0xc9] sm:$0xff]
        %v3861 = vld [vmem:[#allocation3 + $0xd1] sm:$0xff]
        %v3862 = vld [vmem:[#allocation3 + $0xd9] sm:$0xff]
        %v3863 = vld [vmem:[#allocation3 + $0xe1] sm:$0xff]
        %v3864 = vld [vmem:[#allocation3 + $0xe9] sm:$0xff]
        %v3865 = vld [vmem:[#allocation3 + $0xf1] sm:$0xff]
        %v3866 = vld [vmem:[#allocation3 + $0xf9] sm:$0xff]
        %v3867 = vld [vmem:[#allocation3 + $0x101] sm:$0xff]
        %v3868 = vld [vmem:[#allocation3 + $0x109] sm:$0xff]
        %v3869 = vld [vmem:[#allocation3 + $0x111] sm:$0xff]
        %v3870 = vld [vmem:[#allocation3 + $0x119] sm:$0xff]
        %v3871 = vld [vmem:[#allocation3 + $0x121] sm:$0xff]
        %v3872 = vmul.f32 %v3840, %v962
        %v3873 = vmul.f32 %v3841, %v963
        %v3874 = vmul.f32 %v3842, %v964
        %v3875 = vmul.f32 %v3843, %v965
        %v3876 = vmul.f32 %v3844, %v966
        %v3877 = vmul.f32 %v3845, %v967
        %v3878 = vmul.f32 %v3846, %v968
        %v3879 = vmul.f32 %v3847, %v969
        %v3880 = vmul.f32 %v3848, %v970
        %v3881 = vmul.f32 %v3849, %v971
        %v3882 = vmul.f32 %v3850, %v972
        %v3883 = vmul.f32 %v3851, %v973
        %v3884 = vmul.f32 %v3852, %v974
        %v3885 = vmul.f32 %v3853, %v975
        %v3886 = vmul.f32 %v3854, %v976
        %v3887 = vmul.f32 %v3855, %v977
        %v3888 = vmul.f32 %v3856, %v978
        %v3889 = vmul.f32 %v3857, %v979
        %v3890 = vmul.f32 %v3858, %v980
        %v3891 = vmul.f32 %v3859, %v981
        %v3892 = vmul.f32 %v3860, %v982
        %v3893 = vmul.f32 %v3861, %v983
        %v3894 = vmul.f32 %v3862, %v984
        %v3895 = vmul.f32 %v3863, %v985
        %v3896 = vmul.f32 %v3864, %v986
        %v3897 = vmul.f32 %v3865, %v987
        %v3898 = vmul.f32 %v3866, %v988
        %v3899 = vmul.f32 %v3867, %v989
        %v3900 = vmul.f32 %v3868, %v990
        %v3901 = vmul.f32 %v3869, %v991
        %v3902 = vmul.f32 %v3870, %v992
        %v3903 = vmul.f32 %v3871, %v993
        %v3904 = vpack.c.bf16 %v3873, %v3872
        %v3905 = vpack.c.bf16 %v3875, %v3874
        %v3906 = vpack.c.bf16 %v3877, %v3876
        %v3907 = vpack.c.bf16 %v3879, %v3878
        %v3908 = vpack.c.bf16 %v3881, %v3880
        %v3909 = vpack.c.bf16 %v3883, %v3882
        %v3910 = vpack.c.bf16 %v3885, %v3884
        %v3911 = vpack.c.bf16 %v3887, %v3886
        %v3912 = vpack.c.bf16 %v3889, %v3888
        %v3913 = vpack.c.bf16 %v3891, %v3890
        %v3914 = vpack.c.bf16 %v3893, %v3892
        %v3915 = vpack.c.bf16 %v3895, %v3894
        %v3916 = vpack.c.bf16 %v3897, %v3896
        %v3917 = vpack.c.bf16 %v3899, %v3898
        %v3918 = vpack.c.bf16 %v3901, %v3900
        %v3919 = vpack.c.bf16 %v3903, %v3902
        %3936 = vrot.lane.b32.xlu0 %v3904, 64
        %v3937 = vpop.permute.xlu0 %3936
        %3938 = vrot.lane.b32.xlu0 %v3905, 64
        %v3939 = vpop.permute.xlu0 %3938
        %3940 = vrot.lane.b32.xlu0 %v3906, 64
        %v3941 = vpop.permute.xlu0 %3940
        %3942 = vrot.lane.b32.xlu0 %v3907, 64
        %v3943 = vpop.permute.xlu0 %3942
        %3944 = vrot.lane.b32.xlu0 %v3908, 64
        %v3945 = vpop.permute.xlu0 %3944
        %3946 = vrot.lane.b32.xlu0 %v3909, 64
        %v3947 = vpop.permute.xlu0 %3946
        %3948 = vrot.lane.b32.xlu0 %v3910, 64
        %v3949 = vpop.permute.xlu0 %3948
        %3950 = vrot.lane.b32.xlu0 %v3911, 64
        %v3951 = vpop.permute.xlu0 %3950
        %3952 = vrot.lane.b32.xlu0 %v3912, 64
        %v3953 = vpop.permute.xlu0 %3952
        %3954 = vrot.lane.b32.xlu0 %v3913, 64
        %v3955 = vpop.permute.xlu0 %3954
        %3956 = vrot.lane.b32.xlu0 %v3914, 64
        %v3957 = vpop.permute.xlu0 %3956
        %3958 = vrot.lane.b32.xlu0 %v3915, 64
        %v3959 = vpop.permute.xlu0 %3958
        %3960 = vrot.lane.b32.xlu0 %v3916, 64
        %v3961 = vpop.permute.xlu0 %3960
        %3962 = vrot.lane.b32.xlu0 %v3917, 64
        %v3963 = vpop.permute.xlu0 %3962
        %3964 = vrot.lane.b32.xlu0 %v3918, 64
        %v3965 = vpop.permute.xlu0 %3964
        %3966 = vrot.lane.b32.xlu0 %v3919, 64
        %v3967 = vpop.permute.xlu0 %3966
        %vm3984 = vcmask 589312
        %3985 = vst.msk [vmem:[#allocation5] sm:$0xff] %vm3984, %v3937
        %3986 = vst.msk [vmem:[#allocation5 + $0x8] sm:$0xff] %vm3984, %v3939
        %3987 = vst.msk [vmem:[#allocation5 + $0x10] sm:$0xff] %vm3984, %v3941
        %3988 = vst.msk [vmem:[#allocation5 + $0x18] sm:$0xff] %vm3984, %v3943
        %3989 = vst.msk [vmem:[#allocation5 + $0x20] sm:$0xff] %vm3984, %v3945
        %3990 = vst.msk [vmem:[#allocation5 + $0x28] sm:$0xff] %vm3984, %v3947
        %3991 = vst.msk [vmem:[#allocation5 + $0x30] sm:$0xff] %vm3984, %v3949
        %3992 = vst.msk [vmem:[#allocation5 + $0x38] sm:$0xff] %vm3984, %v3951
        %3993 = vst.msk [vmem:[#allocation5 + $0x40] sm:$0xff] %vm3984, %v3953
        %3994 = vst.msk [vmem:[#allocation5 + $0x48] sm:$0xff] %vm3984, %v3955
        %3995 = vst.msk [vmem:[#allocation5 + $0x50] sm:$0xff] %vm3984, %v3957
        %3996 = vst.msk [vmem:[#allocation5 + $0x58] sm:$0xff] %vm3984, %v3959
        %3997 = vst.msk [vmem:[#allocation5 + $0x60] sm:$0xff] %vm3984, %v3961
        %3998 = vst.msk [vmem:[#allocation5 + $0x68] sm:$0xff] %vm3984, %v3963
        %3999 = vst.msk [vmem:[#allocation5 + $0x70] sm:$0xff] %vm3984, %v3965
        %4000 = vst.msk [vmem:[#allocation5 + $0x78] sm:$0xff] %vm3984, %v3967
        %v4001 = vld [vmem:[#allocation5] sm:$0xff]
        %v4002 = vld [vmem:[#allocation5 + $0x8] sm:$0xff]
        %v4003 = vld [vmem:[#allocation5 + $0x10] sm:$0xff]
        %v4004 = vld [vmem:[#allocation5 + $0x18] sm:$0xff]
        %v4005 = vld [vmem:[#allocation5 + $0x20] sm:$0xff]
        %v4006 = vld [vmem:[#allocation5 + $0x28] sm:$0xff]
        %v4007 = vld [vmem:[#allocation5 + $0x30] sm:$0xff]
        %v4008 = vld [vmem:[#allocation5 + $0x38] sm:$0xff]
        %v4009 = vld [vmem:[#allocation5 + $0x40] sm:$0xff]
        %v4010 = vld [vmem:[#allocation5 + $0x48] sm:$0xff]
        %v4011 = vld [vmem:[#allocation5 + $0x50] sm:$0xff]
        %v4012 = vld [vmem:[#allocation5 + $0x58] sm:$0xff]
        %v4013 = vld [vmem:[#allocation5 + $0x60] sm:$0xff]
        %v4014 = vld [vmem:[#allocation5 + $0x68] sm:$0xff]
        %v4015 = vld [vmem:[#allocation5 + $0x70] sm:$0xff]
        %v4016 = vld [vmem:[#allocation5 + $0x78] sm:$0xff]
        %v4017 = vld [vmem:[%s3] sm:$0xf]
        %v4018 = vld [vmem:[%s3 + $0x4] sm:$0xf]
        %v4019 = vld [vmem:[%s3 + $0x8] sm:$0xf]
        %v4020 = vld [vmem:[%s3 + $0xc] sm:$0xf]
        %v4021 = vld [vmem:[%s3 + $0x10] sm:$0xf]
        %v4022 = vld [vmem:[%s3 + $0x14] sm:$0xf]
        %v4023 = vld [vmem:[%s3 + $0x18] sm:$0xf]
        %v4024 = vld [vmem:[%s3 + $0x1c] sm:$0xf]
        %v4025 = vld [vmem:[%s3 + $0x20] sm:$0xf]
        %v4026 = vld [vmem:[%s4] sm:$0x1]
        %v4028 = vlaneseq
        %v4029 = vshrl.u32 %v4028, 7
        %v4030 = vsub.s32 0, %v4029
        %v4031 = vrot.slane %v4026, %v4030
        %v4042 = vunpack.c.l.b16 %v4017
        %v4043 = vunpack.c.l.b16 %v4018
        %v4044 = vunpack.c.l.b16 %v4019
        %v4045 = vunpack.c.l.b16 %v4020
        %v4046 = vunpack.c.l.b16 %v4021
        %v4047 = vunpack.c.l.b16 %v4022
        %v4048 = vunpack.c.l.b16 %v4023
        %v4049 = vunpack.c.l.b16 %v4024
        %v4050 = vunpack.c.l.b16 %v4025
        %v4051 = vpack.c.b16 %v4043, %v4042
        %v4052 = vpack.c.b16 %v4045, %v4044
        %v4053 = vpack.c.b16 %v4047, %v4046
        %v4054 = vpack.c.b16 %v4049, %v4048
        %v4055 = vpack.c.b16 %v4050, %v4050
        %vm4060 = vcmask 588800
        %v4062 = vsel %vm4060, %v4001, 0
        %v4065 = vsel %vm4060, %v4002, 0
        %v4068 = vsel %vm4060, %v4003, 0
        %v4071 = vsel %vm4060, %v4004, 0
        %v4074 = vsel %vm4060, %v4005, 0
        %v4077 = vsel %vm4060, %v4006, 0
        %v4080 = vsel %vm4060, %v4007, 0
        %v4083 = vsel %vm4060, %v4008, 0
        %v4086 = vsel %vm4060, %v4009, 0
        %v4089 = vsel %vm4060, %v4010, 0
        %v4092 = vsel %vm4060, %v4011, 0
        %v4095 = vsel %vm4060, %v4012, 0
        %v4098 = vsel %vm4060, %v4013, 0
        %v4101 = vsel %vm4060, %v4014, 0
        %v4104 = vsel %vm4060, %v4015, 0
        %v4107 = vsel %vm4060, %v4016, 0
        %vm4109 = vcmask 1043456
        %v4111 = vsel %vm4109, %v4055, 0
        %4113 = vmatprep.subr.bf16.mxu0 0
        %4114 = vmatpush1.bf16.msra.mxu0 %v4051
        %4115 = vmatprep.subr.bf16.mxu0 0
        %4116 = vmatpush1.bf16.msra.mxu0 %v4052
        %4117 = vmatprep.subr.bf16.mxu0 0
        %4118 = vmatpush1.bf16.msra.mxu0 %v4053
        %4119 = vmatprep.subr.bf16.mxu0 0
        %4120 = vmatpush1.bf16.msra.mxu0 %v4054
        %4121 = vmatprep.subr.bf16.mxu0 0
        %4122 = vmatpush1.bf16.msra.mxu0 %v4111
        %4123 = vmatprep.subr.bf16.mxu0 0
        %4124 = vmatpush1.bf16.msra.mxu0 0
        %4125 = vmatprep.subr.bf16.mxu0 0
        %4126 = vmatpush1.bf16.msra.mxu0 0
        %4127 = vmatprep.subr.bf16.mxu0 0
        %4128 = vmatpush1.bf16.msra.mxu0 0
        %4129 = vmatprep.subr.bf16.mxu0 0
        %4130 = vmatpush1.bf16.msra.mxu0 0
        %4131 = vmatprep.subr.bf16.mxu0 0
        %4132 = vmatpush1.bf16.msra.mxu0 0
        %4133 = vmatprep.subr.bf16.mxu0 0
        %4134 = vmatpush1.bf16.msra.mxu0 0
        %4135 = vmatprep.subr.bf16.mxu0 0
        %4136 = vmatpush1.bf16.msra.mxu0 0
        %4137 = vmatprep.subr.bf16.mxu0 0
        %4138 = vmatpush1.bf16.msra.mxu0 0
        %4139 = vmatprep.subr.bf16.mxu0 0
        %4140 = vmatpush1.bf16.msra.mxu0 0
        %4141 = vmatprep.subr.bf16.mxu0 0
        %4142 = vmatpush1.bf16.msra.mxu0 0
        %4143 = vmatprep.subr.bf16.mxu0 0
        %4144 = vmatpush1.bf16.msra.mxu0 0
        %4145 = vmatprep.mubr.bf16.mxu0 0
        %4146 = vmatmul.mubr.bf16.gmra.mrb[0].mxu0 %v4062
        %v4147 = vpop.f32.mrb[0].mxu0
        %v4148 = vadd.f32 %v4031, %v4147
        %v4149 = vpop.f32.mrb[0].mxu0
        %v4150 = vpop.f32.mrb[0].mxu0
        %v4151 = vadd.f32 %v4031, %v4150
        %v4152 = vpop.f32.mrb[0].mxu0
        %4153 = vmatprep.mubr.bf16.mxu0 0
        %4154 = vmatmul.mubr.bf16.gmra.mrb[0].mxu0 %v4065
        %v4155 = vpop.f32.mrb[0].mxu0
        %v4156 = vadd.f32 %v4031, %v4155
        %v4157 = vpop.f32.mrb[0].mxu0
        %v4158 = vpop.f32.mrb[0].mxu0
        %v4159 = vadd.f32 %v4031, %v4158
        %v4160 = vpop.f32.mrb[0].mxu0
        %4161 = vmatprep.mubr.bf16.mxu0 0
        %4162 = vmatmul.mubr.bf16.gmra.mrb[0].mxu0 %v4068
        %v4163 = vpop.f32.mrb[0].mxu0
        %v4164 = vadd.f32 %v4031, %v4163
        %v4165 = vpop.f32.mrb[0].mxu0
        %v4166 = vpop.f32.mrb[0].mxu0
        %v4167 = vadd.f32 %v4031, %v4166
        %v4168 = vpop.f32.mrb[0].mxu0
        %4169 = vmatprep.mubr.bf16.mxu0 0
        %4170 = vmatmul.mubr.bf16.gmra.mrb[0].mxu0 %v4071
        %v4171 = vpop.f32.mrb[0].mxu0
        %v4172 = vadd.f32 %v4031, %v4171
        %v4173 = vpop.f32.mrb[0].mxu0
        %v4174 = vpop.f32.mrb[0].mxu0
        %v4175 = vadd.f32 %v4031, %v4174
        %v4176 = vpop.f32.mrb[0].mxu0
        %4177 = vmatprep.mubr.bf16.mxu0 0
        %4178 = vmatmul.mubr.bf16.gmra.mrb[0].mxu0 %v4074
        %v4179 = vpop.f32.mrb[0].mxu0
        %v4180 = vadd.f32 %v4031, %v4179
        %v4181 = vpop.f32.mrb[0].mxu0
        %v4182 = vpop.f32.mrb[0].mxu0
        %v4183 = vadd.f32 %v4031, %v4182
        %v4184 = vpop.f32.mrb[0].mxu0
        %4185 = vmatprep.mubr.bf16.mxu0 0
        %4186 = vmatmul.mubr.bf16.gmra.mrb[0].mxu0 %v4077
        %v4187 = vpop.f32.mrb[0].mxu0
        %v4188 = vadd.f32 %v4031, %v4187
        %v4189 = vpop.f32.mrb[0].mxu0
        %v4190 = vpop.f32.mrb[0].mxu0
        %v4191 = vadd.f32 %v4031, %v4190
        %v4192 = vpop.f32.mrb[0].mxu0
        %4193 = vmatprep.mubr.bf16.mxu0 0
        %4194 = vmatmul.mubr.bf16.gmra.mrb[0].mxu0 %v4080
        %v4195 = vpop.f32.mrb[0].mxu0
        %v4196 = vadd.f32 %v4031, %v4195
        %v4197 = vpop.f32.mrb[0].mxu0
        %v4198 = vpop.f32.mrb[0].mxu0
        %v4199 = vadd.f32 %v4031, %v4198
        %v4200 = vpop.f32.mrb[0].mxu0
        %4201 = vmatprep.mubr.bf16.mxu0 0
        %4202 = vmatmul.mubr.bf16.gmra.mrb[0].mxu0 %v4083
        %v4203 = vpop.f32.mrb[0].mxu0
        %v4204 = vadd.f32 %v4031, %v4203
        %v4205 = vpop.f32.mrb[0].mxu0
        %v4206 = vpop.f32.mrb[0].mxu0
        %v4207 = vadd.f32 %v4031, %v4206
        %v4208 = vpop.f32.mrb[0].mxu0
        %4209 = vmatprep.mubr.bf16.mxu0 0
        %4210 = vmatmul.mubr.bf16.gmra.mrb[0].mxu0 %v4086
        %v4211 = vpop.f32.mrb[0].mxu0
        %v4212 = vadd.f32 %v4031, %v4211
        %v4213 = vpop.f32.mrb[0].mxu0
        %v4214 = vpop.f32.mrb[0].mxu0
        %v4215 = vadd.f32 %v4031, %v4214
        %v4216 = vpop.f32.mrb[0].mxu0
        %4217 = vmatprep.mubr.bf16.mxu0 0
        %4218 = vmatmul.mubr.bf16.gmra.mrb[0].mxu0 %v4089
        %v4219 = vpop.f32.mrb[0].mxu0
        %v4220 = vadd.f32 %v4031, %v4219
        %v4221 = vpop.f32.mrb[0].mxu0
        %v4222 = vpop.f32.mrb[0].mxu0
        %v4223 = vadd.f32 %v4031, %v4222
        %v4224 = vpop.f32.mrb[0].mxu0
        %4225 = vmatprep.mubr.bf16.mxu0 0
        %4226 = vmatmul.mubr.bf16.gmra.mrb[0].mxu0 %v4092
        %v4227 = vpop.f32.mrb[0].mxu0
        %v4228 = vadd.f32 %v4031, %v4227
        %v4229 = vpop.f32.mrb[0].mxu0
        %v4230 = vpop.f32.mrb[0].mxu0
        %v4231 = vadd.f32 %v4031, %v4230
        %v4232 = vpop.f32.mrb[0].mxu0
        %4233 = vmatprep.mubr.bf16.mxu0 0
        %4234 = vmatmul.mubr.bf16.gmra.mrb[0].mxu0 %v4095
        %v4235 = vpop.f32.mrb[0].mxu0
        %v4236 = vadd.f32 %v4031, %v4235
        %v4237 = vpop.f32.mrb[0].mxu0
        %v4238 = vpop.f32.mrb[0].mxu0
        %v4239 = vadd.f32 %v4031, %v4238
        %v4240 = vpop.f32.mrb[0].mxu0
        %4241 = vmatprep.mubr.bf16.mxu0 0
        %4242 = vmatmul.mubr.bf16.gmra.mrb[0].mxu0 %v4098
        %v4243 = vpop.f32.mrb[0].mxu0
        %v4244 = vadd.f32 %v4031, %v4243
        %v4245 = vpop.f32.mrb[0].mxu0
        %v4246 = vpop.f32.mrb[0].mxu0
        %v4247 = vadd.f32 %v4031, %v4246
        %v4248 = vpop.f32.mrb[0].mxu0
        %4249 = vmatprep.mubr.bf16.mxu0 0
        %4250 = vmatmul.mubr.bf16.gmra.mrb[0].mxu0 %v4101
        %v4251 = vpop.f32.mrb[0].mxu0
        %v4252 = vadd.f32 %v4031, %v4251
        %v4253 = vpop.f32.mrb[0].mxu0
        %v4254 = vpop.f32.mrb[0].mxu0
        %v4255 = vadd.f32 %v4031, %v4254
        %v4256 = vpop.f32.mrb[0].mxu0
        %4257 = vmatprep.mubr.bf16.mxu0 0
        %4258 = vmatmul.mubr.bf16.gmra.mrb[0].mxu0 %v4104
        %v4259 = vpop.f32.mrb[0].mxu0
        %v4260 = vadd.f32 %v4031, %v4259
        %v4261 = vpop.f32.mrb[0].mxu0
        %v4262 = vpop.f32.mrb[0].mxu0
        %v4263 = vadd.f32 %v4031, %v4262
        %v4264 = vpop.f32.mrb[0].mxu0
        %4265 = vmatprep.mubr.bf16.mxu0 0
        %4266 = vmatmul.mubr.bf16.gmra.mrb[0].mxu0 %v4107
        %v4267 = vpop.f32.mrb[0].mxu0
        %v4268 = vadd.f32 %v4031, %v4267
        %v4269 = vpop.f32.mrb[0].mxu0
        %v4270 = vpop.f32.mrb[0].mxu0
        %v4271 = vadd.f32 %v4031, %v4270
        %v4272 = vpop.f32.mrb[0].mxu0
        %4273 = vdwg.mxu0
        %v4274 = vmax.f32 %v4148, 0.0
        %v4275 = vmax.f32 %v4151, 0.0
        %v4276 = vmax.f32 %v4156, 0.0
        %v4277 = vmax.f32 %v4159, 0.0
        %v4278 = vmax.f32 %v4164, 0.0
        %v4279 = vmax.f32 %v4167, 0.0
        %v4280 = vmax.f32 %v4172, 0.0
        %v4281 = vmax.f32 %v4175, 0.0
        %v4282 = vmax.f32 %v4180, 0.0
        %v4283 = vmax.f32 %v4183, 0.0
        %v4284 = vmax.f32 %v4188, 0.0
        %v4285 = vmax.f32 %v4191, 0.0
        %v4286 = vmax.f32 %v4196, 0.0
        %v4287 = vmax.f32 %v4199, 0.0
        %v4288 = vmax.f32 %v4204, 0.0
        %v4289 = vmax.f32 %v4207, 0.0
        %v4290 = vmax.f32 %v4212, 0.0
        %v4291 = vmax.f32 %v4215, 0.0
        %v4292 = vmax.f32 %v4220, 0.0
        %v4293 = vmax.f32 %v4223, 0.0
        %v4294 = vmax.f32 %v4228, 0.0
        %v4295 = vmax.f32 %v4231, 0.0
        %v4296 = vmax.f32 %v4236, 0.0
        %v4297 = vmax.f32 %v4239, 0.0
        %v4298 = vmax.f32 %v4244, 0.0
        %v4299 = vmax.f32 %v4247, 0.0
        %v4300 = vmax.f32 %v4252, 0.0
        %v4301 = vmax.f32 %v4255, 0.0
        %v4302 = vmax.f32 %v4260, 0.0
        %v4303 = vmax.f32 %v4263, 0.0
        %v4304 = vmax.f32 %v4268, 0.0
        %v4305 = vmax.f32 %v4271, 0.0
        %4306 = vst.msk [vmem:[#allocation3 + $0x18] sm:$0xff] %vm1001, %v4274
        %4307 = vst.msk [vmem:[#allocation3 + $0x20] sm:$0xff] %vm1001, %v4275
        %4308 = vst.msk [vmem:[#allocation3 + $0x28] sm:$0xff] %vm1001, %v4276
        %4309 = vst.msk [vmem:[#allocation3 + $0x30] sm:$0xff] %vm1001, %v4277
        %4310 = vst.msk [vmem:[#allocation3 + $0x38] sm:$0xff] %vm1001, %v4278
        %4311 = vst.msk [vmem:[#allocation3 + $0x40] sm:$0xff] %vm1001, %v4279
        %4312 = vst.msk [vmem:[#allocation3 + $0x48] sm:$0xff] %vm1001, %v4280
        %4313 = vst.msk [vmem:[#allocation3 + $0x50] sm:$0xff] %vm1001, %v4281
        %4314 = vst.msk [vmem:[#allocation3 + $0x58] sm:$0xff] %vm1001, %v4282
        %4315 = vst.msk [vmem:[#allocation3 + $0x60] sm:$0xff] %vm1001, %v4283
        %4316 = vst.msk [vmem:[#allocation3 + $0x68] sm:$0xff] %vm1001, %v4284
        %4317 = vst.msk [vmem:[#allocation3 + $0x70] sm:$0xff] %vm1001, %v4285
        %4318 = vst.msk [vmem:[#allocation3 + $0x78] sm:$0xff] %vm1001, %v4286
        %4319 = vst.msk [vmem:[#allocation3 + $0x80] sm:$0xff] %vm1001, %v4287
        %4320 = vst.msk [vmem:[#allocation3 + $0x88] sm:$0xff] %vm1001, %v4288
        %4321 = vst.msk [vmem:[#allocation3 + $0x90] sm:$0xff] %vm1001, %v4289
        %4322 = vst.msk [vmem:[#allocation3 + $0x98] sm:$0xff] %vm1001, %v4290
        %4323 = vst.msk [vmem:[#allocation3 + $0xa0] sm:$0xff] %vm1001, %v4291
        %4324 = vst.msk [vmem:[#allocation3 + $0xa8] sm:$0xff] %vm1001, %v4292
        %4325 = vst.msk [vmem:[#allocation3 + $0xb0] sm:$0xff] %vm1001, %v4293
        %4326 = vst.msk [vmem:[#allocation3 + $0xb8] sm:$0xff] %vm1001, %v4294
        %4327 = vst.msk [vmem:[#allocation3 + $0xc0] sm:$0xff] %vm1001, %v4295
        %4328 = vst.msk [vmem:[#allocation3 + $0xc8] sm:$0xff] %vm1001, %v4296
        %4329 = vst.msk [vmem:[#allocation3 + $0xd0] sm:$0xff] %vm1001, %v4297
        %4330 = vst.msk [vmem:[#allocation3 + $0xd8] sm:$0xff] %vm1001, %v4298
        %4331 = vst.msk [vmem:[#allocation3 + $0xe0] sm:$0xff] %vm1001, %v4299
        %4332 = vst.msk [vmem:[#allocation3 + $0xe8] sm:$0xff] %vm1001, %v4300
        %4333 = vst.msk [vmem:[#allocation3 + $0xf0] sm:$0xff] %vm1001, %v4301
        %4334 = vst.msk [vmem:[#allocation3 + $0xf8] sm:$0xff] %vm1001, %v4302
        %4335 = vst.msk [vmem:[#allocation3 + $0x100] sm:$0xff] %vm1001, %v4303
        %4336 = vst.msk [vmem:[#allocation3 + $0x108] sm:$0xff] %vm1001, %v4304
        %4337 = vst.msk [vmem:[#allocation3 + $0x110] sm:$0xff] %vm1001, %v4305
        %v4338 = vld [vmem:[#allocation3 + $0x7] sm:$0xff]
        %v4339 = vld [vmem:[#allocation3 + $0xf] sm:$0xff]
        %v4340 = vld [vmem:[#allocation3 + $0x17] sm:$0xff]
        %v4341 = vld [vmem:[#allocation3 + $0x1f] sm:$0xff]
        %v4342 = vld [vmem:[#allocation3 + $0x27] sm:$0xff]
        %v4343 = vld [vmem:[#allocation3 + $0x2f] sm:$0xff]
        %v4344 = vld [vmem:[#allocation3 + $0x37] sm:$0xff]
        %v4345 = vld [vmem:[#allocation3 + $0x3f] sm:$0xff]
        %v4346 = vld [vmem:[#allocation3 + $0x47] sm:$0xff]
        %v4347 = vld [vmem:[#allocation3 + $0x4f] sm:$0xff]
        %v4348 = vld [vmem:[#allocation3 + $0x57] sm:$0xff]
        %v4349 = vld [vmem:[#allocation3 + $0x5f] sm:$0xff]
        %v4350 = vld [vmem:[#allocation3 + $0x67] sm:$0xff]
        %v4351 = vld [vmem:[#allocation3 + $0x6f] sm:$0xff]
        %v4352 = vld [vmem:[#allocation3 + $0x77] sm:$0xff]
        %v4353 = vld [vmem:[#allocation3 + $0x7f] sm:$0xff]
        %v4354 = vld [vmem:[#allocation3 + $0x87] sm:$0xff]
        %v4355 = vld [vmem:[#allocation3 + $0x8f] sm:$0xff]
        %v4356 = vld [vmem:[#allocation3 + $0x97] sm:$0xff]
        %v4357 = vld [vmem:[#allocation3 + $0x9f] sm:$0xff]
        %v4358 = vld [vmem:[#allocation3 + $0xa7] sm:$0xff]
        %v4359 = vld [vmem:[#allocation3 + $0xaf] sm:$0xff]
        %v4360 = vld [vmem:[#allocation3 + $0xb7] sm:$0xff]
        %v4361 = vld [vmem:[#allocation3 + $0xbf] sm:$0xff]
        %v4362 = vld [vmem:[#allocation3 + $0xc7] sm:$0xff]
        %v4363 = vld [vmem:[#allocation3 + $0xcf] sm:$0xff]
        %v4364 = vld [vmem:[#allocation3 + $0xd7] sm:$0xff]
        %v4365 = vld [vmem:[#allocation3 + $0xdf] sm:$0xff]
        %v4366 = vld [vmem:[#allocation3 + $0xe7] sm:$0xff]
        %v4367 = vld [vmem:[#allocation3 + $0xef] sm:$0xff]
        %v4368 = vld [vmem:[#allocation3 + $0xf7] sm:$0xff]
        %v4369 = vld [vmem:[#allocation3 + $0xff] sm:$0xff]
        %v4370 = vmul.f32 %v4338, %v866
        %v4371 = vmul.f32 %v4339, %v867
        %v4372 = vmul.f32 %v4340, %v868
        %v4373 = vmul.f32 %v4341, %v869
        %v4374 = vmul.f32 %v4342, %v870
        %v4375 = vmul.f32 %v4343, %v871
        %v4376 = vmul.f32 %v4344, %v872
        %v4377 = vmul.f32 %v4345, %v873
        %v4378 = vmul.f32 %v4346, %v874
        %v4379 = vmul.f32 %v4347, %v875
        %v4380 = vmul.f32 %v4348, %v876
        %v4381 = vmul.f32 %v4349, %v877
        %v4382 = vmul.f32 %v4350, %v878
        %v4383 = vmul.f32 %v4351, %v879
        %v4384 = vmul.f32 %v4352, %v880
        %v4385 = vmul.f32 %v4353, %v881
        %v4386 = vmul.f32 %v4354, %v882
        %v4387 = vmul.f32 %v4355, %v883
        %v4388 = vmul.f32 %v4356, %v884
        %v4389 = vmul.f32 %v4357, %v885
        %v4390 = vmul.f32 %v4358, %v886
        %v4391 = vmul.f32 %v4359, %v887
        %v4392 = vmul.f32 %v4360, %v888
        %v4393 = vmul.f32 %v4361, %v889
        %v4394 = vmul.f32 %v4362, %v890
        %v4395 = vmul.f32 %v4363, %v891
        %v4396 = vmul.f32 %v4364, %v892
        %v4397 = vmul.f32 %v4365, %v893
        %v4398 = vmul.f32 %v4366, %v894
        %v4399 = vmul.f32 %v4367, %v895
        %v4400 = vmul.f32 %v4368, %v896
        %v4401 = vmul.f32 %v4369, %v897
        %v4402 = vpack.c.bf16 %v4371, %v4370
        %v4403 = vpack.c.bf16 %v4373, %v4372
        %v4404 = vpack.c.bf16 %v4375, %v4374
        %v4405 = vpack.c.bf16 %v4377, %v4376
        %v4406 = vpack.c.bf16 %v4379, %v4378
        %v4407 = vpack.c.bf16 %v4381, %v4380
        %v4408 = vpack.c.bf16 %v4383, %v4382
        %v4409 = vpack.c.bf16 %v4385, %v4384
        %v4410 = vpack.c.bf16 %v4387, %v4386
        %v4411 = vpack.c.bf16 %v4389, %v4388
        %v4412 = vpack.c.bf16 %v4391, %v4390
        %v4413 = vpack.c.bf16 %v4393, %v4392
        %v4414 = vpack.c.bf16 %v4395, %v4394
        %v4415 = vpack.c.bf16 %v4397, %v4396
        %v4416 = vpack.c.bf16 %v4399, %v4398
        %v4417 = vpack.c.bf16 %v4401, %v4400
        %4418 = vst.msk [vmem:[#allocation5] sm:$0xff] %vm1001, %v4402
        %4419 = vst.msk [vmem:[#allocation5 + $0x8] sm:$0xff] %vm1001, %v4403
        %4420 = vst.msk [vmem:[#allocation5 + $0x10] sm:$0xff] %vm1001, %v4404
        %4421 = vst.msk [vmem:[#allocation5 + $0x18] sm:$0xff] %vm1001, %v4405
        %4422 = vst.msk [vmem:[#allocation5 + $0x20] sm:$0xff] %vm1001, %v4406
        %4423 = vst.msk [vmem:[#allocation5 + $0x28] sm:$0xff] %vm1001, %v4407
        %4424 = vst.msk [vmem:[#allocation5 + $0x30] sm:$0xff] %vm1001, %v4408
        %4425 = vst.msk [vmem:[#allocation5 + $0x38] sm:$0xff] %vm1001, %v4409
        %4426 = vst.msk [vmem:[#allocation5 + $0x40] sm:$0xff] %vm1001, %v4410
        %4427 = vst.msk [vmem:[#allocation5 + $0x48] sm:$0xff] %vm1001, %v4411
        %4428 = vst.msk [vmem:[#allocation5 + $0x50] sm:$0xff] %vm1001, %v4412
        %4429 = vst.msk [vmem:[#allocation5 + $0x58] sm:$0xff] %vm1001, %v4413
        %4430 = vst.msk [vmem:[#allocation5 + $0x60] sm:$0xff] %vm1001, %v4414
        %4431 = vst.msk [vmem:[#allocation5 + $0x68] sm:$0xff] %vm1001, %v4415
        %4432 = vst.msk [vmem:[#allocation5 + $0x70] sm:$0xff] %vm1001, %v4416
        %4433 = vst.msk [vmem:[#allocation5 + $0x78] sm:$0xff] %vm1001, %v4417
        %v4434 = vld [vmem:[#allocation3 + $0x8] sm:$0xff]
        %v4435 = vld [vmem:[#allocation3 + $0x10] sm:$0xff]
        %v4436 = vld [vmem:[#allocation3 + $0x18] sm:$0xff]
        %v4437 = vld [vmem:[#allocation3 + $0x20] sm:$0xff]
        %v4438 = vld [vmem:[#allocation3 + $0x28] sm:$0xff]
        %v4439 = vld [vmem:[#allocation3 + $0x30] sm:$0xff]
        %v4440 = vld [vmem:[#allocation3 + $0x38] sm:$0xff]
        %v4441 = vld [vmem:[#allocation3 + $0x40] sm:$0xff]
        %v4442 = vld [vmem:[#allocation3 + $0x48] sm:$0xff]
        %v4443 = vld [vmem:[#allocation3 + $0x50] sm:$0xff]
        %v4444 = vld [vmem:[#allocation3 + $0x58] sm:$0xff]
        %v4445 = vld [vmem:[#allocation3 + $0x60] sm:$0xff]
        %v4446 = vld [vmem:[#allocation3 + $0x68] sm:$0xff]
        %v4447 = vld [vmem:[#allocation3 + $0x70] sm:$0xff]
        %v4448 = vld [vmem:[#allocation3 + $0x78] sm:$0xff]
        %v4449 = vld [vmem:[#allocation3 + $0x80] sm:$0xff]
        %v4450 = vld [vmem:[#allocation3 + $0x88] sm:$0xff]
        %v4451 = vld [vmem:[#allocation3 + $0x90] sm:$0xff]
        %v4452 = vld [vmem:[#allocation3 + $0x98] sm:$0xff]
        %v4453 = vld [vmem:[#allocation3 + $0xa0] sm:$0xff]
        %v4454 = vld [vmem:[#allocation3 + $0xa8] sm:$0xff]
        %v4455 = vld [vmem:[#allocation3 + $0xb0] sm:$0xff]
        %v4456 = vld [vmem:[#allocation3 + $0xb8] sm:$0xff]
        %v4457 = vld [vmem:[#allocation3 + $0xc0] sm:$0xff]
        %v4458 = vld [vmem:[#allocation3 + $0xc8] sm:$0xff]
        %v4459 = vld [vmem:[#allocation3 + $0xd0] sm:$0xff]
        %v4460 = vld [vmem:[#allocation3 + $0xd8] sm:$0xff]
        %v4461 = vld [vmem:[#allocation3 + $0xe0] sm:$0xff]
        %v4462 = vld [vmem:[#allocation3 + $0xe8] sm:$0xff]
        %v4463 = vld [vmem:[#allocation3 + $0xf0] sm:$0xff]
        %v4464 = vld [vmem:[#allocation3 + $0xf8] sm:$0xff]
        %v4465 = vld [vmem:[#allocation3 + $0x100] sm:$0xff]
        %v4466 = vpack.c.bf16 %v4435, %v4434
        %v4467 = vpack.c.bf16 %v4437, %v4436
        %v4468 = vpack.c.bf16 %v4439, %v4438
        %v4469 = vpack.c.bf16 %v4441, %v4440
        %v4470 = vpack.c.bf16 %v4443, %v4442
        %v4471 = vpack.c.bf16 %v4445, %v4444
        %v4472 = vpack.c.bf16 %v4447, %v4446
        %v4473 = vpack.c.bf16 %v4449, %v4448
        %v4474 = vpack.c.bf16 %v4451, %v4450
        %v4475 = vpack.c.bf16 %v4453, %v4452
        %v4476 = vpack.c.bf16 %v4455, %v4454
        %v4477 = vpack.c.bf16 %v4457, %v4456
        %v4478 = vpack.c.bf16 %v4459, %v4458
        %v4479 = vpack.c.bf16 %v4461, %v4460
        %v4480 = vpack.c.bf16 %v4463, %v4462
        %v4481 = vpack.c.bf16 %v4465, %v4464
        %4498 = vrot.lane.b32.xlu0 %v4466, 8
        %v4499 = vpop.permute.xlu0 %4498
        %4500 = vrot.lane.b32.xlu0 %v4467, 8
        %v4501 = vpop.permute.xlu0 %4500
        %4502 = vrot.lane.b32.xlu0 %v4468, 8
        %v4503 = vpop.permute.xlu0 %4502
        %4504 = vrot.lane.b32.xlu0 %v4469, 8
        %v4505 = vpop.permute.xlu0 %4504
        %4506 = vrot.lane.b32.xlu0 %v4470, 8
        %v4507 = vpop.permute.xlu0 %4506
        %4508 = vrot.lane.b32.xlu0 %v4471, 8
        %v4509 = vpop.permute.xlu0 %4508
        %4510 = vrot.lane.b32.xlu0 %v4472, 8
        %v4511 = vpop.permute.xlu0 %4510
        %4512 = vrot.lane.b32.xlu0 %v4473, 8
        %v4513 = vpop.permute.xlu0 %4512
        %4514 = vrot.lane.b32.xlu0 %v4474, 8
        %v4515 = vpop.permute.xlu0 %4514
        %4516 = vrot.lane.b32.xlu0 %v4475, 8
        %v4517 = vpop.permute.xlu0 %4516
        %4518 = vrot.lane.b32.xlu0 %v4476, 8
        %v4519 = vpop.permute.xlu0 %4518
        %4520 = vrot.lane.b32.xlu0 %v4477, 8
        %v4521 = vpop.permute.xlu0 %4520
        %4522 = vrot.lane.b32.xlu0 %v4478, 8
        %v4523 = vpop.permute.xlu0 %4522
        %4524 = vrot.lane.b32.xlu0 %v4479, 8
        %v4525 = vpop.permute.xlu0 %4524
        %4526 = vrot.lane.b32.xlu0 %v4480, 8
        %v4527 = vpop.permute.xlu0 %4526
        %4528 = vrot.lane.b32.xlu0 %v4481, 8
        %v4529 = vpop.permute.xlu0 %4528
        %4546 = vst.msk [vmem:[#allocation5] sm:$0xff] %vm2921, %v4499
        %4547 = vst.msk [vmem:[#allocation5 + $0x8] sm:$0xff] %vm2921, %v4501
        %4548 = vst.msk [vmem:[#allocation5 + $0x10] sm:$0xff] %vm2921, %v4503
        %4549 = vst.msk [vmem:[#allocation5 + $0x18] sm:$0xff] %vm2921, %v4505
        %4550 = vst.msk [vmem:[#allocation5 + $0x20] sm:$0xff] %vm2921, %v4507
        %4551 = vst.msk [vmem:[#allocation5 + $0x28] sm:$0xff] %vm2921, %v4509
        %4552 = vst.msk [vmem:[#allocation5 + $0x30] sm:$0xff] %vm2921, %v4511
        %4553 = vst.msk [vmem:[#allocation5 + $0x38] sm:$0xff] %vm2921, %v4513
        %4554 = vst.msk [vmem:[#allocation5 + $0x40] sm:$0xff] %vm2921, %v4515
        %4555 = vst.msk [vmem:[#allocation5 + $0x48] sm:$0xff] %vm2921, %v4517
        %4556 = vst.msk [vmem:[#allocation5 + $0x50] sm:$0xff] %vm2921, %v4519
        %4557 = vst.msk [vmem:[#allocation5 + $0x58] sm:$0xff] %vm2921, %v4521
        %4558 = vst.msk [vmem:[#allocation5 + $0x60] sm:$0xff] %vm2921, %v4523
        %4559 = vst.msk [vmem:[#allocation5 + $0x68] sm:$0xff] %vm2921, %v4525
        %4560 = vst.msk [vmem:[#allocation5 + $0x70] sm:$0xff] %vm2921, %v4527
        %4561 = vst.msk [vmem:[#allocation5 + $0x78] sm:$0xff] %vm2921, %v4529
        %v4562 = vld [vmem:[#allocation3 + $0x9] sm:$0xff]
        %v4563 = vld [vmem:[#allocation3 + $0x11] sm:$0xff]
        %v4564 = vld [vmem:[#allocation3 + $0x19] sm:$0xff]
        %v4565 = vld [vmem:[#allocation3 + $0x21] sm:$0xff]
        %v4566 = vld [vmem:[#allocation3 + $0x29] sm:$0xff]
        %v4567 = vld [vmem:[#allocation3 + $0x31] sm:$0xff]
        %v4568 = vld [vmem:[#allocation3 + $0x39] sm:$0xff]
        %v4569 = vld [vmem:[#allocation3 + $0x41] sm:$0xff]
        %v4570 = vld [vmem:[#allocation3 + $0x49] sm:$0xff]
        %v4571 = vld [vmem:[#allocation3 + $0x51] sm:$0xff]
        %v4572 = vld [vmem:[#allocation3 + $0x59] sm:$0xff]
        %v4573 = vld [vmem:[#allocation3 + $0x61] sm:$0xff]
        %v4574 = vld [vmem:[#allocation3 + $0x69] sm:$0xff]
        %v4575 = vld [vmem:[#allocation3 + $0x71] sm:$0xff]
        %v4576 = vld [vmem:[#allocation3 + $0x79] sm:$0xff]
        %v4577 = vld [vmem:[#allocation3 + $0x81] sm:$0xff]
        %v4578 = vld [vmem:[#allocation3 + $0x89] sm:$0xff]
        %v4579 = vld [vmem:[#allocation3 + $0x91] sm:$0xff]
        %v4580 = vld [vmem:[#allocation3 + $0x99] sm:$0xff]
        %v4581 = vld [vmem:[#allocation3 + $0xa1] sm:$0xff]
        %v4582 = vld [vmem:[#allocation3 + $0xa9] sm:$0xff]
        %v4583 = vld [vmem:[#allocation3 + $0xb1] sm:$0xff]
        %v4584 = vld [vmem:[#allocation3 + $0xb9] sm:$0xff]
        %v4585 = vld [vmem:[#allocation3 + $0xc1] sm:$0xff]
        %v4586 = vld [vmem:[#allocation3 + $0xc9] sm:$0xff]
        %v4587 = vld [vmem:[#allocation3 + $0xd1] sm:$0xff]
        %v4588 = vld [vmem:[#allocation3 + $0xd9] sm:$0xff]
        %v4589 = vld [vmem:[#allocation3 + $0xe1] sm:$0xff]
        %v4590 = vld [vmem:[#allocation3 + $0xe9] sm:$0xff]
        %v4591 = vld [vmem:[#allocation3 + $0xf1] sm:$0xff]
        %v4592 = vld [vmem:[#allocation3 + $0xf9] sm:$0xff]
        %v4593 = vld [vmem:[#allocation3 + $0x101] sm:$0xff]
        %v4594 = vmul.f32 %v4562, %v962
        %v4595 = vmul.f32 %v4563, %v963
        %v4596 = vmul.f32 %v4564, %v964
        %v4597 = vmul.f32 %v4565, %v965
        %v4598 = vmul.f32 %v4566, %v966
        %v4599 = vmul.f32 %v4567, %v967
        %v4600 = vmul.f32 %v4568, %v968
        %v4601 = vmul.f32 %v4569, %v969
        %v4602 = vmul.f32 %v4570, %v970
        %v4603 = vmul.f32 %v4571, %v971
        %v4604 = vmul.f32 %v4572, %v972
        %v4605 = vmul.f32 %v4573, %v973
        %v4606 = vmul.f32 %v4574, %v974
        %v4607 = vmul.f32 %v4575, %v975
        %v4608 = vmul.f32 %v4576, %v976
        %v4609 = vmul.f32 %v4577, %v977
        %v4610 = vmul.f32 %v4578, %v978
        %v4611 = vmul.f32 %v4579, %v979
        %v4612 = vmul.f32 %v4580, %v980
        %v4613 = vmul.f32 %v4581, %v981
        %v4614 = vmul.f32 %v4582, %v982
        %v4615 = vmul.f32 %v4583, %v983
        %v4616 = vmul.f32 %v4584, %v984
        %v4617 = vmul.f32 %v4585, %v985
        %v4618 = vmul.f32 %v4586, %v986
        %v4619 = vmul.f32 %v4587, %v987
        %v4620 = vmul.f32 %v4588, %v988
        %v4621 = vmul.f32 %v4589, %v989
        %v4622 = vmul.f32 %v4590, %v990
        %v4623 = vmul.f32 %v4591, %v991
        %v4624 = vmul.f32 %v4592, %v992
        %v4625 = vmul.f32 %v4593, %v993
        %v4626 = vpack.c.bf16 %v4595, %v4594
        %v4627 = vpack.c.bf16 %v4597, %v4596
        %v4628 = vpack.c.bf16 %v4599, %v4598
        %v4629 = vpack.c.bf16 %v4601, %v4600
        %v4630 = vpack.c.bf16 %v4603, %v4602
        %v4631 = vpack.c.bf16 %v4605, %v4604
        %v4632 = vpack.c.bf16 %v4607, %v4606
        %v4633 = vpack.c.bf16 %v4609, %v4608
        %v4634 = vpack.c.bf16 %v4611, %v4610
        %v4635 = vpack.c.bf16 %v4613, %v4612
        %v4636 = vpack.c.bf16 %v4615, %v4614
        %v4637 = vpack.c.bf16 %v4617, %v4616
        %v4638 = vpack.c.bf16 %v4619, %v4618
        %v4639 = vpack.c.bf16 %v4621, %v4620
        %v4640 = vpack.c.bf16 %v4623, %v4622
        %v4641 = vpack.c.bf16 %v4625, %v4624
        %4658 = vrot.lane.b32.xlu0 %v4626, 16
        %v4659 = vpop.permute.xlu0 %4658
        %4660 = vrot.lane.b32.xlu0 %v4627, 16
        %v4661 = vpop.permute.xlu0 %4660
        %4662 = vrot.lane.b32.xlu0 %v4628, 16
        %v4663 = vpop.permute.xlu0 %4662
        %4664 = vrot.lane.b32.xlu0 %v4629, 16
        %v4665 = vpop.permute.xlu0 %4664
        %4666 = vrot.lane.b32.xlu0 %v4630, 16
        %v4667 = vpop.permute.xlu0 %4666
        %4668 = vrot.lane.b32.xlu0 %v4631, 16
        %v4669 = vpop.permute.xlu0 %4668
        %4670 = vrot.lane.b32.xlu0 %v4632, 16
        %v4671 = vpop.permute.xlu0 %4670
        %4672 = vrot.lane.b32.xlu0 %v4633, 16
        %v4673 = vpop.permute.xlu0 %4672
        %4674 = vrot.lane.b32.xlu0 %v4634, 16
        %v4675 = vpop.permute.xlu0 %4674
        %4676 = vrot.lane.b32.xlu0 %v4635, 16
        %v4677 = vpop.permute.xlu0 %4676
        %4678 = vrot.lane.b32.xlu0 %v4636, 16
        %v4679 = vpop.permute.xlu0 %4678
        %4680 = vrot.lane.b32.xlu0 %v4637, 16
        %v4681 = vpop.permute.xlu0 %4680
        %4682 = vrot.lane.b32.xlu0 %v4638, 16
        %v4683 = vpop.permute.xlu0 %4682
        %4684 = vrot.lane.b32.xlu0 %v4639, 16
        %v4685 = vpop.permute.xlu0 %4684
        %4686 = vrot.lane.b32.xlu0 %v4640, 16
        %v4687 = vpop.permute.xlu0 %4686
        %4688 = vrot.lane.b32.xlu0 %v4641, 16
        %v4689 = vpop.permute.xlu0 %4688
        %4706 = vst.msk [vmem:[#allocation5] sm:$0xff] %vm3082, %v4659
        %4707 = vst.msk [vmem:[#allocation5 + $0x8] sm:$0xff] %vm3082, %v4661
        %4708 = vst.msk [vmem:[#allocation5 + $0x10] sm:$0xff] %vm3082, %v4663
        %4709 = vst.msk [vmem:[#allocation5 + $0x18] sm:$0xff] %vm3082, %v4665
        %4710 = vst.msk [vmem:[#allocation5 + $0x20] sm:$0xff] %vm3082, %v4667
        %4711 = vst.msk [vmem:[#allocation5 + $0x28] sm:$0xff] %vm3082, %v4669
        %4712 = vst.msk [vmem:[#allocation5 + $0x30] sm:$0xff] %vm3082, %v4671
        %4713 = vst.msk [vmem:[#allocation5 + $0x38] sm:$0xff] %vm3082, %v4673
        %4714 = vst.msk [vmem:[#allocation5 + $0x40] sm:$0xff] %vm3082, %v4675
        %4715 = vst.msk [vmem:[#allocation5 + $0x48] sm:$0xff] %vm3082, %v4677
        %4716 = vst.msk [vmem:[#allocation5 + $0x50] sm:$0xff] %vm3082, %v4679
        %4717 = vst.msk [vmem:[#allocation5 + $0x58] sm:$0xff] %vm3082, %v4681
        %4718 = vst.msk [vmem:[#allocation5 + $0x60] sm:$0xff] %vm3082, %v4683
        %4719 = vst.msk [vmem:[#allocation5 + $0x68] sm:$0xff] %vm3082, %v4685
        %4720 = vst.msk [vmem:[#allocation5 + $0x70] sm:$0xff] %vm3082, %v4687
        %4721 = vst.msk [vmem:[#allocation5 + $0x78] sm:$0xff] %vm3082, %v4689
        %v4722 = vld [vmem:[#allocation3 + $0x17] sm:$0xff]
        %v4723 = vld [vmem:[#allocation3 + $0x1f] sm:$0xff]
        %v4724 = vld [vmem:[#allocation3 + $0x27] sm:$0xff]
        %v4725 = vld [vmem:[#allocation3 + $0x2f] sm:$0xff]
        %v4726 = vld [vmem:[#allocation3 + $0x37] sm:$0xff]
        %v4727 = vld [vmem:[#allocation3 + $0x3f] sm:$0xff]
        %v4728 = vld [vmem:[#allocation3 + $0x47] sm:$0xff]
        %v4729 = vld [vmem:[#allocation3 + $0x4f] sm:$0xff]
        %v4730 = vld [vmem:[#allocation3 + $0x57] sm:$0xff]
        %v4731 = vld [vmem:[#allocation3 + $0x5f] sm:$0xff]
        %v4732 = vld [vmem:[#allocation3 + $0x67] sm:$0xff]
        %v4733 = vld [vmem:[#allocation3 + $0x6f] sm:$0xff]
        %v4734 = vld [vmem:[#allocation3 + $0x77] sm:$0xff]
        %v4735 = vld [vmem:[#allocation3 + $0x7f] sm:$0xff]
        %v4736 = vld [vmem:[#allocation3 + $0x87] sm:$0xff]
        %v4737 = vld [vmem:[#allocation3 + $0x8f] sm:$0xff]
        %v4738 = vld [vmem:[#allocation3 + $0x97] sm:$0xff]
        %v4739 = vld [vmem:[#allocation3 + $0x9f] sm:$0xff]
        %v4740 = vld [vmem:[#allocation3 + $0xa7] sm:$0xff]
        %v4741 = vld [vmem:[#allocation3 + $0xaf] sm:$0xff]
        %v4742 = vld [vmem:[#allocation3 + $0xb7] sm:$0xff]
        %v4743 = vld [vmem:[#allocation3 + $0xbf] sm:$0xff]
        %v4744 = vld [vmem:[#allocation3 + $0xc7] sm:$0xff]
        %v4745 = vld [vmem:[#allocation3 + $0xcf] sm:$0xff]
        %v4746 = vld [vmem:[#allocation3 + $0xd7] sm:$0xff]
        %v4747 = vld [vmem:[#allocation3 + $0xdf] sm:$0xff]
        %v4748 = vld [vmem:[#allocation3 + $0xe7] sm:$0xff]
        %v4749 = vld [vmem:[#allocation3 + $0xef] sm:$0xff]
        %v4750 = vld [vmem:[#allocation3 + $0xf7] sm:$0xff]
        %v4751 = vld [vmem:[#allocation3 + $0xff] sm:$0xff]
        %v4752 = vld [vmem:[#allocation3 + $0x107] sm:$0xff]
        %v4753 = vld [vmem:[#allocation3 + $0x10f] sm:$0xff]
        %v4754 = vmul.f32 %v4722, %v866
        %v4755 = vmul.f32 %v4723, %v867
        %v4756 = vmul.f32 %v4724, %v868
        %v4757 = vmul.f32 %v4725, %v869
        %v4758 = vmul.f32 %v4726, %v870
        %v4759 = vmul.f32 %v4727, %v871
        %v4760 = vmul.f32 %v4728, %v872
        %v4761 = vmul.f32 %v4729, %v873
        %v4762 = vmul.f32 %v4730, %v874
        %v4763 = vmul.f32 %v4731, %v875
        %v4764 = vmul.f32 %v4732, %v876
        %v4765 = vmul.f32 %v4733, %v877
        %v4766 = vmul.f32 %v4734, %v878
        %v4767 = vmul.f32 %v4735, %v879
        %v4768 = vmul.f32 %v4736, %v880
        %v4769 = vmul.f32 %v4737, %v881
        %v4770 = vmul.f32 %v4738, %v882
        %v4771 = vmul.f32 %v4739, %v883
        %v4772 = vmul.f32 %v4740, %v884
        %v4773 = vmul.f32 %v4741, %v885
        %v4774 = vmul.f32 %v4742, %v886
        %v4775 = vmul.f32 %v4743, %v887
        %v4776 = vmul.f32 %v4744, %v888
        %v4777 = vmul.f32 %v4745, %v889
        %v4778 = vmul.f32 %v4746, %v890
        %v4779 = vmul.f32 %v4747, %v891
        %v4780 = vmul.f32 %v4748, %v892
        %v4781 = vmul.f32 %v4749, %v893
        %v4782 = vmul.f32 %v4750, %v894
        %v4783 = vmul.f32 %v4751, %v895
        %v4784 = vmul.f32 %v4752, %v896
        %v4785 = vmul.f32 %v4753, %v897
        %v4786 = vpack.c.bf16 %v4755, %v4754
        %v4787 = vpack.c.bf16 %v4757, %v4756
        %v4788 = vpack.c.bf16 %v4759, %v4758
        %v4789 = vpack.c.bf16 %v4761, %v4760
        %v4790 = vpack.c.bf16 %v4763, %v4762
        %v4791 = vpack.c.bf16 %v4765, %v4764
        %v4792 = vpack.c.bf16 %v4767, %v4766
        %v4793 = vpack.c.bf16 %v4769, %v4768
        %v4794 = vpack.c.bf16 %v4771, %v4770
        %v4795 = vpack.c.bf16 %v4773, %v4772
        %v4796 = vpack.c.bf16 %v4775, %v4774
        %v4797 = vpack.c.bf16 %v4777, %v4776
        %v4798 = vpack.c.bf16 %v4779, %v4778
        %v4799 = vpack.c.bf16 %v4781, %v4780
        %v4800 = vpack.c.bf16 %v4783, %v4782
        %v4801 = vpack.c.bf16 %v4785, %v4784
        %4818 = vrot.lane.b32.xlu0 %v4786, 24
        %v4819 = vpop.permute.xlu0 %4818
        %4820 = vrot.lane.b32.xlu0 %v4787, 24
        %v4821 = vpop.permute.xlu0 %4820
        %4822 = vrot.lane.b32.xlu0 %v4788, 24
        %v4823 = vpop.permute.xlu0 %4822
        %4824 = vrot.lane.b32.xlu0 %v4789, 24
        %v4825 = vpop.permute.xlu0 %4824
        %4826 = vrot.lane.b32.xlu0 %v4790, 24
        %v4827 = vpop.permute.xlu0 %4826
        %4828 = vrot.lane.b32.xlu0 %v4791, 24
        %v4829 = vpop.permute.xlu0 %4828
        %4830 = vrot.lane.b32.xlu0 %v4792, 24
        %v4831 = vpop.permute.xlu0 %4830
        %4832 = vrot.lane.b32.xlu0 %v4793, 24
        %v4833 = vpop.permute.xlu0 %4832
        %4834 = vrot.lane.b32.xlu0 %v4794, 24
        %v4835 = vpop.permute.xlu0 %4834
        %4836 = vrot.lane.b32.xlu0 %v4795, 24
        %v4837 = vpop.permute.xlu0 %4836
        %4838 = vrot.lane.b32.xlu0 %v4796, 24
        %v4839 = vpop.permute.xlu0 %4838
        %4840 = vrot.lane.b32.xlu0 %v4797, 24
        %v4841 = vpop.permute.xlu0 %4840
        %4842 = vrot.lane.b32.xlu0 %v4798, 24
        %v4843 = vpop.permute.xlu0 %4842
        %4844 = vrot.lane.b32.xlu0 %v4799, 24
        %v4845 = vpop.permute.xlu0 %4844
        %4846 = vrot.lane.b32.xlu0 %v4800, 24
        %v4847 = vpop.permute.xlu0 %4846
        %4848 = vrot.lane.b32.xlu0 %v4801, 24
        %v4849 = vpop.permute.xlu0 %4848
        %4866 = vst.msk [vmem:[#allocation5] sm:$0xff] %vm3243, %v4819
        %4867 = vst.msk [vmem:[#allocation5 + $0x8] sm:$0xff] %vm3243, %v4821
        %4868 = vst.msk [vmem:[#allocation5 + $0x10] sm:$0xff] %vm3243, %v4823
        %4869 = vst.msk [vmem:[#allocation5 + $0x18] sm:$0xff] %vm3243, %v4825
        %4870 = vst.msk [vmem:[#allocation5 + $0x20] sm:$0xff] %vm3243, %v4827
        %4871 = vst.msk [vmem:[#allocation5 + $0x28] sm:$0xff] %vm3243, %v4829
        %4872 = vst.msk [vmem:[#allocation5 + $0x30] sm:$0xff] %vm3243, %v4831
        %4873 = vst.msk [vmem:[#allocation5 + $0x38] sm:$0xff] %vm3243, %v4833
        %4874 = vst.msk [vmem:[#allocation5 + $0x40] sm:$0xff] %vm3243, %v4835
        %4875 = vst.msk [vmem:[#allocation5 + $0x48] sm:$0xff] %vm3243, %v4837
        %4876 = vst.msk [vmem:[#allocation5 + $0x50] sm:$0xff] %vm3243, %v4839
        %4877 = vst.msk [vmem:[#allocation5 + $0x58] sm:$0xff] %vm3243, %v4841
        %4878 = vst.msk [vmem:[#allocation5 + $0x60] sm:$0xff] %vm3243, %v4843
        %4879 = vst.msk [vmem:[#allocation5 + $0x68] sm:$0xff] %vm3243, %v4845
        %4880 = vst.msk [vmem:[#allocation5 + $0x70] sm:$0xff] %vm3243, %v4847
        %4881 = vst.msk [vmem:[#allocation5 + $0x78] sm:$0xff] %vm3243, %v4849
        %v4882 = vld [vmem:[#allocation3 + $0x18] sm:$0xff]
        %v4883 = vld [vmem:[#allocation3 + $0x20] sm:$0xff]
        %v4884 = vld [vmem:[#allocation3 + $0x28] sm:$0xff]
        %v4885 = vld [vmem:[#allocation3 + $0x30] sm:$0xff]
        %v4886 = vld [vmem:[#allocation3 + $0x38] sm:$0xff]
        %v4887 = vld [vmem:[#allocation3 + $0x40] sm:$0xff]
        %v4888 = vld [vmem:[#allocation3 + $0x48] sm:$0xff]
        %v4889 = vld [vmem:[#allocation3 + $0x50] sm:$0xff]
        %v4890 = vld [vmem:[#allocation3 + $0x58] sm:$0xff]
        %v4891 = vld [vmem:[#allocation3 + $0x60] sm:$0xff]
        %v4892 = vld [vmem:[#allocation3 + $0x68] sm:$0xff]
        %v4893 = vld [vmem:[#allocation3 + $0x70] sm:$0xff]
        %v4894 = vld [vmem:[#allocation3 + $0x78] sm:$0xff]
        %v4895 = vld [vmem:[#allocation3 + $0x80] sm:$0xff]
        %v4896 = vld [vmem:[#allocation3 + $0x88] sm:$0xff]
        %v4897 = vld [vmem:[#allocation3 + $0x90] sm:$0xff]
        %v4898 = vld [vmem:[#allocation3 + $0x98] sm:$0xff]
        %v4899 = vld [vmem:[#allocation3 + $0xa0] sm:$0xff]
        %v4900 = vld [vmem:[#allocation3 + $0xa8] sm:$0xff]
        %v4901 = vld [vmem:[#allocation3 + $0xb0] sm:$0xff]
        %v4902 = vld [vmem:[#allocation3 + $0xb8] sm:$0xff]
        %v4903 = vld [vmem:[#allocation3 + $0xc0] sm:$0xff]
        %v4904 = vld [vmem:[#allocation3 + $0xc8] sm:$0xff]
        %v4905 = vld [vmem:[#allocation3 + $0xd0] sm:$0xff]
        %v4906 = vld [vmem:[#allocation3 + $0xd8] sm:$0xff]
        %v4907 = vld [vmem:[#allocation3 + $0xe0] sm:$0xff]
        %v4908 = vld [vmem:[#allocation3 + $0xe8] sm:$0xff]
        %v4909 = vld [vmem:[#allocation3 + $0xf0] sm:$0xff]
        %v4910 = vld [vmem:[#allocation3 + $0xf8] sm:$0xff]
        %v4911 = vld [vmem:[#allocation3 + $0x100] sm:$0xff]
        %v4912 = vld [vmem:[#allocation3 + $0x108] sm:$0xff]
        %v4913 = vld [vmem:[#allocation3 + $0x110] sm:$0xff]
        %v4914 = vpack.c.bf16 %v4883, %v4882
        %v4915 = vpack.c.bf16 %v4885, %v4884
        %v4916 = vpack.c.bf16 %v4887, %v4886
        %v4917 = vpack.c.bf16 %v4889, %v4888
        %v4918 = vpack.c.bf16 %v4891, %v4890
        %v4919 = vpack.c.bf16 %v4893, %v4892
        %v4920 = vpack.c.bf16 %v4895, %v4894
        %v4921 = vpack.c.bf16 %v4897, %v4896
        %v4922 = vpack.c.bf16 %v4899, %v4898
        %v4923 = vpack.c.bf16 %v4901, %v4900
        %v4924 = vpack.c.bf16 %v4903, %v4902
        %v4925 = vpack.c.bf16 %v4905, %v4904
        %v4926 = vpack.c.bf16 %v4907, %v4906
        %v4927 = vpack.c.bf16 %v4909, %v4908
        %v4928 = vpack.c.bf16 %v4911, %v4910
        %v4929 = vpack.c.bf16 %v4913, %v4912
        %4946 = vrot.lane.b32.xlu0 %v4914, 32
        %v4947 = vpop.permute.xlu0 %4946
        %4948 = vrot.lane.b32.xlu0 %v4915, 32
        %v4949 = vpop.permute.xlu0 %4948
        %4950 = vrot.lane.b32.xlu0 %v4916, 32
        %v4951 = vpop.permute.xlu0 %4950
        %4952 = vrot.lane.b32.xlu0 %v4917, 32
        %v4953 = vpop.permute.xlu0 %4952
        %4954 = vrot.lane.b32.xlu0 %v4918, 32
        %v4955 = vpop.permute.xlu0 %4954
        %4956 = vrot.lane.b32.xlu0 %v4919, 32
        %v4957 = vpop.permute.xlu0 %4956
        %4958 = vrot.lane.b32.xlu0 %v4920, 32
        %v4959 = vpop.permute.xlu0 %4958
        %4960 = vrot.lane.b32.xlu0 %v4921, 32
        %v4961 = vpop.permute.xlu0 %4960
        %4962 = vrot.lane.b32.xlu0 %v4922, 32
        %v4963 = vpop.permute.xlu0 %4962
        %4964 = vrot.lane.b32.xlu0 %v4923, 32
        %v4965 = vpop.permute.xlu0 %4964
        %4966 = vrot.lane.b32.xlu0 %v4924, 32
        %v4967 = vpop.permute.xlu0 %4966
        %4968 = vrot.lane.b32.xlu0 %v4925, 32
        %v4969 = vpop.permute.xlu0 %4968
        %4970 = vrot.lane.b32.xlu0 %v4926, 32
        %v4971 = vpop.permute.xlu0 %4970
        %4972 = vrot.lane.b32.xlu0 %v4927, 32
        %v4973 = vpop.permute.xlu0 %4972
        %4974 = vrot.lane.b32.xlu0 %v4928, 32
        %v4975 = vpop.permute.xlu0 %4974
        %4976 = vrot.lane.b32.xlu0 %v4929, 32
        %v4977 = vpop.permute.xlu0 %4976
        %4994 = vst.msk [vmem:[#allocation5] sm:$0xff] %vm3372, %v4947
        %4995 = vst.msk [vmem:[#allocation5 + $0x8] sm:$0xff] %vm3372, %v4949
        %4996 = vst.msk [vmem:[#allocation5 + $0x10] sm:$0xff] %vm3372, %v4951
        %4997 = vst.msk [vmem:[#allocation5 + $0x18] sm:$0xff] %vm3372, %v4953
        %4998 = vst.msk [vmem:[#allocation5 + $0x20] sm:$0xff] %vm3372, %v4955
        %4999 = vst.msk [vmem:[#allocation5 + $0x28] sm:$0xff] %vm3372, %v4957
        %5000 = vst.msk [vmem:[#allocation5 + $0x30] sm:$0xff] %vm3372, %v4959
        %5001 = vst.msk [vmem:[#allocation5 + $0x38] sm:$0xff] %vm3372, %v4961
        %5002 = vst.msk [vmem:[#allocation5 + $0x40] sm:$0xff] %vm3372, %v4963
        %5003 = vst.msk [vmem:[#allocation5 + $0x48] sm:$0xff] %vm3372, %v4965
        %5004 = vst.msk [vmem:[#allocation5 + $0x50] sm:$0xff] %vm3372, %v4967
        %5005 = vst.msk [vmem:[#allocation5 + $0x58] sm:$0xff] %vm3372, %v4969
        %5006 = vst.msk [vmem:[#allocation5 + $0x60] sm:$0xff] %vm3372, %v4971
        %5007 = vst.msk [vmem:[#allocation5 + $0x68] sm:$0xff] %vm3372, %v4973
        %5008 = vst.msk [vmem:[#allocation5 + $0x70] sm:$0xff] %vm3372, %v4975
        %5009 = vst.msk [vmem:[#allocation5 + $0x78] sm:$0xff] %vm3372, %v4977
        %v5010 = vld [vmem:[#allocation3 + $0x19] sm:$0xff]
        %v5011 = vld [vmem:[#allocation3 + $0x21] sm:$0xff]
        %v5012 = vld [vmem:[#allocation3 + $0x29] sm:$0xff]
        %v5013 = vld [vmem:[#allocation3 + $0x31] sm:$0xff]
        %v5014 = vld [vmem:[#allocation3 + $0x39] sm:$0xff]
        %v5015 = vld [vmem:[#allocation3 + $0x41] sm:$0xff]
        %v5016 = vld [vmem:[#allocation3 + $0x49] sm:$0xff]
        %v5017 = vld [vmem:[#allocation3 + $0x51] sm:$0xff]
        %v5018 = vld [vmem:[#allocation3 + $0x59] sm:$0xff]
        %v5019 = vld [vmem:[#allocation3 + $0x61] sm:$0xff]
        %v5020 = vld [vmem:[#allocation3 + $0x69] sm:$0xff]
        %v5021 = vld [vmem:[#allocation3 + $0x71] sm:$0xff]
        %v5022 = vld [vmem:[#allocation3 + $0x79] sm:$0xff]
        %v5023 = vld [vmem:[#allocation3 + $0x81] sm:$0xff]
        %v5024 = vld [vmem:[#allocation3 + $0x89] sm:$0xff]
        %v5025 = vld [vmem:[#allocation3 + $0x91] sm:$0xff]
        %v5026 = vld [vmem:[#allocation3 + $0x99] sm:$0xff]
        %v5027 = vld [vmem:[#allocation3 + $0xa1] sm:$0xff]
        %v5028 = vld [vmem:[#allocation3 + $0xa9] sm:$0xff]
        %v5029 = vld [vmem:[#allocation3 + $0xb1] sm:$0xff]
        %v5030 = vld [vmem:[#allocation3 + $0xb9] sm:$0xff]
        %v5031 = vld [vmem:[#allocation3 + $0xc1] sm:$0xff]
        %v5032 = vld [vmem:[#allocation3 + $0xc9] sm:$0xff]
        %v5033 = vld [vmem:[#allocation3 + $0xd1] sm:$0xff]
        %v5034 = vld [vmem:[#allocation3 + $0xd9] sm:$0xff]
        %v5035 = vld [vmem:[#allocation3 + $0xe1] sm:$0xff]
        %v5036 = vld [vmem:[#allocation3 + $0xe9] sm:$0xff]
        %v5037 = vld [vmem:[#allocation3 + $0xf1] sm:$0xff]
        %v5038 = vld [vmem:[#allocation3 + $0xf9] sm:$0xff]
        %v5039 = vld [vmem:[#allocation3 + $0x101] sm:$0xff]
        %v5040 = vld [vmem:[#allocation3 + $0x109] sm:$0xff]
        %v5041 = vld [vmem:[#allocation3 + $0x111] sm:$0xff]
        %v5042 = vmul.f32 %v5010, %v962
        %v5043 = vmul.f32 %v5011, %v963
        %v5044 = vmul.f32 %v5012, %v964
        %v5045 = vmul.f32 %v5013, %v965
        %v5046 = vmul.f32 %v5014, %v966
        %v5047 = vmul.f32 %v5015, %v967
        %v5048 = vmul.f32 %v5016, %v968
        %v5049 = vmul.f32 %v5017, %v969
        %v5050 = vmul.f32 %v5018, %v970
        %v5051 = vmul.f32 %v5019, %v971
        %v5052 = vmul.f32 %v5020, %v972
        %v5053 = vmul.f32 %v5021, %v973
        %v5054 = vmul.f32 %v5022, %v974
        %v5055 = vmul.f32 %v5023, %v975
        %v5056 = vmul.f32 %v5024, %v976
        %v5057 = vmul.f32 %v5025, %v977
        %v5058 = vmul.f32 %v5026, %v978
        %v5059 = vmul.f32 %v5027, %v979
        %v5060 = vmul.f32 %v5028, %v980
        %v5061 = vmul.f32 %v5029, %v981
        %v5062 = vmul.f32 %v5030, %v982
        %v5063 = vmul.f32 %v5031, %v983
        %v5064 = vmul.f32 %v5032, %v984
        %v5065 = vmul.f32 %v5033, %v985
        %v5066 = vmul.f32 %v5034, %v986
        %v5067 = vmul.f32 %v5035, %v987
        %v5068 = vmul.f32 %v5036, %v988
        %v5069 = vmul.f32 %v5037, %v989
        %v5070 = vmul.f32 %v5038, %v990
        %v5071 = vmul.f32 %v5039, %v991
        %v5072 = vmul.f32 %v5040, %v992
        %v5073 = vmul.f32 %v5041, %v993
        %v5074 = vpack.c.bf16 %v5043, %v5042
        %v5075 = vpack.c.bf16 %v5045, %v5044
        %v5076 = vpack.c.bf16 %v5047, %v5046
        %v5077 = vpack.c.bf16 %v5049, %v5048
        %v5078 = vpack.c.bf16 %v5051, %v5050
        %v5079 = vpack.c.bf16 %v5053, %v5052
        %v5080 = vpack.c.bf16 %v5055, %v5054
        %v5081 = vpack.c.bf16 %v5057, %v5056
        %v5082 = vpack.c.bf16 %v5059, %v5058
        %v5083 = vpack.c.bf16 %v5061, %v5060
        %v5084 = vpack.c.bf16 %v5063, %v5062
        %v5085 = vpack.c.bf16 %v5065, %v5064
        %v5086 = vpack.c.bf16 %v5067, %v5066
        %v5087 = vpack.c.bf16 %v5069, %v5068
        %v5088 = vpack.c.bf16 %v5071, %v5070
        %v5089 = vpack.c.bf16 %v5073, %v5072
        %5106 = vrot.lane.b32.xlu0 %v5074, 40
        %v5107 = vpop.permute.xlu0 %5106
        %5108 = vrot.lane.b32.xlu0 %v5075, 40
        %v5109 = vpop.permute.xlu0 %5108
        %5110 = vrot.lane.b32.xlu0 %v5076, 40
        %v5111 = vpop.permute.xlu0 %5110
        %5112 = vrot.lane.b32.xlu0 %v5077, 40
        %v5113 = vpop.permute.xlu0 %5112
        %5114 = vrot.lane.b32.xlu0 %v5078, 40
        %v5115 = vpop.permute.xlu0 %5114
        %5116 = vrot.lane.b32.xlu0 %v5079, 40
        %v5117 = vpop.permute.xlu0 %5116
        %5118 = vrot.lane.b32.xlu0 %v5080, 40
        %v5119 = vpop.permute.xlu0 %5118
        %5120 = vrot.lane.b32.xlu0 %v5081, 40
        %v5121 = vpop.permute.xlu0 %5120
        %5122 = vrot.lane.b32.xlu0 %v5082, 40
        %v5123 = vpop.permute.xlu0 %5122
        %5124 = vrot.lane.b32.xlu0 %v5083, 40
        %v5125 = vpop.permute.xlu0 %5124
        %5126 = vrot.lane.b32.xlu0 %v5084, 40
        %v5127 = vpop.permute.xlu0 %5126
        %5128 = vrot.lane.b32.xlu0 %v5085, 40
        %v5129 = vpop.permute.xlu0 %5128
        %5130 = vrot.lane.b32.xlu0 %v5086, 40
        %v5131 = vpop.permute.xlu0 %5130
        %5132 = vrot.lane.b32.xlu0 %v5087, 40
        %v5133 = vpop.permute.xlu0 %5132
        %5134 = vrot.lane.b32.xlu0 %v5088, 40
        %v5135 = vpop.permute.xlu0 %5134
        %5136 = vrot.lane.b32.xlu0 %v5089, 40
        %v5137 = vpop.permute.xlu0 %5136
        %5154 = vst.msk [vmem:[#allocation5] sm:$0xff] %vm3533, %v5107
        %5155 = vst.msk [vmem:[#allocation5 + $0x8] sm:$0xff] %vm3533, %v5109
        %5156 = vst.msk [vmem:[#allocation5 + $0x10] sm:$0xff] %vm3533, %v5111
        %5157 = vst.msk [vmem:[#allocation5 + $0x18] sm:$0xff] %vm3533, %v5113
        %5158 = vst.msk [vmem:[#allocation5 + $0x20] sm:$0xff] %vm3533, %v5115
        %5159 = vst.msk [vmem:[#allocation5 + $0x28] sm:$0xff] %vm3533, %v5117
        %5160 = vst.msk [vmem:[#allocation5 + $0x30] sm:$0xff] %vm3533, %v5119
        %5161 = vst.msk [vmem:[#allocation5 + $0x38] sm:$0xff] %vm3533, %v5121
        %5162 = vst.msk [vmem:[#allocation5 + $0x40] sm:$0xff] %vm3533, %v5123
        %5163 = vst.msk [vmem:[#allocation5 + $0x48] sm:$0xff] %vm3533, %v5125
        %5164 = vst.msk [vmem:[#allocation5 + $0x50] sm:$0xff] %vm3533, %v5127
        %5165 = vst.msk [vmem:[#allocation5 + $0x58] sm:$0xff] %vm3533, %v5129
        %5166 = vst.msk [vmem:[#allocation5 + $0x60] sm:$0xff] %vm3533, %v5131
        %5167 = vst.msk [vmem:[#allocation5 + $0x68] sm:$0xff] %vm3533, %v5133
        %5168 = vst.msk [vmem:[#allocation5 + $0x70] sm:$0xff] %vm3533, %v5135
        %5169 = vst.msk [vmem:[#allocation5 + $0x78] sm:$0xff] %vm3533, %v5137
        %v5170 = vld [vmem:[#allocation3 + $0x27] sm:$0xff]
        %v5171 = vld [vmem:[#allocation3 + $0x2f] sm:$0xff]
        %v5172 = vld [vmem:[#allocation3 + $0x37] sm:$0xff]
        %v5173 = vld [vmem:[#allocation3 + $0x3f] sm:$0xff]
        %v5174 = vld [vmem:[#allocation3 + $0x47] sm:$0xff]
        %v5175 = vld [vmem:[#allocation3 + $0x4f] sm:$0xff]
        %v5176 = vld [vmem:[#allocation3 + $0x57] sm:$0xff]
        %v5177 = vld [vmem:[#allocation3 + $0x5f] sm:$0xff]
        %v5178 = vld [vmem:[#allocation3 + $0x67] sm:$0xff]
        %v5179 = vld [vmem:[#allocation3 + $0x6f] sm:$0xff]
        %v5180 = vld [vmem:[#allocation3 + $0x77] sm:$0xff]
        %v5181 = vld [vmem:[#allocation3 + $0x7f] sm:$0xff]
        %v5182 = vld [vmem:[#allocation3 + $0x87] sm:$0xff]
        %v5183 = vld [vmem:[#allocation3 + $0x8f] sm:$0xff]
        %v5184 = vld [vmem:[#allocation3 + $0x97] sm:$0xff]
        %v5185 = vld [vmem:[#allocation3 + $0x9f] sm:$0xff]
        %v5186 = vld [vmem:[#allocation3 + $0xa7] sm:$0xff]
        %v5187 = vld [vmem:[#allocation3 + $0xaf] sm:$0xff]
        %v5188 = vld [vmem:[#allocation3 + $0xb7] sm:$0xff]
        %v5189 = vld [vmem:[#allocation3 + $0xbf] sm:$0xff]
        %v5190 = vld [vmem:[#allocation3 + $0xc7] sm:$0xff]
        %v5191 = vld [vmem:[#allocation3 + $0xcf] sm:$0xff]
        %v5192 = vld [vmem:[#allocation3 + $0xd7] sm:$0xff]
        %v5193 = vld [vmem:[#allocation3 + $0xdf] sm:$0xff]
        %v5194 = vld [vmem:[#allocation3 + $0xe7] sm:$0xff]
        %v5195 = vld [vmem:[#allocation3 + $0xef] sm:$0xff]
        %v5196 = vld [vmem:[#allocation3 + $0xf7] sm:$0xff]
        %v5197 = vld [vmem:[#allocation3 + $0xff] sm:$0xff]
        %v5198 = vld [vmem:[#allocation3 + $0x107] sm:$0xff]
        %v5199 = vld [vmem:[#allocation3 + $0x10f] sm:$0xff]
        %v5200 = vld [vmem:[#allocation3 + $0x117] sm:$0xff]
        %v5201 = vld [vmem:[#allocation3 + $0x11f] sm:$0xff]
        %v5202 = vmul.f32 %v5170, %v866
        %v5203 = vmul.f32 %v5171, %v867
        %v5204 = vmul.f32 %v5172, %v868
        %v5205 = vmul.f32 %v5173, %v869
        %v5206 = vmul.f32 %v5174, %v870
        %v5207 = vmul.f32 %v5175, %v871
        %v5208 = vmul.f32 %v5176, %v872
        %v5209 = vmul.f32 %v5177, %v873
        %v5210 = vmul.f32 %v5178, %v874
        %v5211 = vmul.f32 %v5179, %v875
        %v5212 = vmul.f32 %v5180, %v876
        %v5213 = vmul.f32 %v5181, %v877
        %v5214 = vmul.f32 %v5182, %v878
        %v5215 = vmul.f32 %v5183, %v879
        %v5216 = vmul.f32 %v5184, %v880
        %v5217 = vmul.f32 %v5185, %v881
        %v5218 = vmul.f32 %v5186, %v882
        %v5219 = vmul.f32 %v5187, %v883
        %v5220 = vmul.f32 %v5188, %v884
        %v5221 = vmul.f32 %v5189, %v885
        %v5222 = vmul.f32 %v5190, %v886
        %v5223 = vmul.f32 %v5191, %v887
        %v5224 = vmul.f32 %v5192, %v888
        %v5225 = vmul.f32 %v5193, %v889
        %v5226 = vmul.f32 %v5194, %v890
        %v5227 = vmul.f32 %v5195, %v891
        %v5228 = vmul.f32 %v5196, %v892
        %v5229 = vmul.f32 %v5197, %v893
        %v5230 = vmul.f32 %v5198, %v894
        %v5231 = vmul.f32 %v5199, %v895
        %v5232 = vmul.f32 %v5200, %v896
        %v5233 = vmul.f32 %v5201, %v897
        %v5234 = vpack.c.bf16 %v5203, %v5202
        %v5235 = vpack.c.bf16 %v5205, %v5204
        %v5236 = vpack.c.bf16 %v5207, %v5206
        %v5237 = vpack.c.bf16 %v5209, %v5208
        %v5238 = vpack.c.bf16 %v5211, %v5210
        %v5239 = vpack.c.bf16 %v5213, %v5212
        %v5240 = vpack.c.bf16 %v5215, %v5214
        %v5241 = vpack.c.bf16 %v5217, %v5216
        %v5242 = vpack.c.bf16 %v5219, %v5218
        %v5243 = vpack.c.bf16 %v5221, %v5220
        %v5244 = vpack.c.bf16 %v5223, %v5222
        %v5245 = vpack.c.bf16 %v5225, %v5224
        %v5246 = vpack.c.bf16 %v5227, %v5226
        %v5247 = vpack.c.bf16 %v5229, %v5228
        %v5248 = vpack.c.bf16 %v5231, %v5230
        %v5249 = vpack.c.bf16 %v5233, %v5232
        %5266 = vrot.lane.b32.xlu0 %v5234, 48
        %v5267 = vpop.permute.xlu0 %5266
        %5268 = vrot.lane.b32.xlu0 %v5235, 48
        %v5269 = vpop.permute.xlu0 %5268
        %5270 = vrot.lane.b32.xlu0 %v5236, 48
        %v5271 = vpop.permute.xlu0 %5270
        %5272 = vrot.lane.b32.xlu0 %v5237, 48
        %v5273 = vpop.permute.xlu0 %5272
        %5274 = vrot.lane.b32.xlu0 %v5238, 48
        %v5275 = vpop.permute.xlu0 %5274
        %5276 = vrot.lane.b32.xlu0 %v5239, 48
        %v5277 = vpop.permute.xlu0 %5276
        %5278 = vrot.lane.b32.xlu0 %v5240, 48
        %v5279 = vpop.permute.xlu0 %5278
        %5280 = vrot.lane.b32.xlu0 %v5241, 48
        %v5281 = vpop.permute.xlu0 %5280
        %5282 = vrot.lane.b32.xlu0 %v5242, 48
        %v5283 = vpop.permute.xlu0 %5282
        %5284 = vrot.lane.b32.xlu0 %v5243, 48
        %v5285 = vpop.permute.xlu0 %5284
        %5286 = vrot.lane.b32.xlu0 %v5244, 48
        %v5287 = vpop.permute.xlu0 %5286
        %5288 = vrot.lane.b32.xlu0 %v5245, 48
        %v5289 = vpop.permute.xlu0 %5288
        %5290 = vrot.lane.b32.xlu0 %v5246, 48
        %v5291 = vpop.permute.xlu0 %5290
        %5292 = vrot.lane.b32.xlu0 %v5247, 48
        %v5293 = vpop.permute.xlu0 %5292
        %5294 = vrot.lane.b32.xlu0 %v5248, 48
        %v5295 = vpop.permute.xlu0 %5294
        %5296 = vrot.lane.b32.xlu0 %v5249, 48
        %v5297 = vpop.permute.xlu0 %5296
        %5314 = vst.msk [vmem:[#allocation5] sm:$0xff] %vm3694, %v5267
        %5315 = vst.msk [vmem:[#allocation5 + $0x8] sm:$0xff] %vm3694, %v5269
        %5316 = vst.msk [vmem:[#allocation5 + $0x10] sm:$0xff] %vm3694, %v5271
        %5317 = vst.msk [vmem:[#allocation5 + $0x18] sm:$0xff] %vm3694, %v5273
        %5318 = vst.msk [vmem:[#allocation5 + $0x20] sm:$0xff] %vm3694, %v5275
        %5319 = vst.msk [vmem:[#allocation5 + $0x28] sm:$0xff] %vm3694, %v5277
        %5320 = vst.msk [vmem:[#allocation5 + $0x30] sm:$0xff] %vm3694, %v5279
        %5321 = vst.msk [vmem:[#allocation5 + $0x38] sm:$0xff] %vm3694, %v5281
        %5322 = vst.msk [vmem:[#allocation5 + $0x40] sm:$0xff] %vm3694, %v5283
        %5323 = vst.msk [vmem:[#allocation5 + $0x48] sm:$0xff] %vm3694, %v5285
        %5324 = vst.msk [vmem:[#allocation5 + $0x50] sm:$0xff] %vm3694, %v5287
        %5325 = vst.msk [vmem:[#allocation5 + $0x58] sm:$0xff] %vm3694, %v5289
        %5326 = vst.msk [vmem:[#allocation5 + $0x60] sm:$0xff] %vm3694, %v5291
        %5327 = vst.msk [vmem:[#allocation5 + $0x68] sm:$0xff] %vm3694, %v5293
        %5328 = vst.msk [vmem:[#allocation5 + $0x70] sm:$0xff] %vm3694, %v5295
        %5329 = vst.msk [vmem:[#allocation5 + $0x78] sm:$0xff] %vm3694, %v5297
        %v5330 = vld [vmem:[#allocation3 + $0x28] sm:$0xff]
        %v5331 = vld [vmem:[#allocation3 + $0x30] sm:$0xff]
        %v5332 = vld [vmem:[#allocation3 + $0x38] sm:$0xff]
        %v5333 = vld [vmem:[#allocation3 + $0x40] sm:$0xff]
        %v5334 = vld [vmem:[#allocation3 + $0x48] sm:$0xff]
        %v5335 = vld [vmem:[#allocation3 + $0x50] sm:$0xff]
        %v5336 = vld [vmem:[#allocation3 + $0x58] sm:$0xff]
        %v5337 = vld [vmem:[#allocation3 + $0x60] sm:$0xff]
        %v5338 = vld [vmem:[#allocation3 + $0x68] sm:$0xff]
        %v5339 = vld [vmem:[#allocation3 + $0x70] sm:$0xff]
        %v5340 = vld [vmem:[#allocation3 + $0x78] sm:$0xff]
        %v5341 = vld [vmem:[#allocation3 + $0x80] sm:$0xff]
        %v5342 = vld [vmem:[#allocation3 + $0x88] sm:$0xff]
        %v5343 = vld [vmem:[#allocation3 + $0x90] sm:$0xff]
        %v5344 = vld [vmem:[#allocation3 + $0x98] sm:$0xff]
        %v5345 = vld [vmem:[#allocation3 + $0xa0] sm:$0xff]
        %v5346 = vld [vmem:[#allocation3 + $0xa8] sm:$0xff]
        %v5347 = vld [vmem:[#allocation3 + $0xb0] sm:$0xff]
        %v5348 = vld [vmem:[#allocation3 + $0xb8] sm:$0xff]
        %v5349 = vld [vmem:[#allocation3 + $0xc0] sm:$0xff]
        %v5350 = vld [vmem:[#allocation3 + $0xc8] sm:$0xff]
        %v5351 = vld [vmem:[#allocation3 + $0xd0] sm:$0xff]
        %v5352 = vld [vmem:[#allocation3 + $0xd8] sm:$0xff]
        %v5353 = vld [vmem:[#allocation3 + $0xe0] sm:$0xff]
        %v5354 = vld [vmem:[#allocation3 + $0xe8] sm:$0xff]
        %v5355 = vld [vmem:[#allocation3 + $0xf0] sm:$0xff]
        %v5356 = vld [vmem:[#allocation3 + $0xf8] sm:$0xff]
        %v5357 = vld [vmem:[#allocation3 + $0x100] sm:$0xff]
        %v5358 = vld [vmem:[#allocation3 + $0x108] sm:$0xff]
        %v5359 = vld [vmem:[#allocation3 + $0x110] sm:$0xff]
        %v5360 = vld [vmem:[#allocation3 + $0x118] sm:$0xff]
        %v5361 = vld [vmem:[#allocation3 + $0x120] sm:$0xff]
        %v5362 = vpack.c.bf16 %v5331, %v5330
        %v5363 = vpack.c.bf16 %v5333, %v5332
        %v5364 = vpack.c.bf16 %v5335, %v5334
        %v5365 = vpack.c.bf16 %v5337, %v5336
        %v5366 = vpack.c.bf16 %v5339, %v5338
        %v5367 = vpack.c.bf16 %v5341, %v5340
        %v5368 = vpack.c.bf16 %v5343, %v5342
        %v5369 = vpack.c.bf16 %v5345, %v5344
        %v5370 = vpack.c.bf16 %v5347, %v5346
        %v5371 = vpack.c.bf16 %v5349, %v5348
        %v5372 = vpack.c.bf16 %v5351, %v5350
        %v5373 = vpack.c.bf16 %v5353, %v5352
        %v5374 = vpack.c.bf16 %v5355, %v5354
        %v5375 = vpack.c.bf16 %v5357, %v5356
        %v5376 = vpack.c.bf16 %v5359, %v5358
        %v5377 = vpack.c.bf16 %v5361, %v5360
        %5394 = vrot.lane.b32.xlu0 %v5362, 56
        %v5395 = vpop.permute.xlu0 %5394
        %5396 = vrot.lane.b32.xlu0 %v5363, 56
        %v5397 = vpop.permute.xlu0 %5396
        %5398 = vrot.lane.b32.xlu0 %v5364, 56
        %v5399 = vpop.permute.xlu0 %5398
        %5400 = vrot.lane.b32.xlu0 %v5365, 56
        %v5401 = vpop.permute.xlu0 %5400
        %5402 = vrot.lane.b32.xlu0 %v5366, 56
        %v5403 = vpop.permute.xlu0 %5402
        %5404 = vrot.lane.b32.xlu0 %v5367, 56
        %v5405 = vpop.permute.xlu0 %5404
        %5406 = vrot.lane.b32.xlu0 %v5368, 56
        %v5407 = vpop.permute.xlu0 %5406
        %5408 = vrot.lane.b32.xlu0 %v5369, 56
        %v5409 = vpop.permute.xlu0 %5408
        %5410 = vrot.lane.b32.xlu0 %v5370, 56
        %v5411 = vpop.permute.xlu0 %5410
        %5412 = vrot.lane.b32.xlu0 %v5371, 56
        %v5413 = vpop.permute.xlu0 %5412
        %5414 = vrot.lane.b32.xlu0 %v5372, 56
        %v5415 = vpop.permute.xlu0 %5414
        %5416 = vrot.lane.b32.xlu0 %v5373, 56
        %v5417 = vpop.permute.xlu0 %5416
        %5418 = vrot.lane.b32.xlu0 %v5374, 56
        %v5419 = vpop.permute.xlu0 %5418
        %5420 = vrot.lane.b32.xlu0 %v5375, 56
        %v5421 = vpop.permute.xlu0 %5420
        %5422 = vrot.lane.b32.xlu0 %v5376, 56
        %v5423 = vpop.permute.xlu0 %5422
        %5424 = vrot.lane.b32.xlu0 %v5377, 56
        %v5425 = vpop.permute.xlu0 %5424
        %5442 = vst.msk [vmem:[#allocation5] sm:$0xff] %vm3823, %v5395
        %5443 = vst.msk [vmem:[#allocation5 + $0x8] sm:$0xff] %vm3823, %v5397
        %5444 = vst.msk [vmem:[#allocation5 + $0x10] sm:$0xff] %vm3823, %v5399
        %5445 = vst.msk [vmem:[#allocation5 + $0x18] sm:$0xff] %vm3823, %v5401
        %5446 = vst.msk [vmem:[#allocation5 + $0x20] sm:$0xff] %vm3823, %v5403
        %5447 = vst.msk [vmem:[#allocation5 + $0x28] sm:$0xff] %vm3823, %v5405
        %5448 = vst.msk [vmem:[#allocation5 + $0x30] sm:$0xff] %vm3823, %v5407
        %5449 = vst.msk [vmem:[#allocation5 + $0x38] sm:$0xff] %vm3823, %v5409
        %5450 = vst.msk [vmem:[#allocation5 + $0x40] sm:$0xff] %vm3823, %v5411
        %5451 = vst.msk [vmem:[#allocation5 + $0x48] sm:$0xff] %vm3823, %v5413
        %5452 = vst.msk [vmem:[#allocation5 + $0x50] sm:$0xff] %vm3823, %v5415
        %5453 = vst.msk [vmem:[#allocation5 + $0x58] sm:$0xff] %vm3823, %v5417
        %5454 = vst.msk [vmem:[#allocation5 + $0x60] sm:$0xff] %vm3823, %v5419
        %5455 = vst.msk [vmem:[#allocation5 + $0x68] sm:$0xff] %vm3823, %v5421
        %5456 = vst.msk [vmem:[#allocation5 + $0x70] sm:$0xff] %vm3823, %v5423
        %5457 = vst.msk [vmem:[#allocation5 + $0x78] sm:$0xff] %vm3823, %v5425
        %v5458 = vld [vmem:[#allocation3 + $0x29] sm:$0xff]
        %v5459 = vld [vmem:[#allocation3 + $0x31] sm:$0xff]
        %v5460 = vld [vmem:[#allocation3 + $0x39] sm:$0xff]
        %v5461 = vld [vmem:[#allocation3 + $0x41] sm:$0xff]
        %v5462 = vld [vmem:[#allocation3 + $0x49] sm:$0xff]
        %v5463 = vld [vmem:[#allocation3 + $0x51] sm:$0xff]
        %v5464 = vld [vmem:[#allocation3 + $0x59] sm:$0xff]
        %v5465 = vld [vmem:[#allocation3 + $0x61] sm:$0xff]
        %v5466 = vld [vmem:[#allocation3 + $0x69] sm:$0xff]
        %v5467 = vld [vmem:[#allocation3 + $0x71] sm:$0xff]
        %v5468 = vld [vmem:[#allocation3 + $0x79] sm:$0xff]
        %v5469 = vld [vmem:[#allocation3 + $0x81] sm:$0xff]
        %v5470 = vld [vmem:[#allocation3 + $0x89] sm:$0xff]
        %v5471 = vld [vmem:[#allocation3 + $0x91] sm:$0xff]
        %v5472 = vld [vmem:[#allocation3 + $0x99] sm:$0xff]
        %v5473 = vld [vmem:[#allocation3 + $0xa1] sm:$0xff]
        %v5474 = vld [vmem:[#allocation3 + $0xa9] sm:$0xff]
        %v5475 = vld [vmem:[#allocation3 + $0xb1] sm:$0xff]
        %v5476 = vld [vmem:[#allocation3 + $0xb9] sm:$0xff]
        %v5477 = vld [vmem:[#allocation3 + $0xc1] sm:$0xff]
        %v5478 = vld [vmem:[#allocation3 + $0xc9] sm:$0xff]
        %v5479 = vld [vmem:[#allocation3 + $0xd1] sm:$0xff]
        %v5480 = vld [vmem:[#allocation3 + $0xd9] sm:$0xff]
        %v5481 = vld [vmem:[#allocation3 + $0xe1] sm:$0xff]
        %v5482 = vld [vmem:[#allocation3 + $0xe9] sm:$0xff]
        %v5483 = vld [vmem:[#allocation3 + $0xf1] sm:$0xff]
        %v5484 = vld [vmem:[#allocation3 + $0xf9] sm:$0xff]
        %v5485 = vld [vmem:[#allocation3 + $0x101] sm:$0xff]
        %v5486 = vld [vmem:[#allocation3 + $0x109] sm:$0xff]
        %v5487 = vld [vmem:[#allocation3 + $0x111] sm:$0xff]
        %v5488 = vld [vmem:[#allocation3 + $0x119] sm:$0xff]
        %v5489 = vld [vmem:[#allocation3 + $0x121] sm:$0xff]
        %v5490 = vmul.f32 %v5458, %v962
        %v5491 = vmul.f32 %v5459, %v963
        %v5492 = vmul.f32 %v5460, %v964
        %v5493 = vmul.f32 %v5461, %v965
        %v5494 = vmul.f32 %v5462, %v966
        %v5495 = vmul.f32 %v5463, %v967
        %v5496 = vmul.f32 %v5464, %v968
        %v5497 = vmul.f32 %v5465, %v969
        %v5498 = vmul.f32 %v5466, %v970
        %v5499 = vmul.f32 %v5467, %v971
        %v5500 = vmul.f32 %v5468, %v972
        %v5501 = vmul.f32 %v5469, %v973
        %v5502 = vmul.f32 %v5470, %v974
        %v5503 = vmul.f32 %v5471, %v975
        %v5504 = vmul.f32 %v5472, %v976
        %v5505 = vmul.f32 %v5473, %v977
        %v5506 = vmul.f32 %v5474, %v978
        %v5507 = vmul.f32 %v5475, %v979
        %v5508 = vmul.f32 %v5476, %v980
        %v5509 = vmul.f32 %v5477, %v981
        %v5510 = vmul.f32 %v5478, %v982
        %v5511 = vmul.f32 %v5479, %v983
        %v5512 = vmul.f32 %v5480, %v984
        %v5513 = vmul.f32 %v5481, %v985
        %v5514 = vmul.f32 %v5482, %v986
        %v5515 = vmul.f32 %v5483, %v987
        %v5516 = vmul.f32 %v5484, %v988
        %v5517 = vmul.f32 %v5485, %v989
        %v5518 = vmul.f32 %v5486, %v990
        %v5519 = vmul.f32 %v5487, %v991
        %v5520 = vmul.f32 %v5488, %v992
        %v5521 = vmul.f32 %v5489, %v993
        %v5522 = vpack.c.bf16 %v5491, %v5490
        %v5523 = vpack.c.bf16 %v5493, %v5492
        %v5524 = vpack.c.bf16 %v5495, %v5494
        %v5525 = vpack.c.bf16 %v5497, %v5496
        %v5526 = vpack.c.bf16 %v5499, %v5498
        %v5527 = vpack.c.bf16 %v5501, %v5500
        %v5528 = vpack.c.bf16 %v5503, %v5502
        %v5529 = vpack.c.bf16 %v5505, %v5504
        %v5530 = vpack.c.bf16 %v5507, %v5506
        %v5531 = vpack.c.bf16 %v5509, %v5508
        %v5532 = vpack.c.bf16 %v5511, %v5510
        %v5533 = vpack.c.bf16 %v5513, %v5512
        %v5534 = vpack.c.bf16 %v5515, %v5514
        %v5535 = vpack.c.bf16 %v5517, %v5516
        %v5536 = vpack.c.bf16 %v5519, %v5518
        %v5537 = vpack.c.bf16 %v5521, %v5520
        %5554 = vrot.lane.b32.xlu0 %v5522, 64
        %v5555 = vpop.permute.xlu0 %5554
        %5556 = vrot.lane.b32.xlu0 %v5523, 64
        %v5557 = vpop.permute.xlu0 %5556
        %5558 = vrot.lane.b32.xlu0 %v5524, 64
        %v5559 = vpop.permute.xlu0 %5558
        %5560 = vrot.lane.b32.xlu0 %v5525, 64
        %v5561 = vpop.permute.xlu0 %5560
        %5562 = vrot.lane.b32.xlu0 %v5526, 64
        %v5563 = vpop.permute.xlu0 %5562
        %5564 = vrot.lane.b32.xlu0 %v5527, 64
        %v5565 = vpop.permute.xlu0 %5564
        %5566 = vrot.lane.b32.xlu0 %v5528, 64
        %v5567 = vpop.permute.xlu0 %5566
        %5568 = vrot.lane.b32.xlu0 %v5529, 64
        %v5569 = vpop.permute.xlu0 %5568
        %5570 = vrot.lane.b32.xlu0 %v5530, 64
        %v5571 = vpop.permute.xlu0 %5570
        %5572 = vrot.lane.b32.xlu0 %v5531, 64
        %v5573 = vpop.permute.xlu0 %5572
        %5574 = vrot.lane.b32.xlu0 %v5532, 64
        %v5575 = vpop.permute.xlu0 %5574
        %5576 = vrot.lane.b32.xlu0 %v5533, 64
        %v5577 = vpop.permute.xlu0 %5576
        %5578 = vrot.lane.b32.xlu0 %v5534, 64
        %v5579 = vpop.permute.xlu0 %5578
        %5580 = vrot.lane.b32.xlu0 %v5535, 64
        %v5581 = vpop.permute.xlu0 %5580
        %5582 = vrot.lane.b32.xlu0 %v5536, 64
        %v5583 = vpop.permute.xlu0 %5582
        %5584 = vrot.lane.b32.xlu0 %v5537, 64
        %v5585 = vpop.permute.xlu0 %5584
        %5602 = vst.msk [vmem:[#allocation5] sm:$0xff] %vm3984, %v5555
        %5603 = vst.msk [vmem:[#allocation5 + $0x8] sm:$0xff] %vm3984, %v5557
        %5604 = vst.msk [vmem:[#allocation5 + $0x10] sm:$0xff] %vm3984, %v5559
        %5605 = vst.msk [vmem:[#allocation5 + $0x18] sm:$0xff] %vm3984, %v5561
        %5606 = vst.msk [vmem:[#allocation5 + $0x20] sm:$0xff] %vm3984, %v5563
        %5607 = vst.msk [vmem:[#allocation5 + $0x28] sm:$0xff] %vm3984, %v5565
        %5608 = vst.msk [vmem:[#allocation5 + $0x30] sm:$0xff] %vm3984, %v5567
        %5609 = vst.msk [vmem:[#allocation5 + $0x38] sm:$0xff] %vm3984, %v5569
        %5610 = vst.msk [vmem:[#allocation5 + $0x40] sm:$0xff] %vm3984, %v5571
        %5611 = vst.msk [vmem:[#allocation5 + $0x48] sm:$0xff] %vm3984, %v5573
        %5612 = vst.msk [vmem:[#allocation5 + $0x50] sm:$0xff] %vm3984, %v5575
        %5613 = vst.msk [vmem:[#allocation5 + $0x58] sm:$0xff] %vm3984, %v5577
        %5614 = vst.msk [vmem:[#allocation5 + $0x60] sm:$0xff] %vm3984, %v5579
        %5615 = vst.msk [vmem:[#allocation5 + $0x68] sm:$0xff] %vm3984, %v5581
        %5616 = vst.msk [vmem:[#allocation5 + $0x70] sm:$0xff] %vm3984, %v5583
        %5617 = vst.msk [vmem:[#allocation5 + $0x78] sm:$0xff] %vm3984, %v5585
        %v5618 = vld [vmem:[#allocation5] sm:$0xff]
        %v5619 = vld [vmem:[#allocation5 + $0x8] sm:$0xff]
        %v5620 = vld [vmem:[#allocation5 + $0x10] sm:$0xff]
        %v5621 = vld [vmem:[#allocation5 + $0x18] sm:$0xff]
        %v5622 = vld [vmem:[#allocation5 + $0x20] sm:$0xff]
        %v5623 = vld [vmem:[#allocation5 + $0x28] sm:$0xff]
        %v5624 = vld [vmem:[#allocation5 + $0x30] sm:$0xff]
        %v5625 = vld [vmem:[#allocation5 + $0x38] sm:$0xff]
        %v5626 = vld [vmem:[#allocation5 + $0x40] sm:$0xff]
        %v5627 = vld [vmem:[#allocation5 + $0x48] sm:$0xff]
        %v5628 = vld [vmem:[#allocation5 + $0x50] sm:$0xff]
        %v5629 = vld [vmem:[#allocation5 + $0x58] sm:$0xff]
        %v5630 = vld [vmem:[#allocation5 + $0x60] sm:$0xff]
        %v5631 = vld [vmem:[#allocation5 + $0x68] sm:$0xff]
        %v5632 = vld [vmem:[#allocation5 + $0x70] sm:$0xff]
        %v5633 = vld [vmem:[#allocation5 + $0x78] sm:$0xff]
        %v5634 = vld [vmem:[%s5] sm:$0xf]
        %v5635 = vld [vmem:[%s5 + $0x4] sm:$0xf]
        %v5636 = vld [vmem:[%s5 + $0x8] sm:$0xf]
        %v5637 = vld [vmem:[%s5 + $0xc] sm:$0xf]
        %v5638 = vld [vmem:[%s5 + $0x10] sm:$0xf]
        %v5639 = vld [vmem:[%s5 + $0x14] sm:$0xf]
        %v5640 = vld [vmem:[%s5 + $0x18] sm:$0xf]
        %v5641 = vld [vmem:[%s5 + $0x1c] sm:$0xf]
        %v5642 = vld [vmem:[%s5 + $0x20] sm:$0xf]
        %v5643 = vld [vmem:[%s6] sm:$0x1]
        %v5645 = vlaneseq
        %v5646 = vshrl.u32 %v5645, 7
        %v5647 = vsub.s32 0, %v5646
        %v5648 = vrot.slane %v5643, %v5647
        %v5659 = vunpack.c.l.b16 %v5634
        %v5660 = vunpack.c.l.b16 %v5635
        %v5661 = vunpack.c.l.b16 %v5636
        %v5662 = vunpack.c.l.b16 %v5637
        %v5663 = vunpack.c.l.b16 %v5638
        %v5664 = vunpack.c.l.b16 %v5639
        %v5665 = vunpack.c.l.b16 %v5640
        %v5666 = vunpack.c.l.b16 %v5641
        %v5667 = vunpack.c.l.b16 %v5642
        %v5668 = vpack.c.b16 %v5660, %v5659
        %v5669 = vpack.c.b16 %v5662, %v5661
        %v5670 = vpack.c.b16 %v5664, %v5663
        %v5671 = vpack.c.b16 %v5666, %v5665
        %v5672 = vpack.c.b16 %v5667, %v5667
        %v5678 = vsel %vm4060, %v5618, 0
        %v5681 = vsel %vm4060, %v5619, 0
        %v5684 = vsel %vm4060, %v5620, 0
        %v5687 = vsel %vm4060, %v5621, 0
        %v5690 = vsel %vm4060, %v5622, 0
        %v5693 = vsel %vm4060, %v5623, 0
        %v5696 = vsel %vm4060, %v5624, 0
        %v5699 = vsel %vm4060, %v5625, 0
        %v5702 = vsel %vm4060, %v5626, 0
        %v5705 = vsel %vm4060, %v5627, 0
        %v5708 = vsel %vm4060, %v5628, 0
        %v5711 = vsel %vm4060, %v5629, 0
        %v5714 = vsel %vm4060, %v5630, 0
        %v5717 = vsel %vm4060, %v5631, 0
        %v5720 = vsel %vm4060, %v5632, 0
        %v5723 = vsel %vm4060, %v5633, 0
        %v5726 = vsel %vm4109, %v5672, 0
        %5728 = vmatprep.subr.bf16.mxu0 0
        %5729 = vmatpush1.bf16.msra.mxu0 %v5668
        %5730 = vmatprep.subr.bf16.mxu0 0
        %5731 = vmatpush1.bf16.msra.mxu0 %v5669
        %5732 = vmatprep.subr.bf16.mxu0 0
        %5733 = vmatpush1.bf16.msra.mxu0 %v5670
        %5734 = vmatprep.subr.bf16.mxu0 0
        %5735 = vmatpush1.bf16.msra.mxu0 %v5671
        %5736 = vmatprep.subr.bf16.mxu0 0
        %5737 = vmatpush1.bf16.msra.mxu0 %v5726
        %5738 = vmatprep.subr.bf16.mxu0 0
        %5739 = vmatpush1.bf16.msra.mxu0 0
        %5740 = vmatprep.subr.bf16.mxu0 0
        %5741 = vmatpush1.bf16.msra.mxu0 0
        %5742 = vmatprep.subr.bf16.mxu0 0
        %5743 = vmatpush1.bf16.msra.mxu0 0
        %5744 = vmatprep.subr.bf16.mxu0 0
        %5745 = vmatpush1.bf16.msra.mxu0 0
        %5746 = vmatprep.subr.bf16.mxu0 0
        %5747 = vmatpush1.bf16.msra.mxu0 0
        %5748 = vmatprep.subr.bf16.mxu0 0
        %5749 = vmatpush1.bf16.msra.mxu0 0
        %5750 = vmatprep.subr.bf16.mxu0 0
        %5751 = vmatpush1.bf16.msra.mxu0 0
        %5752 = vmatprep.subr.bf16.mxu0 0
        %5753 = vmatpush1.bf16.msra.mxu0 0
        %5754 = vmatprep.subr.bf16.mxu0 0
        %5755 = vmatpush1.bf16.msra.mxu0 0
        %5756 = vmatprep.subr.bf16.mxu0 0
        %5757 = vmatpush1.bf16.msra.mxu0 0
        %5758 = vmatprep.subr.bf16.mxu0 0
        %5759 = vmatpush1.bf16.msra.mxu0 0
        %5760 = vmatprep.mubr.bf16.mxu0 0
        %5761 = vmatmul.mubr.bf16.gmra.mrb[0].mxu0 %v5678
        %v5762 = vpop.f32.mrb[0].mxu0
        %v5763 = vadd.f32 %v5648, %v5762
        %v5764 = vpop.f32.mrb[0].mxu0
        %v5765 = vpop.f32.mrb[0].mxu0
        %v5766 = vadd.f32 %v5648, %v5765
        %v5767 = vpop.f32.mrb[0].mxu0
        %5768 = vmatprep.mubr.bf16.mxu0 0
        %5769 = vmatmul.mubr.bf16.gmra.mrb[0].mxu0 %v5681
        %v5770 = vpop.f32.mrb[0].mxu0
        %v5771 = vadd.f32 %v5648, %v5770
        %v5772 = vpop.f32.mrb[0].mxu0
        %v5773 = vpop.f32.mrb[0].mxu0
        %v5774 = vadd.f32 %v5648, %v5773
        %v5775 = vpop.f32.mrb[0].mxu0
        %5776 = vmatprep.mubr.bf16.mxu0 0
        %5777 = vmatmul.mubr.bf16.gmra.mrb[0].mxu0 %v5684
        %v5778 = vpop.f32.mrb[0].mxu0
        %v5779 = vadd.f32 %v5648, %v5778
        %v5780 = vpop.f32.mrb[0].mxu0
        %v5781 = vpop.f32.mrb[0].mxu0
        %v5782 = vadd.f32 %v5648, %v5781
        %v5783 = vpop.f32.mrb[0].mxu0
        %5784 = vmatprep.mubr.bf16.mxu0 0
        %5785 = vmatmul.mubr.bf16.gmra.mrb[0].mxu0 %v5687
        %v5786 = vpop.f32.mrb[0].mxu0
        %v5787 = vadd.f32 %v5648, %v5786
        %v5788 = vpop.f32.mrb[0].mxu0
        %v5789 = vpop.f32.mrb[0].mxu0
        %v5790 = vadd.f32 %v5648, %v5789
        %v5791 = vpop.f32.mrb[0].mxu0
        %5792 = vmatprep.mubr.bf16.mxu0 0
        %5793 = vmatmul.mubr.bf16.gmra.mrb[0].mxu0 %v5690
        %v5794 = vpop.f32.mrb[0].mxu0
        %v5795 = vadd.f32 %v5648, %v5794
        %v5796 = vpop.f32.mrb[0].mxu0
        %v5797 = vpop.f32.mrb[0].mxu0
        %v5798 = vadd.f32 %v5648, %v5797
        %v5799 = vpop.f32.mrb[0].mxu0
        %5800 = vmatprep.mubr.bf16.mxu0 0
        %5801 = vmatmul.mubr.bf16.gmra.mrb[0].mxu0 %v5693
        %v5802 = vpop.f32.mrb[0].mxu0
        %v5803 = vadd.f32 %v5648, %v5802
        %v5804 = vpop.f32.mrb[0].mxu0
        %v5805 = vpop.f32.mrb[0].mxu0
        %v5806 = vadd.f32 %v5648, %v5805
        %v5807 = vpop.f32.mrb[0].mxu0
        %5808 = vmatprep.mubr.bf16.mxu0 0
        %5809 = vmatmul.mubr.bf16.gmra.mrb[0].mxu0 %v5696
        %v5810 = vpop.f32.mrb[0].mxu0
        %v5811 = vadd.f32 %v5648, %v5810
        %v5812 = vpop.f32.mrb[0].mxu0
        %v5813 = vpop.f32.mrb[0].mxu0
        %v5814 = vadd.f32 %v5648, %v5813
        %v5815 = vpop.f32.mrb[0].mxu0
        %5816 = vmatprep.mubr.bf16.mxu0 0
        %5817 = vmatmul.mubr.bf16.gmra.mrb[0].mxu0 %v5699
        %v5818 = vpop.f32.mrb[0].mxu0
        %v5819 = vadd.f32 %v5648, %v5818
        %v5820 = vpop.f32.mrb[0].mxu0
        %v5821 = vpop.f32.mrb[0].mxu0
        %v5822 = vadd.f32 %v5648, %v5821
        %v5823 = vpop.f32.mrb[0].mxu0
        %5824 = vmatprep.mubr.bf16.mxu0 0
        %5825 = vmatmul.mubr.bf16.gmra.mrb[0].mxu0 %v5702
        %v5826 = vpop.f32.mrb[0].mxu0
        %v5827 = vadd.f32 %v5648, %v5826
        %v5828 = vpop.f32.mrb[0].mxu0
        %v5829 = vpop.f32.mrb[0].mxu0
        %v5830 = vadd.f32 %v5648, %v5829
        %v5831 = vpop.f32.mrb[0].mxu0
        %5832 = vmatprep.mubr.bf16.mxu0 0
        %5833 = vmatmul.mubr.bf16.gmra.mrb[0].mxu0 %v5705
        %v5834 = vpop.f32.mrb[0].mxu0
        %v5835 = vadd.f32 %v5648, %v5834
        %v5836 = vpop.f32.mrb[0].mxu0
        %v5837 = vpop.f32.mrb[0].mxu0
        %v5838 = vadd.f32 %v5648, %v5837
        %v5839 = vpop.f32.mrb[0].mxu0
        %5840 = vmatprep.mubr.bf16.mxu0 0
        %5841 = vmatmul.mubr.bf16.gmra.mrb[0].mxu0 %v5708
        %v5842 = vpop.f32.mrb[0].mxu0
        %v5843 = vadd.f32 %v5648, %v5842
        %v5844 = vpop.f32.mrb[0].mxu0
        %v5845 = vpop.f32.mrb[0].mxu0
        %v5846 = vadd.f32 %v5648, %v5845
        %v5847 = vpop.f32.mrb[0].mxu0
        %5848 = vmatprep.mubr.bf16.mxu0 0
        %5849 = vmatmul.mubr.bf16.gmra.mrb[0].mxu0 %v5711
        %v5850 = vpop.f32.mrb[0].mxu0
        %v5851 = vadd.f32 %v5648, %v5850
        %v5852 = vpop.f32.mrb[0].mxu0
        %v5853 = vpop.f32.mrb[0].mxu0
        %v5854 = vadd.f32 %v5648, %v5853
        %v5855 = vpop.f32.mrb[0].mxu0
        %5856 = vmatprep.mubr.bf16.mxu0 0
        %5857 = vmatmul.mubr.bf16.gmra.mrb[0].mxu0 %v5714
        %v5858 = vpop.f32.mrb[0].mxu0
        %v5859 = vadd.f32 %v5648, %v5858
        %v5860 = vpop.f32.mrb[0].mxu0
        %v5861 = vpop.f32.mrb[0].mxu0
        %v5862 = vadd.f32 %v5648, %v5861
        %v5863 = vpop.f32.mrb[0].mxu0
        %5864 = vmatprep.mubr.bf16.mxu0 0
        %5865 = vmatmul.mubr.bf16.gmra.mrb[0].mxu0 %v5717
        %v5866 = vpop.f32.mrb[0].mxu0
        %v5867 = vadd.f32 %v5648, %v5866
        %v5868 = vpop.f32.mrb[0].mxu0
        %v5869 = vpop.f32.mrb[0].mxu0
        %v5870 = vadd.f32 %v5648, %v5869
        %v5871 = vpop.f32.mrb[0].mxu0
        %5872 = vmatprep.mubr.bf16.mxu0 0
        %5873 = vmatmul.mubr.bf16.gmra.mrb[0].mxu0 %v5720
        %v5874 = vpop.f32.mrb[0].mxu0
        %v5875 = vadd.f32 %v5648, %v5874
        %v5876 = vpop.f32.mrb[0].mxu0
        %v5877 = vpop.f32.mrb[0].mxu0
        %v5878 = vadd.f32 %v5648, %v5877
        %v5879 = vpop.f32.mrb[0].mxu0
        %5880 = vmatprep.mubr.bf16.mxu0 0
        %5881 = vmatmul.mubr.bf16.gmra.mrb[0].mxu0 %v5723
        %v5882 = vpop.f32.mrb[0].mxu0
        %v5883 = vadd.f32 %v5648, %v5882
        %v5884 = vpop.f32.mrb[0].mxu0
        %v5885 = vpop.f32.mrb[0].mxu0
        %v5886 = vadd.f32 %v5648, %v5885
        %v5887 = vpop.f32.mrb[0].mxu0
        %5888 = vdwg.mxu0
        %v5889 = vld [vmem:[#allocation6] sm:$0xff]
        %v5890 = vld [vmem:[#allocation6 + $0x8] sm:$0xff]
        %v5891 = vld [vmem:[#allocation6 + $0x10] sm:$0xff]
        %v5892 = vld [vmem:[#allocation6 + $0x18] sm:$0xff]
        %v5893 = vld [vmem:[#allocation6 + $0x20] sm:$0xff]
        %v5894 = vld [vmem:[#allocation6 + $0x28] sm:$0xff]
        %v5895 = vld [vmem:[#allocation6 + $0x30] sm:$0xff]
        %v5896 = vld [vmem:[#allocation6 + $0x38] sm:$0xff]
        %v5897 = vld [vmem:[#allocation6 + $0x40] sm:$0xff]
        %v5898 = vld [vmem:[#allocation6 + $0x48] sm:$0xff]
        %v5899 = vld [vmem:[#allocation6 + $0x50] sm:$0xff]
        %v5900 = vld [vmem:[#allocation6 + $0x58] sm:$0xff]
        %v5901 = vld [vmem:[#allocation6 + $0x60] sm:$0xff]
        %v5902 = vld [vmem:[#allocation6 + $0x68] sm:$0xff]
        %v5903 = vld [vmem:[#allocation6 + $0x70] sm:$0xff]
        %v5904 = vld [vmem:[#allocation6 + $0x78] sm:$0xff]
        %v5905 = vld [vmem:[#allocation6 + $0x80] sm:$0xff]
        %v5906 = vld [vmem:[#allocation6 + $0x88] sm:$0xff]
        %v5907 = vld [vmem:[#allocation6 + $0x90] sm:$0xff]
        %v5908 = vld [vmem:[#allocation6 + $0x98] sm:$0xff]
        %v5909 = vld [vmem:[#allocation6 + $0xa0] sm:$0xff]
        %v5910 = vld [vmem:[#allocation6 + $0xa8] sm:$0xff]
        %v5911 = vld [vmem:[#allocation6 + $0xb0] sm:$0xff]
        %v5912 = vld [vmem:[#allocation6 + $0xb8] sm:$0xff]
        %v5913 = vld [vmem:[#allocation6 + $0xc0] sm:$0xff]
        %v5914 = vld [vmem:[#allocation6 + $0xc8] sm:$0xff]
        %v5915 = vld [vmem:[#allocation6 + $0xd0] sm:$0xff]
        %v5916 = vld [vmem:[#allocation6 + $0xd8] sm:$0xff]
        %v5917 = vld [vmem:[#allocation6 + $0xe0] sm:$0xff]
        %v5918 = vld [vmem:[#allocation6 + $0xe8] sm:$0xff]
        %v5919 = vld [vmem:[#allocation6 + $0xf0] sm:$0xff]
        %v5920 = vld [vmem:[#allocation6 + $0xf8] sm:$0xff]
        %v5921 = vadd.f32 %v5763, %v5889
        %v5922 = vadd.f32 %v5766, %v5890
        %v5923 = vadd.f32 %v5771, %v5891
        %v5924 = vadd.f32 %v5774, %v5892
        %v5925 = vadd.f32 %v5779, %v5893
        %v5926 = vadd.f32 %v5782, %v5894
        %v5927 = vadd.f32 %v5787, %v5895
        %v5928 = vadd.f32 %v5790, %v5896
        %v5929 = vadd.f32 %v5795, %v5897
        %v5930 = vadd.f32 %v5798, %v5898
        %v5931 = vadd.f32 %v5803, %v5899
        %v5932 = vadd.f32 %v5806, %v5900
        %v5933 = vadd.f32 %v5811, %v5901
        %v5934 = vadd.f32 %v5814, %v5902
        %v5935 = vadd.f32 %v5819, %v5903
        %v5936 = vadd.f32 %v5822, %v5904
        %v5937 = vadd.f32 %v5827, %v5905
        %v5938 = vadd.f32 %v5830, %v5906
        %v5939 = vadd.f32 %v5835, %v5907
        %v5940 = vadd.f32 %v5838, %v5908
        %v5941 = vadd.f32 %v5843, %v5909
        %v5942 = vadd.f32 %v5846, %v5910
        %v5943 = vadd.f32 %v5851, %v5911
        %v5944 = vadd.f32 %v5854, %v5912
        %v5945 = vadd.f32 %v5859, %v5913
        %v5946 = vadd.f32 %v5862, %v5914
        %v5947 = vadd.f32 %v5867, %v5915
        %v5948 = vadd.f32 %v5870, %v5916
        %v5949 = vadd.f32 %v5875, %v5917
        %v5950 = vadd.f32 %v5878, %v5918
        %v5951 = vadd.f32 %v5883, %v5919
        %v5952 = vadd.f32 %v5886, %v5920
        %v5953 = vmax.f32 %v5921, 0.0
        %v5954 = vmax.f32 %v5922, 0.0
        %v5955 = vmax.f32 %v5923, 0.0
        %v5956 = vmax.f32 %v5924, 0.0
        %v5957 = vmax.f32 %v5925, 0.0
        %v5958 = vmax.f32 %v5926, 0.0
        %v5959 = vmax.f32 %v5927, 0.0
        %v5960 = vmax.f32 %v5928, 0.0
        %v5961 = vmax.f32 %v5929, 0.0
        %v5962 = vmax.f32 %v5930, 0.0
        %v5963 = vmax.f32 %v5931, 0.0
        %v5964 = vmax.f32 %v5932, 0.0
        %v5965 = vmax.f32 %v5933, 0.0
        %v5966 = vmax.f32 %v5934, 0.0
        %v5967 = vmax.f32 %v5935, 0.0
        %v5968 = vmax.f32 %v5936, 0.0
        %v5969 = vmax.f32 %v5937, 0.0
        %v5970 = vmax.f32 %v5938, 0.0
        %v5971 = vmax.f32 %v5939, 0.0
        %v5972 = vmax.f32 %v5940, 0.0
        %v5973 = vmax.f32 %v5941, 0.0
        %v5974 = vmax.f32 %v5942, 0.0
        %v5975 = vmax.f32 %v5943, 0.0
        %v5976 = vmax.f32 %v5944, 0.0
        %v5977 = vmax.f32 %v5945, 0.0
        %v5978 = vmax.f32 %v5946, 0.0
        %v5979 = vmax.f32 %v5947, 0.0
        %v5980 = vmax.f32 %v5948, 0.0
        %v5981 = vmax.f32 %v5949, 0.0
        %v5982 = vmax.f32 %v5950, 0.0
        %v5983 = vmax.f32 %v5951, 0.0
        %v5984 = vmax.f32 %v5952, 0.0
        %v5985 = vsel %vm1001, %v5953, 0.0
        %v5986 = vsel %vm1001, %v5954, 0.0
        %v5987 = vadd.f32 %v5985, %v5986
        %v5988 = vsel %vm1001, %v5955, 0.0
        %v5989 = vadd.f32 %v5987, %v5988
        %v5990 = vsel %vm1001, %v5956, 0.0
        %v5991 = vadd.f32 %v5989, %v5990
        %v5992 = vsel %vm1001, %v5957, 0.0
        %v5993 = vadd.f32 %v5991, %v5992
        %v5994 = vsel %vm1001, %v5958, 0.0
        %v5995 = vadd.f32 %v5993, %v5994
        %v5996 = vsel %vm1001, %v5959, 0.0
        %v5997 = vadd.f32 %v5995, %v5996
        %v5998 = vsel %vm1001, %v5960, 0.0
        %v5999 = vadd.f32 %v5997, %v5998
        %v6000 = vsel %vm1001, %v5961, 0.0
        %v6001 = vadd.f32 %v5999, %v6000
        %v6002 = vsel %vm1001, %v5962, 0.0
        %v6003 = vadd.f32 %v6001, %v6002
        %v6004 = vsel %vm1001, %v5963, 0.0
        %v6005 = vadd.f32 %v6003, %v6004
        %v6006 = vsel %vm1001, %v5964, 0.0
        %v6007 = vadd.f32 %v6005, %v6006
        %v6008 = vsel %vm1001, %v5965, 0.0
        %v6009 = vadd.f32 %v6007, %v6008
        %v6010 = vsel %vm1001, %v5966, 0.0
        %v6011 = vadd.f32 %v6009, %v6010
        %v6012 = vsel %vm1001, %v5967, 0.0
        %v6013 = vadd.f32 %v6011, %v6012
        %v6014 = vsel %vm1001, %v5968, 0.0
        %v6015 = vadd.f32 %v6013, %v6014
        %v6016 = vsel %vm1001, %v5969, 0.0
        %v6017 = vadd.f32 %v6015, %v6016
        %v6018 = vsel %vm1001, %v5970, 0.0
        %v6019 = vadd.f32 %v6017, %v6018
        %v6020 = vsel %vm1001, %v5971, 0.0
        %v6021 = vadd.f32 %v6019, %v6020
        %v6022 = vsel %vm1001, %v5972, 0.0
        %v6023 = vadd.f32 %v6021, %v6022
        %v6024 = vsel %vm1001, %v5973, 0.0
        %v6025 = vadd.f32 %v6023, %v6024
        %v6026 = vsel %vm1001, %v5974, 0.0
        %v6027 = vadd.f32 %v6025, %v6026
        %v6028 = vsel %vm1001, %v5975, 0.0
        %v6029 = vadd.f32 %v6027, %v6028
        %v6030 = vsel %vm1001, %v5976, 0.0
        %v6031 = vadd.f32 %v6029, %v6030
        %v6032 = vsel %vm1001, %v5977, 0.0
        %v6033 = vadd.f32 %v6031, %v6032
        %v6034 = vsel %vm1001, %v5978, 0.0
        %v6035 = vadd.f32 %v6033, %v6034
        %v6036 = vsel %vm1001, %v5979, 0.0
        %v6037 = vadd.f32 %v6035, %v6036
        %v6038 = vsel %vm1001, %v5980, 0.0
        %v6039 = vadd.f32 %v6037, %v6038
        %v6040 = vsel %vm1001, %v5981, 0.0
        %v6041 = vadd.f32 %v6039, %v6040
        %v6042 = vsel %vm1001, %v5982, 0.0
        %v6043 = vadd.f32 %v6041, %v6042
        %v6044 = vsel %vm1001, %v5983, 0.0
        %v6045 = vadd.f32 %v6043, %v6044
        %v6046 = vsel %vm1001, %v5984, 0.0
        %v6047 = vadd.f32 %v6045, %v6046
        %v6048 = vrot.slane %v6047, 4
        %v6049 = vadd.f32 %v6047, %v6048
        %v6050 = vrot.slane %v6049, 2
        %v6051 = vadd.f32 %v6049, %v6050
        %v6052 = vrot.slane %v6051, 1
        %v6053 = vadd.f32 %v6051, %v6052
        %v6054 = vmul.f32 %v6053, 0.00390625
        %v6055 = vpack.c.bf16 %v6054, %v6054
        %v6056 = vld [vmem:[%s7] sm:$0xf]
        %v6057 = vld [vmem:[%s8] sm:$0x1]
        %v6059 = vsel %vm1001, %v6055, 0
        %v6062 = vsel %vm4109, %v6056, 0
        %6064 = vmatprep.subr.bf16.mxu0 0
        %6065 = vmatpush1.bf16.msra.mxu0 %v6062
        %6066 = vmatprep.subr.bf16.mxu0 0
        %6067 = vmatpush1.bf16.msra.mxu0 0
        %6068 = vmatprep.subr.bf16.mxu0 0
        %6069 = vmatpush1.bf16.msra.mxu0 0
        %6070 = vmatprep.subr.bf16.mxu0 0
        %6071 = vmatpush1.bf16.msra.mxu0 0
        %6072 = vmatprep.subr.bf16.mxu0 0
        %6073 = vmatpush1.bf16.msra.mxu0 0
        %6074 = vmatprep.subr.bf16.mxu0 0
        %6075 = vmatpush1.bf16.msra.mxu0 0
        %6076 = vmatprep.subr.bf16.mxu0 0
        %6077 = vmatpush1.bf16.msra.mxu0 0
        %6078 = vmatprep.subr.bf16.mxu0 0
        %6079 = vmatpush1.bf16.msra.mxu0 0
        %6080 = vmatprep.subr.bf16.mxu0 0
        %6081 = vmatpush1.bf16.msra.mxu0 0
        %6082 = vmatprep.subr.bf16.mxu0 0
        %6083 = vmatpush1.bf16.msra.mxu0 0
        %6084 = vmatprep.subr.bf16.mxu0 0
        %6085 = vmatpush1.bf16.msra.mxu0 0
        %6086 = vmatprep.subr.bf16.mxu0 0
        %6087 = vmatpush1.bf16.msra.mxu0 0
        %6088 = vmatprep.subr.bf16.mxu0 0
        %6089 = vmatpush1.bf16.msra.mxu0 0
        %6090 = vmatprep.subr.bf16.mxu0 0
        %6091 = vmatpush1.bf16.msra.mxu0 0
        %6092 = vmatprep.subr.bf16.mxu0 0
        %6093 = vmatpush1.bf16.msra.mxu0 0
        %6094 = vmatprep.subr.bf16.mxu0 0
        %6095 = vmatpush1.bf16.msra.mxu0 0
        %6096 = vmatprep.mubr.bf16.mxu0 0
        %6097 = vmatmul.mubr.bf16.gmra.mrb[0].mxu0 %v6059
        %v6098 = vpop.f32.mrb[0].mxu0
        %v6099 = vadd.f32 %v6057, %v6098
        %v6100 = vpop.f32.mrb[0].mxu0
        %v6101 = vpop.f32.mrb[0].mxu0
        %v6102 = vpop.f32.mrb[0].mxu0
        %6103 = vdwg.mxu0
        %v6104 = vmax.f32 %v6099, 0.0
        %v6105 = vpack.c.bf16 %v6104, %v6104
        %v6106 = vld [vmem:[%s9] sm:$0xf]
        %v6107 = vld [vmem:[%s9 + $0x4] sm:$0xf]
        %v6108 = vld [vmem:[%s9 + $0x8] sm:$0xf]
        %v6109 = vld [vmem:[%s9 + $0xc] sm:$0xf]
        %v6110 = vld [vmem:[%s9 + $0x10] sm:$0xf]
        %v6111 = vld [vmem:[%s9 + $0x14] sm:$0xf]
        %v6112 = vld [vmem:[%s9 + $0x18] sm:$0xf]
        %v6113 = vld [vmem:[%s9 + $0x1c] sm:$0xf]
        %v6114 = vld [vmem:[%s9 + $0x20] sm:$0xf]
        %v6115 = vld [vmem:[%s9 + $0x24] sm:$0xf]
        %v6116 = vld [vmem:[%s9 + $0x28] sm:$0xf]
        %v6117 = vld [vmem:[%s9 + $0x2c] sm:$0xf]
        %v6118 = vld [vmem:[%s9 + $0x30] sm:$0xf]
        %v6119 = vld [vmem:[%s9 + $0x34] sm:$0xf]
        %v6120 = vld [vmem:[%s9 + $0x38] sm:$0xf]
        %v6121 = vld [vmem:[%s9 + $0x3c] sm:$0xf]
        %v6122 = vld [vmem:[%s10] sm:$0x1]
        %v6139 = vunpack.c.l.b16 %v6106
        %v6140 = vunpack.c.l.b16 %v6107
        %v6141 = vunpack.c.l.b16 %v6108
        %v6142 = vunpack.c.l.b16 %v6109
        %v6143 = vunpack.c.l.b16 %v6110
        %v6144 = vunpack.c.l.b16 %v6111
        %v6145 = vunpack.c.l.b16 %v6112
        %v6146 = vunpack.c.l.b16 %v6113
        %v6147 = vunpack.c.l.b16 %v6114
        %v6148 = vunpack.c.l.b16 %v6115
        %v6149 = vunpack.c.l.b16 %v6116
        %v6150 = vunpack.c.l.b16 %v6117
        %v6151 = vunpack.c.l.b16 %v6118
        %v6152 = vunpack.c.l.b16 %v6119
        %v6153 = vunpack.c.l.b16 %v6120
        %v6154 = vunpack.c.l.b16 %v6121
        %v6155 = vpack.c.b16 %v6140, %v6139
        %v6156 = vpack.c.b16 %v6142, %v6141
        %v6157 = vpack.c.b16 %v6144, %v6143
        %v6158 = vpack.c.b16 %v6146, %v6145
        %v6159 = vpack.c.b16 %v6148, %v6147
        %v6160 = vpack.c.b16 %v6150, %v6149
        %v6161 = vpack.c.b16 %v6152, %v6151
        %v6162 = vpack.c.b16 %v6154, %v6153
        %6171 = vmatprep.subr.bf16.mxu0 0
        %6172 = vmatpush1.bf16.msra.mxu0 %v6155
        %6173 = vmatprep.subr.bf16.mxu0 0
        %6174 = vmatpush1.bf16.msra.mxu0 %v6156
        %6175 = vmatprep.subr.bf16.mxu0 0
        %6176 = vmatpush1.bf16.msra.mxu0 %v6157
        %6177 = vmatprep.subr.bf16.mxu0 0
        %6178 = vmatpush1.bf16.msra.mxu0 %v6158
        %6179 = vmatprep.subr.bf16.mxu0 0
        %6180 = vmatpush1.bf16.msra.mxu0 %v6159
        %6181 = vmatprep.subr.bf16.mxu0 0
        %6182 = vmatpush1.bf16.msra.mxu0 %v6160
        %6183 = vmatprep.subr.bf16.mxu0 0
        %6184 = vmatpush1.bf16.msra.mxu0 %v6161
        %6185 = vmatprep.subr.bf16.mxu0 0
        %6186 = vmatpush1.bf16.msra.mxu0 %v6162
        %6187 = vmatprep.subr.bf16.mxu0 0
        %6188 = vmatpush1.bf16.msra.mxu0 0
        %6189 = vmatprep.subr.bf16.mxu0 0
        %6190 = vmatpush1.bf16.msra.mxu0 0
        %6191 = vmatprep.subr.bf16.mxu0 0
        %6192 = vmatpush1.bf16.msra.mxu0 0
        %6193 = vmatprep.subr.bf16.mxu0 0
        %6194 = vmatpush1.bf16.msra.mxu0 0
        %6195 = vmatprep.subr.bf16.mxu0 0
        %6196 = vmatpush1.bf16.msra.mxu0 0
        %6197 = vmatprep.subr.bf16.mxu0 0
        %6198 = vmatpush1.bf16.msra.mxu0 0
        %6199 = vmatprep.subr.bf16.mxu0 0
        %6200 = vmatpush1.bf16.msra.mxu0 0
        %6201 = vmatprep.subr.bf16.mxu0 0
        %6202 = vmatpush1.bf16.msra.mxu0 0
        %6203 = vmatprep.mubr.bf16.mxu0 0
        %6204 = vmatmul.mubr.bf16.gmra.mrb[0].mxu0 %v6105
        %v6205 = vpop.f32.mrb[0].mxu0
        %v6206 = vadd.f32 %v6122, %v6205
        %v6207 = vpop.f32.mrb[0].mxu0
        %v6208 = vpop.f32.mrb[0].mxu0
        %v6209 = vpop.f32.mrb[0].mxu0
        %6210 = vdwg.mxu0
        %vm6211 = vcmask 16384
        %6212 = vst.msk [vmem:[%s378] sm:$0x1] %vm6211, %v6206
        %s6213 = sand.u32 %s269, 1
        %s6214 = scalar_lea.sflag [#allocation8], %s6213
        %s6215 = sand.u32 %s269, 1
        %s6216 = scalar_lea.vmem [#allocation7], %s6215
        // Predicated region
        $region65: #{res_encoder_finetune_forward.1} parent=63 // pred_check
          %p6217 = pneg %p279
        $region66: #{res_encoder_finetune_forward.1} parent=63 // pred_check_branch
          %6219 = sbr.rel (%p6217) target = $region68
        $region67: #{res_encoder_finetune_forward.1} parent=63 // pred_region
          %s6221 = ssub.s32 16, 16
          %6222 = vsyncadd %s6214, %s6221
          %s6223 = smul.addr %s25, 16
          %s6224 = scalar_lea.hbm %s11, %s6223
          %s6226 = sshll.u32 %s6216, 4
          %s6227 = int_to_ptr.vmem [resolvable:$true] %s6226
          %6229 = dma.vmem_to_hbm [thread:$0]  %s6227, 16, %s6224, %s6214
        $region68: #{res_encoder_finetune_forward.1} parent=63 // pred_fallthru
          _
      $region64: #{res_encoder_finetune_forward.1} parent=5 // pred_fallthru
        _
      %p6230 = scmp.le.s32.totalorder 2, %s20
      // Predicated region
      $region69: #{res_encoder_finetune_forward.1} parent=5 // pred_check
        %p6231 = pneg %p6230
      $region70: #{res_encoder_finetune_forward.1} parent=5 // pred_check_branch
        %6233 = sbr.rel (%p6231) target = $region72
      $region71: #{res_encoder_finetune_forward.1} parent=5 // pred_region
        %s6234 = ssub.s32 %s20, 2
        // Predicated region
        $region73: #{res_encoder_finetune_forward.1} parent=71 // pred_check
          %p6235 = pneg %p285
        $region74: #{res_encoder_finetune_forward.1} parent=71 // pred_check_branch
          %6237 = sbr.rel (%p6235) target = $region76
        $region75: #{res_encoder_finetune_forward.1} parent=71 // pred_region
          %s6238 = sand.u32 %s270, 1
          %s6239 = scalar_lea.sflag [#allocation8], %s6238
          %s6240 = sand.u32 %s270, 1
          %s6241 = scalar_lea.vmem [#allocation7], %s6240
          %6242 = dma.done %s6239, 16
        $region76: #{res_encoder_finetune_forward.1} parent=71 // pred_fallthru
          _
      $region72: #{res_encoder_finetune_forward.1} parent=5 // pred_fallthru
        _
    $region6: #{res_encoder_finetune_forward.1} parent=1 // loop_footer
      %s24 = sadd.s32 1, %s20
    $region7: #{res_encoder_finetune_forward.1} parent=1 // loop_footer_branch
      %19 = sbr.rel target = $region3
    $region8: #{res_encoder_finetune_forward.1} parent=1 // loop_exit
      _
    %6243 = vsyncpa [#allocation8], 1
    %s6244 = scalar_lea.sflag [#allocation8], 1
    %6245 = vsyncpa %s6244, 1

</llo_original>
